<compile_context>
chip_gen: v7x
topology: tpu7x:2x2x1
jax: 0.10.0
libtpu: 0.0.40
codegen_flags: <defaults>
</compile_context>

<pallas_src>
import functools

import jax
import jax.numpy as jnp
import numpy as np
from jax import lax
from jax.experimental import pallas as pl
from jax.experimental.pallas import tpu as pltpu

TILE_N = 2048   # batch rows DMA'd per grid step
CHUNK_N = 256   # rows per in-register compute chunk inside a tile


# ---------------------------------------------------------------------------
# Fused kernel.  x arrives in natural [TILE_N, C_in] layout; all compute is
# done lane-dense ([channels, rows]) via transposed-RHS dot_generals; the
# output block is lane-dense [C_out, TILE_N].
# ---------------------------------------------------------------------------
def _fused_multiplenet_kernel(
    x_ref,       # [TILE_N, C_in]  f32 (natural layout)
    w16_ref,     # [2, H, C_in]    mxu dtype: [0]=net0 L1, [1]=net1 L1 (x part)
    wA_ref,      # [2, H, H]       [0]=A0=fw1@W2o_0, [1]=A1=fw1@W2_1
    b32_ref,     # [4, H, 1]  f32  [0]=b1_0, [1]=b1_1, [2]=bias_g0, [3]=bias_g1
    w2f_ref,     # [FD0, H]        net0 L2 feature-vector part
    w1f_ref,     # [H, FD0]        net1 L1 feature-vector part
    b2f_ref,     # [FD0, 1]  f32
    wf2_ref,     # [C_out, H]      feature_net L2
    fb2_ref,     # [C_out, 1] f32  (scale0+scale1)*fb2
    o_ref,       # [C_out, TILE_N]
    *, scale0, scale1, chunk):
    f32 = jnp.float32
    cdt = w16_ref.dtype                      # MXU operand dtype (bf16 or f32)
    tile_n = o_ref.shape[-1]

    # Weights are tiny (<= 2 KB each); load once per grid step.
    w1_0, w1x_1 = w16_ref[0], w16_ref[1]
    a0, a1 = wA_ref[0], wA_ref[1]
    b1_0, b1_1, bg0, bg1 = b32_ref[0], b32_ref[1], b32_ref[2], b32_ref[3]
    w2f = w2f_ref[...]
    w1f = w1f_ref[...]
    b2f = b2f_ref[...]
    wf2 = wf2_ref[...]
    fb2c = fb2_ref[...]

    dn_bt = (((1,), (1,)), ((), ()))          # A @ B^T (contract last dims)

    # Static chunk schedule (handles tile_n not divisible by chunk).
    sizes = [chunk] * (tile_n // chunk)
    if tile_n % chunk:
        sizes.append(tile_n % chunk)

    off = 0
    for sz in sizes:                          # static loop, static slices
        x_c = x_ref[off:off + sz, :].astype(cdt)                     # [sz, Cin]

        # net0 layer 1: relu(W1_0 @ x^T + b)          -> [H, sz]
        h0 = jnp.maximum(
            lax.dot_general(w1_0, x_c, dn_bt, preferred_element_type=f32)
            + b1_0, 0.0)
        h0c = h0.astype(cdt)

        # net0 layer 2, feature-vector part (color part folded into A0)
        fv = (jnp.dot(w2f, h0c, preferred_element_type=f32) + b2f).astype(cdt)

        # net1 layer 1 on concat([x, fv]) expressed as two matmuls (no concat)
        h1 = jnp.maximum(
            lax.dot_general(w1x_1, x_c, dn_bt, preferred_element_type=f32)
            + jnp.dot(w1f, fv, preferred_element_type=f32)
            + b1_1, 0.0)
        h1c = h1.astype(cdt)

        # feature_net layer 1 folded with each net's layer-2 color path
        g0 = jnp.maximum(jnp.dot(a0, h0c, preferred_element_type=f32) + bg0, 0.0)
        g1 = jnp.maximum(jnp.dot(a1, h1c, preferred_element_type=f32) + bg1, 0.0)

        # per-net scales pushed through the (linear) feature_net layer 2
        gc = (scale0 * g0 + scale1 * g1).astype(cdt)                 # [H, sz]
        y = jnp.dot(wf2, gc, preferred_element_type=f32) + fb2c      # [Cout, sz]

        o_ref[:, off:off + sz] = y.astype(o_ref.dtype)
        off += sz


# ---------------------------------------------------------------------------
# Wrapper: natural [N, C_in] input, 1-D parallel grid over row tiles, no
# wrapper-side transpose/pad of x; single output transpose [C_out, N]->[N, C_out].
# ---------------------------------------------------------------------------
def multiplenet_forward(x, kparams, *, out_channels, scale0, scale1,
                        flops_per_row, tile_n=TILE_N, chunk_n=CHUNK_N):
    n, c_in = x.shape
    tile_n = min(tile_n, n)              # block == full array when n < tile_n
    chunk = min(chunk_n, tile_n)
    grid = (pl.cdiv(n, tile_n),)         # edge blocks handled by Pallas masking

    def const_spec(a):                   # VMEM-resident params, constant index
        return pl.BlockSpec(a.shape, lambda i: (0,) * a.ndim)

    x_spec = pl.BlockSpec((tile_n, c_in), lambda i: (i, 0))
    out_spec = pl.BlockSpec((out_channels, tile_n), lambda i: (0, i))

    weight_bytes = sum(int(np.prod(p.shape)) * p.dtype.itemsize for p in kparams)
    cost = pl.CostEstimate(
        flops=int(flops_per_row) * int(n),
        transcendentals=0,
        bytes_accessed=int(n) * (c_in + out_channels) * x.dtype.itemsize
        + weight_bytes,
    )

    kernel = functools.partial(_fused_multiplenet_kernel,
                               scale0=float(scale0), scale1=float(scale1),
                               chunk=chunk)

    out_cn = pl.pallas_call(
        kernel,
        grid=grid,
        in_specs=[x_spec] + [const_spec(p) for p in kparams],
        out_specs=out_spec,
        out_shape=jax.ShapeDtypeStruct((out_channels, n), x.dtype),
        compiler_params=pltpu.CompilerParams(
            dimension_semantics=("parallel",),
            vmem_limit_bytes=32 * 1024 * 1024),
        cost_estimate=cost,
    )(x, *kparams)

    # Kernel output kept lane-dense ([C_out, N]); one small wrapper transpose
    # back to the module's [N, C_out] contract (8 channels vs the removed
    # 16-channel x transpose + pad round trips).
    return jnp.transpose(out_cn)


# ---------------------------------------------------------------------------
# Parameter construction (deterministic, in-script)
# ---------------------------------------------------------------------------
def _init_mlp(key, d_in, d_hidden, d_out):
    k1, k2 = jax.random.split(key)
    w1 = jax.random.normal(k1, (d_in, d_hidden), jnp.float32) / np.sqrt(d_in)
    b1 = jnp.zeros((1, d_hidden), jnp.float32)
    w2 = jax.random.normal(k2, (d_hidden, d_out), jnp.float32) / np.sqrt(d_hidden)
    b2 = jnp.zeros((1, d_out), jnp.float32)
    return (w1, b1, w2, b2)


class MultipleNetPallas:
    def __init__(self, key, in_channels, out_channels, *,
                 hidden=32, out_feature_dim=16,
                 feature_dims=(8, 0), scales=(1.0, 0.5),
                 wait_iters=(0, 0), stop_iters=(10**9, 10**9),
                 latent_dim=0, mxu_dtype=jnp.bfloat16):
        self.in_channels = in_channels
        self.out_channels = out_channels
        self.out_feature_dim = out_feature_dim
        self.feature_dims = list(feature_dims)
        self.scales = list(scales)
        self.wait_iters = list(wait_iters)
        self.stop_iters = list(stop_iters)
        self.cur_iter = 0
        self.use_feature_net = True

        keys = jax.random.split(key, len(feature_dims) + 1)
        self.net_params = []
        for idx in range(len(feature_dims)):
            extra = latent_dim + (self.feature_dims[idx - 1] if idx > 0 else 0)
            d_in = in_channels + extra
            d_out = out_feature_dim + self.feature_dims[idx]
            self.net_params.append(_init_mlp(keys[idx], d_in, hidden, d_out))
        self.feature_net_params = _init_mlp(keys[-1], out_feature_dim, hidden,
                                            out_channels)

        # --- folded / packed params for the fused kernel ----------------------
        w1_0, b1_0, w2_0, b2_0 = self.net_params[0]
        w1_1, b1_1, w2_1, b2_1 = self.net_params[1]
        fw1, fb1, fw2, fb2 = self.feature_net_params
        ofd, cin, fd0 = out_feature_dim, in_channels, self.feature_dims[0]
        s0, s1 = self.scales

        fw1t = fw1.T                                     # [H, OFD]
        fb1t = fb1.T                                     # [H, 1]
        a0 = fw1t @ w2_0[:, :ofd].T                      # fold: fw1 @ W2o_0
        bg0 = fw1t @ b2_0[:, :ofd].T + fb1t
        a1 = fw1t @ w2_1.T                               # fold: fw1 @ W2_1
        bg1 = fw1t @ b2_1.T + fb1t

        cdt, f32 = mxu_dtype, jnp.float32
        self._kparams = (
            jnp.stack([w1_0.T, w1_1[:cin, :].T]).astype(cdt),    # [2, H, Cin]
            jnp.stack([a0, a1]).astype(cdt),                     # [2, H, H]
            jnp.stack([b1_0.T, b1_1.T, bg0, bg1]).astype(f32),   # [4, H, 1]
            w2_0[:, ofd:].T.astype(cdt),                         # [FD0, H]
            w1_1[cin:, :].T.astype(cdt),                         # [H, FD0]
            b2_0[:, ofd:].T.astype(f32),                         # [FD0, 1]
            fw2.T.astype(cdt),                                   # [C_out, H]
            ((s0 + s1) * fb2.T).astype(f32),                     # [C_out, 1]
        )
        self._flops_per_row = 2 * (
            cin * hidden + hidden * fd0            # net0 L1 + feature-vector head
            + (cin + fd0) * hidden                 # net1 L1
            + 2 * hidden * hidden                  # folded A0/A1 matmuls
            + hidden * out_channels)               # shared feature_net L2

    def __call__(self, x):
        active = [idx for idx in range(len(self.net_params))
                  if self.wait_iters[idx] <= self.cur_iter < self.stop_iters[idx]]
        assert active == [0, 1], "fused kernel implements the both-nets-active config"
        # TODO(synk): dynamic wait/stop-iter gating would need scalar-prefetch
        # flags + pl.when inside the kernel.
        return multiplenet_forward(
            x, self._kparams, out_channels=self.out_channels,
            scale0=self.scales[0], scale1=self.scales[1],
            flops_per_row=self._flops_per_row)


# ---------------------------------------------------------------------------
# Pure-JAX reference (mirrors the PyTorch module) for correctness
# ---------------------------------------------------------------------------
def _mlp_ref(x, params, scale=1.0):
    w1, b1, w2, b2 = params
    h = jnp.maximum(x @ w1 + b1, 0.0)
    return (h @ w2 + b2) * scale


def _multiple_net_ref(model, x):
    n = x.shape[0]
    total = jnp.zeros((n, model.out_channels), x.dtype)
    fv = jnp.zeros((n, 0), x.dtype)
    for idx, params in enumerate(model.net_params):
        out = _mlp_ref(jnp.concatenate([x, fv], axis=-1), params)
        fd = model.feature_dims[idx]
        if fd > 0:
            fv = out[..., -fd:]
            out = out[..., :-fd]
        out = _mlp_ref(out, model.feature_net_params, scale=model.scales[idx])
        total = total + out
    return total


if __name__ == "__main__":
    key = jax.random.PRNGKey(0)
    k_param, k_x = jax.random.split(key)

    # N > TILE_N and not a multiple of it -> exercises multi-tile + edge masking.
    N, IN_CH, OUT_CH = 2500, 16, 8
    x = jax.random.normal(k_x, (N, IN_CH), jnp.float32)

    # f32 MXU operands: strict structural check of the fused/folded kernel.
    model_f32 = MultipleNetPallas(k_param, IN_CH, OUT_CH, mxu_dtype=jnp.float32)
    out_f32 = jax.block_until_ready(model_f32(x))
    ref = _multiple_net_ref(model_f32, x)
    np.testing.assert_allclose(np.asarray(out_f32), np.asarray(ref),
                               rtol=5e-3, atol=5e-3)

    # bf16 MXU operands (f32 accumulation): production path, looser tolerance.
    model_bf16 = MultipleNetPallas(k_param, IN_CH, OUT_CH, mxu_dtype=jnp.bfloat16)
    out_bf16 = jax.block_until_ready(model_bf16(x))
    np.testing.assert_allclose(np.asarray(out_bf16), np.asarray(ref),
                               rtol=5e-2, atol=1e-1)

    assert out_f32.shape == (N, OUT_CH) and out_bf16.shape == (N, OUT_CH)
    print("KERNEL_OK")
</pallas_src>

<mosaic_0001>
module attributes {stable_mosaic.version = 11 : i64} {
  func.func @_fused_multiplenet_kernel(%arg0: i32, %arg1: memref<2048x16xf32, #tpu.memory_space<vmem>>, %arg2: memref<2x32x16xf32, #tpu.memory_space<vmem>>, %arg3: memref<2x32x32xf32, #tpu.memory_space<vmem>>, %arg4: memref<4x32x1xf32, #tpu.memory_space<vmem>>, %arg5: memref<8x32xf32, #tpu.memory_space<vmem>>, %arg6: memref<32x8xf32, #tpu.memory_space<vmem>>, %arg7: memref<8x1xf32, #tpu.memory_space<vmem>>, %arg8: memref<8x32xf32, #tpu.memory_space<vmem>>, %arg9: memref<8x1xf32, #tpu.memory_space<vmem>>, %arg10: memref<8x2048xf32, #tpu.memory_space<vmem>>) attributes {dimension_semantics = [#tpu.dimension_semantics<parallel>], iteration_bounds = array<i64: 2>, scalar_prefetch = 0 : i64, scratch_operands = 0 : i64, tpu.core_type = #tpu.core_type<tc>, window_params = [{transform_indices = @transform_0, window_bounds = array<i64: 2048, 16>}, {pipeline_mode = #tpu.pipeline_mode<synchronous>, transform_indices = @transform_1, window_bounds = array<i64: 2, 32, 16>}, {pipeline_mode = #tpu.pipeline_mode<synchronous>, transform_indices = @transform_2, window_bounds = array<i64: 2, 32, 32>}, {pipeline_mode = #tpu.pipeline_mode<synchronous>, transform_indices = @transform_3, window_bounds = array<i64: 4, 32, 1>}, {pipeline_mode = #tpu.pipeline_mode<synchronous>, transform_indices = @transform_4, window_bounds = array<i64: 8, 32>}, {pipeline_mode = #tpu.pipeline_mode<synchronous>, transform_indices = @transform_5, window_bounds = array<i64: 32, 8>}, {pipeline_mode = #tpu.pipeline_mode<synchronous>, transform_indices = @transform_6, window_bounds = array<i64: 8, 1>}, {pipeline_mode = #tpu.pipeline_mode<synchronous>, transform_indices = @transform_7, window_bounds = array<i64: 8, 32>}, {pipeline_mode = #tpu.pipeline_mode<synchronous>, transform_indices = @transform_8, window_bounds = array<i64: 8, 1>}, {transform_indices = @transform_9, window_bounds = array<i64: 8, 2048>}]} {
    %c0 = arith.constant 0 : index
    %c0_0 = arith.constant 0 : index
    %c0_1 = arith.constant 0 : index
    %0 = vector.load %arg2[%c0, %c0_0, %c0_1] : memref<2x32x16xf32, #tpu.memory_space<vmem>>, vector<1x32x16xf32>
    %1 = vector.shape_cast %0 : vector<1x32x16xf32> to vector<32x16xf32>
    %c1 = arith.constant 1 : index
    %c0_2 = arith.constant 0 : index
    %c0_3 = arith.constant 0 : index
    %2 = vector.load %arg2[%c1, %c0_2, %c0_3] : memref<2x32x16xf32, #tpu.memory_space<vmem>>, vector<1x32x16xf32>
    %3 = vector.shape_cast %2 : vector<1x32x16xf32> to vector<32x16xf32>
    %c0_4 = arith.constant 0 : index
    %c0_5 = arith.constant 0 : index
    %c0_6 = arith.constant 0 : index
    %4 = vector.load %arg3[%c0_4, %c0_5, %c0_6] : memref<2x32x32xf32, #tpu.memory_space<vmem>>, vector<1x32x32xf32>
    %5 = vector.shape_cast %4 : vector<1x32x32xf32> to vector<32x32xf32>
    %c1_7 = arith.constant 1 : index
    %c0_8 = arith.constant 0 : index
    %c0_9 = arith.constant 0 : index
    %6 = vector.load %arg3[%c1_7, %c0_8, %c0_9] : memref<2x32x32xf32, #tpu.memory_space<vmem>>, vector<1x32x32xf32>
    %7 = vector.shape_cast %6 : vector<1x32x32xf32> to vector<32x32xf32>
    %c0_10 = arith.constant 0 : index
    %c0_11 = arith.constant 0 : index
    %c0_12 = arith.constant 0 : index
    %8 = vector.load %arg4[%c0_10, %c0_11, %c0_12] : memref<4x32x1xf32, #tpu.memory_space<vmem>>, vector<1x32x1xf32>
    %9 = vector.shape_cast %8 : vector<1x32x1xf32> to vector<32x1xf32>
    %c1_13 = arith.constant 1 : index
    %c0_14 = arith.constant 0 : index
    %c0_15 = arith.constant 0 : index
    %10 = vector.load %arg4[%c1_13, %c0_14, %c0_15] : memref<4x32x1xf32, #tpu.memory_space<vmem>>, vector<1x32x1xf32>
    %11 = vector.shape_cast %10 : vector<1x32x1xf32> to vector<32x1xf32>
    %c2 = arith.constant 2 : index
    %c0_16 = arith.constant 0 : index
    %c0_17 = arith.constant 0 : index
    %12 = vector.load %arg4[%c2, %c0_16, %c0_17] : memref<4x32x1xf32, #tpu.memory_space<vmem>>, vector<1x32x1xf32>
    %13 = vector.shape_cast %12 : vector<1x32x1xf32> to vector<32x1xf32>
    %c3 = arith.constant 3 : index
    %c0_18 = arith.constant 0 : index
    %c0_19 = arith.constant 0 : index
    %14 = vector.load %arg4[%c3, %c0_18, %c0_19] : memref<4x32x1xf32, #tpu.memory_space<vmem>>, vector<1x32x1xf32>
    %15 = vector.shape_cast %14 : vector<1x32x1xf32> to vector<32x1xf32>
    %c0_20 = arith.constant 0 : index
    %c0_21 = arith.constant 0 : index
    %16 = vector.load %arg5[%c0_20, %c0_21] : memref<8x32xf32, #tpu.memory_space<vmem>>, vector<8x32xf32>
    %c0_22 = arith.constant 0 : index
    %c0_23 = arith.constant 0 : index
    %17 = vector.load %arg6[%c0_22, %c0_23] : memref<32x8xf32, #tpu.memory_space<vmem>>, vector<32x8xf32>
    %c0_24 = arith.constant 0 : index
    %c0_25 = arith.constant 0 : index
    %18 = vector.load %arg7[%c0_24, %c0_25] : memref<8x1xf32, #tpu.memory_space<vmem>>, vector<8x1xf32>
    %c0_26 = arith.constant 0 : index
    %c0_27 = arith.constant 0 : index
    %19 = vector.load %arg8[%c0_26, %c0_27] : memref<8x32xf32, #tpu.memory_space<vmem>>, vector<8x32xf32>
    %c0_28 = arith.constant 0 : index
    %c0_29 = arith.constant 0 : index
    %20 = vector.load %arg9[%c0_28, %c0_29] : memref<8x1xf32, #tpu.memory_space<vmem>>, vector<8x1xf32>
    %c0_30 = arith.constant 0 : index
    %c0_31 = arith.constant 0 : index
    %21 = vector.load %arg1[%c0_30, %c0_31] : memref<2048x16xf32, #tpu.memory_space<vmem>>, vector<256x16xf32>
    %cst = arith.constant dense<0.000000e+00> : vector<32x256xf32>
    %22 = tpu.matmul %1, %21, %cst {dimension_numbers = #tpu.dot_dimension_numbers<[1], [1], [0], [0], [0, 0, 1, 0], [], []>} : vector<32x16xf32>, vector<256x16xf32>, vector<32x256xf32> -> vector<32x256xf32>
    %23 = vector.broadcast %9 : vector<32x1xf32> to vector<32x256xf32>
    %24 = arith.addf %22, %23 : vector<32x256xf32>
    %cst_32 = arith.constant 0.000000e+00 : f32
    %25 = vector.broadcast %cst_32 : f32 to vector<32x256xf32>
    %26 = arith.maximumf %24, %25 : vector<32x256xf32>
    %cst_33 = arith.constant dense<0.000000e+00> : vector<8x256xf32>
    %27 = tpu.matmul %16, %26, %cst_33 {dimension_numbers = #tpu.dot_dimension_numbers<[1], [0], [0], [1], [0, 0, 1, 1], [], []>} : vector<8x32xf32>, vector<32x256xf32>, vector<8x256xf32> -> vector<8x256xf32>
    %28 = vector.broadcast %18 : vector<8x1xf32> to vector<8x256xf32>
    %29 = arith.addf %27, %28 : vector<8x256xf32>
    %cst_34 = arith.constant dense<0.000000e+00> : vector<32x256xf32>
    %30 = tpu.matmul %3, %21, %cst_34 {dimension_numbers = #tpu.dot_dimension_numbers<[1], [1], [0], [0], [0, 0, 1, 0], [], []>} : vector<32x16xf32>, vector<256x16xf32>, vector<32x256xf32> -> vector<32x256xf32>
    %cst_35 = arith.constant dense<0.000000e+00> : vector<32x256xf32>
    %31 = tpu.matmul %17, %29, %cst_35 {dimension_numbers = #tpu.dot_dimension_numbers<[1], [0], [0], [1], [0, 0, 1, 1], [], []>} : vector<32x8xf32>, vector<8x256xf32>, vector<32x256xf32> -> vector<32x256xf32>
    %32 = arith.addf %30, %31 : vector<32x256xf32>
    %33 = vector.broadcast %11 : vector<32x1xf32> to vector<32x256xf32>
    %34 = arith.addf %32, %33 : vector<32x256xf32>
    %cst_36 = arith.constant 0.000000e+00 : f32
    %35 = vector.broadcast %cst_36 : f32 to vector<32x256xf32>
    %36 = arith.maximumf %34, %35 : vector<32x256xf32>
    %cst_37 = arith.constant dense<0.000000e+00> : vector<32x256xf32>
    %37 = tpu.matmul %5, %26, %cst_37 {dimension_numbers = #tpu.dot_dimension_numbers<[1], [0], [0], [1], [0, 0, 1, 1], [], []>} : vector<32x32xf32>, vector<32x256xf32>, vector<32x256xf32> -> vector<32x256xf32>
    %38 = vector.broadcast %13 : vector<32x1xf32> to vector<32x256xf32>
    %39 = arith.addf %37, %38 : vector<32x256xf32>
    %cst_38 = arith.constant 0.000000e+00 : f32
    %40 = vector.broadcast %cst_38 : f32 to vector<32x256xf32>
    %41 = arith.maximumf %39, %40 : vector<32x256xf32>
    %cst_39 = arith.constant dense<0.000000e+00> : vector<32x256xf32>
    %42 = tpu.matmul %7, %36, %cst_39 {dimension_numbers = #tpu.dot_dimension_numbers<[1], [0], [0], [1], [0, 0, 1, 1], [], []>} : vector<32x32xf32>, vector<32x256xf32>, vector<32x256xf32> -> vector<32x256xf32>
    %43 = vector.broadcast %15 : vector<32x1xf32> to vector<32x256xf32>
    %44 = arith.addf %42, %43 : vector<32x256xf32>
    %cst_40 = arith.constant 0.000000e+00 : f32
    %45 = vector.broadcast %cst_40 : f32 to vector<32x256xf32>
    %46 = arith.maximumf %44, %45 : vector<32x256xf32>
    %cst_41 = arith.constant 1.000000e+00 : f32
    %47 = vector.broadcast %cst_41 : f32 to vector<32x256xf32>
    %48 = arith.mulf %47, %41 : vector<32x256xf32>
    %cst_42 = arith.constant 5.000000e-01 : f32
    %49 = vector.broadcast %cst_42 : f32 to vector<32x256xf32>
    %50 = arith.mulf %49, %46 : vector<32x256xf32>
    %51 = arith.addf %48, %50 : vector<32x256xf32>
    %cst_43 = arith.constant dense<0.000000e+00> : vector<8x256xf32>
    %52 = tpu.matmul %19, %51, %cst_43 {dimension_numbers = #tpu.dot_dimension_numbers<[1], [0], [0], [1], [0, 0, 1, 1], [], []>} : vector<8x32xf32>, vector<32x256xf32>, vector<8x256xf32> -> vector<8x256xf32>
    %53 = vector.broadcast %20 : vector<8x1xf32> to vector<8x256xf32>
    %54 = arith.addf %52, %53 : vector<8x256xf32>
    %c0_44 = arith.constant 0 : index
    %c0_45 = arith.constant 0 : index
    %55 = vector.load %arg10[%c0_44, %c0_45] : memref<8x2048xf32, #tpu.memory_space<vmem>>, vector<8x256xf32>
    tpu.vector_store %arg10[%c0_44, %c0_45], %54 {strides = array<i32>} : memref<8x2048xf32, #tpu.memory_space<vmem>>, vector<8x256xf32>,
    %c256 = arith.constant 256 : index
    %c0_46 = arith.constant 0 : index
    %56 = vector.load %arg1[%c256, %c0_46] : memref<2048x16xf32, #tpu.memory_space<vmem>>, vector<256x16xf32>
    %cst_47 = arith.constant dense<0.000000e+00> : vector<32x256xf32>
    %57 = tpu.matmul %1, %56, %cst_47 {dimension_numbers = #tpu.dot_dimension_numbers<[1], [1], [0], [0], [0, 0, 1, 0], [], []>} : vector<32x16xf32>, vector<256x16xf32>, vector<32x256xf32> -> vector<32x256xf32>
    %58 = vector.broadcast %9 : vector<32x1xf32> to vector<32x256xf32>
    %59 = arith.addf %57, %58 : vector<32x256xf32>
    %cst_48 = arith.constant 0.000000e+00 : f32
    %60 = vector.broadcast %cst_48 : f32 to vector<32x256xf32>
    %61 = arith.maximumf %59, %60 : vector<32x256xf32>
    %cst_49 = arith.constant dense<0.000000e+00> : vector<8x256xf32>
    %62 = tpu.matmul %16, %61, %cst_49 {dimension_numbers = #tpu.dot_dimension_numbers<[1], [0], [0], [1], [0, 0, 1, 1], [], []>} : vector<8x32xf32>, vector<32x256xf32>, vector<8x256xf32> -> vector<8x256xf32>
    %63 = vector.broadcast %18 : vector<8x1xf32> to vector<8x256xf32>
    %64 = arith.addf %62, %63 : vector<8x256xf32>
    %cst_50 = arith.constant dense<0.000000e+00> : vector<32x256xf32>
    %65 = tpu.matmul %3, %56, %cst_50 {dimension_numbers = #tpu.dot_dimension_numbers<[1], [1], [0], [0], [0, 0, 1, 0], [], []>} : vector<32x16xf32>, vector<256x16xf32>, vector<32x256xf32> -> vector<32x256xf32>
    %cst_51 = arith.constant dense<0.000000e+00> : vector<32x256xf32>
    %66 = tpu.matmul %17, %64, %cst_51 {dimension_numbers = #tpu.dot_dimension_numbers<[1], [0], [0], [1], [0, 0, 1, 1], [], []>} : vector<32x8xf32>, vector<8x256xf32>, vector<32x256xf32> -> vector<32x256xf32>
    %67 = arith.addf %65, %66 : vector<32x256xf32>
    %68 = vector.broadcast %11 : vector<32x1xf32> to vector<32x256xf32>
    %69 = arith.addf %67, %68 : vector<32x256xf32>
    %cst_52 = arith.constant 0.000000e+00 : f32
    %70 = vector.broadcast %cst_52 : f32 to vector<32x256xf32>
    %71 = arith.maximumf %69, %70 : vector<32x256xf32>
    %cst_53 = arith.constant dense<0.000000e+00> : vector<32x256xf32>
    %72 = tpu.matmul %5, %61, %cst_53 {dimension_numbers = #tpu.dot_dimension_numbers<[1], [0], [0], [1], [0, 0, 1, 1], [], []>} : vector<32x32xf32>, vector<32x256xf32>, vector<32x256xf32> -> vector<32x256xf32>
    %73 = vector.broadcast %13 : vector<32x1xf32> to vector<32x256xf32>
    %74 = arith.addf %72, %73 : vector<32x256xf32>
    %cst_54 = arith.constant 0.000000e+00 : f32
    %75 = vector.broadcast %cst_54 : f32 to vector<32x256xf32>
    %76 = arith.maximumf %74, %75 : vector<32x256xf32>
    %cst_55 = arith.constant dense<0.000000e+00> : vector<32x256xf32>
    %77 = tpu.matmul %7, %71, %cst_55 {dimension_numbers = #tpu.dot_dimension_numbers<[1], [0], [0], [1], [0, 0, 1, 1], [], []>} : vector<32x32xf32>, vector<32x256xf32>, vector<32x256xf32> -> vector<32x256xf32>
    %78 = vector.broadcast %15 : vector<32x1xf32> to vector<32x256xf32>
    %79 = arith.addf %77, %78 : vector<32x256xf32>
    %cst_56 = arith.constant 0.000000e+00 : f32
    %80 = vector.broadcast %cst_56 : f32 to vector<32x256xf32>
    %81 = arith.maximumf %79, %80 : vector<32x256xf32>
    %cst_57 = arith.constant 1.000000e+00 : f32
    %82 = vector.broadcast %cst_57 : f32 to vector<32x256xf32>
    %83 = arith.mulf %82, %76 : vector<32x256xf32>
    %cst_58 = arith.constant 5.000000e-01 : f32
    %84 = vector.broadcast %cst_58 : f32 to vector<32x256xf32>
    %85 = arith.mulf %84, %81 : vector<32x256xf32>
    %86 = arith.addf %83, %85 : vector<32x256xf32>
    %cst_59 = arith.constant dense<0.000000e+00> : vector<8x256xf32>
    %87 = tpu.matmul %19, %86, %cst_59 {dimension_numbers = #tpu.dot_dimension_numbers<[1], [0], [0], [1], [0, 0, 1, 1], [], []>} : vector<8x32xf32>, vector<32x256xf32>, vector<8x256xf32> -> vector<8x256xf32>
    %88 = vector.broadcast %20 : vector<8x1xf32> to vector<8x256xf32>
    %89 = arith.addf %87, %88 : vector<8x256xf32>
    %c0_60 = arith.constant 0 : index
    %c256_61 = arith.constant 256 : index
    %90 = vector.load %arg10[%c0_60, %c256_61] : memref<8x2048xf32, #tpu.memory_space<vmem>>, vector<8x256xf32>
    tpu.vector_store %arg10[%c0_60, %c256_61], %89 {strides = array<i32>} : memref<8x2048xf32, #tpu.memory_space<vmem>>, vector<8x256xf32>,
    %c512 = arith.constant 512 : index
    %c0_62 = arith.constant 0 : index
    %91 = vector.load %arg1[%c512, %c0_62] : memref<2048x16xf32, #tpu.memory_space<vmem>>, vector<256x16xf32>
    %cst_63 = arith.constant dense<0.000000e+00> : vector<32x256xf32>
    %92 = tpu.matmul %1, %91, %cst_63 {dimension_numbers = #tpu.dot_dimension_numbers<[1], [1], [0], [0], [0, 0, 1, 0], [], []>} : vector<32x16xf32>, vector<256x16xf32>, vector<32x256xf32> -> vector<32x256xf32>
    %93 = vector.broadcast %9 : vector<32x1xf32> to vector<32x256xf32>
    %94 = arith.addf %92, %93 : vector<32x256xf32>
    %cst_64 = arith.constant 0.000000e+00 : f32
    %95 = vector.broadcast %cst_64 : f32 to vector<32x256xf32>
    %96 = arith.maximumf %94, %95 : vector<32x256xf32>
    %cst_65 = arith.constant dense<0.000000e+00> : vector<8x256xf32>
    %97 = tpu.matmul %16, %96, %cst_65 {dimension_numbers = #tpu.dot_dimension_numbers<[1], [0], [0], [1], [0, 0, 1, 1], [], []>} : vector<8x32xf32>, vector<32x256xf32>, vector<8x256xf32> -> vector<8x256xf32>
    %98 = vector.broadcast %18 : vector<8x1xf32> to vector<8x256xf32>
    %99 = arith.addf %97, %98 : vector<8x256xf32>
    %cst_66 = arith.constant dense<0.000000e+00> : vector<32x256xf32>
    %100 = tpu.matmul %3, %91, %cst_66 {dimension_numbers = #tpu.dot_dimension_numbers<[1], [1], [0], [0], [0, 0, 1, 0], [], []>} : vector<32x16xf32>, vector<256x16xf32>, vector<32x256xf32> -> vector<32x256xf32>
    %cst_67 = arith.constant dense<0.000000e+00> : vector<32x256xf32>
    %101 = tpu.matmul %17, %99, %cst_67 {dimension_numbers = #tpu.dot_dimension_numbers<[1], [0], [0], [1], [0, 0, 1, 1], [], []>} : vector<32x8xf32>, vector<8x256xf32>, vector<32x256xf32> -> vector<32x256xf32>
    %102 = arith.addf %100, %101 : vector<32x256xf32>
    %103 = vector.broadcast %11 : vector<32x1xf32> to vector<32x256xf32>
    %104 = arith.addf %102, %103 : vector<32x256xf32>
    %cst_68 = arith.constant 0.000000e+00 : f32
    %105 = vector.broadcast %cst_68 : f32 to vector<32x256xf32>
    %106 = arith.maximumf %104, %105 : vector<32x256xf32>
    %cst_69 = arith.constant dense<0.000000e+00> : vector<32x256xf32>
    %107 = tpu.matmul %5, %96, %cst_69 {dimension_numbers = #tpu.dot_dimension_numbers<[1], [0], [0], [1], [0, 0, 1, 1], [], []>} : vector<32x32xf32>, vector<32x256xf32>, vector<32x256xf32> -> vector<32x256xf32>
    %108 = vector.broadcast %13 : vector<32x1xf32> to vector<32x256xf32>
    %109 = arith.addf %107, %108 : vector<32x256xf32>
    %cst_70 = arith.constant 0.000000e+00 : f32
    %110 = vector.broadcast %cst_70 : f32 to vector<32x256xf32>
    %111 = arith.maximumf %109, %110 : vector<32x256xf32>
    %cst_71 = arith.constant dense<0.000000e+00> : vector<32x256xf32>
    %112 = tpu.matmul %7, %106, %cst_71 {dimension_numbers = #tpu.dot_dimension_numbers<[1], [0], [0], [1], [0, 0, 1, 1], [], []>} : vector<32x32xf32>, vector<32x256xf32>, vector<32x256xf32> -> vector<32x256xf32>
    %113 = vector.broadcast %15 : vector<32x1xf32> to vector<32x256xf32>
    %114 = arith.addf %112, %113 : vector<32x256xf32>
    %cst_72 = arith.constant 0.000000e+00 : f32
    %115 = vector.broadcast %cst_72 : f32 to vector<32x256xf32>
    %116 = arith.maximumf %114, %115 : vector<32x256xf32>
    %cst_73 = arith.constant 1.000000e+00 : f32
    %117 = vector.broadcast %cst_73 : f32 to vector<32x256xf32>
    %118 = arith.mulf %117, %111 : vector<32x256xf32>
    %cst_74 = arith.constant 5.000000e-01 : f32
    %119 = vector.broadcast %cst_74 : f32 to vector<32x256xf32>
    %120 = arith.mulf %119, %116 : vector<32x256xf32>
    %121 = arith.addf %118, %120 : vector<32x256xf32>
    %cst_75 = arith.constant dense<0.000000e+00> : vector<8x256xf32>
    %122 = tpu.matmul %19, %121, %cst_75 {dimension_numbers = #tpu.dot_dimension_numbers<[1], [0], [0], [1], [0, 0, 1, 1], [], []>} : vector<8x32xf32>, vector<32x256xf32>, vector<8x256xf32> -> vector<8x256xf32>
    %123 = vector.broadcast %20 : vector<8x1xf32> to vector<8x256xf32>
    %124 = arith.addf %122, %123 : vector<8x256xf32>
    %c0_76 = arith.constant 0 : index
    %c512_77 = arith.constant 512 : index
    %125 = vector.load %arg10[%c0_76, %c512_77] : memref<8x2048xf32, #tpu.memory_space<vmem>>, vector<8x256xf32>
    tpu.vector_store %arg10[%c0_76, %c512_77], %124 {strides = array<i32>} : memref<8x2048xf32, #tpu.memory_space<vmem>>, vector<8x256xf32>,
    %c768 = arith.constant 768 : index
    %c0_78 = arith.constant 0 : index
    %126 = vector.load %arg1[%c768, %c0_78] : memref<2048x16xf32, #tpu.memory_space<vmem>>, vector<256x16xf32>
    %cst_79 = arith.constant dense<0.000000e+00> : vector<32x256xf32>
    %127 = tpu.matmul %1, %126, %cst_79 {dimension_numbers = #tpu.dot_dimension_numbers<[1], [1], [0], [0], [0, 0, 1, 0], [], []>} : vector<32x16xf32>, vector<256x16xf32>, vector<32x256xf32> -> vector<32x256xf32>
    %128 = vector.broadcast %9 : vector<32x1xf32> to vector<32x256xf32>
    %129 = arith.addf %127, %128 : vector<32x256xf32>
    %cst_80 = arith.constant 0.000000e+00 : f32
    %130 = vector.broadcast %cst_80 : f32 to vector<32x256xf32>
    %131 = arith.maximumf %129, %130 : vector<32x256xf32>
    %cst_81 = arith.constant dense<0.000000e+00> : vector<8x256xf32>
    %132 = tpu.matmul %16, %131, %cst_81 {dimension_numbers = #tpu.dot_dimension_numbers<[1], [0], [0], [1], [0, 0, 1, 1], [], []>} : vector<8x32xf32>, vector<32x256xf32>, vector<8x256xf32> -> vector<8x256xf32>
    %133 = vector.broadcast %18 : vector<8x1xf32> to vector<8x256xf32>
    %134 = arith.addf %132, %133 : vector<8x256xf32>
    %cst_82 = arith.constant dense<0.000000e+00> : vector<32x256xf32>
    %135 = tpu.matmul %3, %126, %cst_82 {dimension_numbers = #tpu.dot_dimension_numbers<[1], [1], [0], [0], [0, 0, 1, 0], [], []>} : vector<32x16xf32>, vector<256x16xf32>, vector<32x256xf32> -> vector<32x256xf32>
    %cst_83 = arith.constant dense<0.000000e+00> : vector<32x256xf32>
    %136 = tpu.matmul %17, %134, %cst_83 {dimension_numbers = #tpu.dot_dimension_numbers<[1], [0], [0], [1], [0, 0, 1, 1], [], []>} : vector<32x8xf32>, vector<8x256xf32>, vector<32x256xf32> -> vector<32x256xf32>
    %137 = arith.addf %135, %136 : vector<32x256xf32>
    %138 = vector.broadcast %11 : vector<32x1xf32> to vector<32x256xf32>
    %139 = arith.addf %137, %138 : vector<32x256xf32>
    %cst_84 = arith.constant 0.000000e+00 : f32
    %140 = vector.broadcast %cst_84 : f32 to vector<32x256xf32>
    %141 = arith.maximumf %139, %140 : vector<32x256xf32>
    %cst_85 = arith.constant dense<0.000000e+00> : vector<32x256xf32>
    %142 = tpu.matmul %5, %131, %cst_85 {dimension_numbers = #tpu.dot_dimension_numbers<[1], [0], [0], [1], [0, 0, 1, 1], [], []>} : vector<32x32xf32>, vector<32x256xf32>, vector<32x256xf32> -> vector<32x256xf32>
    %143 = vector.broadcast %13 : vector<32x1xf32> to vector<32x256xf32>
    %144 = arith.addf %142, %143 : vector<32x256xf32>
    %cst_86 = arith.constant 0.000000e+00 : f32
    %145 = vector.broadcast %cst_86 : f32 to vector<32x256xf32>
    %146 = arith.maximumf %144, %145 : vector<32x256xf32>
    %cst_87 = arith.constant dense<0.000000e+00> : vector<32x256xf32>
    %147 = tpu.matmul %7, %141, %cst_87 {dimension_numbers = #tpu.dot_dimension_numbers<[1], [0], [0], [1], [0, 0, 1, 1], [], []>} : vector<32x32xf32>, vector<32x256xf32>, vector<32x256xf32> -> vector<32x256xf32>
    %148 = vector.broadcast %15 : vector<32x1xf32> to vector<32x256xf32>
    %149 = arith.addf %147, %148 : vector<32x256xf32>
    %cst_88 = arith.constant 0.000000e+00 : f32
    %150 = vector.broadcast %cst_88 : f32 to vector<32x256xf32>
    %151 = arith.maximumf %149, %150 : vector<32x256xf32>
    %cst_89 = arith.constant 1.000000e+00 : f32
    %152 = vector.broadcast %cst_89 : f32 to vector<32x256xf32>
    %153 = arith.mulf %152, %146 : vector<32x256xf32>
    %cst_90 = arith.constant 5.000000e-01 : f32
    %154 = vector.broadcast %cst_90 : f32 to vector<32x256xf32>
    %155 = arith.mulf %154, %151 : vector<32x256xf32>
    %156 = arith.addf %153, %155 : vector<32x256xf32>
    %cst_91 = arith.constant dense<0.000000e+00> : vector<8x256xf32>
    %157 = tpu.matmul %19, %156, %cst_91 {dimension_numbers = #tpu.dot_dimension_numbers<[1], [0], [0], [1], [0, 0, 1, 1], [], []>} : vector<8x32xf32>, vector<32x256xf32>, vector<8x256xf32> -> vector<8x256xf32>
    %158 = vector.broadcast %20 : vector<8x1xf32> to vector<8x256xf32>
    %159 = arith.addf %157, %158 : vector<8x256xf32>
    %c0_92 = arith.constant 0 : index
    %c768_93 = arith.constant 768 : index
    %160 = vector.load %arg10[%c0_92, %c768_93] : memref<8x2048xf32, #tpu.memory_space<vmem>>, vector<8x256xf32>
    tpu.vector_store %arg10[%c0_92, %c768_93], %159 {strides = array<i32>} : memref<8x2048xf32, #tpu.memory_space<vmem>>, vector<8x256xf32>,
    %c1024 = arith.constant 1024 : index
    %c0_94 = arith.constant 0 : index
    %161 = vector.load %arg1[%c1024, %c0_94] : memref<2048x16xf32, #tpu.memory_space<vmem>>, vector<256x16xf32>
    %cst_95 = arith.constant dense<0.000000e+00> : vector<32x256xf32>
    %162 = tpu.matmul %1, %161, %cst_95 {dimension_numbers = #tpu.dot_dimension_numbers<[1], [1], [0], [0], [0, 0, 1, 0], [], []>} : vector<32x16xf32>, vector<256x16xf32>, vector<32x256xf32> -> vector<32x256xf32>
    %163 = vector.broadcast %9 : vector<32x1xf32> to vector<32x256xf32>
    %164 = arith.addf %162, %163 : vector<32x256xf32>
    %cst_96 = arith.constant 0.000000e+00 : f32
    %165 = vector.broadcast %cst_96 : f32 to vector<32x256xf32>
    %166 = arith.maximumf %164, %165 : vector<32x256xf32>
    %cst_97 = arith.constant dense<0.000000e+00> : vector<8x256xf32>
    %167 = tpu.matmul %16, %166, %cst_97 {dimension_numbers = #tpu.dot_dimension_numbers<[1], [0], [0], [1], [0, 0, 1, 1], [], []>} : vector<8x32xf32>, vector<32x256xf32>, vector<8x256xf32> -> vector<8x256xf32>
    %168 = vector.broadcast %18 : vector<8x1xf32> to vector<8x256xf32>
    %169 = arith.addf %167, %168 : vector<8x256xf32>
    %cst_98 = arith.constant dense<0.000000e+00> : vector<32x256xf32>
    %170 = tpu.matmul %3, %161, %cst_98 {dimension_numbers = #tpu.dot_dimension_numbers<[1], [1], [0], [0], [0, 0, 1, 0], [], []>} : vector<32x16xf32>, vector<256x16xf32>, vector<32x256xf32> -> vector<32x256xf32>
    %cst_99 = arith.constant dense<0.000000e+00> : vector<32x256xf32>
    %171 = tpu.matmul %17, %169, %cst_99 {dimension_numbers = #tpu.dot_dimension_numbers<[1], [0], [0], [1], [0, 0, 1, 1], [], []>} : vector<32x8xf32>, vector<8x256xf32>, vector<32x256xf32> -> vector<32x256xf32>
    %172 = arith.addf %170, %171 : vector<32x256xf32>
    %173 = vector.broadcast %11 : vector<32x1xf32> to vector<32x256xf32>
    %174 = arith.addf %172, %173 : vector<32x256xf32>
    %cst_100 = arith.constant 0.000000e+00 : f32
    %175 = vector.broadcast %cst_100 : f32 to vector<32x256xf32>
    %176 = arith.maximumf %174, %175 : vector<32x256xf32>
    %cst_101 = arith.constant dense<0.000000e+00> : vector<32x256xf32>
    %177 = tpu.matmul %5, %166, %cst_101 {dimension_numbers = #tpu.dot_dimension_numbers<[1], [0], [0], [1], [0, 0, 1, 1], [], []>} : vector<32x32xf32>, vector<32x256xf32>, vector<32x256xf32> -> vector<32x256xf32>
    %178 = vector.broadcast %13 : vector<32x1xf32> to vector<32x256xf32>
    %179 = arith.addf %177, %178 : vector<32x256xf32>
    %cst_102 = arith.constant 0.000000e+00 : f32
    %180 = vector.broadcast %cst_102 : f32 to vector<32x256xf32>
    %181 = arith.maximumf %179, %180 : vector<32x256xf32>
    %cst_103 = arith.constant dense<0.000000e+00> : vector<32x256xf32>
    %182 = tpu.matmul %7, %176, %cst_103 {dimension_numbers = #tpu.dot_dimension_numbers<[1], [0], [0], [1], [0, 0, 1, 1], [], []>} : vector<32x32xf32>, vector<32x256xf32>, vector<32x256xf32> -> vector<32x256xf32>
    %183 = vector.broadcast %15 : vector<32x1xf32> to vector<32x256xf32>
    %184 = arith.addf %182, %183 : vector<32x256xf32>
    %cst_104 = arith.constant 0.000000e+00 : f32
    %185 = vector.broadcast %cst_104 : f32 to vector<32x256xf32>
    %186 = arith.maximumf %184, %185 : vector<32x256xf32>
    %cst_105 = arith.constant 1.000000e+00 : f32
    %187 = vector.broadcast %cst_105 : f32 to vector<32x256xf32>
    %188 = arith.mulf %187, %181 : vector<32x256xf32>
    %cst_106 = arith.constant 5.000000e-01 : f32
    %189 = vector.broadcast %cst_106 : f32 to vector<32x256xf32>
    %190 = arith.mulf %189, %186 : vector<32x256xf32>
    %191 = arith.addf %188, %190 : vector<32x256xf32>
    %cst_107 = arith.constant dense<0.000000e+00> : vector<8x256xf32>
    %192 = tpu.matmul %19, %191, %cst_107 {dimension_numbers = #tpu.dot_dimension_numbers<[1], [0], [0], [1], [0, 0, 1, 1], [], []>} : vector<8x32xf32>, vector<32x256xf32>, vector<8x256xf32> -> vector<8x256xf32>
    %193 = vector.broadcast %20 : vector<8x1xf32> to vector<8x256xf32>
    %194 = arith.addf %192, %193 : vector<8x256xf32>
    %c0_108 = arith.constant 0 : index
    %c1024_109 = arith.constant 1024 : index
    %195 = vector.load %arg10[%c0_108, %c1024_109] : memref<8x2048xf32, #tpu.memory_space<vmem>>, vector<8x256xf32>
    tpu.vector_store %arg10[%c0_108, %c1024_109], %194 {strides = array<i32>} : memref<8x2048xf32, #tpu.memory_space<vmem>>, vector<8x256xf32>,
    %c1280 = arith.constant 1280 : index
    %c0_110 = arith.constant 0 : index
    %196 = vector.load %arg1[%c1280, %c0_110] : memref<2048x16xf32, #tpu.memory_space<vmem>>, vector<256x16xf32>
    %cst_111 = arith.constant dense<0.000000e+00> : vector<32x256xf32>
    %197 = tpu.matmul %1, %196, %cst_111 {dimension_numbers = #tpu.dot_dimension_numbers<[1], [1], [0], [0], [0, 0, 1, 0], [], []>} : vector<32x16xf32>, vector<256x16xf32>, vector<32x256xf32> -> vector<32x256xf32>
    %198 = vector.broadcast %9 : vector<32x1xf32> to vector<32x256xf32>
    %199 = arith.addf %197, %198 : vector<32x256xf32>
    %cst_112 = arith.constant 0.000000e+00 : f32
    %200 = vector.broadcast %cst_112 : f32 to vector<32x256xf32>
    %201 = arith.maximumf %199, %200 : vector<32x256xf32>
    %cst_113 = arith.constant dense<0.000000e+00> : vector<8x256xf32>
    %202 = tpu.matmul %16, %201, %cst_113 {dimension_numbers = #tpu.dot_dimension_numbers<[1], [0], [0], [1], [0, 0, 1, 1], [], []>} : vector<8x32xf32>, vector<32x256xf32>, vector<8x256xf32> -> vector<8x256xf32>
    %203 = vector.broadcast %18 : vector<8x1xf32> to vector<8x256xf32>
    %204 = arith.addf %202, %203 : vector<8x256xf32>
    %cst_114 = arith.constant dense<0.000000e+00> : vector<32x256xf32>
    %205 = tpu.matmul %3, %196, %cst_114 {dimension_numbers = #tpu.dot_dimension_numbers<[1], [1], [0], [0], [0, 0, 1, 0], [], []>} : vector<32x16xf32>, vector<256x16xf32>, vector<32x256xf32> -> vector<32x256xf32>
    %cst_115 = arith.constant dense<0.000000e+00> : vector<32x256xf32>
    %206 = tpu.matmul %17, %204, %cst_115 {dimension_numbers = #tpu.dot_dimension_numbers<[1], [0], [0], [1], [0, 0, 1, 1], [], []>} : vector<32x8xf32>, vector<8x256xf32>, vector<32x256xf32> -> vector<32x256xf32>
    %207 = arith.addf %205, %206 : vector<32x256xf32>
    %208 = vector.broadcast %11 : vector<32x1xf32> to vector<32x256xf32>
    %209 = arith.addf %207, %208 : vector<32x256xf32>
    %cst_116 = arith.constant 0.000000e+00 : f32
    %210 = vector.broadcast %cst_116 : f32 to vector<32x256xf32>
    %211 = arith.maximumf %209, %210 : vector<32x256xf32>
    %cst_117 = arith.constant dense<0.000000e+00> : vector<32x256xf32>
    %212 = tpu.matmul %5, %201, %cst_117 {dimension_numbers = #tpu.dot_dimension_numbers<[1], [0], [0], [1], [0, 0, 1, 1], [], []>} : vector<32x32xf32>, vector<32x256xf32>, vector<32x256xf32> -> vector<32x256xf32>
    %213 = vector.broadcast %13 : vector<32x1xf32> to vector<32x256xf32>
    %214 = arith.addf %212, %213 : vector<32x256xf32>
    %cst_118 = arith.constant 0.000000e+00 : f32
    %215 = vector.broadcast %cst_118 : f32 to vector<32x256xf32>
    %216 = arith.maximumf %214, %215 : vector<32x256xf32>
    %cst_119 = arith.constant dense<0.000000e+00> : vector<32x256xf32>
    %217 = tpu.matmul %7, %211, %cst_119 {dimension_numbers = #tpu.dot_dimension_numbers<[1], [0], [0], [1], [0, 0, 1, 1], [], []>} : vector<32x32xf32>, vector<32x256xf32>, vector<32x256xf32> -> vector<32x256xf32>
    %218 = vector.broadcast %15 : vector<32x1xf32> to vector<32x256xf32>
    %219 = arith.addf %217, %218 : vector<32x256xf32>
    %cst_120 = arith.constant 0.000000e+00 : f32
    %220 = vector.broadcast %cst_120 : f32 to vector<32x256xf32>
    %221 = arith.maximumf %219, %220 : vector<32x256xf32>
    %cst_121 = arith.constant 1.000000e+00 : f32
    %222 = vector.broadcast %cst_121 : f32 to vector<32x256xf32>
    %223 = arith.mulf %222, %216 : vector<32x256xf32>
    %cst_122 = arith.constant 5.000000e-01 : f32
    %224 = vector.broadcast %cst_122 : f32 to vector<32x256xf32>
    %225 = arith.mulf %224, %221 : vector<32x256xf32>
    %226 = arith.addf %223, %225 : vector<32x256xf32>
    %cst_123 = arith.constant dense<0.000000e+00> : vector<8x256xf32>
    %227 = tpu.matmul %19, %226, %cst_123 {dimension_numbers = #tpu.dot_dimension_numbers<[1], [0], [0], [1], [0, 0, 1, 1], [], []>} : vector<8x32xf32>, vector<32x256xf32>, vector<8x256xf32> -> vector<8x256xf32>
    %228 = vector.broadcast %20 : vector<8x1xf32> to vector<8x256xf32>
    %229 = arith.addf %227, %228 : vector<8x256xf32>
    %c0_124 = arith.constant 0 : index
    %c1280_125 = arith.constant 1280 : index
    %230 = vector.load %arg10[%c0_124, %c1280_125] : memref<8x2048xf32, #tpu.memory_space<vmem>>, vector<8x256xf32>
    tpu.vector_store %arg10[%c0_124, %c1280_125], %229 {strides = array<i32>} : memref<8x2048xf32, #tpu.memory_space<vmem>>, vector<8x256xf32>,
    %c1536 = arith.constant 1536 : index
    %c0_126 = arith.constant 0 : index
    %231 = vector.load %arg1[%c1536, %c0_126] : memref<2048x16xf32, #tpu.memory_space<vmem>>, vector<256x16xf32>
    %cst_127 = arith.constant dense<0.000000e+00> : vector<32x256xf32>
    %232 = tpu.matmul %1, %231, %cst_127 {dimension_numbers = #tpu.dot_dimension_numbers<[1], [1], [0], [0], [0, 0, 1, 0], [], []>} : vector<32x16xf32>, vector<256x16xf32>, vector<32x256xf32> -> vector<32x256xf32>
    %233 = vector.broadcast %9 : vector<32x1xf32> to vector<32x256xf32>
    %234 = arith.addf %232, %233 : vector<32x256xf32>
    %cst_128 = arith.constant 0.000000e+00 : f32
    %235 = vector.broadcast %cst_128 : f32 to vector<32x256xf32>
    %236 = arith.maximumf %234, %235 : vector<32x256xf32>
    %cst_129 = arith.constant dense<0.000000e+00> : vector<8x256xf32>
    %237 = tpu.matmul %16, %236, %cst_129 {dimension_numbers = #tpu.dot_dimension_numbers<[1], [0], [0], [1], [0, 0, 1, 1], [], []>} : vector<8x32xf32>, vector<32x256xf32>, vector<8x256xf32> -> vector<8x256xf32>
    %238 = vector.broadcast %18 : vector<8x1xf32> to vector<8x256xf32>
    %239 = arith.addf %237, %238 : vector<8x256xf32>
    %cst_130 = arith.constant dense<0.000000e+00> : vector<32x256xf32>
    %240 = tpu.matmul %3, %231, %cst_130 {dimension_numbers = #tpu.dot_dimension_numbers<[1], [1], [0], [0], [0, 0, 1, 0], [], []>} : vector<32x16xf32>, vector<256x16xf32>, vector<32x256xf32> -> vector<32x256xf32>
    %cst_131 = arith.constant dense<0.000000e+00> : vector<32x256xf32>
    %241 = tpu.matmul %17, %239, %cst_131 {dimension_numbers = #tpu.dot_dimension_numbers<[1], [0], [0], [1], [0, 0, 1, 1], [], []>} : vector<32x8xf32>, vector<8x256xf32>, vector<32x256xf32> -> vector<32x256xf32>
    %242 = arith.addf %240, %241 : vector<32x256xf32>
    %243 = vector.broadcast %11 : vector<32x1xf32> to vector<32x256xf32>
    %244 = arith.addf %242, %243 : vector<32x256xf32>
    %cst_132 = arith.constant 0.000000e+00 : f32
    %245 = vector.broadcast %cst_132 : f32 to vector<32x256xf32>
    %246 = arith.maximumf %244, %245 : vector<32x256xf32>
    %cst_133 = arith.constant dense<0.000000e+00> : vector<32x256xf32>
    %247 = tpu.matmul %5, %236, %cst_133 {dimension_numbers = #tpu.dot_dimension_numbers<[1], [0], [0], [1], [0, 0, 1, 1], [], []>} : vector<32x32xf32>, vector<32x256xf32>, vector<32x256xf32> -> vector<32x256xf32>
    %248 = vector.broadcast %13 : vector<32x1xf32> to vector<32x256xf32>
    %249 = arith.addf %247, %248 : vector<32x256xf32>
    %cst_134 = arith.constant 0.000000e+00 : f32
    %250 = vector.broadcast %cst_134 : f32 to vector<32x256xf32>
    %251 = arith.maximumf %249, %250 : vector<32x256xf32>
    %cst_135 = arith.constant dense<0.000000e+00> : vector<32x256xf32>
    %252 = tpu.matmul %7, %246, %cst_135 {dimension_numbers = #tpu.dot_dimension_numbers<[1], [0], [0], [1], [0, 0, 1, 1], [], []>} : vector<32x32xf32>, vector<32x256xf32>, vector<32x256xf32> -> vector<32x256xf32>
    %253 = vector.broadcast %15 : vector<32x1xf32> to vector<32x256xf32>
    %254 = arith.addf %252, %253 : vector<32x256xf32>
    %cst_136 = arith.constant 0.000000e+00 : f32
    %255 = vector.broadcast %cst_136 : f32 to vector<32x256xf32>
    %256 = arith.maximumf %254, %255 : vector<32x256xf32>
    %cst_137 = arith.constant 1.000000e+00 : f32
    %257 = vector.broadcast %cst_137 : f32 to vector<32x256xf32>
    %258 = arith.mulf %257, %251 : vector<32x256xf32>
    %cst_138 = arith.constant 5.000000e-01 : f32
    %259 = vector.broadcast %cst_138 : f32 to vector<32x256xf32>
    %260 = arith.mulf %259, %256 : vector<32x256xf32>
    %261 = arith.addf %258, %260 : vector<32x256xf32>
    %cst_139 = arith.constant dense<0.000000e+00> : vector<8x256xf32>
    %262 = tpu.matmul %19, %261, %cst_139 {dimension_numbers = #tpu.dot_dimension_numbers<[1], [0], [0], [1], [0, 0, 1, 1], [], []>} : vector<8x32xf32>, vector<32x256xf32>, vector<8x256xf32> -> vector<8x256xf32>
    %263 = vector.broadcast %20 : vector<8x1xf32> to vector<8x256xf32>
    %264 = arith.addf %262, %263 : vector<8x256xf32>
    %c0_140 = arith.constant 0 : index
    %c1536_141 = arith.constant 1536 : index
    %265 = vector.load %arg10[%c0_140, %c1536_141] : memref<8x2048xf32, #tpu.memory_space<vmem>>, vector<8x256xf32>
    tpu.vector_store %arg10[%c0_140, %c1536_141], %264 {strides = array<i32>} : memref<8x2048xf32, #tpu.memory_space<vmem>>, vector<8x256xf32>,
    %c1792 = arith.constant 1792 : index
    %c0_142 = arith.constant 0 : index
    %266 = vector.load %arg1[%c1792, %c0_142] : memref<2048x16xf32, #tpu.memory_space<vmem>>, vector<256x16xf32>
    %cst_143 = arith.constant dense<0.000000e+00> : vector<32x256xf32>
    %267 = tpu.matmul %1, %266, %cst_143 {dimension_numbers = #tpu.dot_dimension_numbers<[1], [1], [0], [0], [0, 0, 1, 0], [], []>} : vector<32x16xf32>, vector<256x16xf32>, vector<32x256xf32> -> vector<32x256xf32>
    %268 = vector.broadcast %9 : vector<32x1xf32> to vector<32x256xf32>
    %269 = arith.addf %267, %268 : vector<32x256xf32>
    %cst_144 = arith.constant 0.000000e+00 : f32
    %270 = vector.broadcast %cst_144 : f32 to vector<32x256xf32>
    %271 = arith.maximumf %269, %270 : vector<32x256xf32>
    %cst_145 = arith.constant dense<0.000000e+00> : vector<8x256xf32>
    %272 = tpu.matmul %16, %271, %cst_145 {dimension_numbers = #tpu.dot_dimension_numbers<[1], [0], [0], [1], [0, 0, 1, 1], [], []>} : vector<8x32xf32>, vector<32x256xf32>, vector<8x256xf32> -> vector<8x256xf32>
    %273 = vector.broadcast %18 : vector<8x1xf32> to vector<8x256xf32>
    %274 = arith.addf %272, %273 : vector<8x256xf32>
    %cst_146 = arith.constant dense<0.000000e+00> : vector<32x256xf32>
    %275 = tpu.matmul %3, %266, %cst_146 {dimension_numbers = #tpu.dot_dimension_numbers<[1], [1], [0], [0], [0, 0, 1, 0], [], []>} : vector<32x16xf32>, vector<256x16xf32>, vector<32x256xf32> -> vector<32x256xf32>
    %cst_147 = arith.constant dense<0.000000e+00> : vector<32x256xf32>
    %276 = tpu.matmul %17, %274, %cst_147 {dimension_numbers = #tpu.dot_dimension_numbers<[1], [0], [0], [1], [0, 0, 1, 1], [], []>} : vector<32x8xf32>, vector<8x256xf32>, vector<32x256xf32> -> vector<32x256xf32>
    %277 = arith.addf %275, %276 : vector<32x256xf32>
    %278 = vector.broadcast %11 : vector<32x1xf32> to vector<32x256xf32>
    %279 = arith.addf %277, %278 : vector<32x256xf32>
    %cst_148 = arith.constant 0.000000e+00 : f32
    %280 = vector.broadcast %cst_148 : f32 to vector<32x256xf32>
    %281 = arith.maximumf %279, %280 : vector<32x256xf32>
    %cst_149 = arith.constant dense<0.000000e+00> : vector<32x256xf32>
    %282 = tpu.matmul %5, %271, %cst_149 {dimension_numbers = #tpu.dot_dimension_numbers<[1], [0], [0], [1], [0, 0, 1, 1], [], []>} : vector<32x32xf32>, vector<32x256xf32>, vector<32x256xf32> -> vector<32x256xf32>
    %283 = vector.broadcast %13 : vector<32x1xf32> to vector<32x256xf32>
    %284 = arith.addf %282, %283 : vector<32x256xf32>
    %cst_150 = arith.constant 0.000000e+00 : f32
    %285 = vector.broadcast %cst_150 : f32 to vector<32x256xf32>
    %286 = arith.maximumf %284, %285 : vector<32x256xf32>
    %cst_151 = arith.constant dense<0.000000e+00> : vector<32x256xf32>
    %287 = tpu.matmul %7, %281, %cst_151 {dimension_numbers = #tpu.dot_dimension_numbers<[1], [0], [0], [1], [0, 0, 1, 1], [], []>} : vector<32x32xf32>, vector<32x256xf32>, vector<32x256xf32> -> vector<32x256xf32>
    %288 = vector.broadcast %15 : vector<32x1xf32> to vector<32x256xf32>
    %289 = arith.addf %287, %288 : vector<32x256xf32>
    %cst_152 = arith.constant 0.000000e+00 : f32
    %290 = vector.broadcast %cst_152 : f32 to vector<32x256xf32>
    %291 = arith.maximumf %289, %290 : vector<32x256xf32>
    %cst_153 = arith.constant 1.000000e+00 : f32
    %292 = vector.broadcast %cst_153 : f32 to vector<32x256xf32>
    %293 = arith.mulf %292, %286 : vector<32x256xf32>
    %cst_154 = arith.constant 5.000000e-01 : f32
    %294 = vector.broadcast %cst_154 : f32 to vector<32x256xf32>
    %295 = arith.mulf %294, %291 : vector<32x256xf32>
    %296 = arith.addf %293, %295 : vector<32x256xf32>
    %cst_155 = arith.constant dense<0.000000e+00> : vector<8x256xf32>
    %297 = tpu.matmul %19, %296, %cst_155 {dimension_numbers = #tpu.dot_dimension_numbers<[1], [0], [0], [1], [0, 0, 1, 1], [], []>} : vector<8x32xf32>, vector<32x256xf32>, vector<8x256xf32> -> vector<8x256xf32>
    %298 = vector.broadcast %20 : vector<8x1xf32> to vector<8x256xf32>
    %299 = arith.addf %297, %298 : vector<8x256xf32>
    %c0_156 = arith.constant 0 : index
    %c1792_157 = arith.constant 1792 : index
    %300 = vector.load %arg10[%c0_156, %c1792_157] : memref<8x2048xf32, #tpu.memory_space<vmem>>, vector<8x256xf32>
    tpu.vector_store %arg10[%c0_156, %c1792_157], %299 {strides = array<i32>} : memref<8x2048xf32, #tpu.memory_space<vmem>>, vector<8x256xf32>,
    return
  }
  func.func @transform_0(%arg0: i32) -> (i32, i32) {
    %c0_i32 = arith.constant 0 : i32
    %c0_i32_0 = arith.constant 0 : i32
    return %arg0, %c0_i32 : i32, i32
  }
  func.func @transform_1(%arg0: i32) -> (i32, i32, i32) {
    %c0_i32 = arith.constant 0 : i32
    %c0_i32_0 = arith.constant 0 : i32
    %c0_i32_1 = arith.constant 0 : i32
    %c0_i32_2 = arith.constant 0 : i32
    return %c0_i32, %c0_i32_0, %c0_i32_1 : i32, i32, i32
  }
  func.func @transform_2(%arg0: i32) -> (i32, i32, i32) {
    %c0_i32 = arith.constant 0 : i32
    %c0_i32_0 = arith.constant 0 : i32
    %c0_i32_1 = arith.constant 0 : i32
    %c0_i32_2 = arith.constant 0 : i32
    return %c0_i32, %c0_i32_0, %c0_i32_1 : i32, i32, i32
  }
  func.func @transform_3(%arg0: i32) -> (i32, i32, i32) {
    %c0_i32 = arith.constant 0 : i32
    %c0_i32_0 = arith.constant 0 : i32
    %c0_i32_1 = arith.constant 0 : i32
    %c0_i32_2 = arith.constant 0 : i32
    return %c0_i32, %c0_i32_0, %c0_i32_1 : i32, i32, i32
  }
  func.func @transform_4(%arg0: i32) -> (i32, i32) {
    %c0_i32 = arith.constant 0 : i32
    %c0_i32_0 = arith.constant 0 : i32
    %c0_i32_1 = arith.constant 0 : i32
    return %c0_i32, %c0_i32_0 : i32, i32
  }
  func.func @transform_5(%arg0: i32) -> (i32, i32) {
    %c0_i32 = arith.constant 0 : i32
    %c0_i32_0 = arith.constant 0 : i32
    %c0_i32_1 = arith.constant 0 : i32
    return %c0_i32, %c0_i32_0 : i32, i32
  }
  func.func @transform_6(%arg0: i32) -> (i32, i32) {
    %c0_i32 = arith.constant 0 : i32
    %c0_i32_0 = arith.constant 0 : i32
    %c0_i32_1 = arith.constant 0 : i32
    return %c0_i32, %c0_i32_0 : i32, i32
  }
  func.func @transform_7(%arg0: i32) -> (i32, i32) {
    %c0_i32 = arith.constant 0 : i32
    %c0_i32_0 = arith.constant 0 : i32
    %c0_i32_1 = arith.constant 0 : i32
    return %c0_i32, %c0_i32_0 : i32, i32
  }
  func.func @transform_8(%arg0: i32) -> (i32, i32) {
    %c0_i32 = arith.constant 0 : i32
    %c0_i32_0 = arith.constant 0 : i32
    %c0_i32_1 = arith.constant 0 : i32
    return %c0_i32, %c0_i32_0 : i32, i32
  }
  func.func @transform_9(%arg0: i32) -> (i32, i32) {
    %c0_i32 = arith.constant 0 : i32
    %c0_i32_0 = arith.constant 0 : i32
    return %c0_i32, %arg0 : i32, i32
  }
}

</mosaic_0001>

<llo_original>
// kernel: tpu_custom_call.1
$region0: #{tpu_custom_call.1}
  #allocation0 [shape = 'u32[]', space=smem, size = 0x4, offset = 0x4, fixed_abs, tag = 'smem constant byte address 0x4 - core index']
  #allocation1 [shape = 'u32[144,128]{1,0:T(1,128)}', space=vmem, size = 0x12000, scoped, tag = 'internal scratch']
  %s0 = inlined_call_operand.vmem [shape: f32[2500,16], index: 0, kind: input, shape index: {}]
  %s1 = inlined_call_operand.vmem [shape: f32[2,32,16], index: 1, kind: input, shape index: {}]
  %s2 = inlined_call_operand.vmem [shape: f32[2,32,32], index: 2, kind: input, shape index: {}]
  %s3 = inlined_call_operand.vmem [shape: f32[4,32,1], index: 3, kind: input, shape index: {}]
  %s4 = inlined_call_operand.vmem [shape: f32[8,32], index: 4, kind: input, shape index: {}]
  %s5 = inlined_call_operand.vmem [shape: f32[32,8], index: 5, kind: input, shape index: {}]
  %s6 = inlined_call_operand.vmem [shape: f32[8,1], index: 6, kind: input, shape index: {}]
  %s7 = inlined_call_operand.vmem [shape: f32[8,32], index: 7, kind: input, shape index: {}]
  %s8 = inlined_call_operand.vmem [shape: f32[8,1], index: 8, kind: input, shape index: {}]
  %s9 = inlined_call_operand.hbm [shape: f32[8,2500], index: 9, kind: output, shape index: {}]
  %s10 = sld [smem:[#allocation0]]
  $region69: #{tpu_custom_call.1} parent=0
    _
  %s12 = ssub.s32 1, %s10
  %s13 = scalar_select 0, %s12, %s10
  $region1: #{tpu_custom_call.1} parent=0
    #allocation2 [shape = 'u8[131072]{0}', space=vmem, size = 0x20000, scoped, tag = 'output window, operand 0']
    #allocation3 [shape = 's32[2]{0}', space=sflag, size = 0x8, scoped, tag = 'scoped memory for tpu_custom_call.1']
    %14 = vsyncpa [#allocation3], 0
    %s15 = scalar_lea.sflag [#allocation3], 1
    %16 = vsyncpa %s15, 0
    loop: start=0, step=1, limit=4
    $region2: #{tpu_custom_call.1} parent=1 // loop_pre_header
      _
    $region3: #{tpu_custom_call.1} parent=1 // loop_header
      %s18 = sphi 0, %s22
      %p19 = scmp.ge.s32.totalorder %s18, 4
      %s28 = sphi 0, %s30
      %s31 = sphi 0, %s28
      %s32 = sphi 0, %s31
      %s48 = sphi 0, %s32
      %s52 = sphi 0, %s52
      %s54 = sphi 0, %s52
      %s55 = sphi 0, %s54
      %s69 = sphi 0, %s55
      %s73 = sphi 0, %s73
      %s75 = sphi 0, %s73
      %s76 = sphi 0, %s75
      %s90 = sphi 0, %s76
      %s94 = sphi 0, %s94
      %s96 = sphi 0, %s94
      %s97 = sphi 0, %s96
      %s111 = sphi 0, %s97
      %s115 = sphi 0, %s115
      %s117 = sphi 0, %s115
      %s118 = sphi 0, %s117
      %s132 = sphi 0, %s118
      %s136 = sphi 0, %s136
      %s138 = sphi 0, %s136
      %s139 = sphi 0, %s138
      %s153 = sphi 0, %s139
      %s157 = sphi 0, %s157
      %s159 = sphi 0, %s157
      %s160 = sphi 0, %s159
      %s174 = sphi 0, %s160
      %s178 = sphi 0, %s178
      %s180 = sphi 0, %s178
      %s181 = sphi 0, %s180
      %s195 = sphi 0, %s181
      %s199 = sphi 0, %s199
      %s201 = sphi 0, %s199
      %s202 = sphi 0, %s201
      %s216 = sphi 0, %s202
      %s222 = sphi 0, %s224
      %s225 = sphi 0, %s222
      %s226 = sphi 0, %s225
      %s242 = sphi 0, %s226
    $region4: #{tpu_custom_call.1} parent=1 // loop_header_branch
      %21 = sbr.rel (%p19) target = $region8
    $region5: #{tpu_custom_call.1} parent=1 // loop_body
      %s23 = ssub.s32 %s18, 1
      %s24 = ssub.s32 %s18, 2
      %s25 = sadd.s32 %s18, 1
      %s26 = ssub.s32 %s18, %s25
      %p27 = scmp.eq.s32.totalorder %s26, 0
      %s29 = sadd.s32 %s28, 1
      %s30 = scalar_select %p27, %s28, %s29
      %p33 = pneg %p27
      %p34 = scmp.eq.s32.totalorder %s18, 1
      %p35 = por %p33, %p34
      %p36 = scmp.ne.s32.totalorder %s28, %s31
      %p37 = scmp.eq.s32.totalorder %s18, 0
      %p38 = por %p36, %p37
      %p39 = scmp.ne.s32.totalorder %s28, %s31
      %p40 = scmp.eq.s32.totalorder %s23, 1
      %p41 = por %p39, %p40
      %p42 = scmp.ne.s32.totalorder %s31, %s32
      %p43 = scmp.eq.s32.totalorder %s23, 0
      %p44 = por %p42, %p43
      %p45 = scmp.ne.s32.totalorder %s31, %s32
      %p46 = scmp.eq.s32.totalorder %s24, 1
      %p47 = por %p45, %p46
      %p49 = scmp.ne.s32.totalorder %s32, %s48
      %p50 = scmp.eq.s32.totalorder %s24, 0
      %p51 = por %p49, %p50
      %s53 = sadd.s32 %s52, 1
      %p56 = scmp.eq.s32.totalorder %s18, 1
      %p57 = scmp.ne.s32.totalorder %s52, %s54
      %p58 = scmp.eq.s32.totalorder %s18, 0
      %p59 = por %p57, %p58
      %p60 = scmp.ne.s32.totalorder %s52, %s54
      %p61 = scmp.eq.s32.totalorder %s23, 1
      %p62 = por %p60, %p61
      %p63 = scmp.ne.s32.totalorder %s54, %s55
      %p64 = scmp.eq.s32.totalorder %s23, 0
      %p65 = por %p63, %p64
      %p66 = scmp.ne.s32.totalorder %s54, %s55
      %p67 = scmp.eq.s32.totalorder %s24, 1
      %p68 = por %p66, %p67
      %p70 = scmp.ne.s32.totalorder %s55, %s69
      %p71 = scmp.eq.s32.totalorder %s24, 0
      %p72 = por %p70, %p71
      %s74 = sadd.s32 %s73, 1
      %p77 = scmp.eq.s32.totalorder %s18, 1
      %p78 = scmp.ne.s32.totalorder %s73, %s75
      %p79 = scmp.eq.s32.totalorder %s18, 0
      %p80 = por %p78, %p79
      %p81 = scmp.ne.s32.totalorder %s73, %s75
      %p82 = scmp.eq.s32.totalorder %s23, 1
      %p83 = por %p81, %p82
      %p84 = scmp.ne.s32.totalorder %s75, %s76
      %p85 = scmp.eq.s32.totalorder %s23, 0
      %p86 = por %p84, %p85
      %p87 = scmp.ne.s32.totalorder %s75, %s76
      %p88 = scmp.eq.s32.totalorder %s24, 1
      %p89 = por %p87, %p88
      %p91 = scmp.ne.s32.totalorder %s76, %s90
      %p92 = scmp.eq.s32.totalorder %s24, 0
      %p93 = por %p91, %p92
      %s95 = sadd.s32 %s94, 1
      %p98 = scmp.eq.s32.totalorder %s18, 1
      %p99 = scmp.ne.s32.totalorder %s94, %s96
      %p100 = scmp.eq.s32.totalorder %s18, 0
      %p101 = por %p99, %p100
      %p102 = scmp.ne.s32.totalorder %s94, %s96
      %p103 = scmp.eq.s32.totalorder %s23, 1
      %p104 = por %p102, %p103
      %p105 = scmp.ne.s32.totalorder %s96, %s97
      %p106 = scmp.eq.s32.totalorder %s23, 0
      %p107 = por %p105, %p106
      %p108 = scmp.ne.s32.totalorder %s96, %s97
      %p109 = scmp.eq.s32.totalorder %s24, 1
      %p110 = por %p108, %p109
      %p112 = scmp.ne.s32.totalorder %s97, %s111
      %p113 = scmp.eq.s32.totalorder %s24, 0
      %p114 = por %p112, %p113
      %s116 = sadd.s32 %s115, 1
      %p119 = scmp.eq.s32.totalorder %s18, 1
      %p120 = scmp.ne.s32.totalorder %s115, %s117
      %p121 = scmp.eq.s32.totalorder %s18, 0
      %p122 = por %p120, %p121
      %p123 = scmp.ne.s32.totalorder %s115, %s117
      %p124 = scmp.eq.s32.totalorder %s23, 1
      %p125 = por %p123, %p124
      %p126 = scmp.ne.s32.totalorder %s117, %s118
      %p127 = scmp.eq.s32.totalorder %s23, 0
      %p128 = por %p126, %p127
      %p129 = scmp.ne.s32.totalorder %s117, %s118
      %p130 = scmp.eq.s32.totalorder %s24, 1
      %p131 = por %p129, %p130
      %p133 = scmp.ne.s32.totalorder %s118, %s132
      %p134 = scmp.eq.s32.totalorder %s24, 0
      %p135 = por %p133, %p134
      %s137 = sadd.s32 %s136, 1
      %p140 = scmp.eq.s32.totalorder %s18, 1
      %p141 = scmp.ne.s32.totalorder %s136, %s138
      %p142 = scmp.eq.s32.totalorder %s18, 0
      %p143 = por %p141, %p142
      %p144 = scmp.ne.s32.totalorder %s136, %s138
      %p145 = scmp.eq.s32.totalorder %s23, 1
      %p146 = por %p144, %p145
      %p147 = scmp.ne.s32.totalorder %s138, %s139
      %p148 = scmp.eq.s32.totalorder %s23, 0
      %p149 = por %p147, %p148
      %p150 = scmp.ne.s32.totalorder %s138, %s139
      %p151 = scmp.eq.s32.totalorder %s24, 1
      %p152 = por %p150, %p151
      %p154 = scmp.ne.s32.totalorder %s139, %s153
      %p155 = scmp.eq.s32.totalorder %s24, 0
      %p156 = por %p154, %p155
      %s158 = sadd.s32 %s157, 1
      %p161 = scmp.eq.s32.totalorder %s18, 1
      %p162 = scmp.ne.s32.totalorder %s157, %s159
      %p163 = scmp.eq.s32.totalorder %s18, 0
      %p164 = por %p162, %p163
      %p165 = scmp.ne.s32.totalorder %s157, %s159
      %p166 = scmp.eq.s32.totalorder %s23, 1
      %p167 = por %p165, %p166
      %p168 = scmp.ne.s32.totalorder %s159, %s160
      %p169 = scmp.eq.s32.totalorder %s23, 0
      %p170 = por %p168, %p169
      %p171 = scmp.ne.s32.totalorder %s159, %s160
      %p172 = scmp.eq.s32.totalorder %s24, 1
      %p173 = por %p171, %p172
      %p175 = scmp.ne.s32.totalorder %s160, %s174
      %p176 = scmp.eq.s32.totalorder %s24, 0
      %p177 = por %p175, %p176
      %s179 = sadd.s32 %s178, 1
      %p182 = scmp.eq.s32.totalorder %s18, 1
      %p183 = scmp.ne.s32.totalorder %s178, %s180
      %p184 = scmp.eq.s32.totalorder %s18, 0
      %p185 = por %p183, %p184
      %p186 = scmp.ne.s32.totalorder %s178, %s180
      %p187 = scmp.eq.s32.totalorder %s23, 1
      %p188 = por %p186, %p187
      %p189 = scmp.ne.s32.totalorder %s180, %s181
      %p190 = scmp.eq.s32.totalorder %s23, 0
      %p191 = por %p189, %p190
      %p192 = scmp.ne.s32.totalorder %s180, %s181
      %p193 = scmp.eq.s32.totalorder %s24, 1
      %p194 = por %p192, %p193
      %p196 = scmp.ne.s32.totalorder %s181, %s195
      %p197 = scmp.eq.s32.totalorder %s24, 0
      %p198 = por %p196, %p197
      %s200 = sadd.s32 %s199, 1
      %p203 = scmp.eq.s32.totalorder %s18, 1
      %p204 = scmp.ne.s32.totalorder %s199, %s201
      %p205 = scmp.eq.s32.totalorder %s18, 0
      %p206 = por %p204, %p205
      %p207 = scmp.ne.s32.totalorder %s199, %s201
      %p208 = scmp.eq.s32.totalorder %s23, 1
      %p209 = por %p207, %p208
      %p210 = scmp.ne.s32.totalorder %s201, %s202
      %p211 = scmp.eq.s32.totalorder %s23, 0
      %p212 = por %p210, %p211
      %p213 = scmp.ne.s32.totalorder %s201, %s202
      %p214 = scmp.eq.s32.totalorder %s24, 1
      %p215 = por %p213, %p214
      %p217 = scmp.ne.s32.totalorder %s202, %s216
      %p218 = scmp.eq.s32.totalorder %s24, 0
      %p219 = por %p217, %p218
      %s220 = ssub.s32 %s18, %s25
      %p221 = scmp.eq.s32.totalorder %s220, 0
      %s223 = sadd.s32 %s222, 1
      %s224 = scalar_select %p221, %s222, %s223
      %p227 = pneg %p221
      %p228 = scmp.eq.s32.totalorder %s18, 1
      %p229 = por %p227, %p228
      %p230 = scmp.ne.s32.totalorder %s222, %s225
      %p231 = scmp.eq.s32.totalorder %s18, 0
      %p232 = por %p230, %p231
      %p233 = scmp.ne.s32.totalorder %s222, %s225
      %p234 = scmp.eq.s32.totalorder %s23, 1
      %p235 = por %p233, %p234
      %p236 = scmp.ne.s32.totalorder %s225, %s226
      %p237 = scmp.eq.s32.totalorder %s23, 0
      %p238 = por %p236, %p237
      %p239 = scmp.ne.s32.totalorder %s225, %s226
      %p240 = scmp.eq.s32.totalorder %s24, 1
      %p241 = por %p239, %p240
      %p243 = scmp.ne.s32.totalorder %s226, %s242
      %p244 = scmp.eq.s32.totalorder %s24, 0
      %p245 = por %p243, %p244
      %p246 = scmp.le.s32.totalorder 1, %s18
      %p247 = scmp.lt.s32.totalorder %s18, 3
      %p248 = pnand %p246, %p247
      %p249 = pneg %p248
      // Predicated region
      $region9: #{tpu_custom_call.1} parent=5 // pred_check
        _
      $region10: #{tpu_custom_call.1} parent=5 // pred_check_branch
        %251 = sbr.rel (%p248) target = $region12
      $region11: #{tpu_custom_call.1} parent=5 // pred_region
        %s252 = ssub.s32 %s18, 1
        // Predicated region
        $region13: #{tpu_custom_call.1} parent=11 // pred_check
          %p253 = pneg %p65
        $region14: #{tpu_custom_call.1} parent=11 // pred_check_branch
          %255 = sbr.rel (%p253) target = $region16
        $region15: #{tpu_custom_call.1} parent=11 // pred_region
          _
        $region16: #{tpu_custom_call.1} parent=11 // pred_fallthru
          _
        // Predicated region
        $region17: #{tpu_custom_call.1} parent=11 // pred_check
          %p256 = pneg %p86
        $region18: #{tpu_custom_call.1} parent=11 // pred_check_branch
          %258 = sbr.rel (%p256) target = $region20
        $region19: #{tpu_custom_call.1} parent=11 // pred_region
          _
        $region20: #{tpu_custom_call.1} parent=11 // pred_fallthru
          _
        // Predicated region
        $region21: #{tpu_custom_call.1} parent=11 // pred_check
          %p259 = pneg %p107
        $region22: #{tpu_custom_call.1} parent=11 // pred_check_branch
          %261 = sbr.rel (%p259) target = $region24
        $region23: #{tpu_custom_call.1} parent=11 // pred_region
          _
        $region24: #{tpu_custom_call.1} parent=11 // pred_fallthru
          _
        // Predicated region
        $region25: #{tpu_custom_call.1} parent=11 // pred_check
          %p262 = pneg %p128
        $region26: #{tpu_custom_call.1} parent=11 // pred_check_branch
          %264 = sbr.rel (%p262) target = $region28
        $region27: #{tpu_custom_call.1} parent=11 // pred_region
          _
        $region28: #{tpu_custom_call.1} parent=11 // pred_fallthru
          _
        // Predicated region
        $region29: #{tpu_custom_call.1} parent=11 // pred_check
          %p265 = pneg %p149
        $region30: #{tpu_custom_call.1} parent=11 // pred_check_branch
          %267 = sbr.rel (%p265) target = $region32
        $region31: #{tpu_custom_call.1} parent=11 // pred_region
          _
        $region32: #{tpu_custom_call.1} parent=11 // pred_fallthru
          _
        // Predicated region
        $region33: #{tpu_custom_call.1} parent=11 // pred_check
          %p268 = pneg %p170
        $region34: #{tpu_custom_call.1} parent=11 // pred_check_branch
          %270 = sbr.rel (%p268) target = $region36
        $region35: #{tpu_custom_call.1} parent=11 // pred_region
          _
        $region36: #{tpu_custom_call.1} parent=11 // pred_fallthru
          _
        // Predicated region
        $region37: #{tpu_custom_call.1} parent=11 // pred_check
          %p271 = pneg %p191
        $region38: #{tpu_custom_call.1} parent=11 // pred_check_branch
          %273 = sbr.rel (%p271) target = $region40
        $region39: #{tpu_custom_call.1} parent=11 // pred_region
          _
        $region40: #{tpu_custom_call.1} parent=11 // pred_fallthru
          _
        // Predicated region
        $region41: #{tpu_custom_call.1} parent=11 // pred_check
          %p274 = pneg %p212
        $region42: #{tpu_custom_call.1} parent=11 // pred_check_branch
          %276 = sbr.rel (%p274) target = $region44
        $region43: #{tpu_custom_call.1} parent=11 // pred_region
          _
        $region44: #{tpu_custom_call.1} parent=11 // pred_fallthru
          _
      $region12: #{tpu_custom_call.1} parent=5 // pred_fallthru
        _
      %p277 = scmp.lt.s32.totalorder %s18, 2
      // Predicated region
      $region45: #{tpu_custom_call.1} parent=5 // pred_check
        %p278 = pneg %p277
      $region46: #{tpu_custom_call.1} parent=5 // pred_check_branch
        %280 = sbr.rel (%p278) target = $region48
      $region47: #{tpu_custom_call.1} parent=5 // pred_region
        // Predicated region
        $region49: #{tpu_custom_call.1} parent=47 // pred_check
          %p281 = pneg %p38
        $region50: #{tpu_custom_call.1} parent=47 // pred_check_branch
          %283 = sbr.rel (%p281) target = $region52
        $region51: #{tpu_custom_call.1} parent=47 // pred_region
          %s284 = smul.u32 256, %s18
          %s285 = ssub.s32 313, %s284
          %p286 = scmp.lt.s32.totalorder %s285, 256
          %s287 = scalar_select %p286, %s285, 256
          %s288 = smul.u32 128, %s287
          %p289 = scmp.lt.s32.totalorder %s284, 312
          %s290 = scalar_select %p289, %s284, 312
          %s291 = smul.addr %s290, 8
          %s292 = scalar_lea.vmem %s0, %s291
          %s293 = smul.u32 256, %s18
          %s294 = ssub.s32 313, %s293
          %p295 = scmp.lt.s32.totalorder %s294, 256
          %s296 = scalar_select %p295, %s294, 256
          %s297 = smul.u32 128, %s296
        $region52: #{tpu_custom_call.1} parent=47 // pred_fallthru
          _
      $region48: #{tpu_custom_call.1} parent=5 // pred_fallthru
        _
      %p298 = scmp.le.s32.totalorder 1, %s18
      %p299 = scmp.lt.s32.totalorder %s18, 3
      %p300 = pnand %p298, %p299
      %p301 = pneg %p300
      // Predicated region
      $region53: #{tpu_custom_call.1} parent=5 // pred_check
        _
      $region54: #{tpu_custom_call.1} parent=5 // pred_check_branch
        %303 = sbr.rel (%p300) target = $region56
      $region55: #{tpu_custom_call.1} parent=5 // pred_region
        %s304 = ssub.s32 %s18, 1
        %s305 = smul.u32 256, %s23
        %s306 = ssub.s32 313, %s305
        %p307 = scmp.lt.s32.totalorder %s306, 256
        %s308 = scalar_select %p307, %s306, 256
        %s309 = smul.u32 128, %s308
        %p310 = scmp.lt.s32.totalorder %s305, 312
        %s311 = scalar_select %p310, %s305, 312
        %s312 = smul.addr %s311, 8
        %s313 = scalar_lea.vmem %s0, %s312
        %p314 = pneg %p44
        %p315 = pneg %p41
        %p316 = pneg %p65
        %p317 = pneg %p62
        %p318 = pneg %p86
        %p319 = pneg %p83
        %p320 = pneg %p107
        %p321 = pneg %p104
        %p322 = pneg %p128
        %p323 = pneg %p125
        %p324 = pneg %p149
        %p325 = pneg %p146
        %p326 = pneg %p170
        %p327 = pneg %p167
        %p328 = pneg %p191
        %p329 = pneg %p188
        %p330 = pneg %p212
        %p331 = pneg %p209
        %p332 = pneg %p238
        %p333 = pneg %p235
        %s334 = sand.u32 %s225, 1
        %s335 = scalar_lea.sflag [#allocation3], %s334
        %s336 = sand.u32 %s225, 1
        %s337 = smul.addr %s336, 128
        %s338 = scalar_lea.vmem [#allocation2], %s337
        %s339 = smul.u32 256, %s23
        %s340 = ssub.s32 313, %s339
        %p341 = scmp.lt.s32.totalorder %s340, 256
        %s342 = scalar_select %p341, %s340, 256
        %s343 = smul.u32 128, %s342
        %p344 = scmp.lt.s32.totalorder %s339, 312
        %s345 = scalar_select %p344, %s339, 312
        %s346 = smul.addr %s345, 8
        %s347 = scalar_lea.vmem %s0, %s346
        %s348 = smul.u32 256, %s23
        %s349 = ssub.s32 313, %s348
        %p350 = scmp.lt.s32.totalorder %s349, 256
        %s351 = scalar_select %p350, %s349, 256
        %s352 = smul.u32 128, %s351
        %s353 = smul.u32 16, %s23
        %s354 = ssub.s32 20, %s353
        %p355 = scmp.lt.s32.totalorder %s354, 16
        %s356 = scalar_select %p355, %s354, 16
        %s357 = smul.u32 128, %s356
        %v358 = vld [vmem:[%s1] sm:$0xff]
        %v359 = vld [vmem:[%s1 + $0x8] sm:$0xff]
        %v360 = vld [vmem:[%s1 + $0x10] sm:$0xff]
        %v361 = vld [vmem:[%s1 + $0x18] sm:$0xff]
        %s362 = scalar_lea.vmem %s1, 32
        %v363 = vld [vmem:[%s362] sm:$0xff]
        %v364 = vld [vmem:[%s362 + $0x8] sm:$0xff]
        %v365 = vld [vmem:[%s362 + $0x10] sm:$0xff]
        %v366 = vld [vmem:[%s362 + $0x18] sm:$0xff]
        %v367 = vld [vmem:[%s2] sm:$0xff]
        %v368 = vld [vmem:[%s2 + $0x8] sm:$0xff]
        %v369 = vld [vmem:[%s2 + $0x10] sm:$0xff]
        %v370 = vld [vmem:[%s2 + $0x18] sm:$0xff]
        %s371 = scalar_lea.vmem %s2, 32
        %v372 = vld [vmem:[%s371] sm:$0xff]
        %v373 = vld [vmem:[%s371 + $0x8] sm:$0xff]
        %v374 = vld [vmem:[%s371 + $0x10] sm:$0xff]
        %v375 = vld [vmem:[%s371 + $0x18] sm:$0xff]
        %v376 = vld [vmem:[%s3] sm:$0xff]
        %v377 = vld [vmem:[%s3 + $0x8] sm:$0xff]
        %v378 = vld [vmem:[%s3 + $0x10] sm:$0xff]
        %v379 = vld [vmem:[%s3 + $0x18] sm:$0xff]
        %s380 = scalar_lea.vmem %s3, 32
        %v381 = vld [vmem:[%s380] sm:$0xff]
        %v382 = vld [vmem:[%s380 + $0x8] sm:$0xff]
        %v383 = vld [vmem:[%s380 + $0x10] sm:$0xff]
        %v384 = vld [vmem:[%s380 + $0x18] sm:$0xff]
        %s385 = scalar_lea.vmem %s3, 64
        %v386 = vld [vmem:[%s385] sm:$0xff]
        %v387 = vld [vmem:[%s385 + $0x8] sm:$0xff]
        %v388 = vld [vmem:[%s385 + $0x10] sm:$0xff]
        %v389 = vld [vmem:[%s385 + $0x18] sm:$0xff]
        %s390 = scalar_lea.vmem %s3, 96
        %v391 = vld [vmem:[%s390] sm:$0xff]
        %v392 = vld [vmem:[%s390 + $0x8] sm:$0xff]
        %v393 = vld [vmem:[%s390 + $0x10] sm:$0xff]
        %v394 = vld [vmem:[%s390 + $0x18] sm:$0xff]
        %v395 = vld [vmem:[%s4] sm:$0xff]
        %v396 = vld [vmem:[%s5] sm:$0xff]
        %v397 = vld [vmem:[%s5 + $0x8] sm:$0xff]
        %v398 = vld [vmem:[%s5 + $0x10] sm:$0xff]
        %v399 = vld [vmem:[%s5 + $0x18] sm:$0xff]
        %v400 = vld [vmem:[%s6] sm:$0xff]
        %v401 = vld [vmem:[%s7] sm:$0xff]
        %v402 = vld [vmem:[%s8] sm:$0xff]
        %v403 = vld [vmem:[%s347] sm:$0xff]
        %v404 = vld [vmem:[%s347 + $0x8] sm:$0xff]
        %v405 = vld [vmem:[%s347 + $0x10] sm:$0xff]
        %v406 = vld [vmem:[%s347 + $0x18] sm:$0xff]
        %v407 = vld [vmem:[%s347 + $0x20] sm:$0xff]
        %v408 = vld [vmem:[%s347 + $0x28] sm:$0xff]
        %v409 = vld [vmem:[%s347 + $0x30] sm:$0xff]
        %v410 = vld [vmem:[%s347 + $0x38] sm:$0xff]
        %v411 = vld [vmem:[%s347 + $0x40] sm:$0xff]
        %v412 = vld [vmem:[%s347 + $0x48] sm:$0xff]
        %v413 = vld [vmem:[%s347 + $0x50] sm:$0xff]
        %v414 = vld [vmem:[%s347 + $0x58] sm:$0xff]
        %v415 = vld [vmem:[%s347 + $0x60] sm:$0xff]
        %v416 = vld [vmem:[%s347 + $0x68] sm:$0xff]
        %v417 = vld [vmem:[%s347 + $0x70] sm:$0xff]
        %v418 = vld [vmem:[%s347 + $0x78] sm:$0xff]
        %v419 = vld [vmem:[%s347 + $0x80] sm:$0xff]
        %v420 = vld [vmem:[%s347 + $0x88] sm:$0xff]
        %v421 = vld [vmem:[%s347 + $0x90] sm:$0xff]
        %v422 = vld [vmem:[%s347 + $0x98] sm:$0xff]
        %v423 = vld [vmem:[%s347 + $0xa0] sm:$0xff]
        %v424 = vld [vmem:[%s347 + $0xa8] sm:$0xff]
        %v425 = vld [vmem:[%s347 + $0xb0] sm:$0xff]
        %v426 = vld [vmem:[%s347 + $0xb8] sm:$0xff]
        %v427 = vld [vmem:[%s347 + $0xc0] sm:$0xff]
        %v428 = vld [vmem:[%s347 + $0xc8] sm:$0xff]
        %v429 = vld [vmem:[%s347 + $0xd0] sm:$0xff]
        %v430 = vld [vmem:[%s347 + $0xd8] sm:$0xff]
        %v431 = vld [vmem:[%s347 + $0xe0] sm:$0xff]
        %v432 = vld [vmem:[%s347 + $0xe8] sm:$0xff]
        %v433 = vld [vmem:[%s347 + $0xf0] sm:$0xff]
        %v434 = vld [vmem:[%s347 + $0xf8] sm:$0xff]
        %436 = vset.pattern.permute.xlu0 0
        %437 = vperm.xlu0 %436, %v376
        %v438 = vpop.permute.xlu0 %437
        %441 = vset.pattern.permute.xlu0 0
        %442 = vperm.xlu0 %441, %v377
        %v443 = vpop.permute.xlu0 %442
        %446 = vset.pattern.permute.xlu0 0
        %447 = vperm.xlu0 %446, %v378
        %v448 = vpop.permute.xlu0 %447
        %451 = vset.pattern.permute.xlu0 0
        %452 = vperm.xlu0 %451, %v379
        %v453 = vpop.permute.xlu0 %452
        %vm455 = vcmask 130048
        %v457 = vsel %vm455, %v358, 0
        %v460 = vsel %vm455, %v359, 0
        %v463 = vsel %vm455, %v360, 0
        %v466 = vsel %vm455, %v361, 0
        %v469 = vsel %vm455, %v403, 0
        %v472 = vsel %vm455, %v404, 0
        %v475 = vsel %vm455, %v405, 0
        %v478 = vsel %vm455, %v406, 0
        %v481 = vsel %vm455, %v407, 0
        %v484 = vsel %vm455, %v408, 0
        %v487 = vsel %vm455, %v409, 0
        %v490 = vsel %vm455, %v410, 0
        %v493 = vsel %vm455, %v411, 0
        %v496 = vsel %vm455, %v412, 0
        %v499 = vsel %vm455, %v413, 0
        %v502 = vsel %vm455, %v414, 0
        %v505 = vsel %vm455, %v415, 0
        %v508 = vsel %vm455, %v416, 0
        %v511 = vsel %vm455, %v417, 0
        %v514 = vsel %vm455, %v418, 0
        %v517 = vsel %vm455, %v419, 0
        %v520 = vsel %vm455, %v420, 0
        %v523 = vsel %vm455, %v421, 0
        %v526 = vsel %vm455, %v422, 0
        %v529 = vsel %vm455, %v423, 0
        %v532 = vsel %vm455, %v424, 0
        %v535 = vsel %vm455, %v425, 0
        %v538 = vsel %vm455, %v426, 0
        %v541 = vsel %vm455, %v427, 0
        %v544 = vsel %vm455, %v428, 0
        %v547 = vsel %vm455, %v429, 0
        %v550 = vsel %vm455, %v430, 0
        %v553 = vsel %vm455, %v431, 0
        %v556 = vsel %vm455, %v432, 0
        %v559 = vsel %vm455, %v433, 0
        %v562 = vsel %vm455, %v434, 0
        %564 = vmatprep.subr.mxu0 0.0
        %565 = vmatpush1.xpose.msra.mxu0 %v469
        %566 = vmatprep.subr.mxu0 0.0
        %567 = vmatpush1.xpose.msra.mxu0 %v472
        %568 = vmatprep.subr.mxu0 0.0
        %569 = vmatpush1.xpose.msra.mxu0 %v475
        %570 = vmatprep.subr.mxu0 0.0
        %571 = vmatpush1.xpose.msra.mxu0 %v478
        %572 = vmatprep.subr.mxu0 0.0
        %573 = vmatpush1.xpose.msra.mxu0 %v481
        %574 = vmatprep.subr.mxu0 0.0
        %575 = vmatpush1.xpose.msra.mxu0 %v484
        %576 = vmatprep.subr.mxu0 0.0
        %577 = vmatpush1.xpose.msra.mxu0 %v487
        %578 = vmatprep.subr.mxu0 0.0
        %579 = vmatpush1.xpose.msra.mxu0 %v490
        %580 = vmatprep.subr.mxu0 0.0
        %581 = vmatpush1.xpose.msra.mxu0 %v493
        %582 = vmatprep.subr.mxu0 0.0
        %583 = vmatpush1.xpose.msra.mxu0 %v496
        %584 = vmatprep.subr.mxu0 0.0
        %585 = vmatpush1.xpose.msra.mxu0 %v499
        %586 = vmatprep.subr.mxu0 0.0
        %587 = vmatpush1.xpose.msra.mxu0 %v502
        %588 = vmatprep.subr.mxu0 0.0
        %589 = vmatpush1.xpose.msra.mxu0 %v505
        %590 = vmatprep.subr.mxu0 0.0
        %591 = vmatpush1.xpose.msra.mxu0 %v508
        %592 = vmatprep.subr.mxu0 0.0
        %593 = vmatpush1.xpose.msra.mxu0 %v511
        %594 = vmatprep.subr.mxu0 0.0
        %595 = vmatpush1.xpose.msra.mxu0 %v514
        %596 = vmatprep.subr.mxu0 0.0
        %597 = vmatpush1.xpose.msra.mxu0 %v517
        %598 = vmatprep.subr.mxu0 0.0
        %599 = vmatpush1.xpose.msra.mxu0 %v520
        %600 = vmatprep.subr.mxu0 0.0
        %601 = vmatpush1.xpose.msra.mxu0 %v523
        %602 = vmatprep.subr.mxu0 0.0
        %603 = vmatpush1.xpose.msra.mxu0 %v526
        %604 = vmatprep.subr.mxu0 0.0
        %605 = vmatpush1.xpose.msra.mxu0 %v529
        %606 = vmatprep.subr.mxu0 0.0
        %607 = vmatpush1.xpose.msra.mxu0 %v532
        %608 = vmatprep.subr.mxu0 0.0
        %609 = vmatpush1.xpose.msra.mxu0 %v535
        %610 = vmatprep.subr.mxu0 0.0
        %611 = vmatpush1.xpose.msra.mxu0 %v538
        %612 = vmatprep.subr.mxu0 0.0
        %613 = vmatpush1.xpose.msra.mxu0 %v541
        %614 = vmatprep.subr.mxu0 0.0
        %615 = vmatpush1.xpose.msra.mxu0 %v544
        %616 = vmatprep.subr.mxu0 0.0
        %617 = vmatpush1.xpose.msra.mxu0 %v547
        %618 = vmatprep.subr.mxu0 0.0
        %619 = vmatpush1.xpose.msra.mxu0 %v550
        %620 = vmatprep.subr.mxu0 0.0
        %621 = vmatpush1.xpose.msra.mxu0 %v553
        %622 = vmatprep.subr.mxu0 0.0
        %623 = vmatpush1.xpose.msra.mxu0 %v556
        %624 = vmatprep.subr.mxu0 0.0
        %625 = vmatpush1.xpose.msra.mxu0 %v559
        %626 = vmatprep.subr.mxu0 0.0
        %627 = vmatpush1.xpose.msra.mxu0 %v562
        %628 = vmatprep.mubr.f32.mxu0 0.0
        %629 = vmatmul.mubr.f32.gmra.mrb[0].mxu0 %v457
        %v630 = vpop.f32.mrb[0].mxu0
        %v631 = vadd.f32 %v438, %v630
        %v632 = vpop.f32.mrb[0].mxu0
        %v633 = vadd.f32 %v438, %v632
        %634 = vmatprep.mubr.f32.mxu0 0.0
        %635 = vmatmul.mubr.f32.gmra.mrb[0].mxu0 %v460
        %v636 = vpop.f32.mrb[0].mxu0
        %v637 = vadd.f32 %v443, %v636
        %v638 = vpop.f32.mrb[0].mxu0
        %v639 = vadd.f32 %v443, %v638
        %640 = vmatprep.mubr.f32.mxu0 0.0
        %641 = vmatmul.mubr.f32.gmra.mrb[0].mxu0 %v463
        %v642 = vpop.f32.mrb[0].mxu0
        %v643 = vadd.f32 %v448, %v642
        %v644 = vpop.f32.mrb[0].mxu0
        %v645 = vadd.f32 %v448, %v644
        %646 = vmatprep.mubr.f32.mxu0 0.0
        %647 = vmatmul.mubr.f32.gmra.mrb[0].mxu0 %v466
        %v648 = vpop.f32.mrb[0].mxu0
        %v649 = vadd.f32 %v453, %v648
        %v650 = vpop.f32.mrb[0].mxu0
        %v651 = vadd.f32 %v453, %v650
        %652 = vdwg.mxu0
        %v653 = vmax.f32 %v631, 0.0
        %v654 = vmax.f32 %v633, 0.0
        %v655 = vmax.f32 %v637, 0.0
        %v656 = vmax.f32 %v639, 0.0
        %v657 = vmax.f32 %v643, 0.0
        %v658 = vmax.f32 %v645, 0.0
        %v659 = vmax.f32 %v649, 0.0
        %v660 = vmax.f32 %v651, 0.0
        %662 = vset.pattern.permute.xlu0 0
        %663 = vperm.xlu0 %662, %v400
        %v664 = vpop.permute.xlu0 %663
        %vm666 = vcmask 261120
        %v668 = vsel %vm666, %v395, 0
        %670 = vmatprep.subr.mxu0 %v654
        %671 = vmatpush1.msra.mxu0 %v653
        %672 = vmatprep.subr.mxu0 %v656
        %673 = vmatpush1.msra.mxu0 %v655
        %674 = vmatprep.subr.mxu0 %v658
        %675 = vmatpush1.msra.mxu0 %v657
        %676 = vmatprep.subr.mxu0 %v660
        %677 = vmatpush1.msra.mxu0 %v659
        %678 = vmatprep.subr.mxu0 0.0
        %679 = vmatpush1.msra.mxu0 0.0
        %680 = vmatprep.subr.mxu0 0.0
        %681 = vmatpush1.msra.mxu0 0.0
        %682 = vmatprep.subr.mxu0 0.0
        %683 = vmatpush1.msra.mxu0 0.0
        %684 = vmatprep.subr.mxu0 0.0
        %685 = vmatpush1.msra.mxu0 0.0
        %686 = vmatprep.subr.mxu0 0.0
        %687 = vmatpush1.msra.mxu0 0.0
        %688 = vmatprep.subr.mxu0 0.0
        %689 = vmatpush1.msra.mxu0 0.0
        %690 = vmatprep.subr.mxu0 0.0
        %691 = vmatpush1.msra.mxu0 0.0
        %692 = vmatprep.subr.mxu0 0.0
        %693 = vmatpush1.msra.mxu0 0.0
        %694 = vmatprep.subr.mxu0 0.0
        %695 = vmatpush1.msra.mxu0 0.0
        %696 = vmatprep.subr.mxu0 0.0
        %697 = vmatpush1.msra.mxu0 0.0
        %698 = vmatprep.subr.mxu0 0.0
        %699 = vmatpush1.msra.mxu0 0.0
        %700 = vmatprep.subr.mxu0 0.0
        %701 = vmatpush1.msra.mxu0 0.0
        %702 = vmatprep.subr.mxu0 0.0
        %703 = vmatpush1.msra.mxu0 0.0
        %704 = vmatprep.subr.mxu0 0.0
        %705 = vmatpush1.msra.mxu0 0.0
        %706 = vmatprep.subr.mxu0 0.0
        %707 = vmatpush1.msra.mxu0 0.0
        %708 = vmatprep.subr.mxu0 0.0
        %709 = vmatpush1.msra.mxu0 0.0
        %710 = vmatprep.subr.mxu0 0.0
        %711 = vmatpush1.msra.mxu0 0.0
        %712 = vmatprep.subr.mxu0 0.0
        %713 = vmatpush1.msra.mxu0 0.0
        %714 = vmatprep.subr.mxu0 0.0
        %715 = vmatpush1.msra.mxu0 0.0
        %716 = vmatprep.subr.mxu0 0.0
        %717 = vmatpush1.msra.mxu0 0.0
        %718 = vmatprep.subr.mxu0 0.0
        %719 = vmatpush1.msra.mxu0 0.0
        %720 = vmatprep.subr.mxu0 0.0
        %721 = vmatpush1.msra.mxu0 0.0
        %722 = vmatprep.subr.mxu0 0.0
        %723 = vmatpush1.msra.mxu0 0.0
        %724 = vmatprep.subr.mxu0 0.0
        %725 = vmatpush1.msra.mxu0 0.0
        %726 = vmatprep.subr.mxu0 0.0
        %727 = vmatpush1.msra.mxu0 0.0
        %728 = vmatprep.subr.mxu0 0.0
        %729 = vmatpush1.msra.mxu0 0.0
        %730 = vmatprep.subr.mxu0 0.0
        %731 = vmatpush1.msra.mxu0 0.0
        %732 = vmatprep.subr.mxu0 0.0
        %733 = vmatpush1.msra.mxu0 0.0
        %734 = vmatprep.mubr.f32.mxu0 0.0
        %735 = vmatmul.mubr.f32.gmra.mrb[0].mxu0 %v668
        %v736 = vpop.f32.mrb[0].mxu0
        %v737 = vadd.f32 %v664, %v736
        %v738 = vpop.f32.mrb[0].mxu0
        %v739 = vadd.f32 %v664, %v738
        %740 = vdwg.mxu0
        %vm741 = vcmask 64512
        %v743 = vsel %vm741, %v396, 0
        %v746 = vsel %vm741, %v397, 0
        %v749 = vsel %vm741, %v398, 0
        %v752 = vsel %vm741, %v399, 0
        %754 = vmatprep.subr.mxu0 %v739
        %755 = vmatpush1.msra.mxu0 %v737
        %756 = vmatprep.subr.mxu0 0.0
        %757 = vmatpush1.msra.mxu0 0.0
        %758 = vmatprep.subr.mxu0 0.0
        %759 = vmatpush1.msra.mxu0 0.0
        %760 = vmatprep.subr.mxu0 0.0
        %761 = vmatpush1.msra.mxu0 0.0
        %762 = vmatprep.subr.mxu0 0.0
        %763 = vmatpush1.msra.mxu0 0.0
        %764 = vmatprep.subr.mxu0 0.0
        %765 = vmatpush1.msra.mxu0 0.0
        %766 = vmatprep.subr.mxu0 0.0
        %767 = vmatpush1.msra.mxu0 0.0
        %768 = vmatprep.subr.mxu0 0.0
        %769 = vmatpush1.msra.mxu0 0.0
        %770 = vmatprep.subr.mxu0 0.0
        %771 = vmatpush1.msra.mxu0 0.0
        %772 = vmatprep.subr.mxu0 0.0
        %773 = vmatpush1.msra.mxu0 0.0
        %774 = vmatprep.subr.mxu0 0.0
        %775 = vmatpush1.msra.mxu0 0.0
        %776 = vmatprep.subr.mxu0 0.0
        %777 = vmatpush1.msra.mxu0 0.0
        %778 = vmatprep.subr.mxu0 0.0
        %779 = vmatpush1.msra.mxu0 0.0
        %780 = vmatprep.subr.mxu0 0.0
        %781 = vmatpush1.msra.mxu0 0.0
        %782 = vmatprep.subr.mxu0 0.0
        %783 = vmatpush1.msra.mxu0 0.0
        %784 = vmatprep.subr.mxu0 0.0
        %785 = vmatpush1.msra.mxu0 0.0
        %786 = vmatprep.subr.mxu0 0.0
        %787 = vmatpush1.msra.mxu0 0.0
        %788 = vmatprep.subr.mxu0 0.0
        %789 = vmatpush1.msra.mxu0 0.0
        %790 = vmatprep.subr.mxu0 0.0
        %791 = vmatpush1.msra.mxu0 0.0
        %792 = vmatprep.subr.mxu0 0.0
        %793 = vmatpush1.msra.mxu0 0.0
        %794 = vmatprep.subr.mxu0 0.0
        %795 = vmatpush1.msra.mxu0 0.0
        %796 = vmatprep.subr.mxu0 0.0
        %797 = vmatpush1.msra.mxu0 0.0
        %798 = vmatprep.subr.mxu0 0.0
        %799 = vmatpush1.msra.mxu0 0.0
        %800 = vmatprep.subr.mxu0 0.0
        %801 = vmatpush1.msra.mxu0 0.0
        %802 = vmatprep.subr.mxu0 0.0
        %803 = vmatpush1.msra.mxu0 0.0
        %804 = vmatprep.subr.mxu0 0.0
        %805 = vmatpush1.msra.mxu0 0.0
        %806 = vmatprep.subr.mxu0 0.0
        %807 = vmatpush1.msra.mxu0 0.0
        %808 = vmatprep.subr.mxu0 0.0
        %809 = vmatpush1.msra.mxu0 0.0
        %810 = vmatprep.subr.mxu0 0.0
        %811 = vmatpush1.msra.mxu0 0.0
        %812 = vmatprep.subr.mxu0 0.0
        %813 = vmatpush1.msra.mxu0 0.0
        %814 = vmatprep.subr.mxu0 0.0
        %815 = vmatpush1.msra.mxu0 0.0
        %816 = vmatprep.subr.mxu0 0.0
        %817 = vmatpush1.msra.mxu0 0.0
        %818 = vmatprep.mubr.f32.mxu0 0.0
        %819 = vmatmul.mubr.f32.gmra.mrb[0].mxu0 %v743
        %v820 = vpop.f32.mrb[0].mxu0
        %v821 = vadd.f32 0.0, %v820
        %v822 = vpop.f32.mrb[0].mxu0
        %v823 = vadd.f32 0.0, %v822
        %824 = vmatprep.mubr.f32.mxu0 0.0
        %825 = vmatmul.mubr.f32.gmra.mrb[0].mxu0 %v746
        %v826 = vpop.f32.mrb[0].mxu0
        %v827 = vadd.f32 0.0, %v826
        %v828 = vpop.f32.mrb[0].mxu0
        %v829 = vadd.f32 0.0, %v828
        %830 = vmatprep.mubr.f32.mxu0 0.0
        %831 = vmatmul.mubr.f32.gmra.mrb[0].mxu0 %v749
        %v832 = vpop.f32.mrb[0].mxu0
        %v833 = vadd.f32 0.0, %v832
        %v834 = vpop.f32.mrb[0].mxu0
        %v835 = vadd.f32 0.0, %v834
        %836 = vmatprep.mubr.f32.mxu0 0.0
        %837 = vmatmul.mubr.f32.gmra.mrb[0].mxu0 %v752
        %v838 = vpop.f32.mrb[0].mxu0
        %v839 = vadd.f32 0.0, %v838
        %v840 = vpop.f32.mrb[0].mxu0
        %v841 = vadd.f32 0.0, %v840
        %842 = vdwg.mxu0
        %v844 = vsel %vm455, %v363, 0
        %v847 = vsel %vm455, %v364, 0
        %v850 = vsel %vm455, %v365, 0
        %v853 = vsel %vm455, %v366, 0
        %855 = vmatprep.subr.mxu0 0.0
        %856 = vmatpush1.xpose.msra.mxu0 %v469
        %857 = vmatprep.subr.mxu0 0.0
        %858 = vmatpush1.xpose.msra.mxu0 %v472
        %859 = vmatprep.subr.mxu0 0.0
        %860 = vmatpush1.xpose.msra.mxu0 %v475
        %861 = vmatprep.subr.mxu0 0.0
        %862 = vmatpush1.xpose.msra.mxu0 %v478
        %863 = vmatprep.subr.mxu0 0.0
        %864 = vmatpush1.xpose.msra.mxu0 %v481
        %865 = vmatprep.subr.mxu0 0.0
        %866 = vmatpush1.xpose.msra.mxu0 %v484
        %867 = vmatprep.subr.mxu0 0.0
        %868 = vmatpush1.xpose.msra.mxu0 %v487
        %869 = vmatprep.subr.mxu0 0.0
        %870 = vmatpush1.xpose.msra.mxu0 %v490
        %871 = vmatprep.subr.mxu0 0.0
        %872 = vmatpush1.xpose.msra.mxu0 %v493
        %873 = vmatprep.subr.mxu0 0.0
        %874 = vmatpush1.xpose.msra.mxu0 %v496
        %875 = vmatprep.subr.mxu0 0.0
        %876 = vmatpush1.xpose.msra.mxu0 %v499
        %877 = vmatprep.subr.mxu0 0.0
        %878 = vmatpush1.xpose.msra.mxu0 %v502
        %879 = vmatprep.subr.mxu0 0.0
        %880 = vmatpush1.xpose.msra.mxu0 %v505
        %881 = vmatprep.subr.mxu0 0.0
        %882 = vmatpush1.xpose.msra.mxu0 %v508
        %883 = vmatprep.subr.mxu0 0.0
        %884 = vmatpush1.xpose.msra.mxu0 %v511
        %885 = vmatprep.subr.mxu0 0.0
        %886 = vmatpush1.xpose.msra.mxu0 %v514
        %887 = vmatprep.subr.mxu0 0.0
        %888 = vmatpush1.xpose.msra.mxu0 %v517
        %889 = vmatprep.subr.mxu0 0.0
        %890 = vmatpush1.xpose.msra.mxu0 %v520
        %891 = vmatprep.subr.mxu0 0.0
        %892 = vmatpush1.xpose.msra.mxu0 %v523
        %893 = vmatprep.subr.mxu0 0.0
        %894 = vmatpush1.xpose.msra.mxu0 %v526
        %895 = vmatprep.subr.mxu0 0.0
        %896 = vmatpush1.xpose.msra.mxu0 %v529
        %897 = vmatprep.subr.mxu0 0.0
        %898 = vmatpush1.xpose.msra.mxu0 %v532
        %899 = vmatprep.subr.mxu0 0.0
        %900 = vmatpush1.xpose.msra.mxu0 %v535
        %901 = vmatprep.subr.mxu0 0.0
        %902 = vmatpush1.xpose.msra.mxu0 %v538
        %903 = vmatprep.subr.mxu0 0.0
        %904 = vmatpush1.xpose.msra.mxu0 %v541
        %905 = vmatprep.subr.mxu0 0.0
        %906 = vmatpush1.xpose.msra.mxu0 %v544
        %907 = vmatprep.subr.mxu0 0.0
        %908 = vmatpush1.xpose.msra.mxu0 %v547
        %909 = vmatprep.subr.mxu0 0.0
        %910 = vmatpush1.xpose.msra.mxu0 %v550
        %911 = vmatprep.subr.mxu0 0.0
        %912 = vmatpush1.xpose.msra.mxu0 %v553
        %913 = vmatprep.subr.mxu0 0.0
        %914 = vmatpush1.xpose.msra.mxu0 %v556
        %915 = vmatprep.subr.mxu0 0.0
        %916 = vmatpush1.xpose.msra.mxu0 %v559
        %917 = vmatprep.subr.mxu0 0.0
        %918 = vmatpush1.xpose.msra.mxu0 %v562
        %919 = vmatprep.mubr.f32.mxu0 0.0
        %920 = vmatmul.mubr.f32.gmra.mrb[0].mxu0 %v844
        %v921 = vpop.f32.mrb[0].mxu0
        %v922 = vadd.f32 %v821, %v921
        %v923 = vpop.f32.mrb[0].mxu0
        %v924 = vadd.f32 %v823, %v923
        %925 = vmatprep.mubr.f32.mxu0 0.0
        %926 = vmatmul.mubr.f32.gmra.mrb[0].mxu0 %v847
        %v927 = vpop.f32.mrb[0].mxu0
        %v928 = vadd.f32 %v827, %v927
        %v929 = vpop.f32.mrb[0].mxu0
        %v930 = vadd.f32 %v829, %v929
        %931 = vmatprep.mubr.f32.mxu0 0.0
        %932 = vmatmul.mubr.f32.gmra.mrb[0].mxu0 %v850
        %v933 = vpop.f32.mrb[0].mxu0
        %v934 = vadd.f32 %v833, %v933
        %v935 = vpop.f32.mrb[0].mxu0
        %v936 = vadd.f32 %v835, %v935
        %937 = vmatprep.mubr.f32.mxu0 0.0
        %938 = vmatmul.mubr.f32.gmra.mrb[0].mxu0 %v853
        %v939 = vpop.f32.mrb[0].mxu0
        %v940 = vadd.f32 %v839, %v939
        %v941 = vpop.f32.mrb[0].mxu0
        %v942 = vadd.f32 %v841, %v941
        %943 = vdwg.mxu0
        %945 = vset.pattern.permute.xlu0 0
        %946 = vperm.xlu0 %945, %v381
        %v947 = vpop.permute.xlu0 %946
        %950 = vset.pattern.permute.xlu0 0
        %951 = vperm.xlu0 %950, %v382
        %v952 = vpop.permute.xlu0 %951
        %955 = vset.pattern.permute.xlu0 0
        %956 = vperm.xlu0 %955, %v383
        %v957 = vpop.permute.xlu0 %956
        %960 = vset.pattern.permute.xlu0 0
        %961 = vperm.xlu0 %960, %v384
        %v962 = vpop.permute.xlu0 %961
        %v964 = vadd.f32 %v922, %v947
        %v965 = vadd.f32 %v924, %v947
        %v966 = vadd.f32 %v928, %v952
        %v967 = vadd.f32 %v930, %v952
        %v968 = vadd.f32 %v934, %v957
        %v969 = vadd.f32 %v936, %v957
        %v970 = vadd.f32 %v940, %v962
        %v971 = vadd.f32 %v942, %v962
        %v972 = vmax.f32 %v964, 0.0
        %v973 = vmax.f32 %v965, 0.0
        %v974 = vmax.f32 %v966, 0.0
        %v975 = vmax.f32 %v967, 0.0
        %v976 = vmax.f32 %v968, 0.0
        %v977 = vmax.f32 %v969, 0.0
        %v978 = vmax.f32 %v970, 0.0
        %v979 = vmax.f32 %v971, 0.0
        %981 = vset.pattern.permute.xlu0 0
        %982 = vperm.xlu0 %981, %v386
        %v983 = vpop.permute.xlu0 %982
        %986 = vset.pattern.permute.xlu0 0
        %987 = vperm.xlu0 %986, %v387
        %v988 = vpop.permute.xlu0 %987
        %991 = vset.pattern.permute.xlu0 0
        %992 = vperm.xlu0 %991, %v388
        %v993 = vpop.permute.xlu0 %992
        %996 = vset.pattern.permute.xlu0 0
        %997 = vperm.xlu0 %996, %v389
        %v998 = vpop.permute.xlu0 %997
        %v1001 = vsel %vm666, %v367, 0
        %v1004 = vsel %vm666, %v368, 0
        %v1007 = vsel %vm666, %v369, 0
        %v1010 = vsel %vm666, %v370, 0
        %1012 = vmatprep.subr.mxu0 %v654
        %1013 = vmatpush1.msra.mxu0 %v653
        %1014 = vmatprep.subr.mxu0 %v656
        %1015 = vmatpush1.msra.mxu0 %v655
        %1016 = vmatprep.subr.mxu0 %v658
        %1017 = vmatpush1.msra.mxu0 %v657
        %1018 = vmatprep.subr.mxu0 %v660
        %1019 = vmatpush1.msra.mxu0 %v659
        %1020 = vmatprep.subr.mxu0 0.0
        %1021 = vmatpush1.msra.mxu0 0.0
        %1022 = vmatprep.subr.mxu0 0.0
        %1023 = vmatpush1.msra.mxu0 0.0
        %1024 = vmatprep.subr.mxu0 0.0
        %1025 = vmatpush1.msra.mxu0 0.0
        %1026 = vmatprep.subr.mxu0 0.0
        %1027 = vmatpush1.msra.mxu0 0.0
        %1028 = vmatprep.subr.mxu0 0.0
        %1029 = vmatpush1.msra.mxu0 0.0
        %1030 = vmatprep.subr.mxu0 0.0
        %1031 = vmatpush1.msra.mxu0 0.0
        %1032 = vmatprep.subr.mxu0 0.0
        %1033 = vmatpush1.msra.mxu0 0.0
        %1034 = vmatprep.subr.mxu0 0.0
        %1035 = vmatpush1.msra.mxu0 0.0
        %1036 = vmatprep.subr.mxu0 0.0
        %1037 = vmatpush1.msra.mxu0 0.0
        %1038 = vmatprep.subr.mxu0 0.0
        %1039 = vmatpush1.msra.mxu0 0.0
        %1040 = vmatprep.subr.mxu0 0.0
        %1041 = vmatpush1.msra.mxu0 0.0
        %1042 = vmatprep.subr.mxu0 0.0
        %1043 = vmatpush1.msra.mxu0 0.0
        %1044 = vmatprep.subr.mxu0 0.0
        %1045 = vmatpush1.msra.mxu0 0.0
        %1046 = vmatprep.subr.mxu0 0.0
        %1047 = vmatpush1.msra.mxu0 0.0
        %1048 = vmatprep.subr.mxu0 0.0
        %1049 = vmatpush1.msra.mxu0 0.0
        %1050 = vmatprep.subr.mxu0 0.0
        %1051 = vmatpush1.msra.mxu0 0.0
        %1052 = vmatprep.subr.mxu0 0.0
        %1053 = vmatpush1.msra.mxu0 0.0
        %1054 = vmatprep.subr.mxu0 0.0
        %1055 = vmatpush1.msra.mxu0 0.0
        %1056 = vmatprep.subr.mxu0 0.0
        %1057 = vmatpush1.msra.mxu0 0.0
        %1058 = vmatprep.subr.mxu0 0.0
        %1059 = vmatpush1.msra.mxu0 0.0
        %1060 = vmatprep.subr.mxu0 0.0
        %1061 = vmatpush1.msra.mxu0 0.0
        %1062 = vmatprep.subr.mxu0 0.0
        %1063 = vmatpush1.msra.mxu0 0.0
        %1064 = vmatprep.subr.mxu0 0.0
        %1065 = vmatpush1.msra.mxu0 0.0
        %1066 = vmatprep.subr.mxu0 0.0
        %1067 = vmatpush1.msra.mxu0 0.0
        %1068 = vmatprep.subr.mxu0 0.0
        %1069 = vmatpush1.msra.mxu0 0.0
        %1070 = vmatprep.subr.mxu0 0.0
        %1071 = vmatpush1.msra.mxu0 0.0
        %1072 = vmatprep.subr.mxu0 0.0
        %1073 = vmatpush1.msra.mxu0 0.0
        %1074 = vmatprep.subr.mxu0 0.0
        %1075 = vmatpush1.msra.mxu0 0.0
        %1076 = vmatprep.mubr.f32.mxu0 0.0
        %1077 = vmatmul.mubr.f32.gmra.mrb[0].mxu0 %v1001
        %v1078 = vpop.f32.mrb[0].mxu0
        %v1079 = vadd.f32 %v983, %v1078
        %v1080 = vpop.f32.mrb[0].mxu0
        %v1081 = vadd.f32 %v983, %v1080
        %1082 = vmatprep.mubr.f32.mxu0 0.0
        %1083 = vmatmul.mubr.f32.gmra.mrb[0].mxu0 %v1004
        %v1084 = vpop.f32.mrb[0].mxu0
        %v1085 = vadd.f32 %v988, %v1084
        %v1086 = vpop.f32.mrb[0].mxu0
        %v1087 = vadd.f32 %v988, %v1086
        %1088 = vmatprep.mubr.f32.mxu0 0.0
        %1089 = vmatmul.mubr.f32.gmra.mrb[0].mxu0 %v1007
        %v1090 = vpop.f32.mrb[0].mxu0
        %v1091 = vadd.f32 %v993, %v1090
        %v1092 = vpop.f32.mrb[0].mxu0
        %v1093 = vadd.f32 %v993, %v1092
        %1094 = vmatprep.mubr.f32.mxu0 0.0
        %1095 = vmatmul.mubr.f32.gmra.mrb[0].mxu0 %v1010
        %v1096 = vpop.f32.mrb[0].mxu0
        %v1097 = vadd.f32 %v998, %v1096
        %v1098 = vpop.f32.mrb[0].mxu0
        %v1099 = vadd.f32 %v998, %v1098
        %1100 = vdwg.mxu0
        %v1101 = vmax.f32 %v1079, 0.0
        %v1102 = vmax.f32 %v1081, 0.0
        %v1103 = vmax.f32 %v1085, 0.0
        %v1104 = vmax.f32 %v1087, 0.0
        %v1105 = vmax.f32 %v1091, 0.0
        %v1106 = vmax.f32 %v1093, 0.0
        %v1107 = vmax.f32 %v1097, 0.0
        %v1108 = vmax.f32 %v1099, 0.0
        %1110 = vset.pattern.permute.xlu0 0
        %1111 = vperm.xlu0 %1110, %v391
        %v1112 = vpop.permute.xlu0 %1111
        %1115 = vset.pattern.permute.xlu0 0
        %1116 = vperm.xlu0 %1115, %v392
        %v1117 = vpop.permute.xlu0 %1116
        %1120 = vset.pattern.permute.xlu0 0
        %1121 = vperm.xlu0 %1120, %v393
        %v1122 = vpop.permute.xlu0 %1121
        %1125 = vset.pattern.permute.xlu0 0
        %1126 = vperm.xlu0 %1125, %v394
        %v1127 = vpop.permute.xlu0 %1126
        %v1130 = vsel %vm666, %v372, 0
        %v1133 = vsel %vm666, %v373, 0
        %v1136 = vsel %vm666, %v374, 0
        %v1139 = vsel %vm666, %v375, 0
        %1141 = vmatprep.subr.mxu0 %v973
        %1142 = vmatpush1.msra.mxu0 %v972
        %1143 = vmatprep.subr.mxu0 %v975
        %1144 = vmatpush1.msra.mxu0 %v974
        %1145 = vmatprep.subr.mxu0 %v977
        %1146 = vmatpush1.msra.mxu0 %v976
        %1147 = vmatprep.subr.mxu0 %v979
        %1148 = vmatpush1.msra.mxu0 %v978
        %1149 = vmatprep.subr.mxu0 0.0
        %1150 = vmatpush1.msra.mxu0 0.0
        %1151 = vmatprep.subr.mxu0 0.0
        %1152 = vmatpush1.msra.mxu0 0.0
        %1153 = vmatprep.subr.mxu0 0.0
        %1154 = vmatpush1.msra.mxu0 0.0
        %1155 = vmatprep.subr.mxu0 0.0
        %1156 = vmatpush1.msra.mxu0 0.0
        %1157 = vmatprep.subr.mxu0 0.0
        %1158 = vmatpush1.msra.mxu0 0.0
        %1159 = vmatprep.subr.mxu0 0.0
        %1160 = vmatpush1.msra.mxu0 0.0
        %1161 = vmatprep.subr.mxu0 0.0
        %1162 = vmatpush1.msra.mxu0 0.0
        %1163 = vmatprep.subr.mxu0 0.0
        %1164 = vmatpush1.msra.mxu0 0.0
        %1165 = vmatprep.subr.mxu0 0.0
        %1166 = vmatpush1.msra.mxu0 0.0
        %1167 = vmatprep.subr.mxu0 0.0
        %1168 = vmatpush1.msra.mxu0 0.0
        %1169 = vmatprep.subr.mxu0 0.0
        %1170 = vmatpush1.msra.mxu0 0.0
        %1171 = vmatprep.subr.mxu0 0.0
        %1172 = vmatpush1.msra.mxu0 0.0
        %1173 = vmatprep.subr.mxu0 0.0
        %1174 = vmatpush1.msra.mxu0 0.0
        %1175 = vmatprep.subr.mxu0 0.0
        %1176 = vmatpush1.msra.mxu0 0.0
        %1177 = vmatprep.subr.mxu0 0.0
        %1178 = vmatpush1.msra.mxu0 0.0
        %1179 = vmatprep.subr.mxu0 0.0
        %1180 = vmatpush1.msra.mxu0 0.0
        %1181 = vmatprep.subr.mxu0 0.0
        %1182 = vmatpush1.msra.mxu0 0.0
        %1183 = vmatprep.subr.mxu0 0.0
        %1184 = vmatpush1.msra.mxu0 0.0
        %1185 = vmatprep.subr.mxu0 0.0
        %1186 = vmatpush1.msra.mxu0 0.0
        %1187 = vmatprep.subr.mxu0 0.0
        %1188 = vmatpush1.msra.mxu0 0.0
        %1189 = vmatprep.subr.mxu0 0.0
        %1190 = vmatpush1.msra.mxu0 0.0
        %1191 = vmatprep.subr.mxu0 0.0
        %1192 = vmatpush1.msra.mxu0 0.0
        %1193 = vmatprep.subr.mxu0 0.0
        %1194 = vmatpush1.msra.mxu0 0.0
        %1195 = vmatprep.subr.mxu0 0.0
        %1196 = vmatpush1.msra.mxu0 0.0
        %1197 = vmatprep.subr.mxu0 0.0
        %1198 = vmatpush1.msra.mxu0 0.0
        %1199 = vmatprep.subr.mxu0 0.0
        %1200 = vmatpush1.msra.mxu0 0.0
        %1201 = vmatprep.subr.mxu0 0.0
        %1202 = vmatpush1.msra.mxu0 0.0
        %1203 = vmatprep.subr.mxu0 0.0
        %1204 = vmatpush1.msra.mxu0 0.0
        %1205 = vmatprep.mubr.f32.mxu0 0.0
        %1206 = vmatmul.mubr.f32.gmra.mrb[0].mxu0 %v1130
        %v1207 = vpop.f32.mrb[0].mxu0
        %v1208 = vadd.f32 %v1112, %v1207
        %v1209 = vpop.f32.mrb[0].mxu0
        %v1210 = vadd.f32 %v1112, %v1209
        %1211 = vmatprep.mubr.f32.mxu0 0.0
        %1212 = vmatmul.mubr.f32.gmra.mrb[0].mxu0 %v1133
        %v1213 = vpop.f32.mrb[0].mxu0
        %v1214 = vadd.f32 %v1117, %v1213
        %v1215 = vpop.f32.mrb[0].mxu0
        %v1216 = vadd.f32 %v1117, %v1215
        %1217 = vmatprep.mubr.f32.mxu0 0.0
        %1218 = vmatmul.mubr.f32.gmra.mrb[0].mxu0 %v1136
        %v1219 = vpop.f32.mrb[0].mxu0
        %v1220 = vadd.f32 %v1122, %v1219
        %v1221 = vpop.f32.mrb[0].mxu0
        %v1222 = vadd.f32 %v1122, %v1221
        %1223 = vmatprep.mubr.f32.mxu0 0.0
        %1224 = vmatmul.mubr.f32.gmra.mrb[0].mxu0 %v1139
        %v1225 = vpop.f32.mrb[0].mxu0
        %v1226 = vadd.f32 %v1127, %v1225
        %v1227 = vpop.f32.mrb[0].mxu0
        %v1228 = vadd.f32 %v1127, %v1227
        %1229 = vdwg.mxu0
        %v1230 = vmax.f32 %v1208, 0.0
        %v1231 = vmax.f32 %v1210, 0.0
        %v1232 = vmax.f32 %v1214, 0.0
        %v1233 = vmax.f32 %v1216, 0.0
        %v1234 = vmax.f32 %v1220, 0.0
        %v1235 = vmax.f32 %v1222, 0.0
        %v1236 = vmax.f32 %v1226, 0.0
        %v1237 = vmax.f32 %v1228, 0.0
        %v1238 = vmul.f32 %v1230, 0.5
        %v1239 = vmul.f32 %v1231, 0.5
        %v1240 = vmul.f32 %v1232, 0.5
        %v1241 = vmul.f32 %v1233, 0.5
        %v1242 = vmul.f32 %v1234, 0.5
        %v1243 = vmul.f32 %v1235, 0.5
        %v1244 = vmul.f32 %v1236, 0.5
        %v1245 = vmul.f32 %v1237, 0.5
        %v1246 = vadd.f32 %v1101, %v1238
        %v1247 = vadd.f32 %v1102, %v1239
        %v1248 = vadd.f32 %v1103, %v1240
        %v1249 = vadd.f32 %v1104, %v1241
        %v1250 = vadd.f32 %v1105, %v1242
        %v1251 = vadd.f32 %v1106, %v1243
        %v1252 = vadd.f32 %v1107, %v1244
        %v1253 = vadd.f32 %v1108, %v1245
        %1255 = vset.pattern.permute.xlu0 0
        %1256 = vperm.xlu0 %1255, %v402
        %v1257 = vpop.permute.xlu0 %1256
        %v1260 = vsel %vm666, %v401, 0
        %1262 = vmatprep.subr.mxu0 %v1247
        %1263 = vmatpush1.msra.mxu0 %v1246
        %1264 = vmatprep.subr.mxu0 %v1249
        %1265 = vmatpush1.msra.mxu0 %v1248
        %1266 = vmatprep.subr.mxu0 %v1251
        %1267 = vmatpush1.msra.mxu0 %v1250
        %1268 = vmatprep.subr.mxu0 %v1253
        %1269 = vmatpush1.msra.mxu0 %v1252
        %1270 = vmatprep.subr.mxu0 0.0
        %1271 = vmatpush1.msra.mxu0 0.0
        %1272 = vmatprep.subr.mxu0 0.0
        %1273 = vmatpush1.msra.mxu0 0.0
        %1274 = vmatprep.subr.mxu0 0.0
        %1275 = vmatpush1.msra.mxu0 0.0
        %1276 = vmatprep.subr.mxu0 0.0
        %1277 = vmatpush1.msra.mxu0 0.0
        %1278 = vmatprep.subr.mxu0 0.0
        %1279 = vmatpush1.msra.mxu0 0.0
        %1280 = vmatprep.subr.mxu0 0.0
        %1281 = vmatpush1.msra.mxu0 0.0
        %1282 = vmatprep.subr.mxu0 0.0
        %1283 = vmatpush1.msra.mxu0 0.0
        %1284 = vmatprep.subr.mxu0 0.0
        %1285 = vmatpush1.msra.mxu0 0.0
        %1286 = vmatprep.subr.mxu0 0.0
        %1287 = vmatpush1.msra.mxu0 0.0
        %1288 = vmatprep.subr.mxu0 0.0
        %1289 = vmatpush1.msra.mxu0 0.0
        %1290 = vmatprep.subr.mxu0 0.0
        %1291 = vmatpush1.msra.mxu0 0.0
        %1292 = vmatprep.subr.mxu0 0.0
        %1293 = vmatpush1.msra.mxu0 0.0
        %1294 = vmatprep.subr.mxu0 0.0
        %1295 = vmatpush1.msra.mxu0 0.0
        %1296 = vmatprep.subr.mxu0 0.0
        %1297 = vmatpush1.msra.mxu0 0.0
        %1298 = vmatprep.subr.mxu0 0.0
        %1299 = vmatpush1.msra.mxu0 0.0
        %1300 = vmatprep.subr.mxu0 0.0
        %1301 = vmatpush1.msra.mxu0 0.0
        %1302 = vmatprep.subr.mxu0 0.0
        %1303 = vmatpush1.msra.mxu0 0.0
        %1304 = vmatprep.subr.mxu0 0.0
        %1305 = vmatpush1.msra.mxu0 0.0
        %1306 = vmatprep.subr.mxu0 0.0
        %1307 = vmatpush1.msra.mxu0 0.0
        %1308 = vmatprep.subr.mxu0 0.0
        %1309 = vmatpush1.msra.mxu0 0.0
        %1310 = vmatprep.subr.mxu0 0.0
        %1311 = vmatpush1.msra.mxu0 0.0
        %1312 = vmatprep.subr.mxu0 0.0
        %1313 = vmatpush1.msra.mxu0 0.0
        %1314 = vmatprep.subr.mxu0 0.0
        %1315 = vmatpush1.msra.mxu0 0.0
        %1316 = vmatprep.subr.mxu0 0.0
        %1317 = vmatpush1.msra.mxu0 0.0
        %1318 = vmatprep.subr.mxu0 0.0
        %1319 = vmatpush1.msra.mxu0 0.0
        %1320 = vmatprep.subr.mxu0 0.0
        %1321 = vmatpush1.msra.mxu0 0.0
        %1322 = vmatprep.subr.mxu0 0.0
        %1323 = vmatpush1.msra.mxu0 0.0
        %1324 = vmatprep.subr.mxu0 0.0
        %1325 = vmatpush1.msra.mxu0 0.0
        %1326 = vmatprep.mubr.f32.mxu0 0.0
        %1327 = vmatmul.mubr.f32.gmra.mrb[0].mxu0 %v1260
        %v1328 = vpop.f32.mrb[0].mxu0
        %v1329 = vadd.f32 %v1257, %v1328
        %v1330 = vpop.f32.mrb[0].mxu0
        %v1331 = vadd.f32 %v1257, %v1330
        %1332 = vdwg.mxu0
        %1333 = vst [vmem:[%s338] sm:$0xff] %v1329
        %1334 = vst [vmem:[%s338 + $0x8] sm:$0xff] %v1331
        %v1335 = vld [vmem:[%s347 + $0x100] sm:$0xff]
        %v1336 = vld [vmem:[%s347 + $0x108] sm:$0xff]
        %v1337 = vld [vmem:[%s347 + $0x110] sm:$0xff]
        %v1338 = vld [vmem:[%s347 + $0x118] sm:$0xff]
        %v1339 = vld [vmem:[%s347 + $0x120] sm:$0xff]
        %v1340 = vld [vmem:[%s347 + $0x128] sm:$0xff]
        %v1341 = vld [vmem:[%s347 + $0x130] sm:$0xff]
        %v1342 = vld [vmem:[%s347 + $0x138] sm:$0xff]
        %v1343 = vld [vmem:[%s347 + $0x140] sm:$0xff]
        %v1344 = vld [vmem:[%s347 + $0x148] sm:$0xff]
        %v1345 = vld [vmem:[%s347 + $0x150] sm:$0xff]
        %v1346 = vld [vmem:[%s347 + $0x158] sm:$0xff]
        %v1347 = vld [vmem:[%s347 + $0x160] sm:$0xff]
        %v1348 = vld [vmem:[%s347 + $0x168] sm:$0xff]
        %v1349 = vld [vmem:[%s347 + $0x170] sm:$0xff]
        %v1350 = vld [vmem:[%s347 + $0x178] sm:$0xff]
        %v1351 = vld [vmem:[%s347 + $0x180] sm:$0xff]
        %v1352 = vld [vmem:[%s347 + $0x188] sm:$0xff]
        %v1353 = vld [vmem:[%s347 + $0x190] sm:$0xff]
        %v1354 = vld [vmem:[%s347 + $0x198] sm:$0xff]
        %v1355 = vld [vmem:[%s347 + $0x1a0] sm:$0xff]
        %v1356 = vld [vmem:[%s347 + $0x1a8] sm:$0xff]
        %v1357 = vld [vmem:[%s347 + $0x1b0] sm:$0xff]
        %v1358 = vld [vmem:[%s347 + $0x1b8] sm:$0xff]
        %v1359 = vld [vmem:[%s347 + $0x1c0] sm:$0xff]
        %v1360 = vld [vmem:[%s347 + $0x1c8] sm:$0xff]
        %v1361 = vld [vmem:[%s347 + $0x1d0] sm:$0xff]
        %v1362 = vld [vmem:[%s347 + $0x1d8] sm:$0xff]
        %v1363 = vld [vmem:[%s347 + $0x1e0] sm:$0xff]
        %v1364 = vld [vmem:[%s347 + $0x1e8] sm:$0xff]
        %v1365 = vld [vmem:[%s347 + $0x1f0] sm:$0xff]
        %v1366 = vld [vmem:[%s347 + $0x1f8] sm:$0xff]
        %v1368 = vsel %vm455, %v1335, 0
        %v1371 = vsel %vm455, %v1336, 0
        %v1374 = vsel %vm455, %v1337, 0
        %v1377 = vsel %vm455, %v1338, 0
        %v1380 = vsel %vm455, %v1339, 0
        %v1383 = vsel %vm455, %v1340, 0
        %v1386 = vsel %vm455, %v1341, 0
        %v1389 = vsel %vm455, %v1342, 0
        %v1392 = vsel %vm455, %v1343, 0
        %v1395 = vsel %vm455, %v1344, 0
        %v1398 = vsel %vm455, %v1345, 0
        %v1401 = vsel %vm455, %v1346, 0
        %v1404 = vsel %vm455, %v1347, 0
        %v1407 = vsel %vm455, %v1348, 0
        %v1410 = vsel %vm455, %v1349, 0
        %v1413 = vsel %vm455, %v1350, 0
        %v1416 = vsel %vm455, %v1351, 0
        %v1419 = vsel %vm455, %v1352, 0
        %v1422 = vsel %vm455, %v1353, 0
        %v1425 = vsel %vm455, %v1354, 0
        %v1428 = vsel %vm455, %v1355, 0
        %v1431 = vsel %vm455, %v1356, 0
        %v1434 = vsel %vm455, %v1357, 0
        %v1437 = vsel %vm455, %v1358, 0
        %v1440 = vsel %vm455, %v1359, 0
        %v1443 = vsel %vm455, %v1360, 0
        %v1446 = vsel %vm455, %v1361, 0
        %v1449 = vsel %vm455, %v1362, 0
        %v1452 = vsel %vm455, %v1363, 0
        %v1455 = vsel %vm455, %v1364, 0
        %v1458 = vsel %vm455, %v1365, 0
        %v1461 = vsel %vm455, %v1366, 0
        %1463 = vmatprep.subr.mxu0 0.0
        %1464 = vmatpush1.xpose.msra.mxu0 %v1368
        %1465 = vmatprep.subr.mxu0 0.0
        %1466 = vmatpush1.xpose.msra.mxu0 %v1371
        %1467 = vmatprep.subr.mxu0 0.0
        %1468 = vmatpush1.xpose.msra.mxu0 %v1374
        %1469 = vmatprep.subr.mxu0 0.0
        %1470 = vmatpush1.xpose.msra.mxu0 %v1377
        %1471 = vmatprep.subr.mxu0 0.0
        %1472 = vmatpush1.xpose.msra.mxu0 %v1380
        %1473 = vmatprep.subr.mxu0 0.0
        %1474 = vmatpush1.xpose.msra.mxu0 %v1383
        %1475 = vmatprep.subr.mxu0 0.0
        %1476 = vmatpush1.xpose.msra.mxu0 %v1386
        %1477 = vmatprep.subr.mxu0 0.0
        %1478 = vmatpush1.xpose.msra.mxu0 %v1389
        %1479 = vmatprep.subr.mxu0 0.0
        %1480 = vmatpush1.xpose.msra.mxu0 %v1392
        %1481 = vmatprep.subr.mxu0 0.0
        %1482 = vmatpush1.xpose.msra.mxu0 %v1395
        %1483 = vmatprep.subr.mxu0 0.0
        %1484 = vmatpush1.xpose.msra.mxu0 %v1398
        %1485 = vmatprep.subr.mxu0 0.0
        %1486 = vmatpush1.xpose.msra.mxu0 %v1401
        %1487 = vmatprep.subr.mxu0 0.0
        %1488 = vmatpush1.xpose.msra.mxu0 %v1404
        %1489 = vmatprep.subr.mxu0 0.0
        %1490 = vmatpush1.xpose.msra.mxu0 %v1407
        %1491 = vmatprep.subr.mxu0 0.0
        %1492 = vmatpush1.xpose.msra.mxu0 %v1410
        %1493 = vmatprep.subr.mxu0 0.0
        %1494 = vmatpush1.xpose.msra.mxu0 %v1413
        %1495 = vmatprep.subr.mxu0 0.0
        %1496 = vmatpush1.xpose.msra.mxu0 %v1416
        %1497 = vmatprep.subr.mxu0 0.0
        %1498 = vmatpush1.xpose.msra.mxu0 %v1419
        %1499 = vmatprep.subr.mxu0 0.0
        %1500 = vmatpush1.xpose.msra.mxu0 %v1422
        %1501 = vmatprep.subr.mxu0 0.0
        %1502 = vmatpush1.xpose.msra.mxu0 %v1425
        %1503 = vmatprep.subr.mxu0 0.0
        %1504 = vmatpush1.xpose.msra.mxu0 %v1428
        %1505 = vmatprep.subr.mxu0 0.0
        %1506 = vmatpush1.xpose.msra.mxu0 %v1431
        %1507 = vmatprep.subr.mxu0 0.0
        %1508 = vmatpush1.xpose.msra.mxu0 %v1434
        %1509 = vmatprep.subr.mxu0 0.0
        %1510 = vmatpush1.xpose.msra.mxu0 %v1437
        %1511 = vmatprep.subr.mxu0 0.0
        %1512 = vmatpush1.xpose.msra.mxu0 %v1440
        %1513 = vmatprep.subr.mxu0 0.0
        %1514 = vmatpush1.xpose.msra.mxu0 %v1443
        %1515 = vmatprep.subr.mxu0 0.0
        %1516 = vmatpush1.xpose.msra.mxu0 %v1446
        %1517 = vmatprep.subr.mxu0 0.0
        %1518 = vmatpush1.xpose.msra.mxu0 %v1449
        %1519 = vmatprep.subr.mxu0 0.0
        %1520 = vmatpush1.xpose.msra.mxu0 %v1452
        %1521 = vmatprep.subr.mxu0 0.0
        %1522 = vmatpush1.xpose.msra.mxu0 %v1455
        %1523 = vmatprep.subr.mxu0 0.0
        %1524 = vmatpush1.xpose.msra.mxu0 %v1458
        %1525 = vmatprep.subr.mxu0 0.0
        %1526 = vmatpush1.xpose.msra.mxu0 %v1461
        %1527 = vmatprep.mubr.f32.mxu0 0.0
        %1528 = vmatmul.mubr.f32.gmra.mrb[0].mxu0 %v457
        %v1529 = vpop.f32.mrb[0].mxu0
        %v1530 = vadd.f32 %v438, %v1529
        %v1531 = vpop.f32.mrb[0].mxu0
        %v1532 = vadd.f32 %v438, %v1531
        %1533 = vmatprep.mubr.f32.mxu0 0.0
        %1534 = vmatmul.mubr.f32.gmra.mrb[0].mxu0 %v460
        %v1535 = vpop.f32.mrb[0].mxu0
        %v1536 = vadd.f32 %v443, %v1535
        %v1537 = vpop.f32.mrb[0].mxu0
        %v1538 = vadd.f32 %v443, %v1537
        %1539 = vmatprep.mubr.f32.mxu0 0.0
        %1540 = vmatmul.mubr.f32.gmra.mrb[0].mxu0 %v463
        %v1541 = vpop.f32.mrb[0].mxu0
        %v1542 = vadd.f32 %v448, %v1541
        %v1543 = vpop.f32.mrb[0].mxu0
        %v1544 = vadd.f32 %v448, %v1543
        %1545 = vmatprep.mubr.f32.mxu0 0.0
        %1546 = vmatmul.mubr.f32.gmra.mrb[0].mxu0 %v466
        %v1547 = vpop.f32.mrb[0].mxu0
        %v1548 = vadd.f32 %v453, %v1547
        %v1549 = vpop.f32.mrb[0].mxu0
        %v1550 = vadd.f32 %v453, %v1549
        %1551 = vdwg.mxu0
        %v1552 = vmax.f32 %v1530, 0.0
        %v1553 = vmax.f32 %v1532, 0.0
        %v1554 = vmax.f32 %v1536, 0.0
        %v1555 = vmax.f32 %v1538, 0.0
        %v1556 = vmax.f32 %v1542, 0.0
        %v1557 = vmax.f32 %v1544, 0.0
        %v1558 = vmax.f32 %v1548, 0.0
        %v1559 = vmax.f32 %v1550, 0.0
        %1560 = vmatprep.subr.mxu0 %v1553
        %1561 = vmatpush1.msra.mxu0 %v1552
        %1562 = vmatprep.subr.mxu0 %v1555
        %1563 = vmatpush1.msra.mxu0 %v1554
        %1564 = vmatprep.subr.mxu0 %v1557
        %1565 = vmatpush1.msra.mxu0 %v1556
        %1566 = vmatprep.subr.mxu0 %v1559
        %1567 = vmatpush1.msra.mxu0 %v1558
        %1568 = vmatprep.subr.mxu0 0.0
        %1569 = vmatpush1.msra.mxu0 0.0
        %1570 = vmatprep.subr.mxu0 0.0
        %1571 = vmatpush1.msra.mxu0 0.0
        %1572 = vmatprep.subr.mxu0 0.0
        %1573 = vmatpush1.msra.mxu0 0.0
        %1574 = vmatprep.subr.mxu0 0.0
        %1575 = vmatpush1.msra.mxu0 0.0
        %1576 = vmatprep.subr.mxu0 0.0
        %1577 = vmatpush1.msra.mxu0 0.0
        %1578 = vmatprep.subr.mxu0 0.0
        %1579 = vmatpush1.msra.mxu0 0.0
        %1580 = vmatprep.subr.mxu0 0.0
        %1581 = vmatpush1.msra.mxu0 0.0
        %1582 = vmatprep.subr.mxu0 0.0
        %1583 = vmatpush1.msra.mxu0 0.0
        %1584 = vmatprep.subr.mxu0 0.0
        %1585 = vmatpush1.msra.mxu0 0.0
        %1586 = vmatprep.subr.mxu0 0.0
        %1587 = vmatpush1.msra.mxu0 0.0
        %1588 = vmatprep.subr.mxu0 0.0
        %1589 = vmatpush1.msra.mxu0 0.0
        %1590 = vmatprep.subr.mxu0 0.0
        %1591 = vmatpush1.msra.mxu0 0.0
        %1592 = vmatprep.subr.mxu0 0.0
        %1593 = vmatpush1.msra.mxu0 0.0
        %1594 = vmatprep.subr.mxu0 0.0
        %1595 = vmatpush1.msra.mxu0 0.0
        %1596 = vmatprep.subr.mxu0 0.0
        %1597 = vmatpush1.msra.mxu0 0.0
        %1598 = vmatprep.subr.mxu0 0.0
        %1599 = vmatpush1.msra.mxu0 0.0
        %1600 = vmatprep.subr.mxu0 0.0
        %1601 = vmatpush1.msra.mxu0 0.0
        %1602 = vmatprep.subr.mxu0 0.0
        %1603 = vmatpush1.msra.mxu0 0.0
        %1604 = vmatprep.subr.mxu0 0.0
        %1605 = vmatpush1.msra.mxu0 0.0
        %1606 = vmatprep.subr.mxu0 0.0
        %1607 = vmatpush1.msra.mxu0 0.0
        %1608 = vmatprep.subr.mxu0 0.0
        %1609 = vmatpush1.msra.mxu0 0.0
        %1610 = vmatprep.subr.mxu0 0.0
        %1611 = vmatpush1.msra.mxu0 0.0
        %1612 = vmatprep.subr.mxu0 0.0
        %1613 = vmatpush1.msra.mxu0 0.0
        %1614 = vmatprep.subr.mxu0 0.0
        %1615 = vmatpush1.msra.mxu0 0.0
        %1616 = vmatprep.subr.mxu0 0.0
        %1617 = vmatpush1.msra.mxu0 0.0
        %1618 = vmatprep.subr.mxu0 0.0
        %1619 = vmatpush1.msra.mxu0 0.0
        %1620 = vmatprep.subr.mxu0 0.0
        %1621 = vmatpush1.msra.mxu0 0.0
        %1622 = vmatprep.subr.mxu0 0.0
        %1623 = vmatpush1.msra.mxu0 0.0
        %1624 = vmatprep.mubr.f32.mxu0 0.0
        %1625 = vmatmul.mubr.f32.gmra.mrb[0].mxu0 %v668
        %v1626 = vpop.f32.mrb[0].mxu0
        %v1627 = vadd.f32 %v664, %v1626
        %v1628 = vpop.f32.mrb[0].mxu0
        %v1629 = vadd.f32 %v664, %v1628
        %1630 = vdwg.mxu0
        %1631 = vmatprep.subr.mxu0 %v1629
        %1632 = vmatpush1.msra.mxu0 %v1627
        %1633 = vmatprep.subr.mxu0 0.0
        %1634 = vmatpush1.msra.mxu0 0.0
        %1635 = vmatprep.subr.mxu0 0.0
        %1636 = vmatpush1.msra.mxu0 0.0
        %1637 = vmatprep.subr.mxu0 0.0
        %1638 = vmatpush1.msra.mxu0 0.0
        %1639 = vmatprep.subr.mxu0 0.0
        %1640 = vmatpush1.msra.mxu0 0.0
        %1641 = vmatprep.subr.mxu0 0.0
        %1642 = vmatpush1.msra.mxu0 0.0
        %1643 = vmatprep.subr.mxu0 0.0
        %1644 = vmatpush1.msra.mxu0 0.0
        %1645 = vmatprep.subr.mxu0 0.0
        %1646 = vmatpush1.msra.mxu0 0.0
        %1647 = vmatprep.subr.mxu0 0.0
        %1648 = vmatpush1.msra.mxu0 0.0
        %1649 = vmatprep.subr.mxu0 0.0
        %1650 = vmatpush1.msra.mxu0 0.0
        %1651 = vmatprep.subr.mxu0 0.0
        %1652 = vmatpush1.msra.mxu0 0.0
        %1653 = vmatprep.subr.mxu0 0.0
        %1654 = vmatpush1.msra.mxu0 0.0
        %1655 = vmatprep.subr.mxu0 0.0
        %1656 = vmatpush1.msra.mxu0 0.0
        %1657 = vmatprep.subr.mxu0 0.0
        %1658 = vmatpush1.msra.mxu0 0.0
        %1659 = vmatprep.subr.mxu0 0.0
        %1660 = vmatpush1.msra.mxu0 0.0
        %1661 = vmatprep.subr.mxu0 0.0
        %1662 = vmatpush1.msra.mxu0 0.0
        %1663 = vmatprep.subr.mxu0 0.0
        %1664 = vmatpush1.msra.mxu0 0.0
        %1665 = vmatprep.subr.mxu0 0.0
        %1666 = vmatpush1.msra.mxu0 0.0
        %1667 = vmatprep.subr.mxu0 0.0
        %1668 = vmatpush1.msra.mxu0 0.0
        %1669 = vmatprep.subr.mxu0 0.0
        %1670 = vmatpush1.msra.mxu0 0.0
        %1671 = vmatprep.subr.mxu0 0.0
        %1672 = vmatpush1.msra.mxu0 0.0
        %1673 = vmatprep.subr.mxu0 0.0
        %1674 = vmatpush1.msra.mxu0 0.0
        %1675 = vmatprep.subr.mxu0 0.0
        %1676 = vmatpush1.msra.mxu0 0.0
        %1677 = vmatprep.subr.mxu0 0.0
        %1678 = vmatpush1.msra.mxu0 0.0
        %1679 = vmatprep.subr.mxu0 0.0
        %1680 = vmatpush1.msra.mxu0 0.0
        %1681 = vmatprep.subr.mxu0 0.0
        %1682 = vmatpush1.msra.mxu0 0.0
        %1683 = vmatprep.subr.mxu0 0.0
        %1684 = vmatpush1.msra.mxu0 0.0
        %1685 = vmatprep.subr.mxu0 0.0
        %1686 = vmatpush1.msra.mxu0 0.0
        %1687 = vmatprep.subr.mxu0 0.0
        %1688 = vmatpush1.msra.mxu0 0.0
        %1689 = vmatprep.subr.mxu0 0.0
        %1690 = vmatpush1.msra.mxu0 0.0
        %1691 = vmatprep.subr.mxu0 0.0
        %1692 = vmatpush1.msra.mxu0 0.0
        %1693 = vmatprep.subr.mxu0 0.0
        %1694 = vmatpush1.msra.mxu0 0.0
        %1695 = vmatprep.mubr.f32.mxu0 0.0
        %1696 = vmatmul.mubr.f32.gmra.mrb[0].mxu0 %v743
        %v1697 = vpop.f32.mrb[0].mxu0
        %v1698 = vadd.f32 0.0, %v1697
        %v1699 = vpop.f32.mrb[0].mxu0
        %v1700 = vadd.f32 0.0, %v1699
        %1701 = vmatprep.mubr.f32.mxu0 0.0
        %1702 = vmatmul.mubr.f32.gmra.mrb[0].mxu0 %v746
        %v1703 = vpop.f32.mrb[0].mxu0
        %v1704 = vadd.f32 0.0, %v1703
        %v1705 = vpop.f32.mrb[0].mxu0
        %v1706 = vadd.f32 0.0, %v1705
        %1707 = vmatprep.mubr.f32.mxu0 0.0
        %1708 = vmatmul.mubr.f32.gmra.mrb[0].mxu0 %v749
        %v1709 = vpop.f32.mrb[0].mxu0
        %v1710 = vadd.f32 0.0, %v1709
        %v1711 = vpop.f32.mrb[0].mxu0
        %v1712 = vadd.f32 0.0, %v1711
        %1713 = vmatprep.mubr.f32.mxu0 0.0
        %1714 = vmatmul.mubr.f32.gmra.mrb[0].mxu0 %v752
        %v1715 = vpop.f32.mrb[0].mxu0
        %v1716 = vadd.f32 0.0, %v1715
        %v1717 = vpop.f32.mrb[0].mxu0
        %v1718 = vadd.f32 0.0, %v1717
        %1719 = vdwg.mxu0
        %1720 = vmatprep.subr.mxu0 0.0
        %1721 = vmatpush1.xpose.msra.mxu0 %v1368
        %1722 = vmatprep.subr.mxu0 0.0
        %1723 = vmatpush1.xpose.msra.mxu0 %v1371
        %1724 = vmatprep.subr.mxu0 0.0
        %1725 = vmatpush1.xpose.msra.mxu0 %v1374
        %1726 = vmatprep.subr.mxu0 0.0
        %1727 = vmatpush1.xpose.msra.mxu0 %v1377
        %1728 = vmatprep.subr.mxu0 0.0
        %1729 = vmatpush1.xpose.msra.mxu0 %v1380
        %1730 = vmatprep.subr.mxu0 0.0
        %1731 = vmatpush1.xpose.msra.mxu0 %v1383
        %1732 = vmatprep.subr.mxu0 0.0
        %1733 = vmatpush1.xpose.msra.mxu0 %v1386
        %1734 = vmatprep.subr.mxu0 0.0
        %1735 = vmatpush1.xpose.msra.mxu0 %v1389
        %1736 = vmatprep.subr.mxu0 0.0
        %1737 = vmatpush1.xpose.msra.mxu0 %v1392
        %1738 = vmatprep.subr.mxu0 0.0
        %1739 = vmatpush1.xpose.msra.mxu0 %v1395
        %1740 = vmatprep.subr.mxu0 0.0
        %1741 = vmatpush1.xpose.msra.mxu0 %v1398
        %1742 = vmatprep.subr.mxu0 0.0
        %1743 = vmatpush1.xpose.msra.mxu0 %v1401
        %1744 = vmatprep.subr.mxu0 0.0
        %1745 = vmatpush1.xpose.msra.mxu0 %v1404
        %1746 = vmatprep.subr.mxu0 0.0
        %1747 = vmatpush1.xpose.msra.mxu0 %v1407
        %1748 = vmatprep.subr.mxu0 0.0
        %1749 = vmatpush1.xpose.msra.mxu0 %v1410
        %1750 = vmatprep.subr.mxu0 0.0
        %1751 = vmatpush1.xpose.msra.mxu0 %v1413
        %1752 = vmatprep.subr.mxu0 0.0
        %1753 = vmatpush1.xpose.msra.mxu0 %v1416
        %1754 = vmatprep.subr.mxu0 0.0
        %1755 = vmatpush1.xpose.msra.mxu0 %v1419
        %1756 = vmatprep.subr.mxu0 0.0
        %1757 = vmatpush1.xpose.msra.mxu0 %v1422
        %1758 = vmatprep.subr.mxu0 0.0
        %1759 = vmatpush1.xpose.msra.mxu0 %v1425
        %1760 = vmatprep.subr.mxu0 0.0
        %1761 = vmatpush1.xpose.msra.mxu0 %v1428
        %1762 = vmatprep.subr.mxu0 0.0
        %1763 = vmatpush1.xpose.msra.mxu0 %v1431
        %1764 = vmatprep.subr.mxu0 0.0
        %1765 = vmatpush1.xpose.msra.mxu0 %v1434
        %1766 = vmatprep.subr.mxu0 0.0
        %1767 = vmatpush1.xpose.msra.mxu0 %v1437
        %1768 = vmatprep.subr.mxu0 0.0
        %1769 = vmatpush1.xpose.msra.mxu0 %v1440
        %1770 = vmatprep.subr.mxu0 0.0
        %1771 = vmatpush1.xpose.msra.mxu0 %v1443
        %1772 = vmatprep.subr.mxu0 0.0
        %1773 = vmatpush1.xpose.msra.mxu0 %v1446
        %1774 = vmatprep.subr.mxu0 0.0
        %1775 = vmatpush1.xpose.msra.mxu0 %v1449
        %1776 = vmatprep.subr.mxu0 0.0
        %1777 = vmatpush1.xpose.msra.mxu0 %v1452
        %1778 = vmatprep.subr.mxu0 0.0
        %1779 = vmatpush1.xpose.msra.mxu0 %v1455
        %1780 = vmatprep.subr.mxu0 0.0
        %1781 = vmatpush1.xpose.msra.mxu0 %v1458
        %1782 = vmatprep.subr.mxu0 0.0
        %1783 = vmatpush1.xpose.msra.mxu0 %v1461
        %1784 = vmatprep.mubr.f32.mxu0 0.0
        %1785 = vmatmul.mubr.f32.gmra.mrb[0].mxu0 %v844
        %v1786 = vpop.f32.mrb[0].mxu0
        %v1787 = vadd.f32 %v1698, %v1786
        %v1788 = vpop.f32.mrb[0].mxu0
        %v1789 = vadd.f32 %v1700, %v1788
        %1790 = vmatprep.mubr.f32.mxu0 0.0
        %1791 = vmatmul.mubr.f32.gmra.mrb[0].mxu0 %v847
        %v1792 = vpop.f32.mrb[0].mxu0
        %v1793 = vadd.f32 %v1704, %v1792
        %v1794 = vpop.f32.mrb[0].mxu0
        %v1795 = vadd.f32 %v1706, %v1794
        %1796 = vmatprep.mubr.f32.mxu0 0.0
        %1797 = vmatmul.mubr.f32.gmra.mrb[0].mxu0 %v850
        %v1798 = vpop.f32.mrb[0].mxu0
        %v1799 = vadd.f32 %v1710, %v1798
        %v1800 = vpop.f32.mrb[0].mxu0
        %v1801 = vadd.f32 %v1712, %v1800
        %1802 = vmatprep.mubr.f32.mxu0 0.0
        %1803 = vmatmul.mubr.f32.gmra.mrb[0].mxu0 %v853
        %v1804 = vpop.f32.mrb[0].mxu0
        %v1805 = vadd.f32 %v1716, %v1804
        %v1806 = vpop.f32.mrb[0].mxu0
        %v1807 = vadd.f32 %v1718, %v1806
        %1808 = vdwg.mxu0
        %v1809 = vadd.f32 %v1787, %v947
        %v1810 = vadd.f32 %v1789, %v947
        %v1811 = vadd.f32 %v1793, %v952
        %v1812 = vadd.f32 %v1795, %v952
        %v1813 = vadd.f32 %v1799, %v957
        %v1814 = vadd.f32 %v1801, %v957
        %v1815 = vadd.f32 %v1805, %v962
        %v1816 = vadd.f32 %v1807, %v962
        %v1817 = vmax.f32 %v1809, 0.0
        %v1818 = vmax.f32 %v1810, 0.0
        %v1819 = vmax.f32 %v1811, 0.0
        %v1820 = vmax.f32 %v1812, 0.0
        %v1821 = vmax.f32 %v1813, 0.0
        %v1822 = vmax.f32 %v1814, 0.0
        %v1823 = vmax.f32 %v1815, 0.0
        %v1824 = vmax.f32 %v1816, 0.0
        %1825 = vmatprep.subr.mxu0 %v1553
        %1826 = vmatpush1.msra.mxu0 %v1552
        %1827 = vmatprep.subr.mxu0 %v1555
        %1828 = vmatpush1.msra.mxu0 %v1554
        %1829 = vmatprep.subr.mxu0 %v1557
        %1830 = vmatpush1.msra.mxu0 %v1556
        %1831 = vmatprep.subr.mxu0 %v1559
        %1832 = vmatpush1.msra.mxu0 %v1558
        %1833 = vmatprep.subr.mxu0 0.0
        %1834 = vmatpush1.msra.mxu0 0.0
        %1835 = vmatprep.subr.mxu0 0.0
        %1836 = vmatpush1.msra.mxu0 0.0
        %1837 = vmatprep.subr.mxu0 0.0
        %1838 = vmatpush1.msra.mxu0 0.0
        %1839 = vmatprep.subr.mxu0 0.0
        %1840 = vmatpush1.msra.mxu0 0.0
        %1841 = vmatprep.subr.mxu0 0.0
        %1842 = vmatpush1.msra.mxu0 0.0
        %1843 = vmatprep.subr.mxu0 0.0
        %1844 = vmatpush1.msra.mxu0 0.0
        %1845 = vmatprep.subr.mxu0 0.0
        %1846 = vmatpush1.msra.mxu0 0.0
        %1847 = vmatprep.subr.mxu0 0.0
        %1848 = vmatpush1.msra.mxu0 0.0
        %1849 = vmatprep.subr.mxu0 0.0
        %1850 = vmatpush1.msra.mxu0 0.0
        %1851 = vmatprep.subr.mxu0 0.0
        %1852 = vmatpush1.msra.mxu0 0.0
        %1853 = vmatprep.subr.mxu0 0.0
        %1854 = vmatpush1.msra.mxu0 0.0
        %1855 = vmatprep.subr.mxu0 0.0
        %1856 = vmatpush1.msra.mxu0 0.0
        %1857 = vmatprep.subr.mxu0 0.0
        %1858 = vmatpush1.msra.mxu0 0.0
        %1859 = vmatprep.subr.mxu0 0.0
        %1860 = vmatpush1.msra.mxu0 0.0
        %1861 = vmatprep.subr.mxu0 0.0
        %1862 = vmatpush1.msra.mxu0 0.0
        %1863 = vmatprep.subr.mxu0 0.0
        %1864 = vmatpush1.msra.mxu0 0.0
        %1865 = vmatprep.subr.mxu0 0.0
        %1866 = vmatpush1.msra.mxu0 0.0
        %1867 = vmatprep.subr.mxu0 0.0
        %1868 = vmatpush1.msra.mxu0 0.0
        %1869 = vmatprep.subr.mxu0 0.0
        %1870 = vmatpush1.msra.mxu0 0.0
        %1871 = vmatprep.subr.mxu0 0.0
        %1872 = vmatpush1.msra.mxu0 0.0
        %1873 = vmatprep.subr.mxu0 0.0
        %1874 = vmatpush1.msra.mxu0 0.0
        %1875 = vmatprep.subr.mxu0 0.0
        %1876 = vmatpush1.msra.mxu0 0.0
        %1877 = vmatprep.subr.mxu0 0.0
        %1878 = vmatpush1.msra.mxu0 0.0
        %1879 = vmatprep.subr.mxu0 0.0
        %1880 = vmatpush1.msra.mxu0 0.0
        %1881 = vmatprep.subr.mxu0 0.0
        %1882 = vmatpush1.msra.mxu0 0.0
        %1883 = vmatprep.subr.mxu0 0.0
        %1884 = vmatpush1.msra.mxu0 0.0
        %1885 = vmatprep.subr.mxu0 0.0
        %1886 = vmatpush1.msra.mxu0 0.0
        %1887 = vmatprep.subr.mxu0 0.0
        %1888 = vmatpush1.msra.mxu0 0.0
        %1889 = vmatprep.mubr.f32.mxu0 0.0
        %1890 = vmatmul.mubr.f32.gmra.mrb[0].mxu0 %v1001
        %v1891 = vpop.f32.mrb[0].mxu0
        %v1892 = vadd.f32 %v983, %v1891
        %v1893 = vpop.f32.mrb[0].mxu0
        %v1894 = vadd.f32 %v983, %v1893
        %1895 = vmatprep.mubr.f32.mxu0 0.0
        %1896 = vmatmul.mubr.f32.gmra.mrb[0].mxu0 %v1004
        %v1897 = vpop.f32.mrb[0].mxu0
        %v1898 = vadd.f32 %v988, %v1897
        %v1899 = vpop.f32.mrb[0].mxu0
        %v1900 = vadd.f32 %v988, %v1899
        %1901 = vmatprep.mubr.f32.mxu0 0.0
        %1902 = vmatmul.mubr.f32.gmra.mrb[0].mxu0 %v1007
        %v1903 = vpop.f32.mrb[0].mxu0
        %v1904 = vadd.f32 %v993, %v1903
        %v1905 = vpop.f32.mrb[0].mxu0
        %v1906 = vadd.f32 %v993, %v1905
        %1907 = vmatprep.mubr.f32.mxu0 0.0
        %1908 = vmatmul.mubr.f32.gmra.mrb[0].mxu0 %v1010
        %v1909 = vpop.f32.mrb[0].mxu0
        %v1910 = vadd.f32 %v998, %v1909
        %v1911 = vpop.f32.mrb[0].mxu0
        %v1912 = vadd.f32 %v998, %v1911
        %1913 = vdwg.mxu0
        %v1914 = vmax.f32 %v1892, 0.0
        %v1915 = vmax.f32 %v1894, 0.0
        %v1916 = vmax.f32 %v1898, 0.0
        %v1917 = vmax.f32 %v1900, 0.0
        %v1918 = vmax.f32 %v1904, 0.0
        %v1919 = vmax.f32 %v1906, 0.0
        %v1920 = vmax.f32 %v1910, 0.0
        %v1921 = vmax.f32 %v1912, 0.0
        %1922 = vmatprep.subr.mxu0 %v1818
        %1923 = vmatpush1.msra.mxu0 %v1817
        %1924 = vmatprep.subr.mxu0 %v1820
        %1925 = vmatpush1.msra.mxu0 %v1819
        %1926 = vmatprep.subr.mxu0 %v1822
        %1927 = vmatpush1.msra.mxu0 %v1821
        %1928 = vmatprep.subr.mxu0 %v1824
        %1929 = vmatpush1.msra.mxu0 %v1823
        %1930 = vmatprep.subr.mxu0 0.0
        %1931 = vmatpush1.msra.mxu0 0.0
        %1932 = vmatprep.subr.mxu0 0.0
        %1933 = vmatpush1.msra.mxu0 0.0
        %1934 = vmatprep.subr.mxu0 0.0
        %1935 = vmatpush1.msra.mxu0 0.0
        %1936 = vmatprep.subr.mxu0 0.0
        %1937 = vmatpush1.msra.mxu0 0.0
        %1938 = vmatprep.subr.mxu0 0.0
        %1939 = vmatpush1.msra.mxu0 0.0
        %1940 = vmatprep.subr.mxu0 0.0
        %1941 = vmatpush1.msra.mxu0 0.0
        %1942 = vmatprep.subr.mxu0 0.0
        %1943 = vmatpush1.msra.mxu0 0.0
        %1944 = vmatprep.subr.mxu0 0.0
        %1945 = vmatpush1.msra.mxu0 0.0
        %1946 = vmatprep.subr.mxu0 0.0
        %1947 = vmatpush1.msra.mxu0 0.0
        %1948 = vmatprep.subr.mxu0 0.0
        %1949 = vmatpush1.msra.mxu0 0.0
        %1950 = vmatprep.subr.mxu0 0.0
        %1951 = vmatpush1.msra.mxu0 0.0
        %1952 = vmatprep.subr.mxu0 0.0
        %1953 = vmatpush1.msra.mxu0 0.0
        %1954 = vmatprep.subr.mxu0 0.0
        %1955 = vmatpush1.msra.mxu0 0.0
        %1956 = vmatprep.subr.mxu0 0.0
        %1957 = vmatpush1.msra.mxu0 0.0
        %1958 = vmatprep.subr.mxu0 0.0
        %1959 = vmatpush1.msra.mxu0 0.0
        %1960 = vmatprep.subr.mxu0 0.0
        %1961 = vmatpush1.msra.mxu0 0.0
        %1962 = vmatprep.subr.mxu0 0.0
        %1963 = vmatpush1.msra.mxu0 0.0
        %1964 = vmatprep.subr.mxu0 0.0
        %1965 = vmatpush1.msra.mxu0 0.0
        %1966 = vmatprep.subr.mxu0 0.0
        %1967 = vmatpush1.msra.mxu0 0.0
        %1968 = vmatprep.subr.mxu0 0.0
        %1969 = vmatpush1.msra.mxu0 0.0
        %1970 = vmatprep.subr.mxu0 0.0
        %1971 = vmatpush1.msra.mxu0 0.0
        %1972 = vmatprep.subr.mxu0 0.0
        %1973 = vmatpush1.msra.mxu0 0.0
        %1974 = vmatprep.subr.mxu0 0.0
        %1975 = vmatpush1.msra.mxu0 0.0
        %1976 = vmatprep.subr.mxu0 0.0
        %1977 = vmatpush1.msra.mxu0 0.0
        %1978 = vmatprep.subr.mxu0 0.0
        %1979 = vmatpush1.msra.mxu0 0.0
        %1980 = vmatprep.subr.mxu0 0.0
        %1981 = vmatpush1.msra.mxu0 0.0
        %1982 = vmatprep.subr.mxu0 0.0
        %1983 = vmatpush1.msra.mxu0 0.0
        %1984 = vmatprep.subr.mxu0 0.0
        %1985 = vmatpush1.msra.mxu0 0.0
        %1986 = vmatprep.mubr.f32.mxu0 0.0
        %1987 = vmatmul.mubr.f32.gmra.mrb[0].mxu0 %v1130
        %v1988 = vpop.f32.mrb[0].mxu0
        %v1989 = vadd.f32 %v1112, %v1988
        %v1990 = vpop.f32.mrb[0].mxu0
        %v1991 = vadd.f32 %v1112, %v1990
        %1992 = vmatprep.mubr.f32.mxu0 0.0
        %1993 = vmatmul.mubr.f32.gmra.mrb[0].mxu0 %v1133
        %v1994 = vpop.f32.mrb[0].mxu0
        %v1995 = vadd.f32 %v1117, %v1994
        %v1996 = vpop.f32.mrb[0].mxu0
        %v1997 = vadd.f32 %v1117, %v1996
        %1998 = vmatprep.mubr.f32.mxu0 0.0
        %1999 = vmatmul.mubr.f32.gmra.mrb[0].mxu0 %v1136
        %v2000 = vpop.f32.mrb[0].mxu0
        %v2001 = vadd.f32 %v1122, %v2000
        %v2002 = vpop.f32.mrb[0].mxu0
        %v2003 = vadd.f32 %v1122, %v2002
        %2004 = vmatprep.mubr.f32.mxu0 0.0
        %2005 = vmatmul.mubr.f32.gmra.mrb[0].mxu0 %v1139
        %v2006 = vpop.f32.mrb[0].mxu0
        %v2007 = vadd.f32 %v1127, %v2006
        %v2008 = vpop.f32.mrb[0].mxu0
        %v2009 = vadd.f32 %v1127, %v2008
        %2010 = vdwg.mxu0
        %v2011 = vmax.f32 %v1989, 0.0
        %v2012 = vmax.f32 %v1991, 0.0
        %v2013 = vmax.f32 %v1995, 0.0
        %v2014 = vmax.f32 %v1997, 0.0
        %v2015 = vmax.f32 %v2001, 0.0
        %v2016 = vmax.f32 %v2003, 0.0
        %v2017 = vmax.f32 %v2007, 0.0
        %v2018 = vmax.f32 %v2009, 0.0
        %v2019 = vmul.f32 %v2011, 0.5
        %v2020 = vmul.f32 %v2012, 0.5
        %v2021 = vmul.f32 %v2013, 0.5
        %v2022 = vmul.f32 %v2014, 0.5
        %v2023 = vmul.f32 %v2015, 0.5
        %v2024 = vmul.f32 %v2016, 0.5
        %v2025 = vmul.f32 %v2017, 0.5
        %v2026 = vmul.f32 %v2018, 0.5
        %v2027 = vadd.f32 %v1914, %v2019
        %v2028 = vadd.f32 %v1915, %v2020
        %v2029 = vadd.f32 %v1916, %v2021
        %v2030 = vadd.f32 %v1917, %v2022
        %v2031 = vadd.f32 %v1918, %v2023
        %v2032 = vadd.f32 %v1919, %v2024
        %v2033 = vadd.f32 %v1920, %v2025
        %v2034 = vadd.f32 %v1921, %v2026
        %2035 = vmatprep.subr.mxu0 %v2028
        %2036 = vmatpush1.msra.mxu0 %v2027
        %2037 = vmatprep.subr.mxu0 %v2030
        %2038 = vmatpush1.msra.mxu0 %v2029
        %2039 = vmatprep.subr.mxu0 %v2032
        %2040 = vmatpush1.msra.mxu0 %v2031
        %2041 = vmatprep.subr.mxu0 %v2034
        %2042 = vmatpush1.msra.mxu0 %v2033
        %2043 = vmatprep.subr.mxu0 0.0
        %2044 = vmatpush1.msra.mxu0 0.0
        %2045 = vmatprep.subr.mxu0 0.0
        %2046 = vmatpush1.msra.mxu0 0.0
        %2047 = vmatprep.subr.mxu0 0.0
        %2048 = vmatpush1.msra.mxu0 0.0
        %2049 = vmatprep.subr.mxu0 0.0
        %2050 = vmatpush1.msra.mxu0 0.0
        %2051 = vmatprep.subr.mxu0 0.0
        %2052 = vmatpush1.msra.mxu0 0.0
        %2053 = vmatprep.subr.mxu0 0.0
        %2054 = vmatpush1.msra.mxu0 0.0
        %2055 = vmatprep.subr.mxu0 0.0
        %2056 = vmatpush1.msra.mxu0 0.0
        %2057 = vmatprep.subr.mxu0 0.0
        %2058 = vmatpush1.msra.mxu0 0.0
        %2059 = vmatprep.subr.mxu0 0.0
        %2060 = vmatpush1.msra.mxu0 0.0
        %2061 = vmatprep.subr.mxu0 0.0
        %2062 = vmatpush1.msra.mxu0 0.0
        %2063 = vmatprep.subr.mxu0 0.0
        %2064 = vmatpush1.msra.mxu0 0.0
        %2065 = vmatprep.subr.mxu0 0.0
        %2066 = vmatpush1.msra.mxu0 0.0
        %2067 = vmatprep.subr.mxu0 0.0
        %2068 = vmatpush1.msra.mxu0 0.0
        %2069 = vmatprep.subr.mxu0 0.0
        %2070 = vmatpush1.msra.mxu0 0.0
        %2071 = vmatprep.subr.mxu0 0.0
        %2072 = vmatpush1.msra.mxu0 0.0
        %2073 = vmatprep.subr.mxu0 0.0
        %2074 = vmatpush1.msra.mxu0 0.0
        %2075 = vmatprep.subr.mxu0 0.0
        %2076 = vmatpush1.msra.mxu0 0.0
        %2077 = vmatprep.subr.mxu0 0.0
        %2078 = vmatpush1.msra.mxu0 0.0
        %2079 = vmatprep.subr.mxu0 0.0
        %2080 = vmatpush1.msra.mxu0 0.0
        %2081 = vmatprep.subr.mxu0 0.0
        %2082 = vmatpush1.msra.mxu0 0.0
        %2083 = vmatprep.subr.mxu0 0.0
        %2084 = vmatpush1.msra.mxu0 0.0
        %2085 = vmatprep.subr.mxu0 0.0
        %2086 = vmatpush1.msra.mxu0 0.0
        %2087 = vmatprep.subr.mxu0 0.0
        %2088 = vmatpush1.msra.mxu0 0.0
        %2089 = vmatprep.subr.mxu0 0.0
        %2090 = vmatpush1.msra.mxu0 0.0
        %2091 = vmatprep.subr.mxu0 0.0
        %2092 = vmatpush1.msra.mxu0 0.0
        %2093 = vmatprep.subr.mxu0 0.0
        %2094 = vmatpush1.msra.mxu0 0.0
        %2095 = vmatprep.subr.mxu0 0.0
        %2096 = vmatpush1.msra.mxu0 0.0
        %2097 = vmatprep.subr.mxu0 0.0
        %2098 = vmatpush1.msra.mxu0 0.0
        %2099 = vmatprep.mubr.f32.mxu0 0.0
        %2100 = vmatmul.mubr.f32.gmra.mrb[0].mxu0 %v1260
        %v2101 = vpop.f32.mrb[0].mxu0
        %v2102 = vadd.f32 %v1257, %v2101
        %v2103 = vpop.f32.mrb[0].mxu0
        %v2104 = vadd.f32 %v1257, %v2103
        %2105 = vdwg.mxu0
        %2106 = vst [vmem:[%s338 + $0x10] sm:$0xff] %v2102
        %2107 = vst [vmem:[%s338 + $0x18] sm:$0xff] %v2104
        %v2108 = vld [vmem:[%s347 + $0x200] sm:$0xff]
        %v2109 = vld [vmem:[%s347 + $0x208] sm:$0xff]
        %v2110 = vld [vmem:[%s347 + $0x210] sm:$0xff]
        %v2111 = vld [vmem:[%s347 + $0x218] sm:$0xff]
        %v2112 = vld [vmem:[%s347 + $0x220] sm:$0xff]
        %v2113 = vld [vmem:[%s347 + $0x228] sm:$0xff]
        %v2114 = vld [vmem:[%s347 + $0x230] sm:$0xff]
        %v2115 = vld [vmem:[%s347 + $0x238] sm:$0xff]
        %v2116 = vld [vmem:[%s347 + $0x240] sm:$0xff]
        %v2117 = vld [vmem:[%s347 + $0x248] sm:$0xff]
        %v2118 = vld [vmem:[%s347 + $0x250] sm:$0xff]
        %v2119 = vld [vmem:[%s347 + $0x258] sm:$0xff]
        %v2120 = vld [vmem:[%s347 + $0x260] sm:$0xff]
        %v2121 = vld [vmem:[%s347 + $0x268] sm:$0xff]
        %v2122 = vld [vmem:[%s347 + $0x270] sm:$0xff]
        %v2123 = vld [vmem:[%s347 + $0x278] sm:$0xff]
        %v2124 = vld [vmem:[%s347 + $0x280] sm:$0xff]
        %v2125 = vld [vmem:[%s347 + $0x288] sm:$0xff]
        %v2126 = vld [vmem:[%s347 + $0x290] sm:$0xff]
        %v2127 = vld [vmem:[%s347 + $0x298] sm:$0xff]
        %v2128 = vld [vmem:[%s347 + $0x2a0] sm:$0xff]
        %v2129 = vld [vmem:[%s347 + $0x2a8] sm:$0xff]
        %v2130 = vld [vmem:[%s347 + $0x2b0] sm:$0xff]
        %v2131 = vld [vmem:[%s347 + $0x2b8] sm:$0xff]
        %v2132 = vld [vmem:[%s347 + $0x2c0] sm:$0xff]
        %v2133 = vld [vmem:[%s347 + $0x2c8] sm:$0xff]
        %v2134 = vld [vmem:[%s347 + $0x2d0] sm:$0xff]
        %v2135 = vld [vmem:[%s347 + $0x2d8] sm:$0xff]
        %v2136 = vld [vmem:[%s347 + $0x2e0] sm:$0xff]
        %v2137 = vld [vmem:[%s347 + $0x2e8] sm:$0xff]
        %v2138 = vld [vmem:[%s347 + $0x2f0] sm:$0xff]
        %v2139 = vld [vmem:[%s347 + $0x2f8] sm:$0xff]
        %v2141 = vsel %vm455, %v2108, 0
        %v2144 = vsel %vm455, %v2109, 0
        %v2147 = vsel %vm455, %v2110, 0
        %v2150 = vsel %vm455, %v2111, 0
        %v2153 = vsel %vm455, %v2112, 0
        %v2156 = vsel %vm455, %v2113, 0
        %v2159 = vsel %vm455, %v2114, 0
        %v2162 = vsel %vm455, %v2115, 0
        %v2165 = vsel %vm455, %v2116, 0
        %v2168 = vsel %vm455, %v2117, 0
        %v2171 = vsel %vm455, %v2118, 0
        %v2174 = vsel %vm455, %v2119, 0
        %v2177 = vsel %vm455, %v2120, 0
        %v2180 = vsel %vm455, %v2121, 0
        %v2183 = vsel %vm455, %v2122, 0
        %v2186 = vsel %vm455, %v2123, 0
        %v2189 = vsel %vm455, %v2124, 0
        %v2192 = vsel %vm455, %v2125, 0
        %v2195 = vsel %vm455, %v2126, 0
        %v2198 = vsel %vm455, %v2127, 0
        %v2201 = vsel %vm455, %v2128, 0
        %v2204 = vsel %vm455, %v2129, 0
        %v2207 = vsel %vm455, %v2130, 0
        %v2210 = vsel %vm455, %v2131, 0
        %v2213 = vsel %vm455, %v2132, 0
        %v2216 = vsel %vm455, %v2133, 0
        %v2219 = vsel %vm455, %v2134, 0
        %v2222 = vsel %vm455, %v2135, 0
        %v2225 = vsel %vm455, %v2136, 0
        %v2228 = vsel %vm455, %v2137, 0
        %v2231 = vsel %vm455, %v2138, 0
        %v2234 = vsel %vm455, %v2139, 0
        %2236 = vmatprep.subr.mxu0 0.0
        %2237 = vmatpush1.xpose.msra.mxu0 %v2141
        %2238 = vmatprep.subr.mxu0 0.0
        %2239 = vmatpush1.xpose.msra.mxu0 %v2144
        %2240 = vmatprep.subr.mxu0 0.0
        %2241 = vmatpush1.xpose.msra.mxu0 %v2147
        %2242 = vmatprep.subr.mxu0 0.0
        %2243 = vmatpush1.xpose.msra.mxu0 %v2150
        %2244 = vmatprep.subr.mxu0 0.0
        %2245 = vmatpush1.xpose.msra.mxu0 %v2153
        %2246 = vmatprep.subr.mxu0 0.0
        %2247 = vmatpush1.xpose.msra.mxu0 %v2156
        %2248 = vmatprep.subr.mxu0 0.0
        %2249 = vmatpush1.xpose.msra.mxu0 %v2159
        %2250 = vmatprep.subr.mxu0 0.0
        %2251 = vmatpush1.xpose.msra.mxu0 %v2162
        %2252 = vmatprep.subr.mxu0 0.0
        %2253 = vmatpush1.xpose.msra.mxu0 %v2165
        %2254 = vmatprep.subr.mxu0 0.0
        %2255 = vmatpush1.xpose.msra.mxu0 %v2168
        %2256 = vmatprep.subr.mxu0 0.0
        %2257 = vmatpush1.xpose.msra.mxu0 %v2171
        %2258 = vmatprep.subr.mxu0 0.0
        %2259 = vmatpush1.xpose.msra.mxu0 %v2174
        %2260 = vmatprep.subr.mxu0 0.0
        %2261 = vmatpush1.xpose.msra.mxu0 %v2177
        %2262 = vmatprep.subr.mxu0 0.0
        %2263 = vmatpush1.xpose.msra.mxu0 %v2180
        %2264 = vmatprep.subr.mxu0 0.0
        %2265 = vmatpush1.xpose.msra.mxu0 %v2183
        %2266 = vmatprep.subr.mxu0 0.0
        %2267 = vmatpush1.xpose.msra.mxu0 %v2186
        %2268 = vmatprep.subr.mxu0 0.0
        %2269 = vmatpush1.xpose.msra.mxu0 %v2189
        %2270 = vmatprep.subr.mxu0 0.0
        %2271 = vmatpush1.xpose.msra.mxu0 %v2192
        %2272 = vmatprep.subr.mxu0 0.0
        %2273 = vmatpush1.xpose.msra.mxu0 %v2195
        %2274 = vmatprep.subr.mxu0 0.0
        %2275 = vmatpush1.xpose.msra.mxu0 %v2198
        %2276 = vmatprep.subr.mxu0 0.0
        %2277 = vmatpush1.xpose.msra.mxu0 %v2201
        %2278 = vmatprep.subr.mxu0 0.0
        %2279 = vmatpush1.xpose.msra.mxu0 %v2204
        %2280 = vmatprep.subr.mxu0 0.0
        %2281 = vmatpush1.xpose.msra.mxu0 %v2207
        %2282 = vmatprep.subr.mxu0 0.0
        %2283 = vmatpush1.xpose.msra.mxu0 %v2210
        %2284 = vmatprep.subr.mxu0 0.0
        %2285 = vmatpush1.xpose.msra.mxu0 %v2213
        %2286 = vmatprep.subr.mxu0 0.0
        %2287 = vmatpush1.xpose.msra.mxu0 %v2216
        %2288 = vmatprep.subr.mxu0 0.0
        %2289 = vmatpush1.xpose.msra.mxu0 %v2219
        %2290 = vmatprep.subr.mxu0 0.0
        %2291 = vmatpush1.xpose.msra.mxu0 %v2222
        %2292 = vmatprep.subr.mxu0 0.0
        %2293 = vmatpush1.xpose.msra.mxu0 %v2225
        %2294 = vmatprep.subr.mxu0 0.0
        %2295 = vmatpush1.xpose.msra.mxu0 %v2228
        %2296 = vmatprep.subr.mxu0 0.0
        %2297 = vmatpush1.xpose.msra.mxu0 %v2231
        %2298 = vmatprep.subr.mxu0 0.0
        %2299 = vmatpush1.xpose.msra.mxu0 %v2234
        %2300 = vmatprep.mubr.f32.mxu0 0.0
        %2301 = vmatmul.mubr.f32.gmra.mrb[0].mxu0 %v457
        %v2302 = vpop.f32.mrb[0].mxu0
        %v2303 = vadd.f32 %v438, %v2302
        %v2304 = vpop.f32.mrb[0].mxu0
        %v2305 = vadd.f32 %v438, %v2304
        %2306 = vmatprep.mubr.f32.mxu0 0.0
        %2307 = vmatmul.mubr.f32.gmra.mrb[0].mxu0 %v460
        %v2308 = vpop.f32.mrb[0].mxu0
        %v2309 = vadd.f32 %v443, %v2308
        %v2310 = vpop.f32.mrb[0].mxu0
        %v2311 = vadd.f32 %v443, %v2310
        %2312 = vmatprep.mubr.f32.mxu0 0.0
        %2313 = vmatmul.mubr.f32.gmra.mrb[0].mxu0 %v463
        %v2314 = vpop.f32.mrb[0].mxu0
        %v2315 = vadd.f32 %v448, %v2314
        %v2316 = vpop.f32.mrb[0].mxu0
        %v2317 = vadd.f32 %v448, %v2316
        %2318 = vmatprep.mubr.f32.mxu0 0.0
        %2319 = vmatmul.mubr.f32.gmra.mrb[0].mxu0 %v466
        %v2320 = vpop.f32.mrb[0].mxu0
        %v2321 = vadd.f32 %v453, %v2320
        %v2322 = vpop.f32.mrb[0].mxu0
        %v2323 = vadd.f32 %v453, %v2322
        %2324 = vdwg.mxu0
        %v2325 = vmax.f32 %v2303, 0.0
        %v2326 = vmax.f32 %v2305, 0.0
        %v2327 = vmax.f32 %v2309, 0.0
        %v2328 = vmax.f32 %v2311, 0.0
        %v2329 = vmax.f32 %v2315, 0.0
        %v2330 = vmax.f32 %v2317, 0.0
        %v2331 = vmax.f32 %v2321, 0.0
        %v2332 = vmax.f32 %v2323, 0.0
        %2333 = vmatprep.subr.mxu0 %v2326
        %2334 = vmatpush1.msra.mxu0 %v2325
        %2335 = vmatprep.subr.mxu0 %v2328
        %2336 = vmatpush1.msra.mxu0 %v2327
        %2337 = vmatprep.subr.mxu0 %v2330
        %2338 = vmatpush1.msra.mxu0 %v2329
        %2339 = vmatprep.subr.mxu0 %v2332
        %2340 = vmatpush1.msra.mxu0 %v2331
        %2341 = vmatprep.subr.mxu0 0.0
        %2342 = vmatpush1.msra.mxu0 0.0
        %2343 = vmatprep.subr.mxu0 0.0
        %2344 = vmatpush1.msra.mxu0 0.0
        %2345 = vmatprep.subr.mxu0 0.0
        %2346 = vmatpush1.msra.mxu0 0.0
        %2347 = vmatprep.subr.mxu0 0.0
        %2348 = vmatpush1.msra.mxu0 0.0
        %2349 = vmatprep.subr.mxu0 0.0
        %2350 = vmatpush1.msra.mxu0 0.0
        %2351 = vmatprep.subr.mxu0 0.0
        %2352 = vmatpush1.msra.mxu0 0.0
        %2353 = vmatprep.subr.mxu0 0.0
        %2354 = vmatpush1.msra.mxu0 0.0
        %2355 = vmatprep.subr.mxu0 0.0
        %2356 = vmatpush1.msra.mxu0 0.0
        %2357 = vmatprep.subr.mxu0 0.0
        %2358 = vmatpush1.msra.mxu0 0.0
        %2359 = vmatprep.subr.mxu0 0.0
        %2360 = vmatpush1.msra.mxu0 0.0
        %2361 = vmatprep.subr.mxu0 0.0
        %2362 = vmatpush1.msra.mxu0 0.0
        %2363 = vmatprep.subr.mxu0 0.0
        %2364 = vmatpush1.msra.mxu0 0.0
        %2365 = vmatprep.subr.mxu0 0.0
        %2366 = vmatpush1.msra.mxu0 0.0
        %2367 = vmatprep.subr.mxu0 0.0
        %2368 = vmatpush1.msra.mxu0 0.0
        %2369 = vmatprep.subr.mxu0 0.0
        %2370 = vmatpush1.msra.mxu0 0.0
        %2371 = vmatprep.subr.mxu0 0.0
        %2372 = vmatpush1.msra.mxu0 0.0
        %2373 = vmatprep.subr.mxu0 0.0
        %2374 = vmatpush1.msra.mxu0 0.0
        %2375 = vmatprep.subr.mxu0 0.0
        %2376 = vmatpush1.msra.mxu0 0.0
        %2377 = vmatprep.subr.mxu0 0.0
        %2378 = vmatpush1.msra.mxu0 0.0
        %2379 = vmatprep.subr.mxu0 0.0
        %2380 = vmatpush1.msra.mxu0 0.0
        %2381 = vmatprep.subr.mxu0 0.0
        %2382 = vmatpush1.msra.mxu0 0.0
        %2383 = vmatprep.subr.mxu0 0.0
        %2384 = vmatpush1.msra.mxu0 0.0
        %2385 = vmatprep.subr.mxu0 0.0
        %2386 = vmatpush1.msra.mxu0 0.0
        %2387 = vmatprep.subr.mxu0 0.0
        %2388 = vmatpush1.msra.mxu0 0.0
        %2389 = vmatprep.subr.mxu0 0.0
        %2390 = vmatpush1.msra.mxu0 0.0
        %2391 = vmatprep.subr.mxu0 0.0
        %2392 = vmatpush1.msra.mxu0 0.0
        %2393 = vmatprep.subr.mxu0 0.0
        %2394 = vmatpush1.msra.mxu0 0.0
        %2395 = vmatprep.subr.mxu0 0.0
        %2396 = vmatpush1.msra.mxu0 0.0
        %2397 = vmatprep.mubr.f32.mxu0 0.0
        %2398 = vmatmul.mubr.f32.gmra.mrb[0].mxu0 %v668
        %v2399 = vpop.f32.mrb[0].mxu0
        %v2400 = vadd.f32 %v664, %v2399
        %v2401 = vpop.f32.mrb[0].mxu0
        %v2402 = vadd.f32 %v664, %v2401
        %2403 = vdwg.mxu0
        %2404 = vmatprep.subr.mxu0 %v2402
        %2405 = vmatpush1.msra.mxu0 %v2400
        %2406 = vmatprep.subr.mxu0 0.0
        %2407 = vmatpush1.msra.mxu0 0.0
        %2408 = vmatprep.subr.mxu0 0.0
        %2409 = vmatpush1.msra.mxu0 0.0
        %2410 = vmatprep.subr.mxu0 0.0
        %2411 = vmatpush1.msra.mxu0 0.0
        %2412 = vmatprep.subr.mxu0 0.0
        %2413 = vmatpush1.msra.mxu0 0.0
        %2414 = vmatprep.subr.mxu0 0.0
        %2415 = vmatpush1.msra.mxu0 0.0
        %2416 = vmatprep.subr.mxu0 0.0
        %2417 = vmatpush1.msra.mxu0 0.0
        %2418 = vmatprep.subr.mxu0 0.0
        %2419 = vmatpush1.msra.mxu0 0.0
        %2420 = vmatprep.subr.mxu0 0.0
        %2421 = vmatpush1.msra.mxu0 0.0
        %2422 = vmatprep.subr.mxu0 0.0
        %2423 = vmatpush1.msra.mxu0 0.0
        %2424 = vmatprep.subr.mxu0 0.0
        %2425 = vmatpush1.msra.mxu0 0.0
        %2426 = vmatprep.subr.mxu0 0.0
        %2427 = vmatpush1.msra.mxu0 0.0
        %2428 = vmatprep.subr.mxu0 0.0
        %2429 = vmatpush1.msra.mxu0 0.0
        %2430 = vmatprep.subr.mxu0 0.0
        %2431 = vmatpush1.msra.mxu0 0.0
        %2432 = vmatprep.subr.mxu0 0.0
        %2433 = vmatpush1.msra.mxu0 0.0
        %2434 = vmatprep.subr.mxu0 0.0
        %2435 = vmatpush1.msra.mxu0 0.0
        %2436 = vmatprep.subr.mxu0 0.0
        %2437 = vmatpush1.msra.mxu0 0.0
        %2438 = vmatprep.subr.mxu0 0.0
        %2439 = vmatpush1.msra.mxu0 0.0
        %2440 = vmatprep.subr.mxu0 0.0
        %2441 = vmatpush1.msra.mxu0 0.0
        %2442 = vmatprep.subr.mxu0 0.0
        %2443 = vmatpush1.msra.mxu0 0.0
        %2444 = vmatprep.subr.mxu0 0.0
        %2445 = vmatpush1.msra.mxu0 0.0
        %2446 = vmatprep.subr.mxu0 0.0
        %2447 = vmatpush1.msra.mxu0 0.0
        %2448 = vmatprep.subr.mxu0 0.0
        %2449 = vmatpush1.msra.mxu0 0.0
        %2450 = vmatprep.subr.mxu0 0.0
        %2451 = vmatpush1.msra.mxu0 0.0
        %2452 = vmatprep.subr.mxu0 0.0
        %2453 = vmatpush1.msra.mxu0 0.0
        %2454 = vmatprep.subr.mxu0 0.0
        %2455 = vmatpush1.msra.mxu0 0.0
        %2456 = vmatprep.subr.mxu0 0.0
        %2457 = vmatpush1.msra.mxu0 0.0
        %2458 = vmatprep.subr.mxu0 0.0
        %2459 = vmatpush1.msra.mxu0 0.0
        %2460 = vmatprep.subr.mxu0 0.0
        %2461 = vmatpush1.msra.mxu0 0.0
        %2462 = vmatprep.subr.mxu0 0.0
        %2463 = vmatpush1.msra.mxu0 0.0
        %2464 = vmatprep.subr.mxu0 0.0
        %2465 = vmatpush1.msra.mxu0 0.0
        %2466 = vmatprep.subr.mxu0 0.0
        %2467 = vmatpush1.msra.mxu0 0.0
        %2468 = vmatprep.mubr.f32.mxu0 0.0
        %2469 = vmatmul.mubr.f32.gmra.mrb[0].mxu0 %v743
        %v2470 = vpop.f32.mrb[0].mxu0
        %v2471 = vadd.f32 0.0, %v2470
        %v2472 = vpop.f32.mrb[0].mxu0
        %v2473 = vadd.f32 0.0, %v2472
        %2474 = vmatprep.mubr.f32.mxu0 0.0
        %2475 = vmatmul.mubr.f32.gmra.mrb[0].mxu0 %v746
        %v2476 = vpop.f32.mrb[0].mxu0
        %v2477 = vadd.f32 0.0, %v2476
        %v2478 = vpop.f32.mrb[0].mxu0
        %v2479 = vadd.f32 0.0, %v2478
        %2480 = vmatprep.mubr.f32.mxu0 0.0
        %2481 = vmatmul.mubr.f32.gmra.mrb[0].mxu0 %v749
        %v2482 = vpop.f32.mrb[0].mxu0
        %v2483 = vadd.f32 0.0, %v2482
        %v2484 = vpop.f32.mrb[0].mxu0
        %v2485 = vadd.f32 0.0, %v2484
        %2486 = vmatprep.mubr.f32.mxu0 0.0
        %2487 = vmatmul.mubr.f32.gmra.mrb[0].mxu0 %v752
        %v2488 = vpop.f32.mrb[0].mxu0
        %v2489 = vadd.f32 0.0, %v2488
        %v2490 = vpop.f32.mrb[0].mxu0
        %v2491 = vadd.f32 0.0, %v2490
        %2492 = vdwg.mxu0
        %2493 = vmatprep.subr.mxu0 0.0
        %2494 = vmatpush1.xpose.msra.mxu0 %v2141
        %2495 = vmatprep.subr.mxu0 0.0
        %2496 = vmatpush1.xpose.msra.mxu0 %v2144
        %2497 = vmatprep.subr.mxu0 0.0
        %2498 = vmatpush1.xpose.msra.mxu0 %v2147
        %2499 = vmatprep.subr.mxu0 0.0
        %2500 = vmatpush1.xpose.msra.mxu0 %v2150
        %2501 = vmatprep.subr.mxu0 0.0
        %2502 = vmatpush1.xpose.msra.mxu0 %v2153
        %2503 = vmatprep.subr.mxu0 0.0
        %2504 = vmatpush1.xpose.msra.mxu0 %v2156
        %2505 = vmatprep.subr.mxu0 0.0
        %2506 = vmatpush1.xpose.msra.mxu0 %v2159
        %2507 = vmatprep.subr.mxu0 0.0
        %2508 = vmatpush1.xpose.msra.mxu0 %v2162
        %2509 = vmatprep.subr.mxu0 0.0
        %2510 = vmatpush1.xpose.msra.mxu0 %v2165
        %2511 = vmatprep.subr.mxu0 0.0
        %2512 = vmatpush1.xpose.msra.mxu0 %v2168
        %2513 = vmatprep.subr.mxu0 0.0
        %2514 = vmatpush1.xpose.msra.mxu0 %v2171
        %2515 = vmatprep.subr.mxu0 0.0
        %2516 = vmatpush1.xpose.msra.mxu0 %v2174
        %2517 = vmatprep.subr.mxu0 0.0
        %2518 = vmatpush1.xpose.msra.mxu0 %v2177
        %2519 = vmatprep.subr.mxu0 0.0
        %2520 = vmatpush1.xpose.msra.mxu0 %v2180
        %2521 = vmatprep.subr.mxu0 0.0
        %2522 = vmatpush1.xpose.msra.mxu0 %v2183
        %2523 = vmatprep.subr.mxu0 0.0
        %2524 = vmatpush1.xpose.msra.mxu0 %v2186
        %2525 = vmatprep.subr.mxu0 0.0
        %2526 = vmatpush1.xpose.msra.mxu0 %v2189
        %2527 = vmatprep.subr.mxu0 0.0
        %2528 = vmatpush1.xpose.msra.mxu0 %v2192
        %2529 = vmatprep.subr.mxu0 0.0
        %2530 = vmatpush1.xpose.msra.mxu0 %v2195
        %2531 = vmatprep.subr.mxu0 0.0
        %2532 = vmatpush1.xpose.msra.mxu0 %v2198
        %2533 = vmatprep.subr.mxu0 0.0
        %2534 = vmatpush1.xpose.msra.mxu0 %v2201
        %2535 = vmatprep.subr.mxu0 0.0
        %2536 = vmatpush1.xpose.msra.mxu0 %v2204
        %2537 = vmatprep.subr.mxu0 0.0
        %2538 = vmatpush1.xpose.msra.mxu0 %v2207
        %2539 = vmatprep.subr.mxu0 0.0
        %2540 = vmatpush1.xpose.msra.mxu0 %v2210
        %2541 = vmatprep.subr.mxu0 0.0
        %2542 = vmatpush1.xpose.msra.mxu0 %v2213
        %2543 = vmatprep.subr.mxu0 0.0
        %2544 = vmatpush1.xpose.msra.mxu0 %v2216
        %2545 = vmatprep.subr.mxu0 0.0
        %2546 = vmatpush1.xpose.msra.mxu0 %v2219
        %2547 = vmatprep.subr.mxu0 0.0
        %2548 = vmatpush1.xpose.msra.mxu0 %v2222
        %2549 = vmatprep.subr.mxu0 0.0
        %2550 = vmatpush1.xpose.msra.mxu0 %v2225
        %2551 = vmatprep.subr.mxu0 0.0
        %2552 = vmatpush1.xpose.msra.mxu0 %v2228
        %2553 = vmatprep.subr.mxu0 0.0
        %2554 = vmatpush1.xpose.msra.mxu0 %v2231
        %2555 = vmatprep.subr.mxu0 0.0
        %2556 = vmatpush1.xpose.msra.mxu0 %v2234
        %2557 = vmatprep.mubr.f32.mxu0 0.0
        %2558 = vmatmul.mubr.f32.gmra.mrb[0].mxu0 %v844
        %v2559 = vpop.f32.mrb[0].mxu0
        %v2560 = vadd.f32 %v2471, %v2559
        %v2561 = vpop.f32.mrb[0].mxu0
        %v2562 = vadd.f32 %v2473, %v2561
        %2563 = vmatprep.mubr.f32.mxu0 0.0
        %2564 = vmatmul.mubr.f32.gmra.mrb[0].mxu0 %v847
        %v2565 = vpop.f32.mrb[0].mxu0
        %v2566 = vadd.f32 %v2477, %v2565
        %v2567 = vpop.f32.mrb[0].mxu0
        %v2568 = vadd.f32 %v2479, %v2567
        %2569 = vmatprep.mubr.f32.mxu0 0.0
        %2570 = vmatmul.mubr.f32.gmra.mrb[0].mxu0 %v850
        %v2571 = vpop.f32.mrb[0].mxu0
        %v2572 = vadd.f32 %v2483, %v2571
        %v2573 = vpop.f32.mrb[0].mxu0
        %v2574 = vadd.f32 %v2485, %v2573
        %2575 = vmatprep.mubr.f32.mxu0 0.0
        %2576 = vmatmul.mubr.f32.gmra.mrb[0].mxu0 %v853
        %v2577 = vpop.f32.mrb[0].mxu0
        %v2578 = vadd.f32 %v2489, %v2577
        %v2579 = vpop.f32.mrb[0].mxu0
        %v2580 = vadd.f32 %v2491, %v2579
        %2581 = vdwg.mxu0
        %v2582 = vadd.f32 %v2560, %v947
        %v2583 = vadd.f32 %v2562, %v947
        %v2584 = vadd.f32 %v2566, %v952
        %v2585 = vadd.f32 %v2568, %v952
        %v2586 = vadd.f32 %v2572, %v957
        %v2587 = vadd.f32 %v2574, %v957
        %v2588 = vadd.f32 %v2578, %v962
        %v2589 = vadd.f32 %v2580, %v962
        %v2590 = vmax.f32 %v2582, 0.0
        %v2591 = vmax.f32 %v2583, 0.0
        %v2592 = vmax.f32 %v2584, 0.0
        %v2593 = vmax.f32 %v2585, 0.0
        %v2594 = vmax.f32 %v2586, 0.0
        %v2595 = vmax.f32 %v2587, 0.0
        %v2596 = vmax.f32 %v2588, 0.0
        %v2597 = vmax.f32 %v2589, 0.0
        %2598 = vmatprep.subr.mxu0 %v2326
        %2599 = vmatpush1.msra.mxu0 %v2325
        %2600 = vmatprep.subr.mxu0 %v2328
        %2601 = vmatpush1.msra.mxu0 %v2327
        %2602 = vmatprep.subr.mxu0 %v2330
        %2603 = vmatpush1.msra.mxu0 %v2329
        %2604 = vmatprep.subr.mxu0 %v2332
        %2605 = vmatpush1.msra.mxu0 %v2331
        %2606 = vmatprep.subr.mxu0 0.0
        %2607 = vmatpush1.msra.mxu0 0.0
        %2608 = vmatprep.subr.mxu0 0.0
        %2609 = vmatpush1.msra.mxu0 0.0
        %2610 = vmatprep.subr.mxu0 0.0
        %2611 = vmatpush1.msra.mxu0 0.0
        %2612 = vmatprep.subr.mxu0 0.0
        %2613 = vmatpush1.msra.mxu0 0.0
        %2614 = vmatprep.subr.mxu0 0.0
        %2615 = vmatpush1.msra.mxu0 0.0
        %2616 = vmatprep.subr.mxu0 0.0
        %2617 = vmatpush1.msra.mxu0 0.0
        %2618 = vmatprep.subr.mxu0 0.0
        %2619 = vmatpush1.msra.mxu0 0.0
        %2620 = vmatprep.subr.mxu0 0.0
        %2621 = vmatpush1.msra.mxu0 0.0
        %2622 = vmatprep.subr.mxu0 0.0
        %2623 = vmatpush1.msra.mxu0 0.0
        %2624 = vmatprep.subr.mxu0 0.0
        %2625 = vmatpush1.msra.mxu0 0.0
        %2626 = vmatprep.subr.mxu0 0.0
        %2627 = vmatpush1.msra.mxu0 0.0
        %2628 = vmatprep.subr.mxu0 0.0
        %2629 = vmatpush1.msra.mxu0 0.0
        %2630 = vmatprep.subr.mxu0 0.0
        %2631 = vmatpush1.msra.mxu0 0.0
        %2632 = vmatprep.subr.mxu0 0.0
        %2633 = vmatpush1.msra.mxu0 0.0
        %2634 = vmatprep.subr.mxu0 0.0
        %2635 = vmatpush1.msra.mxu0 0.0
        %2636 = vmatprep.subr.mxu0 0.0
        %2637 = vmatpush1.msra.mxu0 0.0
        %2638 = vmatprep.subr.mxu0 0.0
        %2639 = vmatpush1.msra.mxu0 0.0
        %2640 = vmatprep.subr.mxu0 0.0
        %2641 = vmatpush1.msra.mxu0 0.0
        %2642 = vmatprep.subr.mxu0 0.0
        %2643 = vmatpush1.msra.mxu0 0.0
        %2644 = vmatprep.subr.mxu0 0.0
        %2645 = vmatpush1.msra.mxu0 0.0
        %2646 = vmatprep.subr.mxu0 0.0
        %2647 = vmatpush1.msra.mxu0 0.0
        %2648 = vmatprep.subr.mxu0 0.0
        %2649 = vmatpush1.msra.mxu0 0.0
        %2650 = vmatprep.subr.mxu0 0.0
        %2651 = vmatpush1.msra.mxu0 0.0
        %2652 = vmatprep.subr.mxu0 0.0
        %2653 = vmatpush1.msra.mxu0 0.0
        %2654 = vmatprep.subr.mxu0 0.0
        %2655 = vmatpush1.msra.mxu0 0.0
        %2656 = vmatprep.subr.mxu0 0.0
        %2657 = vmatpush1.msra.mxu0 0.0
        %2658 = vmatprep.subr.mxu0 0.0
        %2659 = vmatpush1.msra.mxu0 0.0
        %2660 = vmatprep.subr.mxu0 0.0
        %2661 = vmatpush1.msra.mxu0 0.0
        %2662 = vmatprep.mubr.f32.mxu0 0.0
        %2663 = vmatmul.mubr.f32.gmra.mrb[0].mxu0 %v1001
        %v2664 = vpop.f32.mrb[0].mxu0
        %v2665 = vadd.f32 %v983, %v2664
        %v2666 = vpop.f32.mrb[0].mxu0
        %v2667 = vadd.f32 %v983, %v2666
        %2668 = vmatprep.mubr.f32.mxu0 0.0
        %2669 = vmatmul.mubr.f32.gmra.mrb[0].mxu0 %v1004
        %v2670 = vpop.f32.mrb[0].mxu0
        %v2671 = vadd.f32 %v988, %v2670
        %v2672 = vpop.f32.mrb[0].mxu0
        %v2673 = vadd.f32 %v988, %v2672
        %2674 = vmatprep.mubr.f32.mxu0 0.0
        %2675 = vmatmul.mubr.f32.gmra.mrb[0].mxu0 %v1007
        %v2676 = vpop.f32.mrb[0].mxu0
        %v2677 = vadd.f32 %v993, %v2676
        %v2678 = vpop.f32.mrb[0].mxu0
        %v2679 = vadd.f32 %v993, %v2678
        %2680 = vmatprep.mubr.f32.mxu0 0.0
        %2681 = vmatmul.mubr.f32.gmra.mrb[0].mxu0 %v1010
        %v2682 = vpop.f32.mrb[0].mxu0
        %v2683 = vadd.f32 %v998, %v2682
        %v2684 = vpop.f32.mrb[0].mxu0
        %v2685 = vadd.f32 %v998, %v2684
        %2686 = vdwg.mxu0
        %v2687 = vmax.f32 %v2665, 0.0
        %v2688 = vmax.f32 %v2667, 0.0
        %v2689 = vmax.f32 %v2671, 0.0
        %v2690 = vmax.f32 %v2673, 0.0
        %v2691 = vmax.f32 %v2677, 0.0
        %v2692 = vmax.f32 %v2679, 0.0
        %v2693 = vmax.f32 %v2683, 0.0
        %v2694 = vmax.f32 %v2685, 0.0
        %2695 = vmatprep.subr.mxu0 %v2591
        %2696 = vmatpush1.msra.mxu0 %v2590
        %2697 = vmatprep.subr.mxu0 %v2593
        %2698 = vmatpush1.msra.mxu0 %v2592
        %2699 = vmatprep.subr.mxu0 %v2595
        %2700 = vmatpush1.msra.mxu0 %v2594
        %2701 = vmatprep.subr.mxu0 %v2597
        %2702 = vmatpush1.msra.mxu0 %v2596
        %2703 = vmatprep.subr.mxu0 0.0
        %2704 = vmatpush1.msra.mxu0 0.0
        %2705 = vmatprep.subr.mxu0 0.0
        %2706 = vmatpush1.msra.mxu0 0.0
        %2707 = vmatprep.subr.mxu0 0.0
        %2708 = vmatpush1.msra.mxu0 0.0
        %2709 = vmatprep.subr.mxu0 0.0
        %2710 = vmatpush1.msra.mxu0 0.0
        %2711 = vmatprep.subr.mxu0 0.0
        %2712 = vmatpush1.msra.mxu0 0.0
        %2713 = vmatprep.subr.mxu0 0.0
        %2714 = vmatpush1.msra.mxu0 0.0
        %2715 = vmatprep.subr.mxu0 0.0
        %2716 = vmatpush1.msra.mxu0 0.0
        %2717 = vmatprep.subr.mxu0 0.0
        %2718 = vmatpush1.msra.mxu0 0.0
        %2719 = vmatprep.subr.mxu0 0.0
        %2720 = vmatpush1.msra.mxu0 0.0
        %2721 = vmatprep.subr.mxu0 0.0
        %2722 = vmatpush1.msra.mxu0 0.0
        %2723 = vmatprep.subr.mxu0 0.0
        %2724 = vmatpush1.msra.mxu0 0.0
        %2725 = vmatprep.subr.mxu0 0.0
        %2726 = vmatpush1.msra.mxu0 0.0
        %2727 = vmatprep.subr.mxu0 0.0
        %2728 = vmatpush1.msra.mxu0 0.0
        %2729 = vmatprep.subr.mxu0 0.0
        %2730 = vmatpush1.msra.mxu0 0.0
        %2731 = vmatprep.subr.mxu0 0.0
        %2732 = vmatpush1.msra.mxu0 0.0
        %2733 = vmatprep.subr.mxu0 0.0
        %2734 = vmatpush1.msra.mxu0 0.0
        %2735 = vmatprep.subr.mxu0 0.0
        %2736 = vmatpush1.msra.mxu0 0.0
        %2737 = vmatprep.subr.mxu0 0.0
        %2738 = vmatpush1.msra.mxu0 0.0
        %2739 = vmatprep.subr.mxu0 0.0
        %2740 = vmatpush1.msra.mxu0 0.0
        %2741 = vmatprep.subr.mxu0 0.0
        %2742 = vmatpush1.msra.mxu0 0.0
        %2743 = vmatprep.subr.mxu0 0.0
        %2744 = vmatpush1.msra.mxu0 0.0
        %2745 = vmatprep.subr.mxu0 0.0
        %2746 = vmatpush1.msra.mxu0 0.0
        %2747 = vmatprep.subr.mxu0 0.0
        %2748 = vmatpush1.msra.mxu0 0.0
        %2749 = vmatprep.subr.mxu0 0.0
        %2750 = vmatpush1.msra.mxu0 0.0
        %2751 = vmatprep.subr.mxu0 0.0
        %2752 = vmatpush1.msra.mxu0 0.0
        %2753 = vmatprep.subr.mxu0 0.0
        %2754 = vmatpush1.msra.mxu0 0.0
        %2755 = vmatprep.subr.mxu0 0.0
        %2756 = vmatpush1.msra.mxu0 0.0
        %2757 = vmatprep.subr.mxu0 0.0
        %2758 = vmatpush1.msra.mxu0 0.0
        %2759 = vmatprep.mubr.f32.mxu0 0.0
        %2760 = vmatmul.mubr.f32.gmra.mrb[0].mxu0 %v1130
        %v2761 = vpop.f32.mrb[0].mxu0
        %v2762 = vadd.f32 %v1112, %v2761
        %v2763 = vpop.f32.mrb[0].mxu0
        %v2764 = vadd.f32 %v1112, %v2763
        %2765 = vmatprep.mubr.f32.mxu0 0.0
        %2766 = vmatmul.mubr.f32.gmra.mrb[0].mxu0 %v1133
        %v2767 = vpop.f32.mrb[0].mxu0
        %v2768 = vadd.f32 %v1117, %v2767
        %v2769 = vpop.f32.mrb[0].mxu0
        %v2770 = vadd.f32 %v1117, %v2769
        %2771 = vmatprep.mubr.f32.mxu0 0.0
        %2772 = vmatmul.mubr.f32.gmra.mrb[0].mxu0 %v1136
        %v2773 = vpop.f32.mrb[0].mxu0
        %v2774 = vadd.f32 %v1122, %v2773
        %v2775 = vpop.f32.mrb[0].mxu0
        %v2776 = vadd.f32 %v1122, %v2775
        %2777 = vmatprep.mubr.f32.mxu0 0.0
        %2778 = vmatmul.mubr.f32.gmra.mrb[0].mxu0 %v1139
        %v2779 = vpop.f32.mrb[0].mxu0
        %v2780 = vadd.f32 %v1127, %v2779
        %v2781 = vpop.f32.mrb[0].mxu0
        %v2782 = vadd.f32 %v1127, %v2781
        %2783 = vdwg.mxu0
        %v2784 = vmax.f32 %v2762, 0.0
        %v2785 = vmax.f32 %v2764, 0.0
        %v2786 = vmax.f32 %v2768, 0.0
        %v2787 = vmax.f32 %v2770, 0.0
        %v2788 = vmax.f32 %v2774, 0.0
        %v2789 = vmax.f32 %v2776, 0.0
        %v2790 = vmax.f32 %v2780, 0.0
        %v2791 = vmax.f32 %v2782, 0.0
        %v2792 = vmul.f32 %v2784, 0.5
        %v2793 = vmul.f32 %v2785, 0.5
        %v2794 = vmul.f32 %v2786, 0.5
        %v2795 = vmul.f32 %v2787, 0.5
        %v2796 = vmul.f32 %v2788, 0.5
        %v2797 = vmul.f32 %v2789, 0.5
        %v2798 = vmul.f32 %v2790, 0.5
        %v2799 = vmul.f32 %v2791, 0.5
        %v2800 = vadd.f32 %v2687, %v2792
        %v2801 = vadd.f32 %v2688, %v2793
        %v2802 = vadd.f32 %v2689, %v2794
        %v2803 = vadd.f32 %v2690, %v2795
        %v2804 = vadd.f32 %v2691, %v2796
        %v2805 = vadd.f32 %v2692, %v2797
        %v2806 = vadd.f32 %v2693, %v2798
        %v2807 = vadd.f32 %v2694, %v2799
        %2808 = vmatprep.subr.mxu0 %v2801
        %2809 = vmatpush1.msra.mxu0 %v2800
        %2810 = vmatprep.subr.mxu0 %v2803
        %2811 = vmatpush1.msra.mxu0 %v2802
        %2812 = vmatprep.subr.mxu0 %v2805
        %2813 = vmatpush1.msra.mxu0 %v2804
        %2814 = vmatprep.subr.mxu0 %v2807
        %2815 = vmatpush1.msra.mxu0 %v2806
        %2816 = vmatprep.subr.mxu0 0.0
        %2817 = vmatpush1.msra.mxu0 0.0
        %2818 = vmatprep.subr.mxu0 0.0
        %2819 = vmatpush1.msra.mxu0 0.0
        %2820 = vmatprep.subr.mxu0 0.0
        %2821 = vmatpush1.msra.mxu0 0.0
        %2822 = vmatprep.subr.mxu0 0.0
        %2823 = vmatpush1.msra.mxu0 0.0
        %2824 = vmatprep.subr.mxu0 0.0
        %2825 = vmatpush1.msra.mxu0 0.0
        %2826 = vmatprep.subr.mxu0 0.0
        %2827 = vmatpush1.msra.mxu0 0.0
        %2828 = vmatprep.subr.mxu0 0.0
        %2829 = vmatpush1.msra.mxu0 0.0
        %2830 = vmatprep.subr.mxu0 0.0
        %2831 = vmatpush1.msra.mxu0 0.0
        %2832 = vmatprep.subr.mxu0 0.0
        %2833 = vmatpush1.msra.mxu0 0.0
        %2834 = vmatprep.subr.mxu0 0.0
        %2835 = vmatpush1.msra.mxu0 0.0
        %2836 = vmatprep.subr.mxu0 0.0
        %2837 = vmatpush1.msra.mxu0 0.0
        %2838 = vmatprep.subr.mxu0 0.0
        %2839 = vmatpush1.msra.mxu0 0.0
        %2840 = vmatprep.subr.mxu0 0.0
        %2841 = vmatpush1.msra.mxu0 0.0
        %2842 = vmatprep.subr.mxu0 0.0
        %2843 = vmatpush1.msra.mxu0 0.0
        %2844 = vmatprep.subr.mxu0 0.0
        %2845 = vmatpush1.msra.mxu0 0.0
        %2846 = vmatprep.subr.mxu0 0.0
        %2847 = vmatpush1.msra.mxu0 0.0
        %2848 = vmatprep.subr.mxu0 0.0
        %2849 = vmatpush1.msra.mxu0 0.0
        %2850 = vmatprep.subr.mxu0 0.0
        %2851 = vmatpush1.msra.mxu0 0.0
        %2852 = vmatprep.subr.mxu0 0.0
        %2853 = vmatpush1.msra.mxu0 0.0
        %2854 = vmatprep.subr.mxu0 0.0
        %2855 = vmatpush1.msra.mxu0 0.0
        %2856 = vmatprep.subr.mxu0 0.0
        %2857 = vmatpush1.msra.mxu0 0.0
        %2858 = vmatprep.subr.mxu0 0.0
        %2859 = vmatpush1.msra.mxu0 0.0
        %2860 = vmatprep.subr.mxu0 0.0
        %2861 = vmatpush1.msra.mxu0 0.0
        %2862 = vmatprep.subr.mxu0 0.0
        %2863 = vmatpush1.msra.mxu0 0.0
        %2864 = vmatprep.subr.mxu0 0.0
        %2865 = vmatpush1.msra.mxu0 0.0
        %2866 = vmatprep.subr.mxu0 0.0
        %2867 = vmatpush1.msra.mxu0 0.0
        %2868 = vmatprep.subr.mxu0 0.0
        %2869 = vmatpush1.msra.mxu0 0.0
        %2870 = vmatprep.subr.mxu0 0.0
        %2871 = vmatpush1.msra.mxu0 0.0
        %2872 = vmatprep.mubr.f32.mxu0 0.0
        %2873 = vmatmul.mubr.f32.gmra.mrb[0].mxu0 %v1260
        %v2874 = vpop.f32.mrb[0].mxu0
        %v2875 = vadd.f32 %v1257, %v2874
        %v2876 = vpop.f32.mrb[0].mxu0
        %v2877 = vadd.f32 %v1257, %v2876
        %2878 = vdwg.mxu0
        %2879 = vst [vmem:[%s338 + $0x20] sm:$0xff] %v2875
        %2880 = vst [vmem:[%s338 + $0x28] sm:$0xff] %v2877
        %v2881 = vld [vmem:[%s347 + $0x300] sm:$0xff]
        %v2882 = vld [vmem:[%s347 + $0x308] sm:$0xff]
        %v2883 = vld [vmem:[%s347 + $0x310] sm:$0xff]
        %v2884 = vld [vmem:[%s347 + $0x318] sm:$0xff]
        %v2885 = vld [vmem:[%s347 + $0x320] sm:$0xff]
        %v2886 = vld [vmem:[%s347 + $0x328] sm:$0xff]
        %v2887 = vld [vmem:[%s347 + $0x330] sm:$0xff]
        %v2888 = vld [vmem:[%s347 + $0x338] sm:$0xff]
        %v2889 = vld [vmem:[%s347 + $0x340] sm:$0xff]
        %v2890 = vld [vmem:[%s347 + $0x348] sm:$0xff]
        %v2891 = vld [vmem:[%s347 + $0x350] sm:$0xff]
        %v2892 = vld [vmem:[%s347 + $0x358] sm:$0xff]
        %v2893 = vld [vmem:[%s347 + $0x360] sm:$0xff]
        %v2894 = vld [vmem:[%s347 + $0x368] sm:$0xff]
        %v2895 = vld [vmem:[%s347 + $0x370] sm:$0xff]
        %v2896 = vld [vmem:[%s347 + $0x378] sm:$0xff]
        %v2897 = vld [vmem:[%s347 + $0x380] sm:$0xff]
        %v2898 = vld [vmem:[%s347 + $0x388] sm:$0xff]
        %v2899 = vld [vmem:[%s347 + $0x390] sm:$0xff]
        %v2900 = vld [vmem:[%s347 + $0x398] sm:$0xff]
        %v2901 = vld [vmem:[%s347 + $0x3a0] sm:$0xff]
        %v2902 = vld [vmem:[%s347 + $0x3a8] sm:$0xff]
        %v2903 = vld [vmem:[%s347 + $0x3b0] sm:$0xff]
        %v2904 = vld [vmem:[%s347 + $0x3b8] sm:$0xff]
        %v2905 = vld [vmem:[%s347 + $0x3c0] sm:$0xff]
        %v2906 = vld [vmem:[%s347 + $0x3c8] sm:$0xff]
        %v2907 = vld [vmem:[%s347 + $0x3d0] sm:$0xff]
        %v2908 = vld [vmem:[%s347 + $0x3d8] sm:$0xff]
        %v2909 = vld [vmem:[%s347 + $0x3e0] sm:$0xff]
        %v2910 = vld [vmem:[%s347 + $0x3e8] sm:$0xff]
        %v2911 = vld [vmem:[%s347 + $0x3f0] sm:$0xff]
        %v2912 = vld [vmem:[%s347 + $0x3f8] sm:$0xff]
        %v2914 = vsel %vm455, %v2881, 0
        %v2917 = vsel %vm455, %v2882, 0
        %v2920 = vsel %vm455, %v2883, 0
        %v2923 = vsel %vm455, %v2884, 0
        %v2926 = vsel %vm455, %v2885, 0
        %v2929 = vsel %vm455, %v2886, 0
        %v2932 = vsel %vm455, %v2887, 0
        %v2935 = vsel %vm455, %v2888, 0
        %v2938 = vsel %vm455, %v2889, 0
        %v2941 = vsel %vm455, %v2890, 0
        %v2944 = vsel %vm455, %v2891, 0
        %v2947 = vsel %vm455, %v2892, 0
        %v2950 = vsel %vm455, %v2893, 0
        %v2953 = vsel %vm455, %v2894, 0
        %v2956 = vsel %vm455, %v2895, 0
        %v2959 = vsel %vm455, %v2896, 0
        %v2962 = vsel %vm455, %v2897, 0
        %v2965 = vsel %vm455, %v2898, 0
        %v2968 = vsel %vm455, %v2899, 0
        %v2971 = vsel %vm455, %v2900, 0
        %v2974 = vsel %vm455, %v2901, 0
        %v2977 = vsel %vm455, %v2902, 0
        %v2980 = vsel %vm455, %v2903, 0
        %v2983 = vsel %vm455, %v2904, 0
        %v2986 = vsel %vm455, %v2905, 0
        %v2989 = vsel %vm455, %v2906, 0
        %v2992 = vsel %vm455, %v2907, 0
        %v2995 = vsel %vm455, %v2908, 0
        %v2998 = vsel %vm455, %v2909, 0
        %v3001 = vsel %vm455, %v2910, 0
        %v3004 = vsel %vm455, %v2911, 0
        %v3007 = vsel %vm455, %v2912, 0
        %3009 = vmatprep.subr.mxu0 0.0
        %3010 = vmatpush1.xpose.msra.mxu0 %v2914
        %3011 = vmatprep.subr.mxu0 0.0
        %3012 = vmatpush1.xpose.msra.mxu0 %v2917
        %3013 = vmatprep.subr.mxu0 0.0
        %3014 = vmatpush1.xpose.msra.mxu0 %v2920
        %3015 = vmatprep.subr.mxu0 0.0
        %3016 = vmatpush1.xpose.msra.mxu0 %v2923
        %3017 = vmatprep.subr.mxu0 0.0
        %3018 = vmatpush1.xpose.msra.mxu0 %v2926
        %3019 = vmatprep.subr.mxu0 0.0
        %3020 = vmatpush1.xpose.msra.mxu0 %v2929
        %3021 = vmatprep.subr.mxu0 0.0
        %3022 = vmatpush1.xpose.msra.mxu0 %v2932
        %3023 = vmatprep.subr.mxu0 0.0
        %3024 = vmatpush1.xpose.msra.mxu0 %v2935
        %3025 = vmatprep.subr.mxu0 0.0
        %3026 = vmatpush1.xpose.msra.mxu0 %v2938
        %3027 = vmatprep.subr.mxu0 0.0
        %3028 = vmatpush1.xpose.msra.mxu0 %v2941
        %3029 = vmatprep.subr.mxu0 0.0
        %3030 = vmatpush1.xpose.msra.mxu0 %v2944
        %3031 = vmatprep.subr.mxu0 0.0
        %3032 = vmatpush1.xpose.msra.mxu0 %v2947
        %3033 = vmatprep.subr.mxu0 0.0
        %3034 = vmatpush1.xpose.msra.mxu0 %v2950
        %3035 = vmatprep.subr.mxu0 0.0
        %3036 = vmatpush1.xpose.msra.mxu0 %v2953
        %3037 = vmatprep.subr.mxu0 0.0
        %3038 = vmatpush1.xpose.msra.mxu0 %v2956
        %3039 = vmatprep.subr.mxu0 0.0
        %3040 = vmatpush1.xpose.msra.mxu0 %v2959
        %3041 = vmatprep.subr.mxu0 0.0
        %3042 = vmatpush1.xpose.msra.mxu0 %v2962
        %3043 = vmatprep.subr.mxu0 0.0
        %3044 = vmatpush1.xpose.msra.mxu0 %v2965
        %3045 = vmatprep.subr.mxu0 0.0
        %3046 = vmatpush1.xpose.msra.mxu0 %v2968
        %3047 = vmatprep.subr.mxu0 0.0
        %3048 = vmatpush1.xpose.msra.mxu0 %v2971
        %3049 = vmatprep.subr.mxu0 0.0
        %3050 = vmatpush1.xpose.msra.mxu0 %v2974
        %3051 = vmatprep.subr.mxu0 0.0
        %3052 = vmatpush1.xpose.msra.mxu0 %v2977
        %3053 = vmatprep.subr.mxu0 0.0
        %3054 = vmatpush1.xpose.msra.mxu0 %v2980
        %3055 = vmatprep.subr.mxu0 0.0
        %3056 = vmatpush1.xpose.msra.mxu0 %v2983
        %3057 = vmatprep.subr.mxu0 0.0
        %3058 = vmatpush1.xpose.msra.mxu0 %v2986
        %3059 = vmatprep.subr.mxu0 0.0
        %3060 = vmatpush1.xpose.msra.mxu0 %v2989
        %3061 = vmatprep.subr.mxu0 0.0
        %3062 = vmatpush1.xpose.msra.mxu0 %v2992
        %3063 = vmatprep.subr.mxu0 0.0
        %3064 = vmatpush1.xpose.msra.mxu0 %v2995
        %3065 = vmatprep.subr.mxu0 0.0
        %3066 = vmatpush1.xpose.msra.mxu0 %v2998
        %3067 = vmatprep.subr.mxu0 0.0
        %3068 = vmatpush1.xpose.msra.mxu0 %v3001
        %3069 = vmatprep.subr.mxu0 0.0
        %3070 = vmatpush1.xpose.msra.mxu0 %v3004
        %3071 = vmatprep.subr.mxu0 0.0
        %3072 = vmatpush1.xpose.msra.mxu0 %v3007
        %3073 = vmatprep.mubr.f32.mxu0 0.0
        %3074 = vmatmul.mubr.f32.gmra.mrb[0].mxu0 %v457
        %v3075 = vpop.f32.mrb[0].mxu0
        %v3076 = vadd.f32 %v438, %v3075
        %v3077 = vpop.f32.mrb[0].mxu0
        %v3078 = vadd.f32 %v438, %v3077
        %3079 = vmatprep.mubr.f32.mxu0 0.0
        %3080 = vmatmul.mubr.f32.gmra.mrb[0].mxu0 %v460
        %v3081 = vpop.f32.mrb[0].mxu0
        %v3082 = vadd.f32 %v443, %v3081
        %v3083 = vpop.f32.mrb[0].mxu0
        %v3084 = vadd.f32 %v443, %v3083
        %3085 = vmatprep.mubr.f32.mxu0 0.0
        %3086 = vmatmul.mubr.f32.gmra.mrb[0].mxu0 %v463
        %v3087 = vpop.f32.mrb[0].mxu0
        %v3088 = vadd.f32 %v448, %v3087
        %v3089 = vpop.f32.mrb[0].mxu0
        %v3090 = vadd.f32 %v448, %v3089
        %3091 = vmatprep.mubr.f32.mxu0 0.0
        %3092 = vmatmul.mubr.f32.gmra.mrb[0].mxu0 %v466
        %v3093 = vpop.f32.mrb[0].mxu0
        %v3094 = vadd.f32 %v453, %v3093
        %v3095 = vpop.f32.mrb[0].mxu0
        %v3096 = vadd.f32 %v453, %v3095
        %3097 = vdwg.mxu0
        %v3098 = vmax.f32 %v3076, 0.0
        %v3099 = vmax.f32 %v3078, 0.0
        %v3100 = vmax.f32 %v3082, 0.0
        %v3101 = vmax.f32 %v3084, 0.0
        %v3102 = vmax.f32 %v3088, 0.0
        %v3103 = vmax.f32 %v3090, 0.0
        %v3104 = vmax.f32 %v3094, 0.0
        %v3105 = vmax.f32 %v3096, 0.0
        %3106 = vmatprep.subr.mxu0 %v3099
        %3107 = vmatpush1.msra.mxu0 %v3098
        %3108 = vmatprep.subr.mxu0 %v3101
        %3109 = vmatpush1.msra.mxu0 %v3100
        %3110 = vmatprep.subr.mxu0 %v3103
        %3111 = vmatpush1.msra.mxu0 %v3102
        %3112 = vmatprep.subr.mxu0 %v3105
        %3113 = vmatpush1.msra.mxu0 %v3104
        %3114 = vmatprep.subr.mxu0 0.0
        %3115 = vmatpush1.msra.mxu0 0.0
        %3116 = vmatprep.subr.mxu0 0.0
        %3117 = vmatpush1.msra.mxu0 0.0
        %3118 = vmatprep.subr.mxu0 0.0
        %3119 = vmatpush1.msra.mxu0 0.0
        %3120 = vmatprep.subr.mxu0 0.0
        %3121 = vmatpush1.msra.mxu0 0.0
        %3122 = vmatprep.subr.mxu0 0.0
        %3123 = vmatpush1.msra.mxu0 0.0
        %3124 = vmatprep.subr.mxu0 0.0
        %3125 = vmatpush1.msra.mxu0 0.0
        %3126 = vmatprep.subr.mxu0 0.0
        %3127 = vmatpush1.msra.mxu0 0.0
        %3128 = vmatprep.subr.mxu0 0.0
        %3129 = vmatpush1.msra.mxu0 0.0
        %3130 = vmatprep.subr.mxu0 0.0
        %3131 = vmatpush1.msra.mxu0 0.0
        %3132 = vmatprep.subr.mxu0 0.0
        %3133 = vmatpush1.msra.mxu0 0.0
        %3134 = vmatprep.subr.mxu0 0.0
        %3135 = vmatpush1.msra.mxu0 0.0
        %3136 = vmatprep.subr.mxu0 0.0
        %3137 = vmatpush1.msra.mxu0 0.0
        %3138 = vmatprep.subr.mxu0 0.0
        %3139 = vmatpush1.msra.mxu0 0.0
        %3140 = vmatprep.subr.mxu0 0.0
        %3141 = vmatpush1.msra.mxu0 0.0
        %3142 = vmatprep.subr.mxu0 0.0
        %3143 = vmatpush1.msra.mxu0 0.0
        %3144 = vmatprep.subr.mxu0 0.0
        %3145 = vmatpush1.msra.mxu0 0.0
        %3146 = vmatprep.subr.mxu0 0.0
        %3147 = vmatpush1.msra.mxu0 0.0
        %3148 = vmatprep.subr.mxu0 0.0
        %3149 = vmatpush1.msra.mxu0 0.0
        %3150 = vmatprep.subr.mxu0 0.0
        %3151 = vmatpush1.msra.mxu0 0.0
        %3152 = vmatprep.subr.mxu0 0.0
        %3153 = vmatpush1.msra.mxu0 0.0
        %3154 = vmatprep.subr.mxu0 0.0
        %3155 = vmatpush1.msra.mxu0 0.0
        %3156 = vmatprep.subr.mxu0 0.0
        %3157 = vmatpush1.msra.mxu0 0.0
        %3158 = vmatprep.subr.mxu0 0.0
        %3159 = vmatpush1.msra.mxu0 0.0
        %3160 = vmatprep.subr.mxu0 0.0
        %3161 = vmatpush1.msra.mxu0 0.0
        %3162 = vmatprep.subr.mxu0 0.0
        %3163 = vmatpush1.msra.mxu0 0.0
        %3164 = vmatprep.subr.mxu0 0.0
        %3165 = vmatpush1.msra.mxu0 0.0
        %3166 = vmatprep.subr.mxu0 0.0
        %3167 = vmatpush1.msra.mxu0 0.0
        %3168 = vmatprep.subr.mxu0 0.0
        %3169 = vmatpush1.msra.mxu0 0.0
        %3170 = vmatprep.mubr.f32.mxu0 0.0
        %3171 = vmatmul.mubr.f32.gmra.mrb[0].mxu0 %v668
        %v3172 = vpop.f32.mrb[0].mxu0
        %v3173 = vadd.f32 %v664, %v3172
        %v3174 = vpop.f32.mrb[0].mxu0
        %v3175 = vadd.f32 %v664, %v3174
        %3176 = vdwg.mxu0
        %3177 = vmatprep.subr.mxu0 %v3175
        %3178 = vmatpush1.msra.mxu0 %v3173
        %3179 = vmatprep.subr.mxu0 0.0
        %3180 = vmatpush1.msra.mxu0 0.0
        %3181 = vmatprep.subr.mxu0 0.0
        %3182 = vmatpush1.msra.mxu0 0.0
        %3183 = vmatprep.subr.mxu0 0.0
        %3184 = vmatpush1.msra.mxu0 0.0
        %3185 = vmatprep.subr.mxu0 0.0
        %3186 = vmatpush1.msra.mxu0 0.0
        %3187 = vmatprep.subr.mxu0 0.0
        %3188 = vmatpush1.msra.mxu0 0.0
        %3189 = vmatprep.subr.mxu0 0.0
        %3190 = vmatpush1.msra.mxu0 0.0
        %3191 = vmatprep.subr.mxu0 0.0
        %3192 = vmatpush1.msra.mxu0 0.0
        %3193 = vmatprep.subr.mxu0 0.0
        %3194 = vmatpush1.msra.mxu0 0.0
        %3195 = vmatprep.subr.mxu0 0.0
        %3196 = vmatpush1.msra.mxu0 0.0
        %3197 = vmatprep.subr.mxu0 0.0
        %3198 = vmatpush1.msra.mxu0 0.0
        %3199 = vmatprep.subr.mxu0 0.0
        %3200 = vmatpush1.msra.mxu0 0.0
        %3201 = vmatprep.subr.mxu0 0.0
        %3202 = vmatpush1.msra.mxu0 0.0
        %3203 = vmatprep.subr.mxu0 0.0
        %3204 = vmatpush1.msra.mxu0 0.0
        %3205 = vmatprep.subr.mxu0 0.0
        %3206 = vmatpush1.msra.mxu0 0.0
        %3207 = vmatprep.subr.mxu0 0.0
        %3208 = vmatpush1.msra.mxu0 0.0
        %3209 = vmatprep.subr.mxu0 0.0
        %3210 = vmatpush1.msra.mxu0 0.0
        %3211 = vmatprep.subr.mxu0 0.0
        %3212 = vmatpush1.msra.mxu0 0.0
        %3213 = vmatprep.subr.mxu0 0.0
        %3214 = vmatpush1.msra.mxu0 0.0
        %3215 = vmatprep.subr.mxu0 0.0
        %3216 = vmatpush1.msra.mxu0 0.0
        %3217 = vmatprep.subr.mxu0 0.0
        %3218 = vmatpush1.msra.mxu0 0.0
        %3219 = vmatprep.subr.mxu0 0.0
        %3220 = vmatpush1.msra.mxu0 0.0
        %3221 = vmatprep.subr.mxu0 0.0
        %3222 = vmatpush1.msra.mxu0 0.0
        %3223 = vmatprep.subr.mxu0 0.0
        %3224 = vmatpush1.msra.mxu0 0.0
        %3225 = vmatprep.subr.mxu0 0.0
        %3226 = vmatpush1.msra.mxu0 0.0
        %3227 = vmatprep.subr.mxu0 0.0
        %3228 = vmatpush1.msra.mxu0 0.0
        %3229 = vmatprep.subr.mxu0 0.0
        %3230 = vmatpush1.msra.mxu0 0.0
        %3231 = vmatprep.subr.mxu0 0.0
        %3232 = vmatpush1.msra.mxu0 0.0
        %3233 = vmatprep.subr.mxu0 0.0
        %3234 = vmatpush1.msra.mxu0 0.0
        %3235 = vmatprep.subr.mxu0 0.0
        %3236 = vmatpush1.msra.mxu0 0.0
        %3237 = vmatprep.subr.mxu0 0.0
        %3238 = vmatpush1.msra.mxu0 0.0
        %3239 = vmatprep.subr.mxu0 0.0
        %3240 = vmatpush1.msra.mxu0 0.0
        %3241 = vmatprep.mubr.f32.mxu0 0.0
        %3242 = vmatmul.mubr.f32.gmra.mrb[0].mxu0 %v743
        %v3243 = vpop.f32.mrb[0].mxu0
        %v3244 = vadd.f32 0.0, %v3243
        %v3245 = vpop.f32.mrb[0].mxu0
        %v3246 = vadd.f32 0.0, %v3245
        %3247 = vmatprep.mubr.f32.mxu0 0.0
        %3248 = vmatmul.mubr.f32.gmra.mrb[0].mxu0 %v746
        %v3249 = vpop.f32.mrb[0].mxu0
        %v3250 = vadd.f32 0.0, %v3249
        %v3251 = vpop.f32.mrb[0].mxu0
        %v3252 = vadd.f32 0.0, %v3251
        %3253 = vmatprep.mubr.f32.mxu0 0.0
        %3254 = vmatmul.mubr.f32.gmra.mrb[0].mxu0 %v749
        %v3255 = vpop.f32.mrb[0].mxu0
        %v3256 = vadd.f32 0.0, %v3255
        %v3257 = vpop.f32.mrb[0].mxu0
        %v3258 = vadd.f32 0.0, %v3257
        %3259 = vmatprep.mubr.f32.mxu0 0.0
        %3260 = vmatmul.mubr.f32.gmra.mrb[0].mxu0 %v752
        %v3261 = vpop.f32.mrb[0].mxu0
        %v3262 = vadd.f32 0.0, %v3261
        %v3263 = vpop.f32.mrb[0].mxu0
        %v3264 = vadd.f32 0.0, %v3263
        %3265 = vdwg.mxu0
        %3266 = vmatprep.subr.mxu0 0.0
        %3267 = vmatpush1.xpose.msra.mxu0 %v2914
        %3268 = vmatprep.subr.mxu0 0.0
        %3269 = vmatpush1.xpose.msra.mxu0 %v2917
        %3270 = vmatprep.subr.mxu0 0.0
        %3271 = vmatpush1.xpose.msra.mxu0 %v2920
        %3272 = vmatprep.subr.mxu0 0.0
        %3273 = vmatpush1.xpose.msra.mxu0 %v2923
        %3274 = vmatprep.subr.mxu0 0.0
        %3275 = vmatpush1.xpose.msra.mxu0 %v2926
        %3276 = vmatprep.subr.mxu0 0.0
        %3277 = vmatpush1.xpose.msra.mxu0 %v2929
        %3278 = vmatprep.subr.mxu0 0.0
        %3279 = vmatpush1.xpose.msra.mxu0 %v2932
        %3280 = vmatprep.subr.mxu0 0.0
        %3281 = vmatpush1.xpose.msra.mxu0 %v2935
        %3282 = vmatprep.subr.mxu0 0.0
        %3283 = vmatpush1.xpose.msra.mxu0 %v2938
        %3284 = vmatprep.subr.mxu0 0.0
        %3285 = vmatpush1.xpose.msra.mxu0 %v2941
        %3286 = vmatprep.subr.mxu0 0.0
        %3287 = vmatpush1.xpose.msra.mxu0 %v2944
        %3288 = vmatprep.subr.mxu0 0.0
        %3289 = vmatpush1.xpose.msra.mxu0 %v2947
        %3290 = vmatprep.subr.mxu0 0.0
        %3291 = vmatpush1.xpose.msra.mxu0 %v2950
        %3292 = vmatprep.subr.mxu0 0.0
        %3293 = vmatpush1.xpose.msra.mxu0 %v2953
        %3294 = vmatprep.subr.mxu0 0.0
        %3295 = vmatpush1.xpose.msra.mxu0 %v2956
        %3296 = vmatprep.subr.mxu0 0.0
        %3297 = vmatpush1.xpose.msra.mxu0 %v2959
        %3298 = vmatprep.subr.mxu0 0.0
        %3299 = vmatpush1.xpose.msra.mxu0 %v2962
        %3300 = vmatprep.subr.mxu0 0.0
        %3301 = vmatpush1.xpose.msra.mxu0 %v2965
        %3302 = vmatprep.subr.mxu0 0.0
        %3303 = vmatpush1.xpose.msra.mxu0 %v2968
        %3304 = vmatprep.subr.mxu0 0.0
        %3305 = vmatpush1.xpose.msra.mxu0 %v2971
        %3306 = vmatprep.subr.mxu0 0.0
        %3307 = vmatpush1.xpose.msra.mxu0 %v2974
        %3308 = vmatprep.subr.mxu0 0.0
        %3309 = vmatpush1.xpose.msra.mxu0 %v2977
        %3310 = vmatprep.subr.mxu0 0.0
        %3311 = vmatpush1.xpose.msra.mxu0 %v2980
        %3312 = vmatprep.subr.mxu0 0.0
        %3313 = vmatpush1.xpose.msra.mxu0 %v2983
        %3314 = vmatprep.subr.mxu0 0.0
        %3315 = vmatpush1.xpose.msra.mxu0 %v2986
        %3316 = vmatprep.subr.mxu0 0.0
        %3317 = vmatpush1.xpose.msra.mxu0 %v2989
        %3318 = vmatprep.subr.mxu0 0.0
        %3319 = vmatpush1.xpose.msra.mxu0 %v2992
        %3320 = vmatprep.subr.mxu0 0.0
        %3321 = vmatpush1.xpose.msra.mxu0 %v2995
        %3322 = vmatprep.subr.mxu0 0.0
        %3323 = vmatpush1.xpose.msra.mxu0 %v2998
        %3324 = vmatprep.subr.mxu0 0.0
        %3325 = vmatpush1.xpose.msra.mxu0 %v3001
        %3326 = vmatprep.subr.mxu0 0.0
        %3327 = vmatpush1.xpose.msra.mxu0 %v3004
        %3328 = vmatprep.subr.mxu0 0.0
        %3329 = vmatpush1.xpose.msra.mxu0 %v3007
        %3330 = vmatprep.mubr.f32.mxu0 0.0
        %3331 = vmatmul.mubr.f32.gmra.mrb[0].mxu0 %v844
        %v3332 = vpop.f32.mrb[0].mxu0
        %v3333 = vadd.f32 %v3244, %v3332
        %v3334 = vpop.f32.mrb[0].mxu0
        %v3335 = vadd.f32 %v3246, %v3334
        %3336 = vmatprep.mubr.f32.mxu0 0.0
        %3337 = vmatmul.mubr.f32.gmra.mrb[0].mxu0 %v847
        %v3338 = vpop.f32.mrb[0].mxu0
        %v3339 = vadd.f32 %v3250, %v3338
        %v3340 = vpop.f32.mrb[0].mxu0
        %v3341 = vadd.f32 %v3252, %v3340
        %3342 = vmatprep.mubr.f32.mxu0 0.0
        %3343 = vmatmul.mubr.f32.gmra.mrb[0].mxu0 %v850
        %v3344 = vpop.f32.mrb[0].mxu0
        %v3345 = vadd.f32 %v3256, %v3344
        %v3346 = vpop.f32.mrb[0].mxu0
        %v3347 = vadd.f32 %v3258, %v3346
        %3348 = vmatprep.mubr.f32.mxu0 0.0
        %3349 = vmatmul.mubr.f32.gmra.mrb[0].mxu0 %v853
        %v3350 = vpop.f32.mrb[0].mxu0
        %v3351 = vadd.f32 %v3262, %v3350
        %v3352 = vpop.f32.mrb[0].mxu0
        %v3353 = vadd.f32 %v3264, %v3352
        %3354 = vdwg.mxu0
        %v3355 = vadd.f32 %v3333, %v947
        %v3356 = vadd.f32 %v3335, %v947
        %v3357 = vadd.f32 %v3339, %v952
        %v3358 = vadd.f32 %v3341, %v952
        %v3359 = vadd.f32 %v3345, %v957
        %v3360 = vadd.f32 %v3347, %v957
        %v3361 = vadd.f32 %v3351, %v962
        %v3362 = vadd.f32 %v3353, %v962
        %v3363 = vmax.f32 %v3355, 0.0
        %v3364 = vmax.f32 %v3356, 0.0
        %v3365 = vmax.f32 %v3357, 0.0
        %v3366 = vmax.f32 %v3358, 0.0
        %v3367 = vmax.f32 %v3359, 0.0
        %v3368 = vmax.f32 %v3360, 0.0
        %v3369 = vmax.f32 %v3361, 0.0
        %v3370 = vmax.f32 %v3362, 0.0
        %3371 = vmatprep.subr.mxu0 %v3099
        %3372 = vmatpush1.msra.mxu0 %v3098
        %3373 = vmatprep.subr.mxu0 %v3101
        %3374 = vmatpush1.msra.mxu0 %v3100
        %3375 = vmatprep.subr.mxu0 %v3103
        %3376 = vmatpush1.msra.mxu0 %v3102
        %3377 = vmatprep.subr.mxu0 %v3105
        %3378 = vmatpush1.msra.mxu0 %v3104
        %3379 = vmatprep.subr.mxu0 0.0
        %3380 = vmatpush1.msra.mxu0 0.0
        %3381 = vmatprep.subr.mxu0 0.0
        %3382 = vmatpush1.msra.mxu0 0.0
        %3383 = vmatprep.subr.mxu0 0.0
        %3384 = vmatpush1.msra.mxu0 0.0
        %3385 = vmatprep.subr.mxu0 0.0
        %3386 = vmatpush1.msra.mxu0 0.0
        %3387 = vmatprep.subr.mxu0 0.0
        %3388 = vmatpush1.msra.mxu0 0.0
        %3389 = vmatprep.subr.mxu0 0.0
        %3390 = vmatpush1.msra.mxu0 0.0
        %3391 = vmatprep.subr.mxu0 0.0
        %3392 = vmatpush1.msra.mxu0 0.0
        %3393 = vmatprep.subr.mxu0 0.0
        %3394 = vmatpush1.msra.mxu0 0.0
        %3395 = vmatprep.subr.mxu0 0.0
        %3396 = vmatpush1.msra.mxu0 0.0
        %3397 = vmatprep.subr.mxu0 0.0
        %3398 = vmatpush1.msra.mxu0 0.0
        %3399 = vmatprep.subr.mxu0 0.0
        %3400 = vmatpush1.msra.mxu0 0.0
        %3401 = vmatprep.subr.mxu0 0.0
        %3402 = vmatpush1.msra.mxu0 0.0
        %3403 = vmatprep.subr.mxu0 0.0
        %3404 = vmatpush1.msra.mxu0 0.0
        %3405 = vmatprep.subr.mxu0 0.0
        %3406 = vmatpush1.msra.mxu0 0.0
        %3407 = vmatprep.subr.mxu0 0.0
        %3408 = vmatpush1.msra.mxu0 0.0
        %3409 = vmatprep.subr.mxu0 0.0
        %3410 = vmatpush1.msra.mxu0 0.0
        %3411 = vmatprep.subr.mxu0 0.0
        %3412 = vmatpush1.msra.mxu0 0.0
        %3413 = vmatprep.subr.mxu0 0.0
        %3414 = vmatpush1.msra.mxu0 0.0
        %3415 = vmatprep.subr.mxu0 0.0
        %3416 = vmatpush1.msra.mxu0 0.0
        %3417 = vmatprep.subr.mxu0 0.0
        %3418 = vmatpush1.msra.mxu0 0.0
        %3419 = vmatprep.subr.mxu0 0.0
        %3420 = vmatpush1.msra.mxu0 0.0
        %3421 = vmatprep.subr.mxu0 0.0
        %3422 = vmatpush1.msra.mxu0 0.0
        %3423 = vmatprep.subr.mxu0 0.0
        %3424 = vmatpush1.msra.mxu0 0.0
        %3425 = vmatprep.subr.mxu0 0.0
        %3426 = vmatpush1.msra.mxu0 0.0
        %3427 = vmatprep.subr.mxu0 0.0
        %3428 = vmatpush1.msra.mxu0 0.0
        %3429 = vmatprep.subr.mxu0 0.0
        %3430 = vmatpush1.msra.mxu0 0.0
        %3431 = vmatprep.subr.mxu0 0.0
        %3432 = vmatpush1.msra.mxu0 0.0
        %3433 = vmatprep.subr.mxu0 0.0
        %3434 = vmatpush1.msra.mxu0 0.0
        %3435 = vmatprep.mubr.f32.mxu0 0.0
        %3436 = vmatmul.mubr.f32.gmra.mrb[0].mxu0 %v1001
        %v3437 = vpop.f32.mrb[0].mxu0
        %v3438 = vadd.f32 %v983, %v3437
        %v3439 = vpop.f32.mrb[0].mxu0
        %v3440 = vadd.f32 %v983, %v3439
        %3441 = vmatprep.mubr.f32.mxu0 0.0
        %3442 = vmatmul.mubr.f32.gmra.mrb[0].mxu0 %v1004
        %v3443 = vpop.f32.mrb[0].mxu0
        %v3444 = vadd.f32 %v988, %v3443
        %v3445 = vpop.f32.mrb[0].mxu0
        %v3446 = vadd.f32 %v988, %v3445
        %3447 = vmatprep.mubr.f32.mxu0 0.0
        %3448 = vmatmul.mubr.f32.gmra.mrb[0].mxu0 %v1007
        %v3449 = vpop.f32.mrb[0].mxu0
        %v3450 = vadd.f32 %v993, %v3449
        %v3451 = vpop.f32.mrb[0].mxu0
        %v3452 = vadd.f32 %v993, %v3451
        %3453 = vmatprep.mubr.f32.mxu0 0.0
        %3454 = vmatmul.mubr.f32.gmra.mrb[0].mxu0 %v1010
        %v3455 = vpop.f32.mrb[0].mxu0
        %v3456 = vadd.f32 %v998, %v3455
        %v3457 = vpop.f32.mrb[0].mxu0
        %v3458 = vadd.f32 %v998, %v3457
        %3459 = vdwg.mxu0
        %v3460 = vmax.f32 %v3438, 0.0
        %v3461 = vmax.f32 %v3440, 0.0
        %v3462 = vmax.f32 %v3444, 0.0
        %v3463 = vmax.f32 %v3446, 0.0
        %v3464 = vmax.f32 %v3450, 0.0
        %v3465 = vmax.f32 %v3452, 0.0
        %v3466 = vmax.f32 %v3456, 0.0
        %v3467 = vmax.f32 %v3458, 0.0
        %3468 = vmatprep.subr.mxu0 %v3364
        %3469 = vmatpush1.msra.mxu0 %v3363
        %3470 = vmatprep.subr.mxu0 %v3366
        %3471 = vmatpush1.msra.mxu0 %v3365
        %3472 = vmatprep.subr.mxu0 %v3368
        %3473 = vmatpush1.msra.mxu0 %v3367
        %3474 = vmatprep.subr.mxu0 %v3370
        %3475 = vmatpush1.msra.mxu0 %v3369
        %3476 = vmatprep.subr.mxu0 0.0
        %3477 = vmatpush1.msra.mxu0 0.0
        %3478 = vmatprep.subr.mxu0 0.0
        %3479 = vmatpush1.msra.mxu0 0.0
        %3480 = vmatprep.subr.mxu0 0.0
        %3481 = vmatpush1.msra.mxu0 0.0
        %3482 = vmatprep.subr.mxu0 0.0
        %3483 = vmatpush1.msra.mxu0 0.0
        %3484 = vmatprep.subr.mxu0 0.0
        %3485 = vmatpush1.msra.mxu0 0.0
        %3486 = vmatprep.subr.mxu0 0.0
        %3487 = vmatpush1.msra.mxu0 0.0
        %3488 = vmatprep.subr.mxu0 0.0
        %3489 = vmatpush1.msra.mxu0 0.0
        %3490 = vmatprep.subr.mxu0 0.0
        %3491 = vmatpush1.msra.mxu0 0.0
        %3492 = vmatprep.subr.mxu0 0.0
        %3493 = vmatpush1.msra.mxu0 0.0
        %3494 = vmatprep.subr.mxu0 0.0
        %3495 = vmatpush1.msra.mxu0 0.0
        %3496 = vmatprep.subr.mxu0 0.0
        %3497 = vmatpush1.msra.mxu0 0.0
        %3498 = vmatprep.subr.mxu0 0.0
        %3499 = vmatpush1.msra.mxu0 0.0
        %3500 = vmatprep.subr.mxu0 0.0
        %3501 = vmatpush1.msra.mxu0 0.0
        %3502 = vmatprep.subr.mxu0 0.0
        %3503 = vmatpush1.msra.mxu0 0.0
        %3504 = vmatprep.subr.mxu0 0.0
        %3505 = vmatpush1.msra.mxu0 0.0
        %3506 = vmatprep.subr.mxu0 0.0
        %3507 = vmatpush1.msra.mxu0 0.0
        %3508 = vmatprep.subr.mxu0 0.0
        %3509 = vmatpush1.msra.mxu0 0.0
        %3510 = vmatprep.subr.mxu0 0.0
        %3511 = vmatpush1.msra.mxu0 0.0
        %3512 = vmatprep.subr.mxu0 0.0
        %3513 = vmatpush1.msra.mxu0 0.0
        %3514 = vmatprep.subr.mxu0 0.0
        %3515 = vmatpush1.msra.mxu0 0.0
        %3516 = vmatprep.subr.mxu0 0.0
        %3517 = vmatpush1.msra.mxu0 0.0
        %3518 = vmatprep.subr.mxu0 0.0
        %3519 = vmatpush1.msra.mxu0 0.0
        %3520 = vmatprep.subr.mxu0 0.0
        %3521 = vmatpush1.msra.mxu0 0.0
        %3522 = vmatprep.subr.mxu0 0.0
        %3523 = vmatpush1.msra.mxu0 0.0
        %3524 = vmatprep.subr.mxu0 0.0
        %3525 = vmatpush1.msra.mxu0 0.0
        %3526 = vmatprep.subr.mxu0 0.0
        %3527 = vmatpush1.msra.mxu0 0.0
        %3528 = vmatprep.subr.mxu0 0.0
        %3529 = vmatpush1.msra.mxu0 0.0
        %3530 = vmatprep.subr.mxu0 0.0
        %3531 = vmatpush1.msra.mxu0 0.0
        %3532 = vmatprep.mubr.f32.mxu0 0.0
        %3533 = vmatmul.mubr.f32.gmra.mrb[0].mxu0 %v1130
        %v3534 = vpop.f32.mrb[0].mxu0
        %v3535 = vadd.f32 %v1112, %v3534
        %v3536 = vpop.f32.mrb[0].mxu0
        %v3537 = vadd.f32 %v1112, %v3536
        %3538 = vmatprep.mubr.f32.mxu0 0.0
        %3539 = vmatmul.mubr.f32.gmra.mrb[0].mxu0 %v1133
        %v3540 = vpop.f32.mrb[0].mxu0
        %v3541 = vadd.f32 %v1117, %v3540
        %v3542 = vpop.f32.mrb[0].mxu0
        %v3543 = vadd.f32 %v1117, %v3542
        %3544 = vmatprep.mubr.f32.mxu0 0.0
        %3545 = vmatmul.mubr.f32.gmra.mrb[0].mxu0 %v1136
        %v3546 = vpop.f32.mrb[0].mxu0
        %v3547 = vadd.f32 %v1122, %v3546
        %v3548 = vpop.f32.mrb[0].mxu0
        %v3549 = vadd.f32 %v1122, %v3548
        %3550 = vmatprep.mubr.f32.mxu0 0.0
        %3551 = vmatmul.mubr.f32.gmra.mrb[0].mxu0 %v1139
        %v3552 = vpop.f32.mrb[0].mxu0
        %v3553 = vadd.f32 %v1127, %v3552
        %v3554 = vpop.f32.mrb[0].mxu0
        %v3555 = vadd.f32 %v1127, %v3554
        %3556 = vdwg.mxu0
        %v3557 = vmax.f32 %v3535, 0.0
        %v3558 = vmax.f32 %v3537, 0.0
        %v3559 = vmax.f32 %v3541, 0.0
        %v3560 = vmax.f32 %v3543, 0.0
        %v3561 = vmax.f32 %v3547, 0.0
        %v3562 = vmax.f32 %v3549, 0.0
        %v3563 = vmax.f32 %v3553, 0.0
        %v3564 = vmax.f32 %v3555, 0.0
        %v3565 = vmul.f32 %v3557, 0.5
        %v3566 = vmul.f32 %v3558, 0.5
        %v3567 = vmul.f32 %v3559, 0.5
        %v3568 = vmul.f32 %v3560, 0.5
        %v3569 = vmul.f32 %v3561, 0.5
        %v3570 = vmul.f32 %v3562, 0.5
        %v3571 = vmul.f32 %v3563, 0.5
        %v3572 = vmul.f32 %v3564, 0.5
        %v3573 = vadd.f32 %v3460, %v3565
        %v3574 = vadd.f32 %v3461, %v3566
        %v3575 = vadd.f32 %v3462, %v3567
        %v3576 = vadd.f32 %v3463, %v3568
        %v3577 = vadd.f32 %v3464, %v3569
        %v3578 = vadd.f32 %v3465, %v3570
        %v3579 = vadd.f32 %v3466, %v3571
        %v3580 = vadd.f32 %v3467, %v3572
        %3581 = vmatprep.subr.mxu0 %v3574
        %3582 = vmatpush1.msra.mxu0 %v3573
        %3583 = vmatprep.subr.mxu0 %v3576
        %3584 = vmatpush1.msra.mxu0 %v3575
        %3585 = vmatprep.subr.mxu0 %v3578
        %3586 = vmatpush1.msra.mxu0 %v3577
        %3587 = vmatprep.subr.mxu0 %v3580
        %3588 = vmatpush1.msra.mxu0 %v3579
        %3589 = vmatprep.subr.mxu0 0.0
        %3590 = vmatpush1.msra.mxu0 0.0
        %3591 = vmatprep.subr.mxu0 0.0
        %3592 = vmatpush1.msra.mxu0 0.0
        %3593 = vmatprep.subr.mxu0 0.0
        %3594 = vmatpush1.msra.mxu0 0.0
        %3595 = vmatprep.subr.mxu0 0.0
        %3596 = vmatpush1.msra.mxu0 0.0
        %3597 = vmatprep.subr.mxu0 0.0
        %3598 = vmatpush1.msra.mxu0 0.0
        %3599 = vmatprep.subr.mxu0 0.0
        %3600 = vmatpush1.msra.mxu0 0.0
        %3601 = vmatprep.subr.mxu0 0.0
        %3602 = vmatpush1.msra.mxu0 0.0
        %3603 = vmatprep.subr.mxu0 0.0
        %3604 = vmatpush1.msra.mxu0 0.0
        %3605 = vmatprep.subr.mxu0 0.0
        %3606 = vmatpush1.msra.mxu0 0.0
        %3607 = vmatprep.subr.mxu0 0.0
        %3608 = vmatpush1.msra.mxu0 0.0
        %3609 = vmatprep.subr.mxu0 0.0
        %3610 = vmatpush1.msra.mxu0 0.0
        %3611 = vmatprep.subr.mxu0 0.0
        %3612 = vmatpush1.msra.mxu0 0.0
        %3613 = vmatprep.subr.mxu0 0.0
        %3614 = vmatpush1.msra.mxu0 0.0
        %3615 = vmatprep.subr.mxu0 0.0
        %3616 = vmatpush1.msra.mxu0 0.0
        %3617 = vmatprep.subr.mxu0 0.0
        %3618 = vmatpush1.msra.mxu0 0.0
        %3619 = vmatprep.subr.mxu0 0.0
        %3620 = vmatpush1.msra.mxu0 0.0
        %3621 = vmatprep.subr.mxu0 0.0
        %3622 = vmatpush1.msra.mxu0 0.0
        %3623 = vmatprep.subr.mxu0 0.0
        %3624 = vmatpush1.msra.mxu0 0.0
        %3625 = vmatprep.subr.mxu0 0.0
        %3626 = vmatpush1.msra.mxu0 0.0
        %3627 = vmatprep.subr.mxu0 0.0
        %3628 = vmatpush1.msra.mxu0 0.0
        %3629 = vmatprep.subr.mxu0 0.0
        %3630 = vmatpush1.msra.mxu0 0.0
        %3631 = vmatprep.subr.mxu0 0.0
        %3632 = vmatpush1.msra.mxu0 0.0
        %3633 = vmatprep.subr.mxu0 0.0
        %3634 = vmatpush1.msra.mxu0 0.0
        %3635 = vmatprep.subr.mxu0 0.0
        %3636 = vmatpush1.msra.mxu0 0.0
        %3637 = vmatprep.subr.mxu0 0.0
        %3638 = vmatpush1.msra.mxu0 0.0
        %3639 = vmatprep.subr.mxu0 0.0
        %3640 = vmatpush1.msra.mxu0 0.0
        %3641 = vmatprep.subr.mxu0 0.0
        %3642 = vmatpush1.msra.mxu0 0.0
        %3643 = vmatprep.subr.mxu0 0.0
        %3644 = vmatpush1.msra.mxu0 0.0
        %3645 = vmatprep.mubr.f32.mxu0 0.0
        %3646 = vmatmul.mubr.f32.gmra.mrb[0].mxu0 %v1260
        %v3647 = vpop.f32.mrb[0].mxu0
        %v3648 = vadd.f32 %v1257, %v3647
        %v3649 = vpop.f32.mrb[0].mxu0
        %v3650 = vadd.f32 %v1257, %v3649
        %3651 = vdwg.mxu0
        %3652 = vst [vmem:[%s338 + $0x30] sm:$0xff] %v3648
        %3653 = vst [vmem:[%s338 + $0x38] sm:$0xff] %v3650
        %v3654 = vld [vmem:[%s347 + $0x400] sm:$0xff]
        %v3655 = vld [vmem:[%s347 + $0x408] sm:$0xff]
        %v3656 = vld [vmem:[%s347 + $0x410] sm:$0xff]
        %v3657 = vld [vmem:[%s347 + $0x418] sm:$0xff]
        %v3658 = vld [vmem:[%s347 + $0x420] sm:$0xff]
        %v3659 = vld [vmem:[%s347 + $0x428] sm:$0xff]
        %v3660 = vld [vmem:[%s347 + $0x430] sm:$0xff]
        %v3661 = vld [vmem:[%s347 + $0x438] sm:$0xff]
        %v3662 = vld [vmem:[%s347 + $0x440] sm:$0xff]
        %v3663 = vld [vmem:[%s347 + $0x448] sm:$0xff]
        %v3664 = vld [vmem:[%s347 + $0x450] sm:$0xff]
        %v3665 = vld [vmem:[%s347 + $0x458] sm:$0xff]
        %v3666 = vld [vmem:[%s347 + $0x460] sm:$0xff]
        %v3667 = vld [vmem:[%s347 + $0x468] sm:$0xff]
        %v3668 = vld [vmem:[%s347 + $0x470] sm:$0xff]
        %v3669 = vld [vmem:[%s347 + $0x478] sm:$0xff]
        %v3670 = vld [vmem:[%s347 + $0x480] sm:$0xff]
        %v3671 = vld [vmem:[%s347 + $0x488] sm:$0xff]
        %v3672 = vld [vmem:[%s347 + $0x490] sm:$0xff]
        %v3673 = vld [vmem:[%s347 + $0x498] sm:$0xff]
        %v3674 = vld [vmem:[%s347 + $0x4a0] sm:$0xff]
        %v3675 = vld [vmem:[%s347 + $0x4a8] sm:$0xff]
        %v3676 = vld [vmem:[%s347 + $0x4b0] sm:$0xff]
        %v3677 = vld [vmem:[%s347 + $0x4b8] sm:$0xff]
        %v3678 = vld [vmem:[%s347 + $0x4c0] sm:$0xff]
        %v3679 = vld [vmem:[%s347 + $0x4c8] sm:$0xff]
        %v3680 = vld [vmem:[%s347 + $0x4d0] sm:$0xff]
        %v3681 = vld [vmem:[%s347 + $0x4d8] sm:$0xff]
        %v3682 = vld [vmem:[%s347 + $0x4e0] sm:$0xff]
        %v3683 = vld [vmem:[%s347 + $0x4e8] sm:$0xff]
        %v3684 = vld [vmem:[%s347 + $0x4f0] sm:$0xff]
        %v3685 = vld [vmem:[%s347 + $0x4f8] sm:$0xff]
        %v3687 = vsel %vm455, %v3654, 0
        %v3690 = vsel %vm455, %v3655, 0
        %v3693 = vsel %vm455, %v3656, 0
        %v3696 = vsel %vm455, %v3657, 0
        %v3699 = vsel %vm455, %v3658, 0
        %v3702 = vsel %vm455, %v3659, 0
        %v3705 = vsel %vm455, %v3660, 0
        %v3708 = vsel %vm455, %v3661, 0
        %v3711 = vsel %vm455, %v3662, 0
        %v3714 = vsel %vm455, %v3663, 0
        %v3717 = vsel %vm455, %v3664, 0
        %v3720 = vsel %vm455, %v3665, 0
        %v3723 = vsel %vm455, %v3666, 0
        %v3726 = vsel %vm455, %v3667, 0
        %v3729 = vsel %vm455, %v3668, 0
        %v3732 = vsel %vm455, %v3669, 0
        %v3735 = vsel %vm455, %v3670, 0
        %v3738 = vsel %vm455, %v3671, 0
        %v3741 = vsel %vm455, %v3672, 0
        %v3744 = vsel %vm455, %v3673, 0
        %v3747 = vsel %vm455, %v3674, 0
        %v3750 = vsel %vm455, %v3675, 0
        %v3753 = vsel %vm455, %v3676, 0
        %v3756 = vsel %vm455, %v3677, 0
        %v3759 = vsel %vm455, %v3678, 0
        %v3762 = vsel %vm455, %v3679, 0
        %v3765 = vsel %vm455, %v3680, 0
        %v3768 = vsel %vm455, %v3681, 0
        %v3771 = vsel %vm455, %v3682, 0
        %v3774 = vsel %vm455, %v3683, 0
        %v3777 = vsel %vm455, %v3684, 0
        %v3780 = vsel %vm455, %v3685, 0
        %3782 = vmatprep.subr.mxu0 0.0
        %3783 = vmatpush1.xpose.msra.mxu0 %v3687
        %3784 = vmatprep.subr.mxu0 0.0
        %3785 = vmatpush1.xpose.msra.mxu0 %v3690
        %3786 = vmatprep.subr.mxu0 0.0
        %3787 = vmatpush1.xpose.msra.mxu0 %v3693
        %3788 = vmatprep.subr.mxu0 0.0
        %3789 = vmatpush1.xpose.msra.mxu0 %v3696
        %3790 = vmatprep.subr.mxu0 0.0
        %3791 = vmatpush1.xpose.msra.mxu0 %v3699
        %3792 = vmatprep.subr.mxu0 0.0
        %3793 = vmatpush1.xpose.msra.mxu0 %v3702
        %3794 = vmatprep.subr.mxu0 0.0
        %3795 = vmatpush1.xpose.msra.mxu0 %v3705
        %3796 = vmatprep.subr.mxu0 0.0
        %3797 = vmatpush1.xpose.msra.mxu0 %v3708
        %3798 = vmatprep.subr.mxu0 0.0
        %3799 = vmatpush1.xpose.msra.mxu0 %v3711
        %3800 = vmatprep.subr.mxu0 0.0
        %3801 = vmatpush1.xpose.msra.mxu0 %v3714
        %3802 = vmatprep.subr.mxu0 0.0
        %3803 = vmatpush1.xpose.msra.mxu0 %v3717
        %3804 = vmatprep.subr.mxu0 0.0
        %3805 = vmatpush1.xpose.msra.mxu0 %v3720
        %3806 = vmatprep.subr.mxu0 0.0
        %3807 = vmatpush1.xpose.msra.mxu0 %v3723
        %3808 = vmatprep.subr.mxu0 0.0
        %3809 = vmatpush1.xpose.msra.mxu0 %v3726
        %3810 = vmatprep.subr.mxu0 0.0
        %3811 = vmatpush1.xpose.msra.mxu0 %v3729
        %3812 = vmatprep.subr.mxu0 0.0
        %3813 = vmatpush1.xpose.msra.mxu0 %v3732
        %3814 = vmatprep.subr.mxu0 0.0
        %3815 = vmatpush1.xpose.msra.mxu0 %v3735
        %3816 = vmatprep.subr.mxu0 0.0
        %3817 = vmatpush1.xpose.msra.mxu0 %v3738
        %3818 = vmatprep.subr.mxu0 0.0
        %3819 = vmatpush1.xpose.msra.mxu0 %v3741
        %3820 = vmatprep.subr.mxu0 0.0
        %3821 = vmatpush1.xpose.msra.mxu0 %v3744
        %3822 = vmatprep.subr.mxu0 0.0
        %3823 = vmatpush1.xpose.msra.mxu0 %v3747
        %3824 = vmatprep.subr.mxu0 0.0
        %3825 = vmatpush1.xpose.msra.mxu0 %v3750
        %3826 = vmatprep.subr.mxu0 0.0
        %3827 = vmatpush1.xpose.msra.mxu0 %v3753
        %3828 = vmatprep.subr.mxu0 0.0
        %3829 = vmatpush1.xpose.msra.mxu0 %v3756
        %3830 = vmatprep.subr.mxu0 0.0
        %3831 = vmatpush1.xpose.msra.mxu0 %v3759
        %3832 = vmatprep.subr.mxu0 0.0
        %3833 = vmatpush1.xpose.msra.mxu0 %v3762
        %3834 = vmatprep.subr.mxu0 0.0
        %3835 = vmatpush1.xpose.msra.mxu0 %v3765
        %3836 = vmatprep.subr.mxu0 0.0
        %3837 = vmatpush1.xpose.msra.mxu0 %v3768
        %3838 = vmatprep.subr.mxu0 0.0
        %3839 = vmatpush1.xpose.msra.mxu0 %v3771
        %3840 = vmatprep.subr.mxu0 0.0
        %3841 = vmatpush1.xpose.msra.mxu0 %v3774
        %3842 = vmatprep.subr.mxu0 0.0
        %3843 = vmatpush1.xpose.msra.mxu0 %v3777
        %3844 = vmatprep.subr.mxu0 0.0
        %3845 = vmatpush1.xpose.msra.mxu0 %v3780
        %3846 = vmatprep.mubr.f32.mxu0 0.0
        %3847 = vmatmul.mubr.f32.gmra.mrb[0].mxu0 %v457
        %v3848 = vpop.f32.mrb[0].mxu0
        %v3849 = vadd.f32 %v438, %v3848
        %v3850 = vpop.f32.mrb[0].mxu0
        %v3851 = vadd.f32 %v438, %v3850
        %3852 = vmatprep.mubr.f32.mxu0 0.0
        %3853 = vmatmul.mubr.f32.gmra.mrb[0].mxu0 %v460
        %v3854 = vpop.f32.mrb[0].mxu0
        %v3855 = vadd.f32 %v443, %v3854
        %v3856 = vpop.f32.mrb[0].mxu0
        %v3857 = vadd.f32 %v443, %v3856
        %3858 = vmatprep.mubr.f32.mxu0 0.0
        %3859 = vmatmul.mubr.f32.gmra.mrb[0].mxu0 %v463
        %v3860 = vpop.f32.mrb[0].mxu0
        %v3861 = vadd.f32 %v448, %v3860
        %v3862 = vpop.f32.mrb[0].mxu0
        %v3863 = vadd.f32 %v448, %v3862
        %3864 = vmatprep.mubr.f32.mxu0 0.0
        %3865 = vmatmul.mubr.f32.gmra.mrb[0].mxu0 %v466
        %v3866 = vpop.f32.mrb[0].mxu0
        %v3867 = vadd.f32 %v453, %v3866
        %v3868 = vpop.f32.mrb[0].mxu0
        %v3869 = vadd.f32 %v453, %v3868
        %3870 = vdwg.mxu0
        %v3871 = vmax.f32 %v3849, 0.0
        %v3872 = vmax.f32 %v3851, 0.0
        %v3873 = vmax.f32 %v3855, 0.0
        %v3874 = vmax.f32 %v3857, 0.0
        %v3875 = vmax.f32 %v3861, 0.0
        %v3876 = vmax.f32 %v3863, 0.0
        %v3877 = vmax.f32 %v3867, 0.0
        %v3878 = vmax.f32 %v3869, 0.0
        %3879 = vmatprep.subr.mxu0 %v3872
        %3880 = vmatpush1.msra.mxu0 %v3871
        %3881 = vmatprep.subr.mxu0 %v3874
        %3882 = vmatpush1.msra.mxu0 %v3873
        %3883 = vmatprep.subr.mxu0 %v3876
        %3884 = vmatpush1.msra.mxu0 %v3875
        %3885 = vmatprep.subr.mxu0 %v3878
        %3886 = vmatpush1.msra.mxu0 %v3877
        %3887 = vmatprep.subr.mxu0 0.0
        %3888 = vmatpush1.msra.mxu0 0.0
        %3889 = vmatprep.subr.mxu0 0.0
        %3890 = vmatpush1.msra.mxu0 0.0
        %3891 = vmatprep.subr.mxu0 0.0
        %3892 = vmatpush1.msra.mxu0 0.0
        %3893 = vmatprep.subr.mxu0 0.0
        %3894 = vmatpush1.msra.mxu0 0.0
        %3895 = vmatprep.subr.mxu0 0.0
        %3896 = vmatpush1.msra.mxu0 0.0
        %3897 = vmatprep.subr.mxu0 0.0
        %3898 = vmatpush1.msra.mxu0 0.0
        %3899 = vmatprep.subr.mxu0 0.0
        %3900 = vmatpush1.msra.mxu0 0.0
        %3901 = vmatprep.subr.mxu0 0.0
        %3902 = vmatpush1.msra.mxu0 0.0
        %3903 = vmatprep.subr.mxu0 0.0
        %3904 = vmatpush1.msra.mxu0 0.0
        %3905 = vmatprep.subr.mxu0 0.0
        %3906 = vmatpush1.msra.mxu0 0.0
        %3907 = vmatprep.subr.mxu0 0.0
        %3908 = vmatpush1.msra.mxu0 0.0
        %3909 = vmatprep.subr.mxu0 0.0
        %3910 = vmatpush1.msra.mxu0 0.0
        %3911 = vmatprep.subr.mxu0 0.0
        %3912 = vmatpush1.msra.mxu0 0.0
        %3913 = vmatprep.subr.mxu0 0.0
        %3914 = vmatpush1.msra.mxu0 0.0
        %3915 = vmatprep.subr.mxu0 0.0
        %3916 = vmatpush1.msra.mxu0 0.0
        %3917 = vmatprep.subr.mxu0 0.0
        %3918 = vmatpush1.msra.mxu0 0.0
        %3919 = vmatprep.subr.mxu0 0.0
        %3920 = vmatpush1.msra.mxu0 0.0
        %3921 = vmatprep.subr.mxu0 0.0
        %3922 = vmatpush1.msra.mxu0 0.0
        %3923 = vmatprep.subr.mxu0 0.0
        %3924 = vmatpush1.msra.mxu0 0.0
        %3925 = vmatprep.subr.mxu0 0.0
        %3926 = vmatpush1.msra.mxu0 0.0
        %3927 = vmatprep.subr.mxu0 0.0
        %3928 = vmatpush1.msra.mxu0 0.0
        %3929 = vmatprep.subr.mxu0 0.0
        %3930 = vmatpush1.msra.mxu0 0.0
        %3931 = vmatprep.subr.mxu0 0.0
        %3932 = vmatpush1.msra.mxu0 0.0
        %3933 = vmatprep.subr.mxu0 0.0
        %3934 = vmatpush1.msra.mxu0 0.0
        %3935 = vmatprep.subr.mxu0 0.0
        %3936 = vmatpush1.msra.mxu0 0.0
        %3937 = vmatprep.subr.mxu0 0.0
        %3938 = vmatpush1.msra.mxu0 0.0
        %3939 = vmatprep.subr.mxu0 0.0
        %3940 = vmatpush1.msra.mxu0 0.0
        %3941 = vmatprep.subr.mxu0 0.0
        %3942 = vmatpush1.msra.mxu0 0.0
        %3943 = vmatprep.mubr.f32.mxu0 0.0
        %3944 = vmatmul.mubr.f32.gmra.mrb[0].mxu0 %v668
        %v3945 = vpop.f32.mrb[0].mxu0
        %v3946 = vadd.f32 %v664, %v3945
        %v3947 = vpop.f32.mrb[0].mxu0
        %v3948 = vadd.f32 %v664, %v3947
        %3949 = vdwg.mxu0
        %3950 = vmatprep.subr.mxu0 %v3948
        %3951 = vmatpush1.msra.mxu0 %v3946
        %3952 = vmatprep.subr.mxu0 0.0
        %3953 = vmatpush1.msra.mxu0 0.0
        %3954 = vmatprep.subr.mxu0 0.0
        %3955 = vmatpush1.msra.mxu0 0.0
        %3956 = vmatprep.subr.mxu0 0.0
        %3957 = vmatpush1.msra.mxu0 0.0
        %3958 = vmatprep.subr.mxu0 0.0
        %3959 = vmatpush1.msra.mxu0 0.0
        %3960 = vmatprep.subr.mxu0 0.0
        %3961 = vmatpush1.msra.mxu0 0.0
        %3962 = vmatprep.subr.mxu0 0.0
        %3963 = vmatpush1.msra.mxu0 0.0
        %3964 = vmatprep.subr.mxu0 0.0
        %3965 = vmatpush1.msra.mxu0 0.0
        %3966 = vmatprep.subr.mxu0 0.0
        %3967 = vmatpush1.msra.mxu0 0.0
        %3968 = vmatprep.subr.mxu0 0.0
        %3969 = vmatpush1.msra.mxu0 0.0
        %3970 = vmatprep.subr.mxu0 0.0
        %3971 = vmatpush1.msra.mxu0 0.0
        %3972 = vmatprep.subr.mxu0 0.0
        %3973 = vmatpush1.msra.mxu0 0.0
        %3974 = vmatprep.subr.mxu0 0.0
        %3975 = vmatpush1.msra.mxu0 0.0
        %3976 = vmatprep.subr.mxu0 0.0
        %3977 = vmatpush1.msra.mxu0 0.0
        %3978 = vmatprep.subr.mxu0 0.0
        %3979 = vmatpush1.msra.mxu0 0.0
        %3980 = vmatprep.subr.mxu0 0.0
        %3981 = vmatpush1.msra.mxu0 0.0
        %3982 = vmatprep.subr.mxu0 0.0
        %3983 = vmatpush1.msra.mxu0 0.0
        %3984 = vmatprep.subr.mxu0 0.0
        %3985 = vmatpush1.msra.mxu0 0.0
        %3986 = vmatprep.subr.mxu0 0.0
        %3987 = vmatpush1.msra.mxu0 0.0
        %3988 = vmatprep.subr.mxu0 0.0
        %3989 = vmatpush1.msra.mxu0 0.0
        %3990 = vmatprep.subr.mxu0 0.0
        %3991 = vmatpush1.msra.mxu0 0.0
        %3992 = vmatprep.subr.mxu0 0.0
        %3993 = vmatpush1.msra.mxu0 0.0
        %3994 = vmatprep.subr.mxu0 0.0
        %3995 = vmatpush1.msra.mxu0 0.0
        %3996 = vmatprep.subr.mxu0 0.0
        %3997 = vmatpush1.msra.mxu0 0.0
        %3998 = vmatprep.subr.mxu0 0.0
        %3999 = vmatpush1.msra.mxu0 0.0
        %4000 = vmatprep.subr.mxu0 0.0
        %4001 = vmatpush1.msra.mxu0 0.0
        %4002 = vmatprep.subr.mxu0 0.0
        %4003 = vmatpush1.msra.mxu0 0.0
        %4004 = vmatprep.subr.mxu0 0.0
        %4005 = vmatpush1.msra.mxu0 0.0
        %4006 = vmatprep.subr.mxu0 0.0
        %4007 = vmatpush1.msra.mxu0 0.0
        %4008 = vmatprep.subr.mxu0 0.0
        %4009 = vmatpush1.msra.mxu0 0.0
        %4010 = vmatprep.subr.mxu0 0.0
        %4011 = vmatpush1.msra.mxu0 0.0
        %4012 = vmatprep.subr.mxu0 0.0
        %4013 = vmatpush1.msra.mxu0 0.0
        %4014 = vmatprep.mubr.f32.mxu0 0.0
        %4015 = vmatmul.mubr.f32.gmra.mrb[0].mxu0 %v743
        %v4016 = vpop.f32.mrb[0].mxu0
        %v4017 = vadd.f32 0.0, %v4016
        %v4018 = vpop.f32.mrb[0].mxu0
        %v4019 = vadd.f32 0.0, %v4018
        %4020 = vmatprep.mubr.f32.mxu0 0.0
        %4021 = vmatmul.mubr.f32.gmra.mrb[0].mxu0 %v746
        %v4022 = vpop.f32.mrb[0].mxu0
        %v4023 = vadd.f32 0.0, %v4022
        %v4024 = vpop.f32.mrb[0].mxu0
        %v4025 = vadd.f32 0.0, %v4024
        %4026 = vmatprep.mubr.f32.mxu0 0.0
        %4027 = vmatmul.mubr.f32.gmra.mrb[0].mxu0 %v749
        %v4028 = vpop.f32.mrb[0].mxu0
        %v4029 = vadd.f32 0.0, %v4028
        %v4030 = vpop.f32.mrb[0].mxu0
        %v4031 = vadd.f32 0.0, %v4030
        %4032 = vmatprep.mubr.f32.mxu0 0.0
        %4033 = vmatmul.mubr.f32.gmra.mrb[0].mxu0 %v752
        %v4034 = vpop.f32.mrb[0].mxu0
        %v4035 = vadd.f32 0.0, %v4034
        %v4036 = vpop.f32.mrb[0].mxu0
        %v4037 = vadd.f32 0.0, %v4036
        %4038 = vdwg.mxu0
        %4039 = vmatprep.subr.mxu0 0.0
        %4040 = vmatpush1.xpose.msra.mxu0 %v3687
        %4041 = vmatprep.subr.mxu0 0.0
        %4042 = vmatpush1.xpose.msra.mxu0 %v3690
        %4043 = vmatprep.subr.mxu0 0.0
        %4044 = vmatpush1.xpose.msra.mxu0 %v3693
        %4045 = vmatprep.subr.mxu0 0.0
        %4046 = vmatpush1.xpose.msra.mxu0 %v3696
        %4047 = vmatprep.subr.mxu0 0.0
        %4048 = vmatpush1.xpose.msra.mxu0 %v3699
        %4049 = vmatprep.subr.mxu0 0.0
        %4050 = vmatpush1.xpose.msra.mxu0 %v3702
        %4051 = vmatprep.subr.mxu0 0.0
        %4052 = vmatpush1.xpose.msra.mxu0 %v3705
        %4053 = vmatprep.subr.mxu0 0.0
        %4054 = vmatpush1.xpose.msra.mxu0 %v3708
        %4055 = vmatprep.subr.mxu0 0.0
        %4056 = vmatpush1.xpose.msra.mxu0 %v3711
        %4057 = vmatprep.subr.mxu0 0.0
        %4058 = vmatpush1.xpose.msra.mxu0 %v3714
        %4059 = vmatprep.subr.mxu0 0.0
        %4060 = vmatpush1.xpose.msra.mxu0 %v3717
        %4061 = vmatprep.subr.mxu0 0.0
        %4062 = vmatpush1.xpose.msra.mxu0 %v3720
        %4063 = vmatprep.subr.mxu0 0.0
        %4064 = vmatpush1.xpose.msra.mxu0 %v3723
        %4065 = vmatprep.subr.mxu0 0.0
        %4066 = vmatpush1.xpose.msra.mxu0 %v3726
        %4067 = vmatprep.subr.mxu0 0.0
        %4068 = vmatpush1.xpose.msra.mxu0 %v3729
        %4069 = vmatprep.subr.mxu0 0.0
        %4070 = vmatpush1.xpose.msra.mxu0 %v3732
        %4071 = vmatprep.subr.mxu0 0.0
        %4072 = vmatpush1.xpose.msra.mxu0 %v3735
        %4073 = vmatprep.subr.mxu0 0.0
        %4074 = vmatpush1.xpose.msra.mxu0 %v3738
        %4075 = vmatprep.subr.mxu0 0.0
        %4076 = vmatpush1.xpose.msra.mxu0 %v3741
        %4077 = vmatprep.subr.mxu0 0.0
        %4078 = vmatpush1.xpose.msra.mxu0 %v3744
        %4079 = vmatprep.subr.mxu0 0.0
        %4080 = vmatpush1.xpose.msra.mxu0 %v3747
        %4081 = vmatprep.subr.mxu0 0.0
        %4082 = vmatpush1.xpose.msra.mxu0 %v3750
        %4083 = vmatprep.subr.mxu0 0.0
        %4084 = vmatpush1.xpose.msra.mxu0 %v3753
        %4085 = vmatprep.subr.mxu0 0.0
        %4086 = vmatpush1.xpose.msra.mxu0 %v3756
        %4087 = vmatprep.subr.mxu0 0.0
        %4088 = vmatpush1.xpose.msra.mxu0 %v3759
        %4089 = vmatprep.subr.mxu0 0.0
        %4090 = vmatpush1.xpose.msra.mxu0 %v3762
        %4091 = vmatprep.subr.mxu0 0.0
        %4092 = vmatpush1.xpose.msra.mxu0 %v3765
        %4093 = vmatprep.subr.mxu0 0.0
        %4094 = vmatpush1.xpose.msra.mxu0 %v3768
        %4095 = vmatprep.subr.mxu0 0.0
        %4096 = vmatpush1.xpose.msra.mxu0 %v3771
        %4097 = vmatprep.subr.mxu0 0.0
        %4098 = vmatpush1.xpose.msra.mxu0 %v3774
        %4099 = vmatprep.subr.mxu0 0.0
        %4100 = vmatpush1.xpose.msra.mxu0 %v3777
        %4101 = vmatprep.subr.mxu0 0.0
        %4102 = vmatpush1.xpose.msra.mxu0 %v3780
        %4103 = vmatprep.mubr.f32.mxu0 0.0
        %4104 = vmatmul.mubr.f32.gmra.mrb[0].mxu0 %v844
        %v4105 = vpop.f32.mrb[0].mxu0
        %v4106 = vadd.f32 %v4017, %v4105
        %v4107 = vpop.f32.mrb[0].mxu0
        %v4108 = vadd.f32 %v4019, %v4107
        %4109 = vmatprep.mubr.f32.mxu0 0.0
        %4110 = vmatmul.mubr.f32.gmra.mrb[0].mxu0 %v847
        %v4111 = vpop.f32.mrb[0].mxu0
        %v4112 = vadd.f32 %v4023, %v4111
        %v4113 = vpop.f32.mrb[0].mxu0
        %v4114 = vadd.f32 %v4025, %v4113
        %4115 = vmatprep.mubr.f32.mxu0 0.0
        %4116 = vmatmul.mubr.f32.gmra.mrb[0].mxu0 %v850
        %v4117 = vpop.f32.mrb[0].mxu0
        %v4118 = vadd.f32 %v4029, %v4117
        %v4119 = vpop.f32.mrb[0].mxu0
        %v4120 = vadd.f32 %v4031, %v4119
        %4121 = vmatprep.mubr.f32.mxu0 0.0
        %4122 = vmatmul.mubr.f32.gmra.mrb[0].mxu0 %v853
        %v4123 = vpop.f32.mrb[0].mxu0
        %v4124 = vadd.f32 %v4035, %v4123
        %v4125 = vpop.f32.mrb[0].mxu0
        %v4126 = vadd.f32 %v4037, %v4125
        %4127 = vdwg.mxu0
        %v4128 = vadd.f32 %v4106, %v947
        %v4129 = vadd.f32 %v4108, %v947
        %v4130 = vadd.f32 %v4112, %v952
        %v4131 = vadd.f32 %v4114, %v952
        %v4132 = vadd.f32 %v4118, %v957
        %v4133 = vadd.f32 %v4120, %v957
        %v4134 = vadd.f32 %v4124, %v962
        %v4135 = vadd.f32 %v4126, %v962
        %v4136 = vmax.f32 %v4128, 0.0
        %v4137 = vmax.f32 %v4129, 0.0
        %v4138 = vmax.f32 %v4130, 0.0
        %v4139 = vmax.f32 %v4131, 0.0
        %v4140 = vmax.f32 %v4132, 0.0
        %v4141 = vmax.f32 %v4133, 0.0
        %v4142 = vmax.f32 %v4134, 0.0
        %v4143 = vmax.f32 %v4135, 0.0
        %4144 = vmatprep.subr.mxu0 %v3872
        %4145 = vmatpush1.msra.mxu0 %v3871
        %4146 = vmatprep.subr.mxu0 %v3874
        %4147 = vmatpush1.msra.mxu0 %v3873
        %4148 = vmatprep.subr.mxu0 %v3876
        %4149 = vmatpush1.msra.mxu0 %v3875
        %4150 = vmatprep.subr.mxu0 %v3878
        %4151 = vmatpush1.msra.mxu0 %v3877
        %4152 = vmatprep.subr.mxu0 0.0
        %4153 = vmatpush1.msra.mxu0 0.0
        %4154 = vmatprep.subr.mxu0 0.0
        %4155 = vmatpush1.msra.mxu0 0.0
        %4156 = vmatprep.subr.mxu0 0.0
        %4157 = vmatpush1.msra.mxu0 0.0
        %4158 = vmatprep.subr.mxu0 0.0
        %4159 = vmatpush1.msra.mxu0 0.0
        %4160 = vmatprep.subr.mxu0 0.0
        %4161 = vmatpush1.msra.mxu0 0.0
        %4162 = vmatprep.subr.mxu0 0.0
        %4163 = vmatpush1.msra.mxu0 0.0
        %4164 = vmatprep.subr.mxu0 0.0
        %4165 = vmatpush1.msra.mxu0 0.0
        %4166 = vmatprep.subr.mxu0 0.0
        %4167 = vmatpush1.msra.mxu0 0.0
        %4168 = vmatprep.subr.mxu0 0.0
        %4169 = vmatpush1.msra.mxu0 0.0
        %4170 = vmatprep.subr.mxu0 0.0
        %4171 = vmatpush1.msra.mxu0 0.0
        %4172 = vmatprep.subr.mxu0 0.0
        %4173 = vmatpush1.msra.mxu0 0.0
        %4174 = vmatprep.subr.mxu0 0.0
        %4175 = vmatpush1.msra.mxu0 0.0
        %4176 = vmatprep.subr.mxu0 0.0
        %4177 = vmatpush1.msra.mxu0 0.0
        %4178 = vmatprep.subr.mxu0 0.0
        %4179 = vmatpush1.msra.mxu0 0.0
        %4180 = vmatprep.subr.mxu0 0.0
        %4181 = vmatpush1.msra.mxu0 0.0
        %4182 = vmatprep.subr.mxu0 0.0
        %4183 = vmatpush1.msra.mxu0 0.0
        %4184 = vmatprep.subr.mxu0 0.0
        %4185 = vmatpush1.msra.mxu0 0.0
        %4186 = vmatprep.subr.mxu0 0.0
        %4187 = vmatpush1.msra.mxu0 0.0
        %4188 = vmatprep.subr.mxu0 0.0
        %4189 = vmatpush1.msra.mxu0 0.0
        %4190 = vmatprep.subr.mxu0 0.0
        %4191 = vmatpush1.msra.mxu0 0.0
        %4192 = vmatprep.subr.mxu0 0.0
        %4193 = vmatpush1.msra.mxu0 0.0
        %4194 = vmatprep.subr.mxu0 0.0
        %4195 = vmatpush1.msra.mxu0 0.0
        %4196 = vmatprep.subr.mxu0 0.0
        %4197 = vmatpush1.msra.mxu0 0.0
        %4198 = vmatprep.subr.mxu0 0.0
        %4199 = vmatpush1.msra.mxu0 0.0
        %4200 = vmatprep.subr.mxu0 0.0
        %4201 = vmatpush1.msra.mxu0 0.0
        %4202 = vmatprep.subr.mxu0 0.0
        %4203 = vmatpush1.msra.mxu0 0.0
        %4204 = vmatprep.subr.mxu0 0.0
        %4205 = vmatpush1.msra.mxu0 0.0
        %4206 = vmatprep.subr.mxu0 0.0
        %4207 = vmatpush1.msra.mxu0 0.0
        %4208 = vmatprep.mubr.f32.mxu0 0.0
        %4209 = vmatmul.mubr.f32.gmra.mrb[0].mxu0 %v1001
        %v4210 = vpop.f32.mrb[0].mxu0
        %v4211 = vadd.f32 %v983, %v4210
        %v4212 = vpop.f32.mrb[0].mxu0
        %v4213 = vadd.f32 %v983, %v4212
        %4214 = vmatprep.mubr.f32.mxu0 0.0
        %4215 = vmatmul.mubr.f32.gmra.mrb[0].mxu0 %v1004
        %v4216 = vpop.f32.mrb[0].mxu0
        %v4217 = vadd.f32 %v988, %v4216
        %v4218 = vpop.f32.mrb[0].mxu0
        %v4219 = vadd.f32 %v988, %v4218
        %4220 = vmatprep.mubr.f32.mxu0 0.0
        %4221 = vmatmul.mubr.f32.gmra.mrb[0].mxu0 %v1007
        %v4222 = vpop.f32.mrb[0].mxu0
        %v4223 = vadd.f32 %v993, %v4222
        %v4224 = vpop.f32.mrb[0].mxu0
        %v4225 = vadd.f32 %v993, %v4224
        %4226 = vmatprep.mubr.f32.mxu0 0.0
        %4227 = vmatmul.mubr.f32.gmra.mrb[0].mxu0 %v1010
        %v4228 = vpop.f32.mrb[0].mxu0
        %v4229 = vadd.f32 %v998, %v4228
        %v4230 = vpop.f32.mrb[0].mxu0
        %v4231 = vadd.f32 %v998, %v4230
        %4232 = vdwg.mxu0
        %v4233 = vmax.f32 %v4211, 0.0
        %v4234 = vmax.f32 %v4213, 0.0
        %v4235 = vmax.f32 %v4217, 0.0
        %v4236 = vmax.f32 %v4219, 0.0
        %v4237 = vmax.f32 %v4223, 0.0
        %v4238 = vmax.f32 %v4225, 0.0
        %v4239 = vmax.f32 %v4229, 0.0
        %v4240 = vmax.f32 %v4231, 0.0
        %4241 = vmatprep.subr.mxu0 %v4137
        %4242 = vmatpush1.msra.mxu0 %v4136
        %4243 = vmatprep.subr.mxu0 %v4139
        %4244 = vmatpush1.msra.mxu0 %v4138
        %4245 = vmatprep.subr.mxu0 %v4141
        %4246 = vmatpush1.msra.mxu0 %v4140
        %4247 = vmatprep.subr.mxu0 %v4143
        %4248 = vmatpush1.msra.mxu0 %v4142
        %4249 = vmatprep.subr.mxu0 0.0
        %4250 = vmatpush1.msra.mxu0 0.0
        %4251 = vmatprep.subr.mxu0 0.0
        %4252 = vmatpush1.msra.mxu0 0.0
        %4253 = vmatprep.subr.mxu0 0.0
        %4254 = vmatpush1.msra.mxu0 0.0
        %4255 = vmatprep.subr.mxu0 0.0
        %4256 = vmatpush1.msra.mxu0 0.0
        %4257 = vmatprep.subr.mxu0 0.0
        %4258 = vmatpush1.msra.mxu0 0.0
        %4259 = vmatprep.subr.mxu0 0.0
        %4260 = vmatpush1.msra.mxu0 0.0
        %4261 = vmatprep.subr.mxu0 0.0
        %4262 = vmatpush1.msra.mxu0 0.0
        %4263 = vmatprep.subr.mxu0 0.0
        %4264 = vmatpush1.msra.mxu0 0.0
        %4265 = vmatprep.subr.mxu0 0.0
        %4266 = vmatpush1.msra.mxu0 0.0
        %4267 = vmatprep.subr.mxu0 0.0
        %4268 = vmatpush1.msra.mxu0 0.0
        %4269 = vmatprep.subr.mxu0 0.0
        %4270 = vmatpush1.msra.mxu0 0.0
        %4271 = vmatprep.subr.mxu0 0.0
        %4272 = vmatpush1.msra.mxu0 0.0
        %4273 = vmatprep.subr.mxu0 0.0
        %4274 = vmatpush1.msra.mxu0 0.0
        %4275 = vmatprep.subr.mxu0 0.0
        %4276 = vmatpush1.msra.mxu0 0.0
        %4277 = vmatprep.subr.mxu0 0.0
        %4278 = vmatpush1.msra.mxu0 0.0
        %4279 = vmatprep.subr.mxu0 0.0
        %4280 = vmatpush1.msra.mxu0 0.0
        %4281 = vmatprep.subr.mxu0 0.0
        %4282 = vmatpush1.msra.mxu0 0.0
        %4283 = vmatprep.subr.mxu0 0.0
        %4284 = vmatpush1.msra.mxu0 0.0
        %4285 = vmatprep.subr.mxu0 0.0
        %4286 = vmatpush1.msra.mxu0 0.0
        %4287 = vmatprep.subr.mxu0 0.0
        %4288 = vmatpush1.msra.mxu0 0.0
        %4289 = vmatprep.subr.mxu0 0.0
        %4290 = vmatpush1.msra.mxu0 0.0
        %4291 = vmatprep.subr.mxu0 0.0
        %4292 = vmatpush1.msra.mxu0 0.0
        %4293 = vmatprep.subr.mxu0 0.0
        %4294 = vmatpush1.msra.mxu0 0.0
        %4295 = vmatprep.subr.mxu0 0.0
        %4296 = vmatpush1.msra.mxu0 0.0
        %4297 = vmatprep.subr.mxu0 0.0
        %4298 = vmatpush1.msra.mxu0 0.0
        %4299 = vmatprep.subr.mxu0 0.0
        %4300 = vmatpush1.msra.mxu0 0.0
        %4301 = vmatprep.subr.mxu0 0.0
        %4302 = vmatpush1.msra.mxu0 0.0
        %4303 = vmatprep.subr.mxu0 0.0
        %4304 = vmatpush1.msra.mxu0 0.0
        %4305 = vmatprep.mubr.f32.mxu0 0.0
        %4306 = vmatmul.mubr.f32.gmra.mrb[0].mxu0 %v1130
        %v4307 = vpop.f32.mrb[0].mxu0
        %v4308 = vadd.f32 %v1112, %v4307
        %v4309 = vpop.f32.mrb[0].mxu0
        %v4310 = vadd.f32 %v1112, %v4309
        %4311 = vmatprep.mubr.f32.mxu0 0.0
        %4312 = vmatmul.mubr.f32.gmra.mrb[0].mxu0 %v1133
        %v4313 = vpop.f32.mrb[0].mxu0
        %v4314 = vadd.f32 %v1117, %v4313
        %v4315 = vpop.f32.mrb[0].mxu0
        %v4316 = vadd.f32 %v1117, %v4315
        %4317 = vmatprep.mubr.f32.mxu0 0.0
        %4318 = vmatmul.mubr.f32.gmra.mrb[0].mxu0 %v1136
        %v4319 = vpop.f32.mrb[0].mxu0
        %v4320 = vadd.f32 %v1122, %v4319
        %v4321 = vpop.f32.mrb[0].mxu0
        %v4322 = vadd.f32 %v1122, %v4321
        %4323 = vmatprep.mubr.f32.mxu0 0.0
        %4324 = vmatmul.mubr.f32.gmra.mrb[0].mxu0 %v1139
        %v4325 = vpop.f32.mrb[0].mxu0
        %v4326 = vadd.f32 %v1127, %v4325
        %v4327 = vpop.f32.mrb[0].mxu0
        %v4328 = vadd.f32 %v1127, %v4327
        %4329 = vdwg.mxu0
        %v4330 = vmax.f32 %v4308, 0.0
        %v4331 = vmax.f32 %v4310, 0.0
        %v4332 = vmax.f32 %v4314, 0.0
        %v4333 = vmax.f32 %v4316, 0.0
        %v4334 = vmax.f32 %v4320, 0.0
        %v4335 = vmax.f32 %v4322, 0.0
        %v4336 = vmax.f32 %v4326, 0.0
        %v4337 = vmax.f32 %v4328, 0.0
        %v4338 = vmul.f32 %v4330, 0.5
        %v4339 = vmul.f32 %v4331, 0.5
        %v4340 = vmul.f32 %v4332, 0.5
        %v4341 = vmul.f32 %v4333, 0.5
        %v4342 = vmul.f32 %v4334, 0.5
        %v4343 = vmul.f32 %v4335, 0.5
        %v4344 = vmul.f32 %v4336, 0.5
        %v4345 = vmul.f32 %v4337, 0.5
        %v4346 = vadd.f32 %v4233, %v4338
        %v4347 = vadd.f32 %v4234, %v4339
        %v4348 = vadd.f32 %v4235, %v4340
        %v4349 = vadd.f32 %v4236, %v4341
        %v4350 = vadd.f32 %v4237, %v4342
        %v4351 = vadd.f32 %v4238, %v4343
        %v4352 = vadd.f32 %v4239, %v4344
        %v4353 = vadd.f32 %v4240, %v4345
        %4354 = vmatprep.subr.mxu0 %v4347
        %4355 = vmatpush1.msra.mxu0 %v4346
        %4356 = vmatprep.subr.mxu0 %v4349
        %4357 = vmatpush1.msra.mxu0 %v4348
        %4358 = vmatprep.subr.mxu0 %v4351
        %4359 = vmatpush1.msra.mxu0 %v4350
        %4360 = vmatprep.subr.mxu0 %v4353
        %4361 = vmatpush1.msra.mxu0 %v4352
        %4362 = vmatprep.subr.mxu0 0.0
        %4363 = vmatpush1.msra.mxu0 0.0
        %4364 = vmatprep.subr.mxu0 0.0
        %4365 = vmatpush1.msra.mxu0 0.0
        %4366 = vmatprep.subr.mxu0 0.0
        %4367 = vmatpush1.msra.mxu0 0.0
        %4368 = vmatprep.subr.mxu0 0.0
        %4369 = vmatpush1.msra.mxu0 0.0
        %4370 = vmatprep.subr.mxu0 0.0
        %4371 = vmatpush1.msra.mxu0 0.0
        %4372 = vmatprep.subr.mxu0 0.0
        %4373 = vmatpush1.msra.mxu0 0.0
        %4374 = vmatprep.subr.mxu0 0.0
        %4375 = vmatpush1.msra.mxu0 0.0
        %4376 = vmatprep.subr.mxu0 0.0
        %4377 = vmatpush1.msra.mxu0 0.0
        %4378 = vmatprep.subr.mxu0 0.0
        %4379 = vmatpush1.msra.mxu0 0.0
        %4380 = vmatprep.subr.mxu0 0.0
        %4381 = vmatpush1.msra.mxu0 0.0
        %4382 = vmatprep.subr.mxu0 0.0
        %4383 = vmatpush1.msra.mxu0 0.0
        %4384 = vmatprep.subr.mxu0 0.0
        %4385 = vmatpush1.msra.mxu0 0.0
        %4386 = vmatprep.subr.mxu0 0.0
        %4387 = vmatpush1.msra.mxu0 0.0
        %4388 = vmatprep.subr.mxu0 0.0
        %4389 = vmatpush1.msra.mxu0 0.0
        %4390 = vmatprep.subr.mxu0 0.0
        %4391 = vmatpush1.msra.mxu0 0.0
        %4392 = vmatprep.subr.mxu0 0.0
        %4393 = vmatpush1.msra.mxu0 0.0
        %4394 = vmatprep.subr.mxu0 0.0
        %4395 = vmatpush1.msra.mxu0 0.0
        %4396 = vmatprep.subr.mxu0 0.0
        %4397 = vmatpush1.msra.mxu0 0.0
        %4398 = vmatprep.subr.mxu0 0.0
        %4399 = vmatpush1.msra.mxu0 0.0
        %4400 = vmatprep.subr.mxu0 0.0
        %4401 = vmatpush1.msra.mxu0 0.0
        %4402 = vmatprep.subr.mxu0 0.0
        %4403 = vmatpush1.msra.mxu0 0.0
        %4404 = vmatprep.subr.mxu0 0.0
        %4405 = vmatpush1.msra.mxu0 0.0
        %4406 = vmatprep.subr.mxu0 0.0
        %4407 = vmatpush1.msra.mxu0 0.0
        %4408 = vmatprep.subr.mxu0 0.0
        %4409 = vmatpush1.msra.mxu0 0.0
        %4410 = vmatprep.subr.mxu0 0.0
        %4411 = vmatpush1.msra.mxu0 0.0
        %4412 = vmatprep.subr.mxu0 0.0
        %4413 = vmatpush1.msra.mxu0 0.0
        %4414 = vmatprep.subr.mxu0 0.0
        %4415 = vmatpush1.msra.mxu0 0.0
        %4416 = vmatprep.subr.mxu0 0.0
        %4417 = vmatpush1.msra.mxu0 0.0
        %4418 = vmatprep.mubr.f32.mxu0 0.0
        %4419 = vmatmul.mubr.f32.gmra.mrb[0].mxu0 %v1260
        %v4420 = vpop.f32.mrb[0].mxu0
        %v4421 = vadd.f32 %v1257, %v4420
        %v4422 = vpop.f32.mrb[0].mxu0
        %v4423 = vadd.f32 %v1257, %v4422
        %4424 = vdwg.mxu0
        %4425 = vst [vmem:[%s338 + $0x40] sm:$0xff] %v4421
        %4426 = vst [vmem:[%s338 + $0x48] sm:$0xff] %v4423
        %v4427 = vld [vmem:[%s347 + $0x500] sm:$0xff]
        %v4428 = vld [vmem:[%s347 + $0x508] sm:$0xff]
        %v4429 = vld [vmem:[%s347 + $0x510] sm:$0xff]
        %v4430 = vld [vmem:[%s347 + $0x518] sm:$0xff]
        %v4431 = vld [vmem:[%s347 + $0x520] sm:$0xff]
        %v4432 = vld [vmem:[%s347 + $0x528] sm:$0xff]
        %v4433 = vld [vmem:[%s347 + $0x530] sm:$0xff]
        %v4434 = vld [vmem:[%s347 + $0x538] sm:$0xff]
        %v4435 = vld [vmem:[%s347 + $0x540] sm:$0xff]
        %v4436 = vld [vmem:[%s347 + $0x548] sm:$0xff]
        %v4437 = vld [vmem:[%s347 + $0x550] sm:$0xff]
        %v4438 = vld [vmem:[%s347 + $0x558] sm:$0xff]
        %v4439 = vld [vmem:[%s347 + $0x560] sm:$0xff]
        %v4440 = vld [vmem:[%s347 + $0x568] sm:$0xff]
        %v4441 = vld [vmem:[%s347 + $0x570] sm:$0xff]
        %v4442 = vld [vmem:[%s347 + $0x578] sm:$0xff]
        %v4443 = vld [vmem:[%s347 + $0x580] sm:$0xff]
        %v4444 = vld [vmem:[%s347 + $0x588] sm:$0xff]
        %v4445 = vld [vmem:[%s347 + $0x590] sm:$0xff]
        %v4446 = vld [vmem:[%s347 + $0x598] sm:$0xff]
        %v4447 = vld [vmem:[%s347 + $0x5a0] sm:$0xff]
        %v4448 = vld [vmem:[%s347 + $0x5a8] sm:$0xff]
        %v4449 = vld [vmem:[%s347 + $0x5b0] sm:$0xff]
        %v4450 = vld [vmem:[%s347 + $0x5b8] sm:$0xff]
        %v4451 = vld [vmem:[%s347 + $0x5c0] sm:$0xff]
        %v4452 = vld [vmem:[%s347 + $0x5c8] sm:$0xff]
        %v4453 = vld [vmem:[%s347 + $0x5d0] sm:$0xff]
        %v4454 = vld [vmem:[%s347 + $0x5d8] sm:$0xff]
        %v4455 = vld [vmem:[%s347 + $0x5e0] sm:$0xff]
        %v4456 = vld [vmem:[%s347 + $0x5e8] sm:$0xff]
        %v4457 = vld [vmem:[%s347 + $0x5f0] sm:$0xff]
        %v4458 = vld [vmem:[%s347 + $0x5f8] sm:$0xff]
        %v4460 = vsel %vm455, %v4427, 0
        %v4463 = vsel %vm455, %v4428, 0
        %v4466 = vsel %vm455, %v4429, 0
        %v4469 = vsel %vm455, %v4430, 0
        %v4472 = vsel %vm455, %v4431, 0
        %v4475 = vsel %vm455, %v4432, 0
        %v4478 = vsel %vm455, %v4433, 0
        %v4481 = vsel %vm455, %v4434, 0
        %v4484 = vsel %vm455, %v4435, 0
        %v4487 = vsel %vm455, %v4436, 0
        %v4490 = vsel %vm455, %v4437, 0
        %v4493 = vsel %vm455, %v4438, 0
        %v4496 = vsel %vm455, %v4439, 0
        %v4499 = vsel %vm455, %v4440, 0
        %v4502 = vsel %vm455, %v4441, 0
        %v4505 = vsel %vm455, %v4442, 0
        %v4508 = vsel %vm455, %v4443, 0
        %v4511 = vsel %vm455, %v4444, 0
        %v4514 = vsel %vm455, %v4445, 0
        %v4517 = vsel %vm455, %v4446, 0
        %v4520 = vsel %vm455, %v4447, 0
        %v4523 = vsel %vm455, %v4448, 0
        %v4526 = vsel %vm455, %v4449, 0
        %v4529 = vsel %vm455, %v4450, 0
        %v4532 = vsel %vm455, %v4451, 0
        %v4535 = vsel %vm455, %v4452, 0
        %v4538 = vsel %vm455, %v4453, 0
        %v4541 = vsel %vm455, %v4454, 0
        %v4544 = vsel %vm455, %v4455, 0
        %v4547 = vsel %vm455, %v4456, 0
        %v4550 = vsel %vm455, %v4457, 0
        %v4553 = vsel %vm455, %v4458, 0
        %4555 = vmatprep.subr.mxu0 0.0
        %4556 = vmatpush1.xpose.msra.mxu0 %v4460
        %4557 = vmatprep.subr.mxu0 0.0
        %4558 = vmatpush1.xpose.msra.mxu0 %v4463
        %4559 = vmatprep.subr.mxu0 0.0
        %4560 = vmatpush1.xpose.msra.mxu0 %v4466
        %4561 = vmatprep.subr.mxu0 0.0
        %4562 = vmatpush1.xpose.msra.mxu0 %v4469
        %4563 = vmatprep.subr.mxu0 0.0
        %4564 = vmatpush1.xpose.msra.mxu0 %v4472
        %4565 = vmatprep.subr.mxu0 0.0
        %4566 = vmatpush1.xpose.msra.mxu0 %v4475
        %4567 = vmatprep.subr.mxu0 0.0
        %4568 = vmatpush1.xpose.msra.mxu0 %v4478
        %4569 = vmatprep.subr.mxu0 0.0
        %4570 = vmatpush1.xpose.msra.mxu0 %v4481
        %4571 = vmatprep.subr.mxu0 0.0
        %4572 = vmatpush1.xpose.msra.mxu0 %v4484
        %4573 = vmatprep.subr.mxu0 0.0
        %4574 = vmatpush1.xpose.msra.mxu0 %v4487
        %4575 = vmatprep.subr.mxu0 0.0
        %4576 = vmatpush1.xpose.msra.mxu0 %v4490
        %4577 = vmatprep.subr.mxu0 0.0
        %4578 = vmatpush1.xpose.msra.mxu0 %v4493
        %4579 = vmatprep.subr.mxu0 0.0
        %4580 = vmatpush1.xpose.msra.mxu0 %v4496
        %4581 = vmatprep.subr.mxu0 0.0
        %4582 = vmatpush1.xpose.msra.mxu0 %v4499
        %4583 = vmatprep.subr.mxu0 0.0
        %4584 = vmatpush1.xpose.msra.mxu0 %v4502
        %4585 = vmatprep.subr.mxu0 0.0
        %4586 = vmatpush1.xpose.msra.mxu0 %v4505
        %4587 = vmatprep.subr.mxu0 0.0
        %4588 = vmatpush1.xpose.msra.mxu0 %v4508
        %4589 = vmatprep.subr.mxu0 0.0
        %4590 = vmatpush1.xpose.msra.mxu0 %v4511
        %4591 = vmatprep.subr.mxu0 0.0
        %4592 = vmatpush1.xpose.msra.mxu0 %v4514
        %4593 = vmatprep.subr.mxu0 0.0
        %4594 = vmatpush1.xpose.msra.mxu0 %v4517
        %4595 = vmatprep.subr.mxu0 0.0
        %4596 = vmatpush1.xpose.msra.mxu0 %v4520
        %4597 = vmatprep.subr.mxu0 0.0
        %4598 = vmatpush1.xpose.msra.mxu0 %v4523
        %4599 = vmatprep.subr.mxu0 0.0
        %4600 = vmatpush1.xpose.msra.mxu0 %v4526
        %4601 = vmatprep.subr.mxu0 0.0
        %4602 = vmatpush1.xpose.msra.mxu0 %v4529
        %4603 = vmatprep.subr.mxu0 0.0
        %4604 = vmatpush1.xpose.msra.mxu0 %v4532
        %4605 = vmatprep.subr.mxu0 0.0
        %4606 = vmatpush1.xpose.msra.mxu0 %v4535
        %4607 = vmatprep.subr.mxu0 0.0
        %4608 = vmatpush1.xpose.msra.mxu0 %v4538
        %4609 = vmatprep.subr.mxu0 0.0
        %4610 = vmatpush1.xpose.msra.mxu0 %v4541
        %4611 = vmatprep.subr.mxu0 0.0
        %4612 = vmatpush1.xpose.msra.mxu0 %v4544
        %4613 = vmatprep.subr.mxu0 0.0
        %4614 = vmatpush1.xpose.msra.mxu0 %v4547
        %4615 = vmatprep.subr.mxu0 0.0
        %4616 = vmatpush1.xpose.msra.mxu0 %v4550
        %4617 = vmatprep.subr.mxu0 0.0
        %4618 = vmatpush1.xpose.msra.mxu0 %v4553
        %4619 = vmatprep.mubr.f32.mxu0 0.0
        %4620 = vmatmul.mubr.f32.gmra.mrb[0].mxu0 %v457
        %v4621 = vpop.f32.mrb[0].mxu0
        %v4622 = vadd.f32 %v438, %v4621
        %v4623 = vpop.f32.mrb[0].mxu0
        %v4624 = vadd.f32 %v438, %v4623
        %4625 = vmatprep.mubr.f32.mxu0 0.0
        %4626 = vmatmul.mubr.f32.gmra.mrb[0].mxu0 %v460
        %v4627 = vpop.f32.mrb[0].mxu0
        %v4628 = vadd.f32 %v443, %v4627
        %v4629 = vpop.f32.mrb[0].mxu0
        %v4630 = vadd.f32 %v443, %v4629
        %4631 = vmatprep.mubr.f32.mxu0 0.0
        %4632 = vmatmul.mubr.f32.gmra.mrb[0].mxu0 %v463
        %v4633 = vpop.f32.mrb[0].mxu0
        %v4634 = vadd.f32 %v448, %v4633
        %v4635 = vpop.f32.mrb[0].mxu0
        %v4636 = vadd.f32 %v448, %v4635
        %4637 = vmatprep.mubr.f32.mxu0 0.0
        %4638 = vmatmul.mubr.f32.gmra.mrb[0].mxu0 %v466
        %v4639 = vpop.f32.mrb[0].mxu0
        %v4640 = vadd.f32 %v453, %v4639
        %v4641 = vpop.f32.mrb[0].mxu0
        %v4642 = vadd.f32 %v453, %v4641
        %4643 = vdwg.mxu0
        %v4644 = vmax.f32 %v4622, 0.0
        %v4645 = vmax.f32 %v4624, 0.0
        %v4646 = vmax.f32 %v4628, 0.0
        %v4647 = vmax.f32 %v4630, 0.0
        %v4648 = vmax.f32 %v4634, 0.0
        %v4649 = vmax.f32 %v4636, 0.0
        %v4650 = vmax.f32 %v4640, 0.0
        %v4651 = vmax.f32 %v4642, 0.0
        %4652 = vmatprep.subr.mxu0 %v4645
        %4653 = vmatpush1.msra.mxu0 %v4644
        %4654 = vmatprep.subr.mxu0 %v4647
        %4655 = vmatpush1.msra.mxu0 %v4646
        %4656 = vmatprep.subr.mxu0 %v4649
        %4657 = vmatpush1.msra.mxu0 %v4648
        %4658 = vmatprep.subr.mxu0 %v4651
        %4659 = vmatpush1.msra.mxu0 %v4650
        %4660 = vmatprep.subr.mxu0 0.0
        %4661 = vmatpush1.msra.mxu0 0.0
        %4662 = vmatprep.subr.mxu0 0.0
        %4663 = vmatpush1.msra.mxu0 0.0
        %4664 = vmatprep.subr.mxu0 0.0
        %4665 = vmatpush1.msra.mxu0 0.0
        %4666 = vmatprep.subr.mxu0 0.0
        %4667 = vmatpush1.msra.mxu0 0.0
        %4668 = vmatprep.subr.mxu0 0.0
        %4669 = vmatpush1.msra.mxu0 0.0
        %4670 = vmatprep.subr.mxu0 0.0
        %4671 = vmatpush1.msra.mxu0 0.0
        %4672 = vmatprep.subr.mxu0 0.0
        %4673 = vmatpush1.msra.mxu0 0.0
        %4674 = vmatprep.subr.mxu0 0.0
        %4675 = vmatpush1.msra.mxu0 0.0
        %4676 = vmatprep.subr.mxu0 0.0
        %4677 = vmatpush1.msra.mxu0 0.0
        %4678 = vmatprep.subr.mxu0 0.0
        %4679 = vmatpush1.msra.mxu0 0.0
        %4680 = vmatprep.subr.mxu0 0.0
        %4681 = vmatpush1.msra.mxu0 0.0
        %4682 = vmatprep.subr.mxu0 0.0
        %4683 = vmatpush1.msra.mxu0 0.0
        %4684 = vmatprep.subr.mxu0 0.0
        %4685 = vmatpush1.msra.mxu0 0.0
        %4686 = vmatprep.subr.mxu0 0.0
        %4687 = vmatpush1.msra.mxu0 0.0
        %4688 = vmatprep.subr.mxu0 0.0
        %4689 = vmatpush1.msra.mxu0 0.0
        %4690 = vmatprep.subr.mxu0 0.0
        %4691 = vmatpush1.msra.mxu0 0.0
        %4692 = vmatprep.subr.mxu0 0.0
        %4693 = vmatpush1.msra.mxu0 0.0
        %4694 = vmatprep.subr.mxu0 0.0
        %4695 = vmatpush1.msra.mxu0 0.0
        %4696 = vmatprep.subr.mxu0 0.0
        %4697 = vmatpush1.msra.mxu0 0.0
        %4698 = vmatprep.subr.mxu0 0.0
        %4699 = vmatpush1.msra.mxu0 0.0
        %4700 = vmatprep.subr.mxu0 0.0
        %4701 = vmatpush1.msra.mxu0 0.0
        %4702 = vmatprep.subr.mxu0 0.0
        %4703 = vmatpush1.msra.mxu0 0.0
        %4704 = vmatprep.subr.mxu0 0.0
        %4705 = vmatpush1.msra.mxu0 0.0
        %4706 = vmatprep.subr.mxu0 0.0
        %4707 = vmatpush1.msra.mxu0 0.0
        %4708 = vmatprep.subr.mxu0 0.0
        %4709 = vmatpush1.msra.mxu0 0.0
        %4710 = vmatprep.subr.mxu0 0.0
        %4711 = vmatpush1.msra.mxu0 0.0
        %4712 = vmatprep.subr.mxu0 0.0
        %4713 = vmatpush1.msra.mxu0 0.0
        %4714 = vmatprep.subr.mxu0 0.0
        %4715 = vmatpush1.msra.mxu0 0.0
        %4716 = vmatprep.mubr.f32.mxu0 0.0
        %4717 = vmatmul.mubr.f32.gmra.mrb[0].mxu0 %v668
        %v4718 = vpop.f32.mrb[0].mxu0
        %v4719 = vadd.f32 %v664, %v4718
        %v4720 = vpop.f32.mrb[0].mxu0
        %v4721 = vadd.f32 %v664, %v4720
        %4722 = vdwg.mxu0
        %4723 = vmatprep.subr.mxu0 %v4721
        %4724 = vmatpush1.msra.mxu0 %v4719
        %4725 = vmatprep.subr.mxu0 0.0
        %4726 = vmatpush1.msra.mxu0 0.0
        %4727 = vmatprep.subr.mxu0 0.0
        %4728 = vmatpush1.msra.mxu0 0.0
        %4729 = vmatprep.subr.mxu0 0.0
        %4730 = vmatpush1.msra.mxu0 0.0
        %4731 = vmatprep.subr.mxu0 0.0
        %4732 = vmatpush1.msra.mxu0 0.0
        %4733 = vmatprep.subr.mxu0 0.0
        %4734 = vmatpush1.msra.mxu0 0.0
        %4735 = vmatprep.subr.mxu0 0.0
        %4736 = vmatpush1.msra.mxu0 0.0
        %4737 = vmatprep.subr.mxu0 0.0
        %4738 = vmatpush1.msra.mxu0 0.0
        %4739 = vmatprep.subr.mxu0 0.0
        %4740 = vmatpush1.msra.mxu0 0.0
        %4741 = vmatprep.subr.mxu0 0.0
        %4742 = vmatpush1.msra.mxu0 0.0
        %4743 = vmatprep.subr.mxu0 0.0
        %4744 = vmatpush1.msra.mxu0 0.0
        %4745 = vmatprep.subr.mxu0 0.0
        %4746 = vmatpush1.msra.mxu0 0.0
        %4747 = vmatprep.subr.mxu0 0.0
        %4748 = vmatpush1.msra.mxu0 0.0
        %4749 = vmatprep.subr.mxu0 0.0
        %4750 = vmatpush1.msra.mxu0 0.0
        %4751 = vmatprep.subr.mxu0 0.0
        %4752 = vmatpush1.msra.mxu0 0.0
        %4753 = vmatprep.subr.mxu0 0.0
        %4754 = vmatpush1.msra.mxu0 0.0
        %4755 = vmatprep.subr.mxu0 0.0
        %4756 = vmatpush1.msra.mxu0 0.0
        %4757 = vmatprep.subr.mxu0 0.0
        %4758 = vmatpush1.msra.mxu0 0.0
        %4759 = vmatprep.subr.mxu0 0.0
        %4760 = vmatpush1.msra.mxu0 0.0
        %4761 = vmatprep.subr.mxu0 0.0
        %4762 = vmatpush1.msra.mxu0 0.0
        %4763 = vmatprep.subr.mxu0 0.0
        %4764 = vmatpush1.msra.mxu0 0.0
        %4765 = vmatprep.subr.mxu0 0.0
        %4766 = vmatpush1.msra.mxu0 0.0
        %4767 = vmatprep.subr.mxu0 0.0
        %4768 = vmatpush1.msra.mxu0 0.0
        %4769 = vmatprep.subr.mxu0 0.0
        %4770 = vmatpush1.msra.mxu0 0.0
        %4771 = vmatprep.subr.mxu0 0.0
        %4772 = vmatpush1.msra.mxu0 0.0
        %4773 = vmatprep.subr.mxu0 0.0
        %4774 = vmatpush1.msra.mxu0 0.0
        %4775 = vmatprep.subr.mxu0 0.0
        %4776 = vmatpush1.msra.mxu0 0.0
        %4777 = vmatprep.subr.mxu0 0.0
        %4778 = vmatpush1.msra.mxu0 0.0
        %4779 = vmatprep.subr.mxu0 0.0
        %4780 = vmatpush1.msra.mxu0 0.0
        %4781 = vmatprep.subr.mxu0 0.0
        %4782 = vmatpush1.msra.mxu0 0.0
        %4783 = vmatprep.subr.mxu0 0.0
        %4784 = vmatpush1.msra.mxu0 0.0
        %4785 = vmatprep.subr.mxu0 0.0
        %4786 = vmatpush1.msra.mxu0 0.0
        %4787 = vmatprep.mubr.f32.mxu0 0.0
        %4788 = vmatmul.mubr.f32.gmra.mrb[0].mxu0 %v743
        %v4789 = vpop.f32.mrb[0].mxu0
        %v4790 = vadd.f32 0.0, %v4789
        %v4791 = vpop.f32.mrb[0].mxu0
        %v4792 = vadd.f32 0.0, %v4791
        %4793 = vmatprep.mubr.f32.mxu0 0.0
        %4794 = vmatmul.mubr.f32.gmra.mrb[0].mxu0 %v746
        %v4795 = vpop.f32.mrb[0].mxu0
        %v4796 = vadd.f32 0.0, %v4795
        %v4797 = vpop.f32.mrb[0].mxu0
        %v4798 = vadd.f32 0.0, %v4797
        %4799 = vmatprep.mubr.f32.mxu0 0.0
        %4800 = vmatmul.mubr.f32.gmra.mrb[0].mxu0 %v749
        %v4801 = vpop.f32.mrb[0].mxu0
        %v4802 = vadd.f32 0.0, %v4801
        %v4803 = vpop.f32.mrb[0].mxu0
        %v4804 = vadd.f32 0.0, %v4803
        %4805 = vmatprep.mubr.f32.mxu0 0.0
        %4806 = vmatmul.mubr.f32.gmra.mrb[0].mxu0 %v752
        %v4807 = vpop.f32.mrb[0].mxu0
        %v4808 = vadd.f32 0.0, %v4807
        %v4809 = vpop.f32.mrb[0].mxu0
        %v4810 = vadd.f32 0.0, %v4809
        %4811 = vdwg.mxu0
        %4812 = vmatprep.subr.mxu0 0.0
        %4813 = vmatpush1.xpose.msra.mxu0 %v4460
        %4814 = vmatprep.subr.mxu0 0.0
        %4815 = vmatpush1.xpose.msra.mxu0 %v4463
        %4816 = vmatprep.subr.mxu0 0.0
        %4817 = vmatpush1.xpose.msra.mxu0 %v4466
        %4818 = vmatprep.subr.mxu0 0.0
        %4819 = vmatpush1.xpose.msra.mxu0 %v4469
        %4820 = vmatprep.subr.mxu0 0.0
        %4821 = vmatpush1.xpose.msra.mxu0 %v4472
        %4822 = vmatprep.subr.mxu0 0.0
        %4823 = vmatpush1.xpose.msra.mxu0 %v4475
        %4824 = vmatprep.subr.mxu0 0.0
        %4825 = vmatpush1.xpose.msra.mxu0 %v4478
        %4826 = vmatprep.subr.mxu0 0.0
        %4827 = vmatpush1.xpose.msra.mxu0 %v4481
        %4828 = vmatprep.subr.mxu0 0.0
        %4829 = vmatpush1.xpose.msra.mxu0 %v4484
        %4830 = vmatprep.subr.mxu0 0.0
        %4831 = vmatpush1.xpose.msra.mxu0 %v4487
        %4832 = vmatprep.subr.mxu0 0.0
        %4833 = vmatpush1.xpose.msra.mxu0 %v4490
        %4834 = vmatprep.subr.mxu0 0.0
        %4835 = vmatpush1.xpose.msra.mxu0 %v4493
        %4836 = vmatprep.subr.mxu0 0.0
        %4837 = vmatpush1.xpose.msra.mxu0 %v4496
        %4838 = vmatprep.subr.mxu0 0.0
        %4839 = vmatpush1.xpose.msra.mxu0 %v4499
        %4840 = vmatprep.subr.mxu0 0.0
        %4841 = vmatpush1.xpose.msra.mxu0 %v4502
        %4842 = vmatprep.subr.mxu0 0.0
        %4843 = vmatpush1.xpose.msra.mxu0 %v4505
        %4844 = vmatprep.subr.mxu0 0.0
        %4845 = vmatpush1.xpose.msra.mxu0 %v4508
        %4846 = vmatprep.subr.mxu0 0.0
        %4847 = vmatpush1.xpose.msra.mxu0 %v4511
        %4848 = vmatprep.subr.mxu0 0.0
        %4849 = vmatpush1.xpose.msra.mxu0 %v4514
        %4850 = vmatprep.subr.mxu0 0.0
        %4851 = vmatpush1.xpose.msra.mxu0 %v4517
        %4852 = vmatprep.subr.mxu0 0.0
        %4853 = vmatpush1.xpose.msra.mxu0 %v4520
        %4854 = vmatprep.subr.mxu0 0.0
        %4855 = vmatpush1.xpose.msra.mxu0 %v4523
        %4856 = vmatprep.subr.mxu0 0.0
        %4857 = vmatpush1.xpose.msra.mxu0 %v4526
        %4858 = vmatprep.subr.mxu0 0.0
        %4859 = vmatpush1.xpose.msra.mxu0 %v4529
        %4860 = vmatprep.subr.mxu0 0.0
        %4861 = vmatpush1.xpose.msra.mxu0 %v4532
        %4862 = vmatprep.subr.mxu0 0.0
        %4863 = vmatpush1.xpose.msra.mxu0 %v4535
        %4864 = vmatprep.subr.mxu0 0.0
        %4865 = vmatpush1.xpose.msra.mxu0 %v4538
        %4866 = vmatprep.subr.mxu0 0.0
        %4867 = vmatpush1.xpose.msra.mxu0 %v4541
        %4868 = vmatprep.subr.mxu0 0.0
        %4869 = vmatpush1.xpose.msra.mxu0 %v4544
        %4870 = vmatprep.subr.mxu0 0.0
        %4871 = vmatpush1.xpose.msra.mxu0 %v4547
        %4872 = vmatprep.subr.mxu0 0.0
        %4873 = vmatpush1.xpose.msra.mxu0 %v4550
        %4874 = vmatprep.subr.mxu0 0.0
        %4875 = vmatpush1.xpose.msra.mxu0 %v4553
        %4876 = vmatprep.mubr.f32.mxu0 0.0
        %4877 = vmatmul.mubr.f32.gmra.mrb[0].mxu0 %v844
        %v4878 = vpop.f32.mrb[0].mxu0
        %v4879 = vadd.f32 %v4790, %v4878
        %v4880 = vpop.f32.mrb[0].mxu0
        %v4881 = vadd.f32 %v4792, %v4880
        %4882 = vmatprep.mubr.f32.mxu0 0.0
        %4883 = vmatmul.mubr.f32.gmra.mrb[0].mxu0 %v847
        %v4884 = vpop.f32.mrb[0].mxu0
        %v4885 = vadd.f32 %v4796, %v4884
        %v4886 = vpop.f32.mrb[0].mxu0
        %v4887 = vadd.f32 %v4798, %v4886
        %4888 = vmatprep.mubr.f32.mxu0 0.0
        %4889 = vmatmul.mubr.f32.gmra.mrb[0].mxu0 %v850
        %v4890 = vpop.f32.mrb[0].mxu0
        %v4891 = vadd.f32 %v4802, %v4890
        %v4892 = vpop.f32.mrb[0].mxu0
        %v4893 = vadd.f32 %v4804, %v4892
        %4894 = vmatprep.mubr.f32.mxu0 0.0
        %4895 = vmatmul.mubr.f32.gmra.mrb[0].mxu0 %v853
        %v4896 = vpop.f32.mrb[0].mxu0
        %v4897 = vadd.f32 %v4808, %v4896
        %v4898 = vpop.f32.mrb[0].mxu0
        %v4899 = vadd.f32 %v4810, %v4898
        %4900 = vdwg.mxu0
        %v4901 = vadd.f32 %v4879, %v947
        %v4902 = vadd.f32 %v4881, %v947
        %v4903 = vadd.f32 %v4885, %v952
        %v4904 = vadd.f32 %v4887, %v952
        %v4905 = vadd.f32 %v4891, %v957
        %v4906 = vadd.f32 %v4893, %v957
        %v4907 = vadd.f32 %v4897, %v962
        %v4908 = vadd.f32 %v4899, %v962
        %v4909 = vmax.f32 %v4901, 0.0
        %v4910 = vmax.f32 %v4902, 0.0
        %v4911 = vmax.f32 %v4903, 0.0
        %v4912 = vmax.f32 %v4904, 0.0
        %v4913 = vmax.f32 %v4905, 0.0
        %v4914 = vmax.f32 %v4906, 0.0
        %v4915 = vmax.f32 %v4907, 0.0
        %v4916 = vmax.f32 %v4908, 0.0
        %4917 = vmatprep.subr.mxu0 %v4645
        %4918 = vmatpush1.msra.mxu0 %v4644
        %4919 = vmatprep.subr.mxu0 %v4647
        %4920 = vmatpush1.msra.mxu0 %v4646
        %4921 = vmatprep.subr.mxu0 %v4649
        %4922 = vmatpush1.msra.mxu0 %v4648
        %4923 = vmatprep.subr.mxu0 %v4651
        %4924 = vmatpush1.msra.mxu0 %v4650
        %4925 = vmatprep.subr.mxu0 0.0
        %4926 = vmatpush1.msra.mxu0 0.0
        %4927 = vmatprep.subr.mxu0 0.0
        %4928 = vmatpush1.msra.mxu0 0.0
        %4929 = vmatprep.subr.mxu0 0.0
        %4930 = vmatpush1.msra.mxu0 0.0
        %4931 = vmatprep.subr.mxu0 0.0
        %4932 = vmatpush1.msra.mxu0 0.0
        %4933 = vmatprep.subr.mxu0 0.0
        %4934 = vmatpush1.msra.mxu0 0.0
        %4935 = vmatprep.subr.mxu0 0.0
        %4936 = vmatpush1.msra.mxu0 0.0
        %4937 = vmatprep.subr.mxu0 0.0
        %4938 = vmatpush1.msra.mxu0 0.0
        %4939 = vmatprep.subr.mxu0 0.0
        %4940 = vmatpush1.msra.mxu0 0.0
        %4941 = vmatprep.subr.mxu0 0.0
        %4942 = vmatpush1.msra.mxu0 0.0
        %4943 = vmatprep.subr.mxu0 0.0
        %4944 = vmatpush1.msra.mxu0 0.0
        %4945 = vmatprep.subr.mxu0 0.0
        %4946 = vmatpush1.msra.mxu0 0.0
        %4947 = vmatprep.subr.mxu0 0.0
        %4948 = vmatpush1.msra.mxu0 0.0
        %4949 = vmatprep.subr.mxu0 0.0
        %4950 = vmatpush1.msra.mxu0 0.0
        %4951 = vmatprep.subr.mxu0 0.0
        %4952 = vmatpush1.msra.mxu0 0.0
        %4953 = vmatprep.subr.mxu0 0.0
        %4954 = vmatpush1.msra.mxu0 0.0
        %4955 = vmatprep.subr.mxu0 0.0
        %4956 = vmatpush1.msra.mxu0 0.0
        %4957 = vmatprep.subr.mxu0 0.0
        %4958 = vmatpush1.msra.mxu0 0.0
        %4959 = vmatprep.subr.mxu0 0.0
        %4960 = vmatpush1.msra.mxu0 0.0
        %4961 = vmatprep.subr.mxu0 0.0
        %4962 = vmatpush1.msra.mxu0 0.0
        %4963 = vmatprep.subr.mxu0 0.0
        %4964 = vmatpush1.msra.mxu0 0.0
        %4965 = vmatprep.subr.mxu0 0.0
        %4966 = vmatpush1.msra.mxu0 0.0
        %4967 = vmatprep.subr.mxu0 0.0
        %4968 = vmatpush1.msra.mxu0 0.0
        %4969 = vmatprep.subr.mxu0 0.0
        %4970 = vmatpush1.msra.mxu0 0.0
        %4971 = vmatprep.subr.mxu0 0.0
        %4972 = vmatpush1.msra.mxu0 0.0
        %4973 = vmatprep.subr.mxu0 0.0
        %4974 = vmatpush1.msra.mxu0 0.0
        %4975 = vmatprep.subr.mxu0 0.0
        %4976 = vmatpush1.msra.mxu0 0.0
        %4977 = vmatprep.subr.mxu0 0.0
        %4978 = vmatpush1.msra.mxu0 0.0
        %4979 = vmatprep.subr.mxu0 0.0
        %4980 = vmatpush1.msra.mxu0 0.0
        %4981 = vmatprep.mubr.f32.mxu0 0.0
        %4982 = vmatmul.mubr.f32.gmra.mrb[0].mxu0 %v1001
        %v4983 = vpop.f32.mrb[0].mxu0
        %v4984 = vadd.f32 %v983, %v4983
        %v4985 = vpop.f32.mrb[0].mxu0
        %v4986 = vadd.f32 %v983, %v4985
        %4987 = vmatprep.mubr.f32.mxu0 0.0
        %4988 = vmatmul.mubr.f32.gmra.mrb[0].mxu0 %v1004
        %v4989 = vpop.f32.mrb[0].mxu0
        %v4990 = vadd.f32 %v988, %v4989
        %v4991 = vpop.f32.mrb[0].mxu0
        %v4992 = vadd.f32 %v988, %v4991
        %4993 = vmatprep.mubr.f32.mxu0 0.0
        %4994 = vmatmul.mubr.f32.gmra.mrb[0].mxu0 %v1007
        %v4995 = vpop.f32.mrb[0].mxu0
        %v4996 = vadd.f32 %v993, %v4995
        %v4997 = vpop.f32.mrb[0].mxu0
        %v4998 = vadd.f32 %v993, %v4997
        %4999 = vmatprep.mubr.f32.mxu0 0.0
        %5000 = vmatmul.mubr.f32.gmra.mrb[0].mxu0 %v1010
        %v5001 = vpop.f32.mrb[0].mxu0
        %v5002 = vadd.f32 %v998, %v5001
        %v5003 = vpop.f32.mrb[0].mxu0
        %v5004 = vadd.f32 %v998, %v5003
        %5005 = vdwg.mxu0
        %v5006 = vmax.f32 %v4984, 0.0
        %v5007 = vmax.f32 %v4986, 0.0
        %v5008 = vmax.f32 %v4990, 0.0
        %v5009 = vmax.f32 %v4992, 0.0
        %v5010 = vmax.f32 %v4996, 0.0
        %v5011 = vmax.f32 %v4998, 0.0
        %v5012 = vmax.f32 %v5002, 0.0
        %v5013 = vmax.f32 %v5004, 0.0
        %5014 = vmatprep.subr.mxu0 %v4910
        %5015 = vmatpush1.msra.mxu0 %v4909
        %5016 = vmatprep.subr.mxu0 %v4912
        %5017 = vmatpush1.msra.mxu0 %v4911
        %5018 = vmatprep.subr.mxu0 %v4914
        %5019 = vmatpush1.msra.mxu0 %v4913
        %5020 = vmatprep.subr.mxu0 %v4916
        %5021 = vmatpush1.msra.mxu0 %v4915
        %5022 = vmatprep.subr.mxu0 0.0
        %5023 = vmatpush1.msra.mxu0 0.0
        %5024 = vmatprep.subr.mxu0 0.0
        %5025 = vmatpush1.msra.mxu0 0.0
        %5026 = vmatprep.subr.mxu0 0.0
        %5027 = vmatpush1.msra.mxu0 0.0
        %5028 = vmatprep.subr.mxu0 0.0
        %5029 = vmatpush1.msra.mxu0 0.0
        %5030 = vmatprep.subr.mxu0 0.0
        %5031 = vmatpush1.msra.mxu0 0.0
        %5032 = vmatprep.subr.mxu0 0.0
        %5033 = vmatpush1.msra.mxu0 0.0
        %5034 = vmatprep.subr.mxu0 0.0
        %5035 = vmatpush1.msra.mxu0 0.0
        %5036 = vmatprep.subr.mxu0 0.0
        %5037 = vmatpush1.msra.mxu0 0.0
        %5038 = vmatprep.subr.mxu0 0.0
        %5039 = vmatpush1.msra.mxu0 0.0
        %5040 = vmatprep.subr.mxu0 0.0
        %5041 = vmatpush1.msra.mxu0 0.0
        %5042 = vmatprep.subr.mxu0 0.0
        %5043 = vmatpush1.msra.mxu0 0.0
        %5044 = vmatprep.subr.mxu0 0.0
        %5045 = vmatpush1.msra.mxu0 0.0
        %5046 = vmatprep.subr.mxu0 0.0
        %5047 = vmatpush1.msra.mxu0 0.0
        %5048 = vmatprep.subr.mxu0 0.0
        %5049 = vmatpush1.msra.mxu0 0.0
        %5050 = vmatprep.subr.mxu0 0.0
        %5051 = vmatpush1.msra.mxu0 0.0
        %5052 = vmatprep.subr.mxu0 0.0
        %5053 = vmatpush1.msra.mxu0 0.0
        %5054 = vmatprep.subr.mxu0 0.0
        %5055 = vmatpush1.msra.mxu0 0.0
        %5056 = vmatprep.subr.mxu0 0.0
        %5057 = vmatpush1.msra.mxu0 0.0
        %5058 = vmatprep.subr.mxu0 0.0
        %5059 = vmatpush1.msra.mxu0 0.0
        %5060 = vmatprep.subr.mxu0 0.0
        %5061 = vmatpush1.msra.mxu0 0.0
        %5062 = vmatprep.subr.mxu0 0.0
        %5063 = vmatpush1.msra.mxu0 0.0
        %5064 = vmatprep.subr.mxu0 0.0
        %5065 = vmatpush1.msra.mxu0 0.0
        %5066 = vmatprep.subr.mxu0 0.0
        %5067 = vmatpush1.msra.mxu0 0.0
        %5068 = vmatprep.subr.mxu0 0.0
        %5069 = vmatpush1.msra.mxu0 0.0
        %5070 = vmatprep.subr.mxu0 0.0
        %5071 = vmatpush1.msra.mxu0 0.0
        %5072 = vmatprep.subr.mxu0 0.0
        %5073 = vmatpush1.msra.mxu0 0.0
        %5074 = vmatprep.subr.mxu0 0.0
        %5075 = vmatpush1.msra.mxu0 0.0
        %5076 = vmatprep.subr.mxu0 0.0
        %5077 = vmatpush1.msra.mxu0 0.0
        %5078 = vmatprep.mubr.f32.mxu0 0.0
        %5079 = vmatmul.mubr.f32.gmra.mrb[0].mxu0 %v1130
        %v5080 = vpop.f32.mrb[0].mxu0
        %v5081 = vadd.f32 %v1112, %v5080
        %v5082 = vpop.f32.mrb[0].mxu0
        %v5083 = vadd.f32 %v1112, %v5082
        %5084 = vmatprep.mubr.f32.mxu0 0.0
        %5085 = vmatmul.mubr.f32.gmra.mrb[0].mxu0 %v1133
        %v5086 = vpop.f32.mrb[0].mxu0
        %v5087 = vadd.f32 %v1117, %v5086
        %v5088 = vpop.f32.mrb[0].mxu0
        %v5089 = vadd.f32 %v1117, %v5088
        %5090 = vmatprep.mubr.f32.mxu0 0.0
        %5091 = vmatmul.mubr.f32.gmra.mrb[0].mxu0 %v1136
        %v5092 = vpop.f32.mrb[0].mxu0
        %v5093 = vadd.f32 %v1122, %v5092
        %v5094 = vpop.f32.mrb[0].mxu0
        %v5095 = vadd.f32 %v1122, %v5094
        %5096 = vmatprep.mubr.f32.mxu0 0.0
        %5097 = vmatmul.mubr.f32.gmra.mrb[0].mxu0 %v1139
        %v5098 = vpop.f32.mrb[0].mxu0
        %v5099 = vadd.f32 %v1127, %v5098
        %v5100 = vpop.f32.mrb[0].mxu0
        %v5101 = vadd.f32 %v1127, %v5100
        %5102 = vdwg.mxu0
        %v5103 = vmax.f32 %v5081, 0.0
        %v5104 = vmax.f32 %v5083, 0.0
        %v5105 = vmax.f32 %v5087, 0.0
        %v5106 = vmax.f32 %v5089, 0.0
        %v5107 = vmax.f32 %v5093, 0.0
        %v5108 = vmax.f32 %v5095, 0.0
        %v5109 = vmax.f32 %v5099, 0.0
        %v5110 = vmax.f32 %v5101, 0.0
        %v5111 = vmul.f32 %v5103, 0.5
        %v5112 = vmul.f32 %v5104, 0.5
        %v5113 = vmul.f32 %v5105, 0.5
        %v5114 = vmul.f32 %v5106, 0.5
        %v5115 = vmul.f32 %v5107, 0.5
        %v5116 = vmul.f32 %v5108, 0.5
        %v5117 = vmul.f32 %v5109, 0.5
        %v5118 = vmul.f32 %v5110, 0.5
        %v5119 = vadd.f32 %v5006, %v5111
        %v5120 = vadd.f32 %v5007, %v5112
        %v5121 = vadd.f32 %v5008, %v5113
        %v5122 = vadd.f32 %v5009, %v5114
        %v5123 = vadd.f32 %v5010, %v5115
        %v5124 = vadd.f32 %v5011, %v5116
        %v5125 = vadd.f32 %v5012, %v5117
        %v5126 = vadd.f32 %v5013, %v5118
        %5127 = vmatprep.subr.mxu0 %v5120
        %5128 = vmatpush1.msra.mxu0 %v5119
        %5129 = vmatprep.subr.mxu0 %v5122
        %5130 = vmatpush1.msra.mxu0 %v5121
        %5131 = vmatprep.subr.mxu0 %v5124
        %5132 = vmatpush1.msra.mxu0 %v5123
        %5133 = vmatprep.subr.mxu0 %v5126
        %5134 = vmatpush1.msra.mxu0 %v5125
        %5135 = vmatprep.subr.mxu0 0.0
        %5136 = vmatpush1.msra.mxu0 0.0
        %5137 = vmatprep.subr.mxu0 0.0
        %5138 = vmatpush1.msra.mxu0 0.0
        %5139 = vmatprep.subr.mxu0 0.0
        %5140 = vmatpush1.msra.mxu0 0.0
        %5141 = vmatprep.subr.mxu0 0.0
        %5142 = vmatpush1.msra.mxu0 0.0
        %5143 = vmatprep.subr.mxu0 0.0
        %5144 = vmatpush1.msra.mxu0 0.0
        %5145 = vmatprep.subr.mxu0 0.0
        %5146 = vmatpush1.msra.mxu0 0.0
        %5147 = vmatprep.subr.mxu0 0.0
        %5148 = vmatpush1.msra.mxu0 0.0
        %5149 = vmatprep.subr.mxu0 0.0
        %5150 = vmatpush1.msra.mxu0 0.0
        %5151 = vmatprep.subr.mxu0 0.0
        %5152 = vmatpush1.msra.mxu0 0.0
        %5153 = vmatprep.subr.mxu0 0.0
        %5154 = vmatpush1.msra.mxu0 0.0
        %5155 = vmatprep.subr.mxu0 0.0
        %5156 = vmatpush1.msra.mxu0 0.0
        %5157 = vmatprep.subr.mxu0 0.0
        %5158 = vmatpush1.msra.mxu0 0.0
        %5159 = vmatprep.subr.mxu0 0.0
        %5160 = vmatpush1.msra.mxu0 0.0
        %5161 = vmatprep.subr.mxu0 0.0
        %5162 = vmatpush1.msra.mxu0 0.0
        %5163 = vmatprep.subr.mxu0 0.0
        %5164 = vmatpush1.msra.mxu0 0.0
        %5165 = vmatprep.subr.mxu0 0.0
        %5166 = vmatpush1.msra.mxu0 0.0
        %5167 = vmatprep.subr.mxu0 0.0
        %5168 = vmatpush1.msra.mxu0 0.0
        %5169 = vmatprep.subr.mxu0 0.0
        %5170 = vmatpush1.msra.mxu0 0.0
        %5171 = vmatprep.subr.mxu0 0.0
        %5172 = vmatpush1.msra.mxu0 0.0
        %5173 = vmatprep.subr.mxu0 0.0
        %5174 = vmatpush1.msra.mxu0 0.0
        %5175 = vmatprep.subr.mxu0 0.0
        %5176 = vmatpush1.msra.mxu0 0.0
        %5177 = vmatprep.subr.mxu0 0.0
        %5178 = vmatpush1.msra.mxu0 0.0
        %5179 = vmatprep.subr.mxu0 0.0
        %5180 = vmatpush1.msra.mxu0 0.0
        %5181 = vmatprep.subr.mxu0 0.0
        %5182 = vmatpush1.msra.mxu0 0.0
        %5183 = vmatprep.subr.mxu0 0.0
        %5184 = vmatpush1.msra.mxu0 0.0
        %5185 = vmatprep.subr.mxu0 0.0
        %5186 = vmatpush1.msra.mxu0 0.0
        %5187 = vmatprep.subr.mxu0 0.0
        %5188 = vmatpush1.msra.mxu0 0.0
        %5189 = vmatprep.subr.mxu0 0.0
        %5190 = vmatpush1.msra.mxu0 0.0
        %5191 = vmatprep.mubr.f32.mxu0 0.0
        %5192 = vmatmul.mubr.f32.gmra.mrb[0].mxu0 %v1260
        %v5193 = vpop.f32.mrb[0].mxu0
        %v5194 = vadd.f32 %v1257, %v5193
        %v5195 = vpop.f32.mrb[0].mxu0
        %v5196 = vadd.f32 %v1257, %v5195
        %5197 = vdwg.mxu0
        %5198 = vst [vmem:[%s338 + $0x50] sm:$0xff] %v5194
        %5199 = vst [vmem:[%s338 + $0x58] sm:$0xff] %v5196
        %v5200 = vld [vmem:[%s347 + $0x600] sm:$0xff]
        %v5201 = vld [vmem:[%s347 + $0x608] sm:$0xff]
        %v5202 = vld [vmem:[%s347 + $0x610] sm:$0xff]
        %v5203 = vld [vmem:[%s347 + $0x618] sm:$0xff]
        %v5204 = vld [vmem:[%s347 + $0x620] sm:$0xff]
        %v5205 = vld [vmem:[%s347 + $0x628] sm:$0xff]
        %v5206 = vld [vmem:[%s347 + $0x630] sm:$0xff]
        %v5207 = vld [vmem:[%s347 + $0x638] sm:$0xff]
        %v5208 = vld [vmem:[%s347 + $0x640] sm:$0xff]
        %v5209 = vld [vmem:[%s347 + $0x648] sm:$0xff]
        %v5210 = vld [vmem:[%s347 + $0x650] sm:$0xff]
        %v5211 = vld [vmem:[%s347 + $0x658] sm:$0xff]
        %v5212 = vld [vmem:[%s347 + $0x660] sm:$0xff]
        %v5213 = vld [vmem:[%s347 + $0x668] sm:$0xff]
        %v5214 = vld [vmem:[%s347 + $0x670] sm:$0xff]
        %v5215 = vld [vmem:[%s347 + $0x678] sm:$0xff]
        %v5216 = vld [vmem:[%s347 + $0x680] sm:$0xff]
        %v5217 = vld [vmem:[%s347 + $0x688] sm:$0xff]
        %v5218 = vld [vmem:[%s347 + $0x690] sm:$0xff]
        %v5219 = vld [vmem:[%s347 + $0x698] sm:$0xff]
        %v5220 = vld [vmem:[%s347 + $0x6a0] sm:$0xff]
        %v5221 = vld [vmem:[%s347 + $0x6a8] sm:$0xff]
        %v5222 = vld [vmem:[%s347 + $0x6b0] sm:$0xff]
        %v5223 = vld [vmem:[%s347 + $0x6b8] sm:$0xff]
        %v5224 = vld [vmem:[%s347 + $0x6c0] sm:$0xff]
        %v5225 = vld [vmem:[%s347 + $0x6c8] sm:$0xff]
        %v5226 = vld [vmem:[%s347 + $0x6d0] sm:$0xff]
        %v5227 = vld [vmem:[%s347 + $0x6d8] sm:$0xff]
        %v5228 = vld [vmem:[%s347 + $0x6e0] sm:$0xff]
        %v5229 = vld [vmem:[%s347 + $0x6e8] sm:$0xff]
        %v5230 = vld [vmem:[%s347 + $0x6f0] sm:$0xff]
        %v5231 = vld [vmem:[%s347 + $0x6f8] sm:$0xff]
        %v5233 = vsel %vm455, %v5200, 0
        %v5236 = vsel %vm455, %v5201, 0
        %v5239 = vsel %vm455, %v5202, 0
        %v5242 = vsel %vm455, %v5203, 0
        %v5245 = vsel %vm455, %v5204, 0
        %v5248 = vsel %vm455, %v5205, 0
        %v5251 = vsel %vm455, %v5206, 0
        %v5254 = vsel %vm455, %v5207, 0
        %v5257 = vsel %vm455, %v5208, 0
        %v5260 = vsel %vm455, %v5209, 0
        %v5263 = vsel %vm455, %v5210, 0
        %v5266 = vsel %vm455, %v5211, 0
        %v5269 = vsel %vm455, %v5212, 0
        %v5272 = vsel %vm455, %v5213, 0
        %v5275 = vsel %vm455, %v5214, 0
        %v5278 = vsel %vm455, %v5215, 0
        %v5281 = vsel %vm455, %v5216, 0
        %v5284 = vsel %vm455, %v5217, 0
        %v5287 = vsel %vm455, %v5218, 0
        %v5290 = vsel %vm455, %v5219, 0
        %v5293 = vsel %vm455, %v5220, 0
        %v5296 = vsel %vm455, %v5221, 0
        %v5299 = vsel %vm455, %v5222, 0
        %v5302 = vsel %vm455, %v5223, 0
        %v5305 = vsel %vm455, %v5224, 0
        %v5308 = vsel %vm455, %v5225, 0
        %v5311 = vsel %vm455, %v5226, 0
        %v5314 = vsel %vm455, %v5227, 0
        %v5317 = vsel %vm455, %v5228, 0
        %v5320 = vsel %vm455, %v5229, 0
        %v5323 = vsel %vm455, %v5230, 0
        %v5326 = vsel %vm455, %v5231, 0
        %5328 = vmatprep.subr.mxu0 0.0
        %5329 = vmatpush1.xpose.msra.mxu0 %v5233
        %5330 = vmatprep.subr.mxu0 0.0
        %5331 = vmatpush1.xpose.msra.mxu0 %v5236
        %5332 = vmatprep.subr.mxu0 0.0
        %5333 = vmatpush1.xpose.msra.mxu0 %v5239
        %5334 = vmatprep.subr.mxu0 0.0
        %5335 = vmatpush1.xpose.msra.mxu0 %v5242
        %5336 = vmatprep.subr.mxu0 0.0
        %5337 = vmatpush1.xpose.msra.mxu0 %v5245
        %5338 = vmatprep.subr.mxu0 0.0
        %5339 = vmatpush1.xpose.msra.mxu0 %v5248
        %5340 = vmatprep.subr.mxu0 0.0
        %5341 = vmatpush1.xpose.msra.mxu0 %v5251
        %5342 = vmatprep.subr.mxu0 0.0
        %5343 = vmatpush1.xpose.msra.mxu0 %v5254
        %5344 = vmatprep.subr.mxu0 0.0
        %5345 = vmatpush1.xpose.msra.mxu0 %v5257
        %5346 = vmatprep.subr.mxu0 0.0
        %5347 = vmatpush1.xpose.msra.mxu0 %v5260
        %5348 = vmatprep.subr.mxu0 0.0
        %5349 = vmatpush1.xpose.msra.mxu0 %v5263
        %5350 = vmatprep.subr.mxu0 0.0
        %5351 = vmatpush1.xpose.msra.mxu0 %v5266
        %5352 = vmatprep.subr.mxu0 0.0
        %5353 = vmatpush1.xpose.msra.mxu0 %v5269
        %5354 = vmatprep.subr.mxu0 0.0
        %5355 = vmatpush1.xpose.msra.mxu0 %v5272
        %5356 = vmatprep.subr.mxu0 0.0
        %5357 = vmatpush1.xpose.msra.mxu0 %v5275
        %5358 = vmatprep.subr.mxu0 0.0
        %5359 = vmatpush1.xpose.msra.mxu0 %v5278
        %5360 = vmatprep.subr.mxu0 0.0
        %5361 = vmatpush1.xpose.msra.mxu0 %v5281
        %5362 = vmatprep.subr.mxu0 0.0
        %5363 = vmatpush1.xpose.msra.mxu0 %v5284
        %5364 = vmatprep.subr.mxu0 0.0
        %5365 = vmatpush1.xpose.msra.mxu0 %v5287
        %5366 = vmatprep.subr.mxu0 0.0
        %5367 = vmatpush1.xpose.msra.mxu0 %v5290
        %5368 = vmatprep.subr.mxu0 0.0
        %5369 = vmatpush1.xpose.msra.mxu0 %v5293
        %5370 = vmatprep.subr.mxu0 0.0
        %5371 = vmatpush1.xpose.msra.mxu0 %v5296
        %5372 = vmatprep.subr.mxu0 0.0
        %5373 = vmatpush1.xpose.msra.mxu0 %v5299
        %5374 = vmatprep.subr.mxu0 0.0
        %5375 = vmatpush1.xpose.msra.mxu0 %v5302
        %5376 = vmatprep.subr.mxu0 0.0
        %5377 = vmatpush1.xpose.msra.mxu0 %v5305
        %5378 = vmatprep.subr.mxu0 0.0
        %5379 = vmatpush1.xpose.msra.mxu0 %v5308
        %5380 = vmatprep.subr.mxu0 0.0
        %5381 = vmatpush1.xpose.msra.mxu0 %v5311
        %5382 = vmatprep.subr.mxu0 0.0
        %5383 = vmatpush1.xpose.msra.mxu0 %v5314
        %5384 = vmatprep.subr.mxu0 0.0
        %5385 = vmatpush1.xpose.msra.mxu0 %v5317
        %5386 = vmatprep.subr.mxu0 0.0
        %5387 = vmatpush1.xpose.msra.mxu0 %v5320
        %5388 = vmatprep.subr.mxu0 0.0
        %5389 = vmatpush1.xpose.msra.mxu0 %v5323
        %5390 = vmatprep.subr.mxu0 0.0
        %5391 = vmatpush1.xpose.msra.mxu0 %v5326
        %5392 = vmatprep.mubr.f32.mxu0 0.0
        %5393 = vmatmul.mubr.f32.gmra.mrb[0].mxu0 %v457
        %v5394 = vpop.f32.mrb[0].mxu0
        %v5395 = vadd.f32 %v438, %v5394
        %v5396 = vpop.f32.mrb[0].mxu0
        %v5397 = vadd.f32 %v438, %v5396
        %5398 = vmatprep.mubr.f32.mxu0 0.0
        %5399 = vmatmul.mubr.f32.gmra.mrb[0].mxu0 %v460
        %v5400 = vpop.f32.mrb[0].mxu0
        %v5401 = vadd.f32 %v443, %v5400
        %v5402 = vpop.f32.mrb[0].mxu0
        %v5403 = vadd.f32 %v443, %v5402
        %5404 = vmatprep.mubr.f32.mxu0 0.0
        %5405 = vmatmul.mubr.f32.gmra.mrb[0].mxu0 %v463
        %v5406 = vpop.f32.mrb[0].mxu0
        %v5407 = vadd.f32 %v448, %v5406
        %v5408 = vpop.f32.mrb[0].mxu0
        %v5409 = vadd.f32 %v448, %v5408
        %5410 = vmatprep.mubr.f32.mxu0 0.0
        %5411 = vmatmul.mubr.f32.gmra.mrb[0].mxu0 %v466
        %v5412 = vpop.f32.mrb[0].mxu0
        %v5413 = vadd.f32 %v453, %v5412
        %v5414 = vpop.f32.mrb[0].mxu0
        %v5415 = vadd.f32 %v453, %v5414
        %5416 = vdwg.mxu0
        %v5417 = vmax.f32 %v5395, 0.0
        %v5418 = vmax.f32 %v5397, 0.0
        %v5419 = vmax.f32 %v5401, 0.0
        %v5420 = vmax.f32 %v5403, 0.0
        %v5421 = vmax.f32 %v5407, 0.0
        %v5422 = vmax.f32 %v5409, 0.0
        %v5423 = vmax.f32 %v5413, 0.0
        %v5424 = vmax.f32 %v5415, 0.0
        %5425 = vmatprep.subr.mxu0 %v5418
        %5426 = vmatpush1.msra.mxu0 %v5417
        %5427 = vmatprep.subr.mxu0 %v5420
        %5428 = vmatpush1.msra.mxu0 %v5419
        %5429 = vmatprep.subr.mxu0 %v5422
        %5430 = vmatpush1.msra.mxu0 %v5421
        %5431 = vmatprep.subr.mxu0 %v5424
        %5432 = vmatpush1.msra.mxu0 %v5423
        %5433 = vmatprep.subr.mxu0 0.0
        %5434 = vmatpush1.msra.mxu0 0.0
        %5435 = vmatprep.subr.mxu0 0.0
        %5436 = vmatpush1.msra.mxu0 0.0
        %5437 = vmatprep.subr.mxu0 0.0
        %5438 = vmatpush1.msra.mxu0 0.0
        %5439 = vmatprep.subr.mxu0 0.0
        %5440 = vmatpush1.msra.mxu0 0.0
        %5441 = vmatprep.subr.mxu0 0.0
        %5442 = vmatpush1.msra.mxu0 0.0
        %5443 = vmatprep.subr.mxu0 0.0
        %5444 = vmatpush1.msra.mxu0 0.0
        %5445 = vmatprep.subr.mxu0 0.0
        %5446 = vmatpush1.msra.mxu0 0.0
        %5447 = vmatprep.subr.mxu0 0.0
        %5448 = vmatpush1.msra.mxu0 0.0
        %5449 = vmatprep.subr.mxu0 0.0
        %5450 = vmatpush1.msra.mxu0 0.0
        %5451 = vmatprep.subr.mxu0 0.0
        %5452 = vmatpush1.msra.mxu0 0.0
        %5453 = vmatprep.subr.mxu0 0.0
        %5454 = vmatpush1.msra.mxu0 0.0
        %5455 = vmatprep.subr.mxu0 0.0
        %5456 = vmatpush1.msra.mxu0 0.0
        %5457 = vmatprep.subr.mxu0 0.0
        %5458 = vmatpush1.msra.mxu0 0.0
        %5459 = vmatprep.subr.mxu0 0.0
        %5460 = vmatpush1.msra.mxu0 0.0
        %5461 = vmatprep.subr.mxu0 0.0
        %5462 = vmatpush1.msra.mxu0 0.0
        %5463 = vmatprep.subr.mxu0 0.0
        %5464 = vmatpush1.msra.mxu0 0.0
        %5465 = vmatprep.subr.mxu0 0.0
        %5466 = vmatpush1.msra.mxu0 0.0
        %5467 = vmatprep.subr.mxu0 0.0
        %5468 = vmatpush1.msra.mxu0 0.0
        %5469 = vmatprep.subr.mxu0 0.0
        %5470 = vmatpush1.msra.mxu0 0.0
        %5471 = vmatprep.subr.mxu0 0.0
        %5472 = vmatpush1.msra.mxu0 0.0
        %5473 = vmatprep.subr.mxu0 0.0
        %5474 = vmatpush1.msra.mxu0 0.0
        %5475 = vmatprep.subr.mxu0 0.0
        %5476 = vmatpush1.msra.mxu0 0.0
        %5477 = vmatprep.subr.mxu0 0.0
        %5478 = vmatpush1.msra.mxu0 0.0
        %5479 = vmatprep.subr.mxu0 0.0
        %5480 = vmatpush1.msra.mxu0 0.0
        %5481 = vmatprep.subr.mxu0 0.0
        %5482 = vmatpush1.msra.mxu0 0.0
        %5483 = vmatprep.subr.mxu0 0.0
        %5484 = vmatpush1.msra.mxu0 0.0
        %5485 = vmatprep.subr.mxu0 0.0
        %5486 = vmatpush1.msra.mxu0 0.0
        %5487 = vmatprep.subr.mxu0 0.0
        %5488 = vmatpush1.msra.mxu0 0.0
        %5489 = vmatprep.mubr.f32.mxu0 0.0
        %5490 = vmatmul.mubr.f32.gmra.mrb[0].mxu0 %v668
        %v5491 = vpop.f32.mrb[0].mxu0
        %v5492 = vadd.f32 %v664, %v5491
        %v5493 = vpop.f32.mrb[0].mxu0
        %v5494 = vadd.f32 %v664, %v5493
        %5495 = vdwg.mxu0
        %5496 = vmatprep.subr.mxu0 %v5494
        %5497 = vmatpush1.msra.mxu0 %v5492
        %5498 = vmatprep.subr.mxu0 0.0
        %5499 = vmatpush1.msra.mxu0 0.0
        %5500 = vmatprep.subr.mxu0 0.0
        %5501 = vmatpush1.msra.mxu0 0.0
        %5502 = vmatprep.subr.mxu0 0.0
        %5503 = vmatpush1.msra.mxu0 0.0
        %5504 = vmatprep.subr.mxu0 0.0
        %5505 = vmatpush1.msra.mxu0 0.0
        %5506 = vmatprep.subr.mxu0 0.0
        %5507 = vmatpush1.msra.mxu0 0.0
        %5508 = vmatprep.subr.mxu0 0.0
        %5509 = vmatpush1.msra.mxu0 0.0
        %5510 = vmatprep.subr.mxu0 0.0
        %5511 = vmatpush1.msra.mxu0 0.0
        %5512 = vmatprep.subr.mxu0 0.0
        %5513 = vmatpush1.msra.mxu0 0.0
        %5514 = vmatprep.subr.mxu0 0.0
        %5515 = vmatpush1.msra.mxu0 0.0
        %5516 = vmatprep.subr.mxu0 0.0
        %5517 = vmatpush1.msra.mxu0 0.0
        %5518 = vmatprep.subr.mxu0 0.0
        %5519 = vmatpush1.msra.mxu0 0.0
        %5520 = vmatprep.subr.mxu0 0.0
        %5521 = vmatpush1.msra.mxu0 0.0
        %5522 = vmatprep.subr.mxu0 0.0
        %5523 = vmatpush1.msra.mxu0 0.0
        %5524 = vmatprep.subr.mxu0 0.0
        %5525 = vmatpush1.msra.mxu0 0.0
        %5526 = vmatprep.subr.mxu0 0.0
        %5527 = vmatpush1.msra.mxu0 0.0
        %5528 = vmatprep.subr.mxu0 0.0
        %5529 = vmatpush1.msra.mxu0 0.0
        %5530 = vmatprep.subr.mxu0 0.0
        %5531 = vmatpush1.msra.mxu0 0.0
        %5532 = vmatprep.subr.mxu0 0.0
        %5533 = vmatpush1.msra.mxu0 0.0
        %5534 = vmatprep.subr.mxu0 0.0
        %5535 = vmatpush1.msra.mxu0 0.0
        %5536 = vmatprep.subr.mxu0 0.0
        %5537 = vmatpush1.msra.mxu0 0.0
        %5538 = vmatprep.subr.mxu0 0.0
        %5539 = vmatpush1.msra.mxu0 0.0
        %5540 = vmatprep.subr.mxu0 0.0
        %5541 = vmatpush1.msra.mxu0 0.0
        %5542 = vmatprep.subr.mxu0 0.0
        %5543 = vmatpush1.msra.mxu0 0.0
        %5544 = vmatprep.subr.mxu0 0.0
        %5545 = vmatpush1.msra.mxu0 0.0
        %5546 = vmatprep.subr.mxu0 0.0
        %5547 = vmatpush1.msra.mxu0 0.0
        %5548 = vmatprep.subr.mxu0 0.0
        %5549 = vmatpush1.msra.mxu0 0.0
        %5550 = vmatprep.subr.mxu0 0.0
        %5551 = vmatpush1.msra.mxu0 0.0
        %5552 = vmatprep.subr.mxu0 0.0
        %5553 = vmatpush1.msra.mxu0 0.0
        %5554 = vmatprep.subr.mxu0 0.0
        %5555 = vmatpush1.msra.mxu0 0.0
        %5556 = vmatprep.subr.mxu0 0.0
        %5557 = vmatpush1.msra.mxu0 0.0
        %5558 = vmatprep.subr.mxu0 0.0
        %5559 = vmatpush1.msra.mxu0 0.0
        %5560 = vmatprep.mubr.f32.mxu0 0.0
        %5561 = vmatmul.mubr.f32.gmra.mrb[0].mxu0 %v743
        %v5562 = vpop.f32.mrb[0].mxu0
        %v5563 = vadd.f32 0.0, %v5562
        %v5564 = vpop.f32.mrb[0].mxu0
        %v5565 = vadd.f32 0.0, %v5564
        %5566 = vmatprep.mubr.f32.mxu0 0.0
        %5567 = vmatmul.mubr.f32.gmra.mrb[0].mxu0 %v746
        %v5568 = vpop.f32.mrb[0].mxu0
        %v5569 = vadd.f32 0.0, %v5568
        %v5570 = vpop.f32.mrb[0].mxu0
        %v5571 = vadd.f32 0.0, %v5570
        %5572 = vmatprep.mubr.f32.mxu0 0.0
        %5573 = vmatmul.mubr.f32.gmra.mrb[0].mxu0 %v749
        %v5574 = vpop.f32.mrb[0].mxu0
        %v5575 = vadd.f32 0.0, %v5574
        %v5576 = vpop.f32.mrb[0].mxu0
        %v5577 = vadd.f32 0.0, %v5576
        %5578 = vmatprep.mubr.f32.mxu0 0.0
        %5579 = vmatmul.mubr.f32.gmra.mrb[0].mxu0 %v752
        %v5580 = vpop.f32.mrb[0].mxu0
        %v5581 = vadd.f32 0.0, %v5580
        %v5582 = vpop.f32.mrb[0].mxu0
        %v5583 = vadd.f32 0.0, %v5582
        %5584 = vdwg.mxu0
        %5585 = vmatprep.subr.mxu0 0.0
        %5586 = vmatpush1.xpose.msra.mxu0 %v5233
        %5587 = vmatprep.subr.mxu0 0.0
        %5588 = vmatpush1.xpose.msra.mxu0 %v5236
        %5589 = vmatprep.subr.mxu0 0.0
        %5590 = vmatpush1.xpose.msra.mxu0 %v5239
        %5591 = vmatprep.subr.mxu0 0.0
        %5592 = vmatpush1.xpose.msra.mxu0 %v5242
        %5593 = vmatprep.subr.mxu0 0.0
        %5594 = vmatpush1.xpose.msra.mxu0 %v5245
        %5595 = vmatprep.subr.mxu0 0.0
        %5596 = vmatpush1.xpose.msra.mxu0 %v5248
        %5597 = vmatprep.subr.mxu0 0.0
        %5598 = vmatpush1.xpose.msra.mxu0 %v5251
        %5599 = vmatprep.subr.mxu0 0.0
        %5600 = vmatpush1.xpose.msra.mxu0 %v5254
        %5601 = vmatprep.subr.mxu0 0.0
        %5602 = vmatpush1.xpose.msra.mxu0 %v5257
        %5603 = vmatprep.subr.mxu0 0.0
        %5604 = vmatpush1.xpose.msra.mxu0 %v5260
        %5605 = vmatprep.subr.mxu0 0.0
        %5606 = vmatpush1.xpose.msra.mxu0 %v5263
        %5607 = vmatprep.subr.mxu0 0.0
        %5608 = vmatpush1.xpose.msra.mxu0 %v5266
        %5609 = vmatprep.subr.mxu0 0.0
        %5610 = vmatpush1.xpose.msra.mxu0 %v5269
        %5611 = vmatprep.subr.mxu0 0.0
        %5612 = vmatpush1.xpose.msra.mxu0 %v5272
        %5613 = vmatprep.subr.mxu0 0.0
        %5614 = vmatpush1.xpose.msra.mxu0 %v5275
        %5615 = vmatprep.subr.mxu0 0.0
        %5616 = vmatpush1.xpose.msra.mxu0 %v5278
        %5617 = vmatprep.subr.mxu0 0.0
        %5618 = vmatpush1.xpose.msra.mxu0 %v5281
        %5619 = vmatprep.subr.mxu0 0.0
        %5620 = vmatpush1.xpose.msra.mxu0 %v5284
        %5621 = vmatprep.subr.mxu0 0.0
        %5622 = vmatpush1.xpose.msra.mxu0 %v5287
        %5623 = vmatprep.subr.mxu0 0.0
        %5624 = vmatpush1.xpose.msra.mxu0 %v5290
        %5625 = vmatprep.subr.mxu0 0.0
        %5626 = vmatpush1.xpose.msra.mxu0 %v5293
        %5627 = vmatprep.subr.mxu0 0.0
        %5628 = vmatpush1.xpose.msra.mxu0 %v5296
        %5629 = vmatprep.subr.mxu0 0.0
        %5630 = vmatpush1.xpose.msra.mxu0 %v5299
        %5631 = vmatprep.subr.mxu0 0.0
        %5632 = vmatpush1.xpose.msra.mxu0 %v5302
        %5633 = vmatprep.subr.mxu0 0.0
        %5634 = vmatpush1.xpose.msra.mxu0 %v5305
        %5635 = vmatprep.subr.mxu0 0.0
        %5636 = vmatpush1.xpose.msra.mxu0 %v5308
        %5637 = vmatprep.subr.mxu0 0.0
        %5638 = vmatpush1.xpose.msra.mxu0 %v5311
        %5639 = vmatprep.subr.mxu0 0.0
        %5640 = vmatpush1.xpose.msra.mxu0 %v5314
        %5641 = vmatprep.subr.mxu0 0.0
        %5642 = vmatpush1.xpose.msra.mxu0 %v5317
        %5643 = vmatprep.subr.mxu0 0.0
        %5644 = vmatpush1.xpose.msra.mxu0 %v5320
        %5645 = vmatprep.subr.mxu0 0.0
        %5646 = vmatpush1.xpose.msra.mxu0 %v5323
        %5647 = vmatprep.subr.mxu0 0.0
        %5648 = vmatpush1.xpose.msra.mxu0 %v5326
        %5649 = vmatprep.mubr.f32.mxu0 0.0
        %5650 = vmatmul.mubr.f32.gmra.mrb[0].mxu0 %v844
        %v5651 = vpop.f32.mrb[0].mxu0
        %v5652 = vadd.f32 %v5563, %v5651
        %v5653 = vpop.f32.mrb[0].mxu0
        %v5654 = vadd.f32 %v5565, %v5653
        %5655 = vmatprep.mubr.f32.mxu0 0.0
        %5656 = vmatmul.mubr.f32.gmra.mrb[0].mxu0 %v847
        %v5657 = vpop.f32.mrb[0].mxu0
        %v5658 = vadd.f32 %v5569, %v5657
        %v5659 = vpop.f32.mrb[0].mxu0
        %v5660 = vadd.f32 %v5571, %v5659
        %5661 = vmatprep.mubr.f32.mxu0 0.0
        %5662 = vmatmul.mubr.f32.gmra.mrb[0].mxu0 %v850
        %v5663 = vpop.f32.mrb[0].mxu0
        %v5664 = vadd.f32 %v5575, %v5663
        %v5665 = vpop.f32.mrb[0].mxu0
        %v5666 = vadd.f32 %v5577, %v5665
        %5667 = vmatprep.mubr.f32.mxu0 0.0
        %5668 = vmatmul.mubr.f32.gmra.mrb[0].mxu0 %v853
        %v5669 = vpop.f32.mrb[0].mxu0
        %v5670 = vadd.f32 %v5581, %v5669
        %v5671 = vpop.f32.mrb[0].mxu0
        %v5672 = vadd.f32 %v5583, %v5671
        %5673 = vdwg.mxu0
        %v5674 = vadd.f32 %v5652, %v947
        %v5675 = vadd.f32 %v5654, %v947
        %v5676 = vadd.f32 %v5658, %v952
        %v5677 = vadd.f32 %v5660, %v952
        %v5678 = vadd.f32 %v5664, %v957
        %v5679 = vadd.f32 %v5666, %v957
        %v5680 = vadd.f32 %v5670, %v962
        %v5681 = vadd.f32 %v5672, %v962
        %v5682 = vmax.f32 %v5674, 0.0
        %v5683 = vmax.f32 %v5675, 0.0
        %v5684 = vmax.f32 %v5676, 0.0
        %v5685 = vmax.f32 %v5677, 0.0
        %v5686 = vmax.f32 %v5678, 0.0
        %v5687 = vmax.f32 %v5679, 0.0
        %v5688 = vmax.f32 %v5680, 0.0
        %v5689 = vmax.f32 %v5681, 0.0
        %5690 = vmatprep.subr.mxu0 %v5418
        %5691 = vmatpush1.msra.mxu0 %v5417
        %5692 = vmatprep.subr.mxu0 %v5420
        %5693 = vmatpush1.msra.mxu0 %v5419
        %5694 = vmatprep.subr.mxu0 %v5422
        %5695 = vmatpush1.msra.mxu0 %v5421
        %5696 = vmatprep.subr.mxu0 %v5424
        %5697 = vmatpush1.msra.mxu0 %v5423
        %5698 = vmatprep.subr.mxu0 0.0
        %5699 = vmatpush1.msra.mxu0 0.0
        %5700 = vmatprep.subr.mxu0 0.0
        %5701 = vmatpush1.msra.mxu0 0.0
        %5702 = vmatprep.subr.mxu0 0.0
        %5703 = vmatpush1.msra.mxu0 0.0
        %5704 = vmatprep.subr.mxu0 0.0
        %5705 = vmatpush1.msra.mxu0 0.0
        %5706 = vmatprep.subr.mxu0 0.0
        %5707 = vmatpush1.msra.mxu0 0.0
        %5708 = vmatprep.subr.mxu0 0.0
        %5709 = vmatpush1.msra.mxu0 0.0
        %5710 = vmatprep.subr.mxu0 0.0
        %5711 = vmatpush1.msra.mxu0 0.0
        %5712 = vmatprep.subr.mxu0 0.0
        %5713 = vmatpush1.msra.mxu0 0.0
        %5714 = vmatprep.subr.mxu0 0.0
        %5715 = vmatpush1.msra.mxu0 0.0
        %5716 = vmatprep.subr.mxu0 0.0
        %5717 = vmatpush1.msra.mxu0 0.0
        %5718 = vmatprep.subr.mxu0 0.0
        %5719 = vmatpush1.msra.mxu0 0.0
        %5720 = vmatprep.subr.mxu0 0.0
        %5721 = vmatpush1.msra.mxu0 0.0
        %5722 = vmatprep.subr.mxu0 0.0
        %5723 = vmatpush1.msra.mxu0 0.0
        %5724 = vmatprep.subr.mxu0 0.0
        %5725 = vmatpush1.msra.mxu0 0.0
        %5726 = vmatprep.subr.mxu0 0.0
        %5727 = vmatpush1.msra.mxu0 0.0
        %5728 = vmatprep.subr.mxu0 0.0
        %5729 = vmatpush1.msra.mxu0 0.0
        %5730 = vmatprep.subr.mxu0 0.0
        %5731 = vmatpush1.msra.mxu0 0.0
        %5732 = vmatprep.subr.mxu0 0.0
        %5733 = vmatpush1.msra.mxu0 0.0
        %5734 = vmatprep.subr.mxu0 0.0
        %5735 = vmatpush1.msra.mxu0 0.0
        %5736 = vmatprep.subr.mxu0 0.0
        %5737 = vmatpush1.msra.mxu0 0.0
        %5738 = vmatprep.subr.mxu0 0.0
        %5739 = vmatpush1.msra.mxu0 0.0
        %5740 = vmatprep.subr.mxu0 0.0
        %5741 = vmatpush1.msra.mxu0 0.0
        %5742 = vmatprep.subr.mxu0 0.0
        %5743 = vmatpush1.msra.mxu0 0.0
        %5744 = vmatprep.subr.mxu0 0.0
        %5745 = vmatpush1.msra.mxu0 0.0
        %5746 = vmatprep.subr.mxu0 0.0
        %5747 = vmatpush1.msra.mxu0 0.0
        %5748 = vmatprep.subr.mxu0 0.0
        %5749 = vmatpush1.msra.mxu0 0.0
        %5750 = vmatprep.subr.mxu0 0.0
        %5751 = vmatpush1.msra.mxu0 0.0
        %5752 = vmatprep.subr.mxu0 0.0
        %5753 = vmatpush1.msra.mxu0 0.0
        %5754 = vmatprep.mubr.f32.mxu0 0.0
        %5755 = vmatmul.mubr.f32.gmra.mrb[0].mxu0 %v1001
        %v5756 = vpop.f32.mrb[0].mxu0
        %v5757 = vadd.f32 %v983, %v5756
        %v5758 = vpop.f32.mrb[0].mxu0
        %v5759 = vadd.f32 %v983, %v5758
        %5760 = vmatprep.mubr.f32.mxu0 0.0
        %5761 = vmatmul.mubr.f32.gmra.mrb[0].mxu0 %v1004
        %v5762 = vpop.f32.mrb[0].mxu0
        %v5763 = vadd.f32 %v988, %v5762
        %v5764 = vpop.f32.mrb[0].mxu0
        %v5765 = vadd.f32 %v988, %v5764
        %5766 = vmatprep.mubr.f32.mxu0 0.0
        %5767 = vmatmul.mubr.f32.gmra.mrb[0].mxu0 %v1007
        %v5768 = vpop.f32.mrb[0].mxu0
        %v5769 = vadd.f32 %v993, %v5768
        %v5770 = vpop.f32.mrb[0].mxu0
        %v5771 = vadd.f32 %v993, %v5770
        %5772 = vmatprep.mubr.f32.mxu0 0.0
        %5773 = vmatmul.mubr.f32.gmra.mrb[0].mxu0 %v1010
        %v5774 = vpop.f32.mrb[0].mxu0
        %v5775 = vadd.f32 %v998, %v5774
        %v5776 = vpop.f32.mrb[0].mxu0
        %v5777 = vadd.f32 %v998, %v5776
        %5778 = vdwg.mxu0
        %v5779 = vmax.f32 %v5757, 0.0
        %v5780 = vmax.f32 %v5759, 0.0
        %v5781 = vmax.f32 %v5763, 0.0
        %v5782 = vmax.f32 %v5765, 0.0
        %v5783 = vmax.f32 %v5769, 0.0
        %v5784 = vmax.f32 %v5771, 0.0
        %v5785 = vmax.f32 %v5775, 0.0
        %v5786 = vmax.f32 %v5777, 0.0
        %5787 = vmatprep.subr.mxu0 %v5683
        %5788 = vmatpush1.msra.mxu0 %v5682
        %5789 = vmatprep.subr.mxu0 %v5685
        %5790 = vmatpush1.msra.mxu0 %v5684
        %5791 = vmatprep.subr.mxu0 %v5687
        %5792 = vmatpush1.msra.mxu0 %v5686
        %5793 = vmatprep.subr.mxu0 %v5689
        %5794 = vmatpush1.msra.mxu0 %v5688
        %5795 = vmatprep.subr.mxu0 0.0
        %5796 = vmatpush1.msra.mxu0 0.0
        %5797 = vmatprep.subr.mxu0 0.0
        %5798 = vmatpush1.msra.mxu0 0.0
        %5799 = vmatprep.subr.mxu0 0.0
        %5800 = vmatpush1.msra.mxu0 0.0
        %5801 = vmatprep.subr.mxu0 0.0
        %5802 = vmatpush1.msra.mxu0 0.0
        %5803 = vmatprep.subr.mxu0 0.0
        %5804 = vmatpush1.msra.mxu0 0.0
        %5805 = vmatprep.subr.mxu0 0.0
        %5806 = vmatpush1.msra.mxu0 0.0
        %5807 = vmatprep.subr.mxu0 0.0
        %5808 = vmatpush1.msra.mxu0 0.0
        %5809 = vmatprep.subr.mxu0 0.0
        %5810 = vmatpush1.msra.mxu0 0.0
        %5811 = vmatprep.subr.mxu0 0.0
        %5812 = vmatpush1.msra.mxu0 0.0
        %5813 = vmatprep.subr.mxu0 0.0
        %5814 = vmatpush1.msra.mxu0 0.0
        %5815 = vmatprep.subr.mxu0 0.0
        %5816 = vmatpush1.msra.mxu0 0.0
        %5817 = vmatprep.subr.mxu0 0.0
        %5818 = vmatpush1.msra.mxu0 0.0
        %5819 = vmatprep.subr.mxu0 0.0
        %5820 = vmatpush1.msra.mxu0 0.0
        %5821 = vmatprep.subr.mxu0 0.0
        %5822 = vmatpush1.msra.mxu0 0.0
        %5823 = vmatprep.subr.mxu0 0.0
        %5824 = vmatpush1.msra.mxu0 0.0
        %5825 = vmatprep.subr.mxu0 0.0
        %5826 = vmatpush1.msra.mxu0 0.0
        %5827 = vmatprep.subr.mxu0 0.0
        %5828 = vmatpush1.msra.mxu0 0.0
        %5829 = vmatprep.subr.mxu0 0.0
        %5830 = vmatpush1.msra.mxu0 0.0
        %5831 = vmatprep.subr.mxu0 0.0
        %5832 = vmatpush1.msra.mxu0 0.0
        %5833 = vmatprep.subr.mxu0 0.0
        %5834 = vmatpush1.msra.mxu0 0.0
        %5835 = vmatprep.subr.mxu0 0.0
        %5836 = vmatpush1.msra.mxu0 0.0
        %5837 = vmatprep.subr.mxu0 0.0
        %5838 = vmatpush1.msra.mxu0 0.0
        %5839 = vmatprep.subr.mxu0 0.0
        %5840 = vmatpush1.msra.mxu0 0.0
        %5841 = vmatprep.subr.mxu0 0.0
        %5842 = vmatpush1.msra.mxu0 0.0
        %5843 = vmatprep.subr.mxu0 0.0
        %5844 = vmatpush1.msra.mxu0 0.0
        %5845 = vmatprep.subr.mxu0 0.0
        %5846 = vmatpush1.msra.mxu0 0.0
        %5847 = vmatprep.subr.mxu0 0.0
        %5848 = vmatpush1.msra.mxu0 0.0
        %5849 = vmatprep.subr.mxu0 0.0
        %5850 = vmatpush1.msra.mxu0 0.0
        %5851 = vmatprep.mubr.f32.mxu0 0.0
        %5852 = vmatmul.mubr.f32.gmra.mrb[0].mxu0 %v1130
        %v5853 = vpop.f32.mrb[0].mxu0
        %v5854 = vadd.f32 %v1112, %v5853
        %v5855 = vpop.f32.mrb[0].mxu0
        %v5856 = vadd.f32 %v1112, %v5855
        %5857 = vmatprep.mubr.f32.mxu0 0.0
        %5858 = vmatmul.mubr.f32.gmra.mrb[0].mxu0 %v1133
        %v5859 = vpop.f32.mrb[0].mxu0
        %v5860 = vadd.f32 %v1117, %v5859
        %v5861 = vpop.f32.mrb[0].mxu0
        %v5862 = vadd.f32 %v1117, %v5861
        %5863 = vmatprep.mubr.f32.mxu0 0.0
        %5864 = vmatmul.mubr.f32.gmra.mrb[0].mxu0 %v1136
        %v5865 = vpop.f32.mrb[0].mxu0
        %v5866 = vadd.f32 %v1122, %v5865
        %v5867 = vpop.f32.mrb[0].mxu0
        %v5868 = vadd.f32 %v1122, %v5867
        %5869 = vmatprep.mubr.f32.mxu0 0.0
        %5870 = vmatmul.mubr.f32.gmra.mrb[0].mxu0 %v1139
        %v5871 = vpop.f32.mrb[0].mxu0
        %v5872 = vadd.f32 %v1127, %v5871
        %v5873 = vpop.f32.mrb[0].mxu0
        %v5874 = vadd.f32 %v1127, %v5873
        %5875 = vdwg.mxu0
        %v5876 = vmax.f32 %v5854, 0.0
        %v5877 = vmax.f32 %v5856, 0.0
        %v5878 = vmax.f32 %v5860, 0.0
        %v5879 = vmax.f32 %v5862, 0.0
        %v5880 = vmax.f32 %v5866, 0.0
        %v5881 = vmax.f32 %v5868, 0.0
        %v5882 = vmax.f32 %v5872, 0.0
        %v5883 = vmax.f32 %v5874, 0.0
        %v5884 = vmul.f32 %v5876, 0.5
        %v5885 = vmul.f32 %v5877, 0.5
        %v5886 = vmul.f32 %v5878, 0.5
        %v5887 = vmul.f32 %v5879, 0.5
        %v5888 = vmul.f32 %v5880, 0.5
        %v5889 = vmul.f32 %v5881, 0.5
        %v5890 = vmul.f32 %v5882, 0.5
        %v5891 = vmul.f32 %v5883, 0.5
        %v5892 = vadd.f32 %v5779, %v5884
        %v5893 = vadd.f32 %v5780, %v5885
        %v5894 = vadd.f32 %v5781, %v5886
        %v5895 = vadd.f32 %v5782, %v5887
        %v5896 = vadd.f32 %v5783, %v5888
        %v5897 = vadd.f32 %v5784, %v5889
        %v5898 = vadd.f32 %v5785, %v5890
        %v5899 = vadd.f32 %v5786, %v5891
        %5900 = vmatprep.subr.mxu0 %v5893
        %5901 = vmatpush1.msra.mxu0 %v5892
        %5902 = vmatprep.subr.mxu0 %v5895
        %5903 = vmatpush1.msra.mxu0 %v5894
        %5904 = vmatprep.subr.mxu0 %v5897
        %5905 = vmatpush1.msra.mxu0 %v5896
        %5906 = vmatprep.subr.mxu0 %v5899
        %5907 = vmatpush1.msra.mxu0 %v5898
        %5908 = vmatprep.subr.mxu0 0.0
        %5909 = vmatpush1.msra.mxu0 0.0
        %5910 = vmatprep.subr.mxu0 0.0
        %5911 = vmatpush1.msra.mxu0 0.0
        %5912 = vmatprep.subr.mxu0 0.0
        %5913 = vmatpush1.msra.mxu0 0.0
        %5914 = vmatprep.subr.mxu0 0.0
        %5915 = vmatpush1.msra.mxu0 0.0
        %5916 = vmatprep.subr.mxu0 0.0
        %5917 = vmatpush1.msra.mxu0 0.0
        %5918 = vmatprep.subr.mxu0 0.0
        %5919 = vmatpush1.msra.mxu0 0.0
        %5920 = vmatprep.subr.mxu0 0.0
        %5921 = vmatpush1.msra.mxu0 0.0
        %5922 = vmatprep.subr.mxu0 0.0
        %5923 = vmatpush1.msra.mxu0 0.0
        %5924 = vmatprep.subr.mxu0 0.0
        %5925 = vmatpush1.msra.mxu0 0.0
        %5926 = vmatprep.subr.mxu0 0.0
        %5927 = vmatpush1.msra.mxu0 0.0
        %5928 = vmatprep.subr.mxu0 0.0
        %5929 = vmatpush1.msra.mxu0 0.0
        %5930 = vmatprep.subr.mxu0 0.0
        %5931 = vmatpush1.msra.mxu0 0.0
        %5932 = vmatprep.subr.mxu0 0.0
        %5933 = vmatpush1.msra.mxu0 0.0
        %5934 = vmatprep.subr.mxu0 0.0
        %5935 = vmatpush1.msra.mxu0 0.0
        %5936 = vmatprep.subr.mxu0 0.0
        %5937 = vmatpush1.msra.mxu0 0.0
        %5938 = vmatprep.subr.mxu0 0.0
        %5939 = vmatpush1.msra.mxu0 0.0
        %5940 = vmatprep.subr.mxu0 0.0
        %5941 = vmatpush1.msra.mxu0 0.0
        %5942 = vmatprep.subr.mxu0 0.0
        %5943 = vmatpush1.msra.mxu0 0.0
        %5944 = vmatprep.subr.mxu0 0.0
        %5945 = vmatpush1.msra.mxu0 0.0
        %5946 = vmatprep.subr.mxu0 0.0
        %5947 = vmatpush1.msra.mxu0 0.0
        %5948 = vmatprep.subr.mxu0 0.0
        %5949 = vmatpush1.msra.mxu0 0.0
        %5950 = vmatprep.subr.mxu0 0.0
        %5951 = vmatpush1.msra.mxu0 0.0
        %5952 = vmatprep.subr.mxu0 0.0
        %5953 = vmatpush1.msra.mxu0 0.0
        %5954 = vmatprep.subr.mxu0 0.0
        %5955 = vmatpush1.msra.mxu0 0.0
        %5956 = vmatprep.subr.mxu0 0.0
        %5957 = vmatpush1.msra.mxu0 0.0
        %5958 = vmatprep.subr.mxu0 0.0
        %5959 = vmatpush1.msra.mxu0 0.0
        %5960 = vmatprep.subr.mxu0 0.0
        %5961 = vmatpush1.msra.mxu0 0.0
        %5962 = vmatprep.subr.mxu0 0.0
        %5963 = vmatpush1.msra.mxu0 0.0
        %5964 = vmatprep.mubr.f32.mxu0 0.0
        %5965 = vmatmul.mubr.f32.gmra.mrb[0].mxu0 %v1260
        %v5966 = vpop.f32.mrb[0].mxu0
        %v5967 = vadd.f32 %v1257, %v5966
        %v5968 = vpop.f32.mrb[0].mxu0
        %v5969 = vadd.f32 %v1257, %v5968
        %5970 = vdwg.mxu0
        %5971 = vst [vmem:[%s338 + $0x60] sm:$0xff] %v5967
        %5972 = vst [vmem:[%s338 + $0x68] sm:$0xff] %v5969
        %v5973 = vld [vmem:[%s347 + $0x700] sm:$0xff]
        %v5974 = vld [vmem:[%s347 + $0x708] sm:$0xff]
        %v5975 = vld [vmem:[%s347 + $0x710] sm:$0xff]
        %v5976 = vld [vmem:[%s347 + $0x718] sm:$0xff]
        %v5977 = vld [vmem:[%s347 + $0x720] sm:$0xff]
        %v5978 = vld [vmem:[%s347 + $0x728] sm:$0xff]
        %v5979 = vld [vmem:[%s347 + $0x730] sm:$0xff]
        %v5980 = vld [vmem:[%s347 + $0x738] sm:$0xff]
        %v5981 = vld [vmem:[%s347 + $0x740] sm:$0xff]
        %v5982 = vld [vmem:[%s347 + $0x748] sm:$0xff]
        %v5983 = vld [vmem:[%s347 + $0x750] sm:$0xff]
        %v5984 = vld [vmem:[%s347 + $0x758] sm:$0xff]
        %v5985 = vld [vmem:[%s347 + $0x760] sm:$0xff]
        %v5986 = vld [vmem:[%s347 + $0x768] sm:$0xff]
        %v5987 = vld [vmem:[%s347 + $0x770] sm:$0xff]
        %v5988 = vld [vmem:[%s347 + $0x778] sm:$0xff]
        %v5989 = vld [vmem:[%s347 + $0x780] sm:$0xff]
        %v5990 = vld [vmem:[%s347 + $0x788] sm:$0xff]
        %v5991 = vld [vmem:[%s347 + $0x790] sm:$0xff]
        %v5992 = vld [vmem:[%s347 + $0x798] sm:$0xff]
        %v5993 = vld [vmem:[%s347 + $0x7a0] sm:$0xff]
        %v5994 = vld [vmem:[%s347 + $0x7a8] sm:$0xff]
        %v5995 = vld [vmem:[%s347 + $0x7b0] sm:$0xff]
        %v5996 = vld [vmem:[%s347 + $0x7b8] sm:$0xff]
        %v5997 = vld [vmem:[%s347 + $0x7c0] sm:$0xff]
        %v5998 = vld [vmem:[%s347 + $0x7c8] sm:$0xff]
        %v5999 = vld [vmem:[%s347 + $0x7d0] sm:$0xff]
        %v6000 = vld [vmem:[%s347 + $0x7d8] sm:$0xff]
        %v6001 = vld [vmem:[%s347 + $0x7e0] sm:$0xff]
        %v6002 = vld [vmem:[%s347 + $0x7e8] sm:$0xff]
        %v6003 = vld [vmem:[%s347 + $0x7f0] sm:$0xff]
        %v6004 = vld [vmem:[%s347 + $0x7f8] sm:$0xff]
        %v6006 = vsel %vm455, %v5973, 0
        %v6009 = vsel %vm455, %v5974, 0
        %v6012 = vsel %vm455, %v5975, 0
        %v6015 = vsel %vm455, %v5976, 0
        %v6018 = vsel %vm455, %v5977, 0
        %v6021 = vsel %vm455, %v5978, 0
        %v6024 = vsel %vm455, %v5979, 0
        %v6027 = vsel %vm455, %v5980, 0
        %v6030 = vsel %vm455, %v5981, 0
        %v6033 = vsel %vm455, %v5982, 0
        %v6036 = vsel %vm455, %v5983, 0
        %v6039 = vsel %vm455, %v5984, 0
        %v6042 = vsel %vm455, %v5985, 0
        %v6045 = vsel %vm455, %v5986, 0
        %v6048 = vsel %vm455, %v5987, 0
        %v6051 = vsel %vm455, %v5988, 0
        %v6054 = vsel %vm455, %v5989, 0
        %v6057 = vsel %vm455, %v5990, 0
        %v6060 = vsel %vm455, %v5991, 0
        %v6063 = vsel %vm455, %v5992, 0
        %v6066 = vsel %vm455, %v5993, 0
        %v6069 = vsel %vm455, %v5994, 0
        %v6072 = vsel %vm455, %v5995, 0
        %v6075 = vsel %vm455, %v5996, 0
        %v6078 = vsel %vm455, %v5997, 0
        %v6081 = vsel %vm455, %v5998, 0
        %v6084 = vsel %vm455, %v5999, 0
        %v6087 = vsel %vm455, %v6000, 0
        %v6090 = vsel %vm455, %v6001, 0
        %v6093 = vsel %vm455, %v6002, 0
        %v6096 = vsel %vm455, %v6003, 0
        %v6099 = vsel %vm455, %v6004, 0
        %6101 = vmatprep.subr.mxu0 0.0
        %6102 = vmatpush1.xpose.msra.mxu0 %v6006
        %6103 = vmatprep.subr.mxu0 0.0
        %6104 = vmatpush1.xpose.msra.mxu0 %v6009
        %6105 = vmatprep.subr.mxu0 0.0
        %6106 = vmatpush1.xpose.msra.mxu0 %v6012
        %6107 = vmatprep.subr.mxu0 0.0
        %6108 = vmatpush1.xpose.msra.mxu0 %v6015
        %6109 = vmatprep.subr.mxu0 0.0
        %6110 = vmatpush1.xpose.msra.mxu0 %v6018
        %6111 = vmatprep.subr.mxu0 0.0
        %6112 = vmatpush1.xpose.msra.mxu0 %v6021
        %6113 = vmatprep.subr.mxu0 0.0
        %6114 = vmatpush1.xpose.msra.mxu0 %v6024
        %6115 = vmatprep.subr.mxu0 0.0
        %6116 = vmatpush1.xpose.msra.mxu0 %v6027
        %6117 = vmatprep.subr.mxu0 0.0
        %6118 = vmatpush1.xpose.msra.mxu0 %v6030
        %6119 = vmatprep.subr.mxu0 0.0
        %6120 = vmatpush1.xpose.msra.mxu0 %v6033
        %6121 = vmatprep.subr.mxu0 0.0
        %6122 = vmatpush1.xpose.msra.mxu0 %v6036
        %6123 = vmatprep.subr.mxu0 0.0
        %6124 = vmatpush1.xpose.msra.mxu0 %v6039
        %6125 = vmatprep.subr.mxu0 0.0
        %6126 = vmatpush1.xpose.msra.mxu0 %v6042
        %6127 = vmatprep.subr.mxu0 0.0
        %6128 = vmatpush1.xpose.msra.mxu0 %v6045
        %6129 = vmatprep.subr.mxu0 0.0
        %6130 = vmatpush1.xpose.msra.mxu0 %v6048
        %6131 = vmatprep.subr.mxu0 0.0
        %6132 = vmatpush1.xpose.msra.mxu0 %v6051
        %6133 = vmatprep.subr.mxu0 0.0
        %6134 = vmatpush1.xpose.msra.mxu0 %v6054
        %6135 = vmatprep.subr.mxu0 0.0
        %6136 = vmatpush1.xpose.msra.mxu0 %v6057
        %6137 = vmatprep.subr.mxu0 0.0
        %6138 = vmatpush1.xpose.msra.mxu0 %v6060
        %6139 = vmatprep.subr.mxu0 0.0
        %6140 = vmatpush1.xpose.msra.mxu0 %v6063
        %6141 = vmatprep.subr.mxu0 0.0
        %6142 = vmatpush1.xpose.msra.mxu0 %v6066
        %6143 = vmatprep.subr.mxu0 0.0
        %6144 = vmatpush1.xpose.msra.mxu0 %v6069
        %6145 = vmatprep.subr.mxu0 0.0
        %6146 = vmatpush1.xpose.msra.mxu0 %v6072
        %6147 = vmatprep.subr.mxu0 0.0
        %6148 = vmatpush1.xpose.msra.mxu0 %v6075
        %6149 = vmatprep.subr.mxu0 0.0
        %6150 = vmatpush1.xpose.msra.mxu0 %v6078
        %6151 = vmatprep.subr.mxu0 0.0
        %6152 = vmatpush1.xpose.msra.mxu0 %v6081
        %6153 = vmatprep.subr.mxu0 0.0
        %6154 = vmatpush1.xpose.msra.mxu0 %v6084
        %6155 = vmatprep.subr.mxu0 0.0
        %6156 = vmatpush1.xpose.msra.mxu0 %v6087
        %6157 = vmatprep.subr.mxu0 0.0
        %6158 = vmatpush1.xpose.msra.mxu0 %v6090
        %6159 = vmatprep.subr.mxu0 0.0
        %6160 = vmatpush1.xpose.msra.mxu0 %v6093
        %6161 = vmatprep.subr.mxu0 0.0
        %6162 = vmatpush1.xpose.msra.mxu0 %v6096
        %6163 = vmatprep.subr.mxu0 0.0
        %6164 = vmatpush1.xpose.msra.mxu0 %v6099
        %6165 = vmatprep.mubr.f32.mxu0 0.0
        %6166 = vmatmul.mubr.f32.gmra.mrb[0].mxu0 %v457
        %v6167 = vpop.f32.mrb[0].mxu0
        %v6168 = vadd.f32 %v438, %v6167
        %v6169 = vpop.f32.mrb[0].mxu0
        %v6170 = vadd.f32 %v438, %v6169
        %6171 = vmatprep.mubr.f32.mxu0 0.0
        %6172 = vmatmul.mubr.f32.gmra.mrb[0].mxu0 %v460
        %v6173 = vpop.f32.mrb[0].mxu0
        %v6174 = vadd.f32 %v443, %v6173
        %v6175 = vpop.f32.mrb[0].mxu0
        %v6176 = vadd.f32 %v443, %v6175
        %6177 = vmatprep.mubr.f32.mxu0 0.0
        %6178 = vmatmul.mubr.f32.gmra.mrb[0].mxu0 %v463
        %v6179 = vpop.f32.mrb[0].mxu0
        %v6180 = vadd.f32 %v448, %v6179
        %v6181 = vpop.f32.mrb[0].mxu0
        %v6182 = vadd.f32 %v448, %v6181
        %6183 = vmatprep.mubr.f32.mxu0 0.0
        %6184 = vmatmul.mubr.f32.gmra.mrb[0].mxu0 %v466
        %v6185 = vpop.f32.mrb[0].mxu0
        %v6186 = vadd.f32 %v453, %v6185
        %v6187 = vpop.f32.mrb[0].mxu0
        %v6188 = vadd.f32 %v453, %v6187
        %6189 = vdwg.mxu0
        %v6190 = vmax.f32 %v6168, 0.0
        %v6191 = vmax.f32 %v6170, 0.0
        %v6192 = vmax.f32 %v6174, 0.0
        %v6193 = vmax.f32 %v6176, 0.0
        %v6194 = vmax.f32 %v6180, 0.0
        %v6195 = vmax.f32 %v6182, 0.0
        %v6196 = vmax.f32 %v6186, 0.0
        %v6197 = vmax.f32 %v6188, 0.0
        %6198 = vmatprep.subr.mxu0 %v6191
        %6199 = vmatpush1.msra.mxu0 %v6190
        %6200 = vmatprep.subr.mxu0 %v6193
        %6201 = vmatpush1.msra.mxu0 %v6192
        %6202 = vmatprep.subr.mxu0 %v6195
        %6203 = vmatpush1.msra.mxu0 %v6194
        %6204 = vmatprep.subr.mxu0 %v6197
        %6205 = vmatpush1.msra.mxu0 %v6196
        %6206 = vmatprep.subr.mxu0 0.0
        %6207 = vmatpush1.msra.mxu0 0.0
        %6208 = vmatprep.subr.mxu0 0.0
        %6209 = vmatpush1.msra.mxu0 0.0
        %6210 = vmatprep.subr.mxu0 0.0
        %6211 = vmatpush1.msra.mxu0 0.0
        %6212 = vmatprep.subr.mxu0 0.0
        %6213 = vmatpush1.msra.mxu0 0.0
        %6214 = vmatprep.subr.mxu0 0.0
        %6215 = vmatpush1.msra.mxu0 0.0
        %6216 = vmatprep.subr.mxu0 0.0
        %6217 = vmatpush1.msra.mxu0 0.0
        %6218 = vmatprep.subr.mxu0 0.0
        %6219 = vmatpush1.msra.mxu0 0.0
        %6220 = vmatprep.subr.mxu0 0.0
        %6221 = vmatpush1.msra.mxu0 0.0
        %6222 = vmatprep.subr.mxu0 0.0
        %6223 = vmatpush1.msra.mxu0 0.0
        %6224 = vmatprep.subr.mxu0 0.0
        %6225 = vmatpush1.msra.mxu0 0.0
        %6226 = vmatprep.subr.mxu0 0.0
        %6227 = vmatpush1.msra.mxu0 0.0
        %6228 = vmatprep.subr.mxu0 0.0
        %6229 = vmatpush1.msra.mxu0 0.0
        %6230 = vmatprep.subr.mxu0 0.0
        %6231 = vmatpush1.msra.mxu0 0.0
        %6232 = vmatprep.subr.mxu0 0.0
        %6233 = vmatpush1.msra.mxu0 0.0
        %6234 = vmatprep.subr.mxu0 0.0
        %6235 = vmatpush1.msra.mxu0 0.0
        %6236 = vmatprep.subr.mxu0 0.0
        %6237 = vmatpush1.msra.mxu0 0.0
        %6238 = vmatprep.subr.mxu0 0.0
        %6239 = vmatpush1.msra.mxu0 0.0
        %6240 = vmatprep.subr.mxu0 0.0
        %6241 = vmatpush1.msra.mxu0 0.0
        %6242 = vmatprep.subr.mxu0 0.0
        %6243 = vmatpush1.msra.mxu0 0.0
        %6244 = vmatprep.subr.mxu0 0.0
        %6245 = vmatpush1.msra.mxu0 0.0
        %6246 = vmatprep.subr.mxu0 0.0
        %6247 = vmatpush1.msra.mxu0 0.0
        %6248 = vmatprep.subr.mxu0 0.0
        %6249 = vmatpush1.msra.mxu0 0.0
        %6250 = vmatprep.subr.mxu0 0.0
        %6251 = vmatpush1.msra.mxu0 0.0
        %6252 = vmatprep.subr.mxu0 0.0
        %6253 = vmatpush1.msra.mxu0 0.0
        %6254 = vmatprep.subr.mxu0 0.0
        %6255 = vmatpush1.msra.mxu0 0.0
        %6256 = vmatprep.subr.mxu0 0.0
        %6257 = vmatpush1.msra.mxu0 0.0
        %6258 = vmatprep.subr.mxu0 0.0
        %6259 = vmatpush1.msra.mxu0 0.0
        %6260 = vmatprep.subr.mxu0 0.0
        %6261 = vmatpush1.msra.mxu0 0.0
        %6262 = vmatprep.mubr.f32.mxu0 0.0
        %6263 = vmatmul.mubr.f32.gmra.mrb[0].mxu0 %v668
        %v6264 = vpop.f32.mrb[0].mxu0
        %v6265 = vadd.f32 %v664, %v6264
        %v6266 = vpop.f32.mrb[0].mxu0
        %v6267 = vadd.f32 %v664, %v6266
        %6268 = vdwg.mxu0
        %6269 = vmatprep.subr.mxu0 %v6267
        %6270 = vmatpush1.msra.mxu0 %v6265
        %6271 = vmatprep.subr.mxu0 0.0
        %6272 = vmatpush1.msra.mxu0 0.0
        %6273 = vmatprep.subr.mxu0 0.0
        %6274 = vmatpush1.msra.mxu0 0.0
        %6275 = vmatprep.subr.mxu0 0.0
        %6276 = vmatpush1.msra.mxu0 0.0
        %6277 = vmatprep.subr.mxu0 0.0
        %6278 = vmatpush1.msra.mxu0 0.0
        %6279 = vmatprep.subr.mxu0 0.0
        %6280 = vmatpush1.msra.mxu0 0.0
        %6281 = vmatprep.subr.mxu0 0.0
        %6282 = vmatpush1.msra.mxu0 0.0
        %6283 = vmatprep.subr.mxu0 0.0
        %6284 = vmatpush1.msra.mxu0 0.0
        %6285 = vmatprep.subr.mxu0 0.0
        %6286 = vmatpush1.msra.mxu0 0.0
        %6287 = vmatprep.subr.mxu0 0.0
        %6288 = vmatpush1.msra.mxu0 0.0
        %6289 = vmatprep.subr.mxu0 0.0
        %6290 = vmatpush1.msra.mxu0 0.0
        %6291 = vmatprep.subr.mxu0 0.0
        %6292 = vmatpush1.msra.mxu0 0.0
        %6293 = vmatprep.subr.mxu0 0.0
        %6294 = vmatpush1.msra.mxu0 0.0
        %6295 = vmatprep.subr.mxu0 0.0
        %6296 = vmatpush1.msra.mxu0 0.0
        %6297 = vmatprep.subr.mxu0 0.0
        %6298 = vmatpush1.msra.mxu0 0.0
        %6299 = vmatprep.subr.mxu0 0.0
        %6300 = vmatpush1.msra.mxu0 0.0
        %6301 = vmatprep.subr.mxu0 0.0
        %6302 = vmatpush1.msra.mxu0 0.0
        %6303 = vmatprep.subr.mxu0 0.0
        %6304 = vmatpush1.msra.mxu0 0.0
        %6305 = vmatprep.subr.mxu0 0.0
        %6306 = vmatpush1.msra.mxu0 0.0
        %6307 = vmatprep.subr.mxu0 0.0
        %6308 = vmatpush1.msra.mxu0 0.0
        %6309 = vmatprep.subr.mxu0 0.0
        %6310 = vmatpush1.msra.mxu0 0.0
        %6311 = vmatprep.subr.mxu0 0.0
        %6312 = vmatpush1.msra.mxu0 0.0
        %6313 = vmatprep.subr.mxu0 0.0
        %6314 = vmatpush1.msra.mxu0 0.0
        %6315 = vmatprep.subr.mxu0 0.0
        %6316 = vmatpush1.msra.mxu0 0.0
        %6317 = vmatprep.subr.mxu0 0.0
        %6318 = vmatpush1.msra.mxu0 0.0
        %6319 = vmatprep.subr.mxu0 0.0
        %6320 = vmatpush1.msra.mxu0 0.0
        %6321 = vmatprep.subr.mxu0 0.0
        %6322 = vmatpush1.msra.mxu0 0.0
        %6323 = vmatprep.subr.mxu0 0.0
        %6324 = vmatpush1.msra.mxu0 0.0
        %6325 = vmatprep.subr.mxu0 0.0
        %6326 = vmatpush1.msra.mxu0 0.0
        %6327 = vmatprep.subr.mxu0 0.0
        %6328 = vmatpush1.msra.mxu0 0.0
        %6329 = vmatprep.subr.mxu0 0.0
        %6330 = vmatpush1.msra.mxu0 0.0
        %6331 = vmatprep.subr.mxu0 0.0
        %6332 = vmatpush1.msra.mxu0 0.0
        %6333 = vmatprep.mubr.f32.mxu0 0.0
        %6334 = vmatmul.mubr.f32.gmra.mrb[0].mxu0 %v743
        %v6335 = vpop.f32.mrb[0].mxu0
        %v6336 = vadd.f32 0.0, %v6335
        %v6337 = vpop.f32.mrb[0].mxu0
        %v6338 = vadd.f32 0.0, %v6337
        %6339 = vmatprep.mubr.f32.mxu0 0.0
        %6340 = vmatmul.mubr.f32.gmra.mrb[0].mxu0 %v746
        %v6341 = vpop.f32.mrb[0].mxu0
        %v6342 = vadd.f32 0.0, %v6341
        %v6343 = vpop.f32.mrb[0].mxu0
        %v6344 = vadd.f32 0.0, %v6343
        %6345 = vmatprep.mubr.f32.mxu0 0.0
        %6346 = vmatmul.mubr.f32.gmra.mrb[0].mxu0 %v749
        %v6347 = vpop.f32.mrb[0].mxu0
        %v6348 = vadd.f32 0.0, %v6347
        %v6349 = vpop.f32.mrb[0].mxu0
        %v6350 = vadd.f32 0.0, %v6349
        %6351 = vmatprep.mubr.f32.mxu0 0.0
        %6352 = vmatmul.mubr.f32.gmra.mrb[0].mxu0 %v752
        %v6353 = vpop.f32.mrb[0].mxu0
        %v6354 = vadd.f32 0.0, %v6353
        %v6355 = vpop.f32.mrb[0].mxu0
        %v6356 = vadd.f32 0.0, %v6355
        %6357 = vdwg.mxu0
        %6358 = vmatprep.subr.mxu0 0.0
        %6359 = vmatpush1.xpose.msra.mxu0 %v6006
        %6360 = vmatprep.subr.mxu0 0.0
        %6361 = vmatpush1.xpose.msra.mxu0 %v6009
        %6362 = vmatprep.subr.mxu0 0.0
        %6363 = vmatpush1.xpose.msra.mxu0 %v6012
        %6364 = vmatprep.subr.mxu0 0.0
        %6365 = vmatpush1.xpose.msra.mxu0 %v6015
        %6366 = vmatprep.subr.mxu0 0.0
        %6367 = vmatpush1.xpose.msra.mxu0 %v6018
        %6368 = vmatprep.subr.mxu0 0.0
        %6369 = vmatpush1.xpose.msra.mxu0 %v6021
        %6370 = vmatprep.subr.mxu0 0.0
        %6371 = vmatpush1.xpose.msra.mxu0 %v6024
        %6372 = vmatprep.subr.mxu0 0.0
        %6373 = vmatpush1.xpose.msra.mxu0 %v6027
        %6374 = vmatprep.subr.mxu0 0.0
        %6375 = vmatpush1.xpose.msra.mxu0 %v6030
        %6376 = vmatprep.subr.mxu0 0.0
        %6377 = vmatpush1.xpose.msra.mxu0 %v6033
        %6378 = vmatprep.subr.mxu0 0.0
        %6379 = vmatpush1.xpose.msra.mxu0 %v6036
        %6380 = vmatprep.subr.mxu0 0.0
        %6381 = vmatpush1.xpose.msra.mxu0 %v6039
        %6382 = vmatprep.subr.mxu0 0.0
        %6383 = vmatpush1.xpose.msra.mxu0 %v6042
        %6384 = vmatprep.subr.mxu0 0.0
        %6385 = vmatpush1.xpose.msra.mxu0 %v6045
        %6386 = vmatprep.subr.mxu0 0.0
        %6387 = vmatpush1.xpose.msra.mxu0 %v6048
        %6388 = vmatprep.subr.mxu0 0.0
        %6389 = vmatpush1.xpose.msra.mxu0 %v6051
        %6390 = vmatprep.subr.mxu0 0.0
        %6391 = vmatpush1.xpose.msra.mxu0 %v6054
        %6392 = vmatprep.subr.mxu0 0.0
        %6393 = vmatpush1.xpose.msra.mxu0 %v6057
        %6394 = vmatprep.subr.mxu0 0.0
        %6395 = vmatpush1.xpose.msra.mxu0 %v6060
        %6396 = vmatprep.subr.mxu0 0.0
        %6397 = vmatpush1.xpose.msra.mxu0 %v6063
        %6398 = vmatprep.subr.mxu0 0.0
        %6399 = vmatpush1.xpose.msra.mxu0 %v6066
        %6400 = vmatprep.subr.mxu0 0.0
        %6401 = vmatpush1.xpose.msra.mxu0 %v6069
        %6402 = vmatprep.subr.mxu0 0.0
        %6403 = vmatpush1.xpose.msra.mxu0 %v6072
        %6404 = vmatprep.subr.mxu0 0.0
        %6405 = vmatpush1.xpose.msra.mxu0 %v6075
        %6406 = vmatprep.subr.mxu0 0.0
        %6407 = vmatpush1.xpose.msra.mxu0 %v6078
        %6408 = vmatprep.subr.mxu0 0.0
        %6409 = vmatpush1.xpose.msra.mxu0 %v6081
        %6410 = vmatprep.subr.mxu0 0.0
        %6411 = vmatpush1.xpose.msra.mxu0 %v6084
        %6412 = vmatprep.subr.mxu0 0.0
        %6413 = vmatpush1.xpose.msra.mxu0 %v6087
        %6414 = vmatprep.subr.mxu0 0.0
        %6415 = vmatpush1.xpose.msra.mxu0 %v6090
        %6416 = vmatprep.subr.mxu0 0.0
        %6417 = vmatpush1.xpose.msra.mxu0 %v6093
        %6418 = vmatprep.subr.mxu0 0.0
        %6419 = vmatpush1.xpose.msra.mxu0 %v6096
        %6420 = vmatprep.subr.mxu0 0.0
        %6421 = vmatpush1.xpose.msra.mxu0 %v6099
        %6422 = vmatprep.mubr.f32.mxu0 0.0
        %6423 = vmatmul.mubr.f32.gmra.mrb[0].mxu0 %v844
        %v6424 = vpop.f32.mrb[0].mxu0
        %v6425 = vadd.f32 %v6336, %v6424
        %v6426 = vpop.f32.mrb[0].mxu0
        %v6427 = vadd.f32 %v6338, %v6426
        %6428 = vmatprep.mubr.f32.mxu0 0.0
        %6429 = vmatmul.mubr.f32.gmra.mrb[0].mxu0 %v847
        %v6430 = vpop.f32.mrb[0].mxu0
        %v6431 = vadd.f32 %v6342, %v6430
        %v6432 = vpop.f32.mrb[0].mxu0
        %v6433 = vadd.f32 %v6344, %v6432
        %6434 = vmatprep.mubr.f32.mxu0 0.0
        %6435 = vmatmul.mubr.f32.gmra.mrb[0].mxu0 %v850
        %v6436 = vpop.f32.mrb[0].mxu0
        %v6437 = vadd.f32 %v6348, %v6436
        %v6438 = vpop.f32.mrb[0].mxu0
        %v6439 = vadd.f32 %v6350, %v6438
        %6440 = vmatprep.mubr.f32.mxu0 0.0
        %6441 = vmatmul.mubr.f32.gmra.mrb[0].mxu0 %v853
        %v6442 = vpop.f32.mrb[0].mxu0
        %v6443 = vadd.f32 %v6354, %v6442
        %v6444 = vpop.f32.mrb[0].mxu0
        %v6445 = vadd.f32 %v6356, %v6444
        %6446 = vdwg.mxu0
        %v6447 = vadd.f32 %v6425, %v947
        %v6448 = vadd.f32 %v6427, %v947
        %v6449 = vadd.f32 %v6431, %v952
        %v6450 = vadd.f32 %v6433, %v952
        %v6451 = vadd.f32 %v6437, %v957
        %v6452 = vadd.f32 %v6439, %v957
        %v6453 = vadd.f32 %v6443, %v962
        %v6454 = vadd.f32 %v6445, %v962
        %v6455 = vmax.f32 %v6447, 0.0
        %v6456 = vmax.f32 %v6448, 0.0
        %v6457 = vmax.f32 %v6449, 0.0
        %v6458 = vmax.f32 %v6450, 0.0
        %v6459 = vmax.f32 %v6451, 0.0
        %v6460 = vmax.f32 %v6452, 0.0
        %v6461 = vmax.f32 %v6453, 0.0
        %v6462 = vmax.f32 %v6454, 0.0
        %6463 = vmatprep.subr.mxu0 %v6191
        %6464 = vmatpush1.msra.mxu0 %v6190
        %6465 = vmatprep.subr.mxu0 %v6193
        %6466 = vmatpush1.msra.mxu0 %v6192
        %6467 = vmatprep.subr.mxu0 %v6195
        %6468 = vmatpush1.msra.mxu0 %v6194
        %6469 = vmatprep.subr.mxu0 %v6197
        %6470 = vmatpush1.msra.mxu0 %v6196
        %6471 = vmatprep.subr.mxu0 0.0
        %6472 = vmatpush1.msra.mxu0 0.0
        %6473 = vmatprep.subr.mxu0 0.0
        %6474 = vmatpush1.msra.mxu0 0.0
        %6475 = vmatprep.subr.mxu0 0.0
        %6476 = vmatpush1.msra.mxu0 0.0
        %6477 = vmatprep.subr.mxu0 0.0
        %6478 = vmatpush1.msra.mxu0 0.0
        %6479 = vmatprep.subr.mxu0 0.0
        %6480 = vmatpush1.msra.mxu0 0.0
        %6481 = vmatprep.subr.mxu0 0.0
        %6482 = vmatpush1.msra.mxu0 0.0
        %6483 = vmatprep.subr.mxu0 0.0
        %6484 = vmatpush1.msra.mxu0 0.0
        %6485 = vmatprep.subr.mxu0 0.0
        %6486 = vmatpush1.msra.mxu0 0.0
        %6487 = vmatprep.subr.mxu0 0.0
        %6488 = vmatpush1.msra.mxu0 0.0
        %6489 = vmatprep.subr.mxu0 0.0
        %6490 = vmatpush1.msra.mxu0 0.0
        %6491 = vmatprep.subr.mxu0 0.0
        %6492 = vmatpush1.msra.mxu0 0.0
        %6493 = vmatprep.subr.mxu0 0.0
        %6494 = vmatpush1.msra.mxu0 0.0
        %6495 = vmatprep.subr.mxu0 0.0
        %6496 = vmatpush1.msra.mxu0 0.0
        %6497 = vmatprep.subr.mxu0 0.0
        %6498 = vmatpush1.msra.mxu0 0.0
        %6499 = vmatprep.subr.mxu0 0.0
        %6500 = vmatpush1.msra.mxu0 0.0
        %6501 = vmatprep.subr.mxu0 0.0
        %6502 = vmatpush1.msra.mxu0 0.0
        %6503 = vmatprep.subr.mxu0 0.0
        %6504 = vmatpush1.msra.mxu0 0.0
        %6505 = vmatprep.subr.mxu0 0.0
        %6506 = vmatpush1.msra.mxu0 0.0
        %6507 = vmatprep.subr.mxu0 0.0
        %6508 = vmatpush1.msra.mxu0 0.0
        %6509 = vmatprep.subr.mxu0 0.0
        %6510 = vmatpush1.msra.mxu0 0.0
        %6511 = vmatprep.subr.mxu0 0.0
        %6512 = vmatpush1.msra.mxu0 0.0
        %6513 = vmatprep.subr.mxu0 0.0
        %6514 = vmatpush1.msra.mxu0 0.0
        %6515 = vmatprep.subr.mxu0 0.0
        %6516 = vmatpush1.msra.mxu0 0.0
        %6517 = vmatprep.subr.mxu0 0.0
        %6518 = vmatpush1.msra.mxu0 0.0
        %6519 = vmatprep.subr.mxu0 0.0
        %6520 = vmatpush1.msra.mxu0 0.0
        %6521 = vmatprep.subr.mxu0 0.0
        %6522 = vmatpush1.msra.mxu0 0.0
        %6523 = vmatprep.subr.mxu0 0.0
        %6524 = vmatpush1.msra.mxu0 0.0
        %6525 = vmatprep.subr.mxu0 0.0
        %6526 = vmatpush1.msra.mxu0 0.0
        %6527 = vmatprep.mubr.f32.mxu0 0.0
        %6528 = vmatmul.mubr.f32.gmra.mrb[0].mxu0 %v1001
        %v6529 = vpop.f32.mrb[0].mxu0
        %v6530 = vadd.f32 %v983, %v6529
        %v6531 = vpop.f32.mrb[0].mxu0
        %v6532 = vadd.f32 %v983, %v6531
        %6533 = vmatprep.mubr.f32.mxu0 0.0
        %6534 = vmatmul.mubr.f32.gmra.mrb[0].mxu0 %v1004
        %v6535 = vpop.f32.mrb[0].mxu0
        %v6536 = vadd.f32 %v988, %v6535
        %v6537 = vpop.f32.mrb[0].mxu0
        %v6538 = vadd.f32 %v988, %v6537
        %6539 = vmatprep.mubr.f32.mxu0 0.0
        %6540 = vmatmul.mubr.f32.gmra.mrb[0].mxu0 %v1007
        %v6541 = vpop.f32.mrb[0].mxu0
        %v6542 = vadd.f32 %v993, %v6541
        %v6543 = vpop.f32.mrb[0].mxu0
        %v6544 = vadd.f32 %v993, %v6543
        %6545 = vmatprep.mubr.f32.mxu0 0.0
        %6546 = vmatmul.mubr.f32.gmra.mrb[0].mxu0 %v1010
        %v6547 = vpop.f32.mrb[0].mxu0
        %v6548 = vadd.f32 %v998, %v6547
        %v6549 = vpop.f32.mrb[0].mxu0
        %v6550 = vadd.f32 %v998, %v6549
        %6551 = vdwg.mxu0
        %v6552 = vmax.f32 %v6530, 0.0
        %v6553 = vmax.f32 %v6532, 0.0
        %v6554 = vmax.f32 %v6536, 0.0
        %v6555 = vmax.f32 %v6538, 0.0
        %v6556 = vmax.f32 %v6542, 0.0
        %v6557 = vmax.f32 %v6544, 0.0
        %v6558 = vmax.f32 %v6548, 0.0
        %v6559 = vmax.f32 %v6550, 0.0
        %6560 = vmatprep.subr.mxu0 %v6456
        %6561 = vmatpush1.msra.mxu0 %v6455
        %6562 = vmatprep.subr.mxu0 %v6458
        %6563 = vmatpush1.msra.mxu0 %v6457
        %6564 = vmatprep.subr.mxu0 %v6460
        %6565 = vmatpush1.msra.mxu0 %v6459
        %6566 = vmatprep.subr.mxu0 %v6462
        %6567 = vmatpush1.msra.mxu0 %v6461
        %6568 = vmatprep.subr.mxu0 0.0
        %6569 = vmatpush1.msra.mxu0 0.0
        %6570 = vmatprep.subr.mxu0 0.0
        %6571 = vmatpush1.msra.mxu0 0.0
        %6572 = vmatprep.subr.mxu0 0.0
        %6573 = vmatpush1.msra.mxu0 0.0
        %6574 = vmatprep.subr.mxu0 0.0
        %6575 = vmatpush1.msra.mxu0 0.0
        %6576 = vmatprep.subr.mxu0 0.0
        %6577 = vmatpush1.msra.mxu0 0.0
        %6578 = vmatprep.subr.mxu0 0.0
        %6579 = vmatpush1.msra.mxu0 0.0
        %6580 = vmatprep.subr.mxu0 0.0
        %6581 = vmatpush1.msra.mxu0 0.0
        %6582 = vmatprep.subr.mxu0 0.0
        %6583 = vmatpush1.msra.mxu0 0.0
        %6584 = vmatprep.subr.mxu0 0.0
        %6585 = vmatpush1.msra.mxu0 0.0
        %6586 = vmatprep.subr.mxu0 0.0
        %6587 = vmatpush1.msra.mxu0 0.0
        %6588 = vmatprep.subr.mxu0 0.0
        %6589 = vmatpush1.msra.mxu0 0.0
        %6590 = vmatprep.subr.mxu0 0.0
        %6591 = vmatpush1.msra.mxu0 0.0
        %6592 = vmatprep.subr.mxu0 0.0
        %6593 = vmatpush1.msra.mxu0 0.0
        %6594 = vmatprep.subr.mxu0 0.0
        %6595 = vmatpush1.msra.mxu0 0.0
        %6596 = vmatprep.subr.mxu0 0.0
        %6597 = vmatpush1.msra.mxu0 0.0
        %6598 = vmatprep.subr.mxu0 0.0
        %6599 = vmatpush1.msra.mxu0 0.0
        %6600 = vmatprep.subr.mxu0 0.0
        %6601 = vmatpush1.msra.mxu0 0.0
        %6602 = vmatprep.subr.mxu0 0.0
        %6603 = vmatpush1.msra.mxu0 0.0
        %6604 = vmatprep.subr.mxu0 0.0
        %6605 = vmatpush1.msra.mxu0 0.0
        %6606 = vmatprep.subr.mxu0 0.0
        %6607 = vmatpush1.msra.mxu0 0.0
        %6608 = vmatprep.subr.mxu0 0.0
        %6609 = vmatpush1.msra.mxu0 0.0
        %6610 = vmatprep.subr.mxu0 0.0
        %6611 = vmatpush1.msra.mxu0 0.0
        %6612 = vmatprep.subr.mxu0 0.0
        %6613 = vmatpush1.msra.mxu0 0.0
        %6614 = vmatprep.subr.mxu0 0.0
        %6615 = vmatpush1.msra.mxu0 0.0
        %6616 = vmatprep.subr.mxu0 0.0
        %6617 = vmatpush1.msra.mxu0 0.0
        %6618 = vmatprep.subr.mxu0 0.0
        %6619 = vmatpush1.msra.mxu0 0.0
        %6620 = vmatprep.subr.mxu0 0.0
        %6621 = vmatpush1.msra.mxu0 0.0
        %6622 = vmatprep.subr.mxu0 0.0
        %6623 = vmatpush1.msra.mxu0 0.0
        %6624 = vmatprep.mubr.f32.mxu0 0.0
        %6625 = vmatmul.mubr.f32.gmra.mrb[0].mxu0 %v1130
        %v6626 = vpop.f32.mrb[0].mxu0
        %v6627 = vadd.f32 %v1112, %v6626
        %v6628 = vpop.f32.mrb[0].mxu0
        %v6629 = vadd.f32 %v1112, %v6628
        %6630 = vmatprep.mubr.f32.mxu0 0.0
        %6631 = vmatmul.mubr.f32.gmra.mrb[0].mxu0 %v1133
        %v6632 = vpop.f32.mrb[0].mxu0
        %v6633 = vadd.f32 %v1117, %v6632
        %v6634 = vpop.f32.mrb[0].mxu0
        %v6635 = vadd.f32 %v1117, %v6634
        %6636 = vmatprep.mubr.f32.mxu0 0.0
        %6637 = vmatmul.mubr.f32.gmra.mrb[0].mxu0 %v1136
        %v6638 = vpop.f32.mrb[0].mxu0
        %v6639 = vadd.f32 %v1122, %v6638
        %v6640 = vpop.f32.mrb[0].mxu0
        %v6641 = vadd.f32 %v1122, %v6640
        %6642 = vmatprep.mubr.f32.mxu0 0.0
        %6643 = vmatmul.mubr.f32.gmra.mrb[0].mxu0 %v1139
        %v6644 = vpop.f32.mrb[0].mxu0
        %v6645 = vadd.f32 %v1127, %v6644
        %v6646 = vpop.f32.mrb[0].mxu0
        %v6647 = vadd.f32 %v1127, %v6646
        %6648 = vdwg.mxu0
        %v6649 = vmax.f32 %v6627, 0.0
        %v6650 = vmax.f32 %v6629, 0.0
        %v6651 = vmax.f32 %v6633, 0.0
        %v6652 = vmax.f32 %v6635, 0.0
        %v6653 = vmax.f32 %v6639, 0.0
        %v6654 = vmax.f32 %v6641, 0.0
        %v6655 = vmax.f32 %v6645, 0.0
        %v6656 = vmax.f32 %v6647, 0.0
        %v6657 = vmul.f32 %v6649, 0.5
        %v6658 = vmul.f32 %v6650, 0.5
        %v6659 = vmul.f32 %v6651, 0.5
        %v6660 = vmul.f32 %v6652, 0.5
        %v6661 = vmul.f32 %v6653, 0.5
        %v6662 = vmul.f32 %v6654, 0.5
        %v6663 = vmul.f32 %v6655, 0.5
        %v6664 = vmul.f32 %v6656, 0.5
        %v6665 = vadd.f32 %v6552, %v6657
        %v6666 = vadd.f32 %v6553, %v6658
        %v6667 = vadd.f32 %v6554, %v6659
        %v6668 = vadd.f32 %v6555, %v6660
        %v6669 = vadd.f32 %v6556, %v6661
        %v6670 = vadd.f32 %v6557, %v6662
        %v6671 = vadd.f32 %v6558, %v6663
        %v6672 = vadd.f32 %v6559, %v6664
        %6673 = vmatprep.subr.mxu0 %v6666
        %6674 = vmatpush1.msra.mxu0 %v6665
        %6675 = vmatprep.subr.mxu0 %v6668
        %6676 = vmatpush1.msra.mxu0 %v6667
        %6677 = vmatprep.subr.mxu0 %v6670
        %6678 = vmatpush1.msra.mxu0 %v6669
        %6679 = vmatprep.subr.mxu0 %v6672
        %6680 = vmatpush1.msra.mxu0 %v6671
        %6681 = vmatprep.subr.mxu0 0.0
        %6682 = vmatpush1.msra.mxu0 0.0
        %6683 = vmatprep.subr.mxu0 0.0
        %6684 = vmatpush1.msra.mxu0 0.0
        %6685 = vmatprep.subr.mxu0 0.0
        %6686 = vmatpush1.msra.mxu0 0.0
        %6687 = vmatprep.subr.mxu0 0.0
        %6688 = vmatpush1.msra.mxu0 0.0
        %6689 = vmatprep.subr.mxu0 0.0
        %6690 = vmatpush1.msra.mxu0 0.0
        %6691 = vmatprep.subr.mxu0 0.0
        %6692 = vmatpush1.msra.mxu0 0.0
        %6693 = vmatprep.subr.mxu0 0.0
        %6694 = vmatpush1.msra.mxu0 0.0
        %6695 = vmatprep.subr.mxu0 0.0
        %6696 = vmatpush1.msra.mxu0 0.0
        %6697 = vmatprep.subr.mxu0 0.0
        %6698 = vmatpush1.msra.mxu0 0.0
        %6699 = vmatprep.subr.mxu0 0.0
        %6700 = vmatpush1.msra.mxu0 0.0
        %6701 = vmatprep.subr.mxu0 0.0
        %6702 = vmatpush1.msra.mxu0 0.0
        %6703 = vmatprep.subr.mxu0 0.0
        %6704 = vmatpush1.msra.mxu0 0.0
        %6705 = vmatprep.subr.mxu0 0.0
        %6706 = vmatpush1.msra.mxu0 0.0
        %6707 = vmatprep.subr.mxu0 0.0
        %6708 = vmatpush1.msra.mxu0 0.0
        %6709 = vmatprep.subr.mxu0 0.0
        %6710 = vmatpush1.msra.mxu0 0.0
        %6711 = vmatprep.subr.mxu0 0.0
        %6712 = vmatpush1.msra.mxu0 0.0
        %6713 = vmatprep.subr.mxu0 0.0
        %6714 = vmatpush1.msra.mxu0 0.0
        %6715 = vmatprep.subr.mxu0 0.0
        %6716 = vmatpush1.msra.mxu0 0.0
        %6717 = vmatprep.subr.mxu0 0.0
        %6718 = vmatpush1.msra.mxu0 0.0
        %6719 = vmatprep.subr.mxu0 0.0
        %6720 = vmatpush1.msra.mxu0 0.0
        %6721 = vmatprep.subr.mxu0 0.0
        %6722 = vmatpush1.msra.mxu0 0.0
        %6723 = vmatprep.subr.mxu0 0.0
        %6724 = vmatpush1.msra.mxu0 0.0
        %6725 = vmatprep.subr.mxu0 0.0
        %6726 = vmatpush1.msra.mxu0 0.0
        %6727 = vmatprep.subr.mxu0 0.0
        %6728 = vmatpush1.msra.mxu0 0.0
        %6729 = vmatprep.subr.mxu0 0.0
        %6730 = vmatpush1.msra.mxu0 0.0
        %6731 = vmatprep.subr.mxu0 0.0
        %6732 = vmatpush1.msra.mxu0 0.0
        %6733 = vmatprep.subr.mxu0 0.0
        %6734 = vmatpush1.msra.mxu0 0.0
        %6735 = vmatprep.subr.mxu0 0.0
        %6736 = vmatpush1.msra.mxu0 0.0
        %6737 = vmatprep.mubr.f32.mxu0 0.0
        %6738 = vmatmul.mubr.f32.gmra.mrb[0].mxu0 %v1260
        %v6739 = vpop.f32.mrb[0].mxu0
        %v6740 = vadd.f32 %v1257, %v6739
        %v6741 = vpop.f32.mrb[0].mxu0
        %v6742 = vadd.f32 %v1257, %v6741
        %6743 = vdwg.mxu0
        %6744 = vst [vmem:[%s338 + $0x70] sm:$0xff] %v6740
        %6745 = vst [vmem:[%s338 + $0x78] sm:$0xff] %v6742
        %s6746 = sand.u32 %s225, 1
        %s6747 = scalar_lea.sflag [#allocation3], %s6746
        %s6748 = sand.u32 %s225, 1
        %s6749 = smul.addr %s6748, 128
        %s6750 = scalar_lea.vmem [#allocation2], %s6749
        // Predicated region
        $region57: #{tpu_custom_call.1} parent=55 // pred_check
          %p6751 = pneg %p235
        $region58: #{tpu_custom_call.1} parent=55 // pred_check_branch
          %6753 = sbr.rel (%p6751) target = $region60
        $region59: #{tpu_custom_call.1} parent=55 // pred_region
          %s6754 = smul.u32 16, %s23
          %s6755 = ssub.s32 20, %s6754
          %p6756 = scmp.lt.s32.totalorder %s6755, 16
          %s6757 = scalar_select %p6756, %s6755, 16
          %s6758 = smul.u32 128, %s6757
          %s6760 = ssub.s32 2048, %s6758
          %6761 = vsyncadd %s6747, %s6760
          %p6762 = scmp.ne.s32.totalorder 0, %s6758
          %s6763 = smul.addr %s6754, 128
          %s6764 = scalar_lea.hbm %s9, %s6763
          %s6765 = smul.u32 %s6757, 8
          %s6766 = sshll.u32 %s6765, 4
          %s6767 = sshll.u32 %s6750, 4
          %s6768 = int_to_ptr.vmem [resolvable:$true] %s6767
          %6770 = dma.vmem_to_hbm [thread:$0]  (%p6762), %s6768, %s6766, %s6764, %s6747
        $region60: #{tpu_custom_call.1} parent=55 // pred_fallthru
          _
      $region56: #{tpu_custom_call.1} parent=5 // pred_fallthru
        _
      %p6771 = scmp.le.s32.totalorder 2, %s18
      // Predicated region
      $region61: #{tpu_custom_call.1} parent=5 // pred_check
        %p6772 = pneg %p6771
      $region62: #{tpu_custom_call.1} parent=5 // pred_check_branch
        %6774 = sbr.rel (%p6772) target = $region64
      $region63: #{tpu_custom_call.1} parent=5 // pred_region
        %s6775 = ssub.s32 %s18, 2
        // Predicated region
        $region65: #{tpu_custom_call.1} parent=63 // pred_check
          %p6776 = pneg %p241
        $region66: #{tpu_custom_call.1} parent=63 // pred_check_branch
          %6778 = sbr.rel (%p6776) target = $region68
        $region67: #{tpu_custom_call.1} parent=63 // pred_region
          %s6779 = sand.u32 %s226, 1
          %s6780 = scalar_lea.sflag [#allocation3], %s6779
          %s6781 = sand.u32 %s226, 1
          %s6782 = smul.addr %s6781, 128
          %s6783 = scalar_lea.vmem [#allocation2], %s6782
          %6784 = dma.done %s6780, 2048
        $region68: #{tpu_custom_call.1} parent=63 // pred_fallthru
          _
      $region64: #{tpu_custom_call.1} parent=5 // pred_fallthru
        _
    $region6: #{tpu_custom_call.1} parent=1 // loop_footer
      %s22 = sadd.s32 1, %s18
    $region7: #{tpu_custom_call.1} parent=1 // loop_footer_branch
      %17 = sbr.rel target = $region3
    $region8: #{tpu_custom_call.1} parent=1 // loop_exit
      _
    %6785 = vsyncpa [#allocation3], 1
    %s6786 = scalar_lea.sflag [#allocation3], 1
    %6787 = vsyncpa %s6786, 1

</llo_original>
